<compile_context>
chip_gen: v7x
topology: tpu7x:2x2x1
jax: 0.10.0
libtpu: 0.0.40
codegen_flags: <defaults>
</compile_context>

<pallas_src>
import functools

import numpy as np

import jax
import jax.numpy as jnp
from jax.experimental import pallas as pl
from jax.experimental.pallas import tpu as pltpu


# ----------------------------------------------------------------------------
# Layer geometry (MNIST encoder, all convs kernel=4, stride=2, pad=1).
#   conv1: (28, 28, 1)  -> (14, 14, 32)
#   conv2: (14, 14, 32) -> (7, 7, 64)
#   conv3: (7, 7, 64)   -> (3, 3, 128)
#   fc   : 128*3*3 -> n_latent (mu) and n_latent (logvar)
# ----------------------------------------------------------------------------
_K, _STRIDE, _PAD = 4, 2, 1
_L1 = dict(hin=28, win=28, cin=1, ho=14, wo=14, cout=32)
_L2 = dict(hin=14, win=14, cin=32, ho=7, wo=7, cout=64)
_L3 = dict(hin=7, win=7, cin=64, ho=3, wo=3, cout=128)


# --------------------------- one-time weight prep ----------------------------

def _row_select_mats(hin, ho):
    """SH_i[o, h] = 1 iff h == stride*o + i - pad (all-zero row => zero pad)."""
    mats = np.zeros((_K, ho, hin), np.float32)
    for i in range(_K):
        for o in range(ho):
            h = _STRIDE * o + i - _PAD
            if 0 <= h < hin:
                mats[i, o, h] = 1.0
    return mats


def _banded_weight_mats(w, win, wo):
    """G_i[(w, ci), (o, co)] = conv_w[co, ci, i, j] with j = w - stride*o + pad.

    Folds the kernel-column loop, W stride-2 subsampling and W zero-padding of
    the conv into one (Win*Cin, Wo*Cout) matrix per kernel row i.
    """
    cout, cin, kh, kw = w.shape
    mats = np.zeros((_K, win * cin, wo * cout), np.float32)
    for i in range(kh):
        for o in range(wo):
            for j in range(kw):
                col = _STRIDE * o + j - _PAD
                if 0 <= col < win:
                    mats[i, col * cin:(col + 1) * cin,
                         o * cout:(o + 1) * cout] = w[:, :, i, j].T
    return mats


def _fc_mats(w_mu, w_logvar, ho=3, wo=3, c=128):
    """Wfc_r[(o, co), n] = Wcat[n, co*9 + r*3 + o]  (PyTorch NCHW flatten order)."""
    wcat = np.concatenate([w_mu, w_logvar], axis=0)          # (2*nl, 1152)
    n2 = wcat.shape[0]
    mats = np.zeros((ho, wo * c, n2), np.float32)
    for r in range(ho):
        for o in range(wo):
            for co in range(c):
                mats[r, o * c + co, :] = wcat[:, co * ho * wo + r * wo + o]
    return mats


def prep_params(params):
    """Fold / permute / cast all weights once, outside the hot path."""
    def bf16(a):
        return jnp.asarray(a, dtype=jnp.bfloat16)

    def f32(a):
        return jnp.asarray(np.asarray(a, np.float32))

    p = {}
    for name, wk, bk, L in (("1", "w1", "b1", _L1),
                            ("2", "w2", "b2", _L2),
                            ("3", "w3", "b3", _L3)):
        w = np.asarray(params[wk], np.float32)
        b = np.asarray(params[bk], np.float32)
        p["sh" + name] = bf16(_row_select_mats(L["hin"], L["ho"]))
        p["g" + name] = bf16(_banded_weight_mats(w, L["win"], L["wo"]))
        p["b" + name] = f32(np.tile(b, L["wo"])[None, :])      # (1, Wo*Cout)
    p["wfc"] = bf16(_fc_mats(np.asarray(params["w_mu"], np.float32),
                             np.asarray(params["w_logvar"], np.float32)))
    p["bfc"] = f32(np.concatenate([np.asarray(params["b_mu"], np.float32),
                                   np.asarray(params["b_logvar"], np.float32)])[None, :])
    return p


# -------------------------------- the kernel ----------------------------------

def _encoder_kernel(x_ref,
                    sh1_ref, g1_ref, b1_ref,
                    sh2_ref, g2_ref, b2_ref,
                    sh3_ref, g3_ref, b3_ref,
                    wfc_ref, bfc_ref,
                    mu_ref, logvar_ref, *, n_latent):
    """One image per grid step; all intermediates stay on-chip."""

    def conv_relu(a, sh_ref, g_ref, b_ref):
        # a: (Hin, Win*Cin) bf16  ->  (Ho, Wo*Cout) bf16
        acc = None
        for i in range(_K):
            rows = jnp.dot(sh_ref[i], a, preferred_element_type=jnp.float32)
            part = jnp.dot(rows.astype(jnp.bfloat16), g_ref[i],
                           preferred_element_type=jnp.float32)
            acc = part if acc is None else acc + part
        acc = acc + b_ref[...]
        return jnp.maximum(acc, 0.0).astype(jnp.bfloat16)

    a0 = x_ref[0].astype(jnp.bfloat16)                  # (28, 28), Cin == 1
    h1 = conv_relu(a0, sh1_ref, g1_ref, b1_ref)         # (14, 14*32)
    h2 = conv_relu(h1, sh2_ref, g2_ref, b2_ref)         # (7, 7*64)
    h3 = conv_relu(h2, sh3_ref, g3_ref, b3_ref)         # (3, 3*128)

    out = bfc_ref[...]                                  # (1, 2*n_latent) f32
    for r in range(3):
        out = out + jnp.dot(h3[r:r + 1, :], wfc_ref[r],
                            preferred_element_type=jnp.float32)
    mu_ref[0] = out[:, :n_latent]
    logvar_ref[0] = out[:, n_latent:]


# ------------------------------- forward pass ----------------------------------

def vae_encoder_forward(prepped, x, *, n_latent):
    """x: (B, 1, 28, 28) f32 NCHW -> (mu, logvar), each (B, n_latent) f32."""
    B = x.shape[0]
    assert x.shape[1:] == (1, 28, 28), x.shape
    x3 = x.reshape(B, 28, 28)                           # drop Cin == 1 (free)

    def invariant(arr):
        if arr.ndim == 2:
            return pl.BlockSpec(arr.shape, lambda b: (0, 0))
        return pl.BlockSpec(arr.shape, lambda b: (0, 0, 0))

    weights = (prepped["sh1"], prepped["g1"], prepped["b1"],
               prepped["sh2"], prepped["g2"], prepped["b2"],
               prepped["sh3"], prepped["g3"], prepped["b3"],
               prepped["wfc"], prepped["bfc"])

    weight_bytes = sum(int(np.prod(w.shape)) * w.dtype.itemsize for w in weights)
    vmem_bytes = int(min(32 << 20, 2 * weight_bytes + (8 << 20)))

    mu3, lv3 = pl.pallas_call(
        functools.partial(_encoder_kernel, n_latent=n_latent),
        out_shape=(jax.ShapeDtypeStruct((B, 1, n_latent), jnp.float32),
                   jax.ShapeDtypeStruct((B, 1, n_latent), jnp.float32)),
        grid=(B,),
        in_specs=[pl.BlockSpec((1, 28, 28), lambda b: (b, 0, 0))]
                 + [invariant(w) for w in weights],
        out_specs=(pl.BlockSpec((1, 1, n_latent), lambda b: (b, 0, 0)),
                   pl.BlockSpec((1, 1, n_latent), lambda b: (b, 0, 0))),
        compiler_params=pltpu.CompilerParams(
            dimension_semantics=("parallel",),
            vmem_limit_bytes=vmem_bytes,
        ),
    )(x3, *weights)
    return mu3.reshape(B, n_latent), lv3.reshape(B, n_latent)


# ------------------------------ model parameters -------------------------------

def init_params(key, n_latent):
    ks = jax.random.split(key, 10)

    def uinit(k, shape, fan_in):
        bound = 1.0 / jnp.sqrt(jnp.float32(fan_in))
        return jax.random.uniform(k, shape, jnp.float32, -bound, bound)

    feat = 128 * 3 * 3
    return {
        "w1": uinit(ks[0], (32, 1, 4, 4), 1 * 4 * 4),
        "b1": uinit(ks[1], (32,), 1 * 4 * 4),
        "w2": uinit(ks[2], (64, 32, 4, 4), 32 * 4 * 4),
        "b2": uinit(ks[3], (64,), 32 * 4 * 4),
        "w3": uinit(ks[4], (128, 64, 4, 4), 64 * 4 * 4),
        "b3": uinit(ks[5], (128,), 64 * 4 * 4),
        "w_mu": uinit(ks[6], (n_latent, feat), feat),
        "b_mu": uinit(ks[7], (n_latent,), feat),
        "w_logvar": uinit(ks[8], (n_latent, feat), feat),
        "b_logvar": uinit(ks[9], (n_latent,), feat),
    }


# Pure-JAX f32 reference (independent code path: lax.conv) for correctness.
def ref_forward(params, x):
    def conv(h, w, b):
        y = jax.lax.conv_general_dilated(
            h, w, window_strides=(2, 2), padding=((1, 1), (1, 1)),
            dimension_numbers=("NCHW", "OIHW", "NCHW"),
            precision=jax.lax.Precision.HIGHEST)
        return jnp.maximum(y + b[None, :, None, None], 0.0)

    h = conv(x, params["w1"], params["b1"])
    h = conv(h, params["w2"], params["b2"])
    h = conv(h, params["w3"], params["b3"])
    flat = h.reshape(x.shape[0], -1)
    hi = jax.lax.Precision.HIGHEST
    mu = jnp.dot(flat, params["w_mu"].T, precision=hi) + params["b_mu"]
    logvar = jnp.dot(flat, params["w_logvar"].T, precision=hi) + params["b_logvar"]
    return mu, logvar


if __name__ == "__main__":
    n_latent = 8
    batch = 2
    key = jax.random.PRNGKey(0)
    k_param, k_x = jax.random.split(key)
    params = init_params(k_param, n_latent)
    x = jax.random.normal(k_x, (batch, 1, 28, 28), dtype=jnp.float32)

    prepped = prep_params(params)          # one-time weight folding, outside jit
    fwd = jax.jit(functools.partial(vae_encoder_forward, n_latent=n_latent))

    mu, logvar = fwd(prepped, x)
    jax.block_until_ready((mu, logvar))

    assert mu.shape == (batch, n_latent) and logvar.shape == (batch, n_latent)

    mu_ref, lv_ref = ref_forward(params, x)
    # bf16 MXU inputs (f32 accumulation) vs. f32 reference -> looser tolerance.
    assert jnp.allclose(mu, mu_ref, rtol=3e-2, atol=3e-2), \
        float(jnp.max(jnp.abs(mu - mu_ref)))
    assert jnp.allclose(logvar, lv_ref, rtol=3e-2, atol=3e-2), \
        float(jnp.max(jnp.abs(logvar - lv_ref)))

    print("KERNEL_OK")
</pallas_src>

<mosaic_0001>
module attributes {stable_mosaic.version = 11 : i64} {
  func.func @_encoder_kernel(%arg0: i32, %arg1: memref<1x28x28xf32, #tpu.memory_space<vmem>>, %arg2: memref<4x14x28xbf16, #tpu.memory_space<vmem>>, %arg3: memref<4x28x448xbf16, #tpu.memory_space<vmem>>, %arg4: memref<1x448xf32, #tpu.memory_space<vmem>>, %arg5: memref<4x7x14xbf16, #tpu.memory_space<vmem>>, %arg6: memref<4x448x448xbf16, #tpu.memory_space<vmem>>, %arg7: memref<1x448xf32, #tpu.memory_space<vmem>>, %arg8: memref<4x3x7xbf16, #tpu.memory_space<vmem>>, %arg9: memref<4x448x384xbf16, #tpu.memory_space<vmem>>, %arg10: memref<1x384xf32, #tpu.memory_space<vmem>>, %arg11: memref<3x384x16xbf16, #tpu.memory_space<vmem>>, %arg12: memref<1x16xf32, #tpu.memory_space<vmem>>, %arg13: memref<1x1x8xf32, #tpu.memory_space<vmem>>, %arg14: memref<1x1x8xf32, #tpu.memory_space<vmem>>) attributes {dimension_semantics = [#tpu.dimension_semantics<parallel>], iteration_bounds = array<i64: 2>, scalar_prefetch = 0 : i64, scratch_operands = 0 : i64, tpu.core_type = #tpu.core_type<tc>, window_params = [{transform_indices = @transform_0, window_bounds = array<i64: 1, 28, 28>}, {pipeline_mode = #tpu.pipeline_mode<synchronous>, transform_indices = @transform_1, window_bounds = array<i64: 4, 14, 28>}, {pipeline_mode = #tpu.pipeline_mode<synchronous>, transform_indices = @transform_2, window_bounds = array<i64: 4, 28, 448>}, {pipeline_mode = #tpu.pipeline_mode<synchronous>, transform_indices = @transform_3, window_bounds = array<i64: 1, 448>}, {pipeline_mode = #tpu.pipeline_mode<synchronous>, transform_indices = @transform_4, window_bounds = array<i64: 4, 7, 14>}, {pipeline_mode = #tpu.pipeline_mode<synchronous>, transform_indices = @transform_5, window_bounds = array<i64: 4, 448, 448>}, {pipeline_mode = #tpu.pipeline_mode<synchronous>, transform_indices = @transform_6, window_bounds = array<i64: 1, 448>}, {pipeline_mode = #tpu.pipeline_mode<synchronous>, transform_indices = @transform_7, window_bounds = array<i64: 4, 3, 7>}, {pipeline_mode = #tpu.pipeline_mode<synchronous>, transform_indices = @transform_8, window_bounds = array<i64: 4, 448, 384>}, {pipeline_mode = #tpu.pipeline_mode<synchronous>, transform_indices = @transform_9, window_bounds = array<i64: 1, 384>}, {pipeline_mode = #tpu.pipeline_mode<synchronous>, transform_indices = @transform_10, window_bounds = array<i64: 3, 384, 16>}, {pipeline_mode = #tpu.pipeline_mode<synchronous>, transform_indices = @transform_11, window_bounds = array<i64: 1, 16>}, {transform_indices = @transform_12, window_bounds = array<i64: 1, 1, 8>}, {transform_indices = @transform_13, window_bounds = array<i64: 1, 1, 8>}]} {
    %c0 = arith.constant 0 : index
    %c0_0 = arith.constant 0 : index
    %c0_1 = arith.constant 0 : index
    %0 = vector.load %arg1[%c0, %c0_0, %c0_1] : memref<1x28x28xf32, #tpu.memory_space<vmem>>, vector<1x28x28xf32>
    %1 = vector.shape_cast %0 : vector<1x28x28xf32> to vector<28x28xf32>
    %2 = arith.truncf %1 : vector<28x28xf32> to vector<28x28xbf16>
    %c0_2 = arith.constant 0 : index
    %c0_3 = arith.constant 0 : index
    %c0_4 = arith.constant 0 : index
    %3 = vector.load %arg2[%c0_2, %c0_3, %c0_4] : memref<4x14x28xbf16, #tpu.memory_space<vmem>>, vector<1x14x28xbf16>
    %4 = vector.shape_cast %3 : vector<1x14x28xbf16> to vector<14x28xbf16>
    %cst = arith.constant dense<0.000000e+00> : vector<14x28xf32>
    %5 = tpu.matmul %4, %2, %cst {dimension_numbers = #tpu.dot_dimension_numbers<[1], [0], [0], [1], [0, 0, 1, 1], [], []>} : vector<14x28xbf16>, vector<28x28xbf16>, vector<14x28xf32> -> vector<14x28xf32>
    %6 = arith.truncf %5 : vector<14x28xf32> to vector<14x28xbf16>
    %c0_5 = arith.constant 0 : index
    %c0_6 = arith.constant 0 : index
    %c0_7 = arith.constant 0 : index
    %7 = vector.load %arg3[%c0_5, %c0_6, %c0_7] : memref<4x28x448xbf16, #tpu.memory_space<vmem>>, vector<1x28x448xbf16>
    %8 = vector.shape_cast %7 : vector<1x28x448xbf16> to vector<28x448xbf16>
    %cst_8 = arith.constant dense<0.000000e+00> : vector<14x448xf32>
    %9 = tpu.matmul %6, %8, %cst_8 {dimension_numbers = #tpu.dot_dimension_numbers<[1], [0], [0], [1], [0, 0, 1, 1], [], []>} : vector<14x28xbf16>, vector<28x448xbf16>, vector<14x448xf32> -> vector<14x448xf32>
    %c1 = arith.constant 1 : index
    %c0_9 = arith.constant 0 : index
    %c0_10 = arith.constant 0 : index
    %10 = vector.load %arg2[%c1, %c0_9, %c0_10] : memref<4x14x28xbf16, #tpu.memory_space<vmem>>, vector<1x14x28xbf16>
    %11 = vector.shape_cast %10 : vector<1x14x28xbf16> to vector<14x28xbf16>
    %cst_11 = arith.constant dense<0.000000e+00> : vector<14x28xf32>
    %12 = tpu.matmul %11, %2, %cst_11 {dimension_numbers = #tpu.dot_dimension_numbers<[1], [0], [0], [1], [0, 0, 1, 1], [], []>} : vector<14x28xbf16>, vector<28x28xbf16>, vector<14x28xf32> -> vector<14x28xf32>
    %13 = arith.truncf %12 : vector<14x28xf32> to vector<14x28xbf16>
    %c1_12 = arith.constant 1 : index
    %c0_13 = arith.constant 0 : index
    %c0_14 = arith.constant 0 : index
    %14 = vector.load %arg3[%c1_12, %c0_13, %c0_14] : memref<4x28x448xbf16, #tpu.memory_space<vmem>>, vector<1x28x448xbf16>
    %15 = vector.shape_cast %14 : vector<1x28x448xbf16> to vector<28x448xbf16>
    %cst_15 = arith.constant dense<0.000000e+00> : vector<14x448xf32>
    %16 = tpu.matmul %13, %15, %cst_15 {dimension_numbers = #tpu.dot_dimension_numbers<[1], [0], [0], [1], [0, 0, 1, 1], [], []>} : vector<14x28xbf16>, vector<28x448xbf16>, vector<14x448xf32> -> vector<14x448xf32>
    %17 = arith.addf %9, %16 : vector<14x448xf32>
    %c2 = arith.constant 2 : index
    %c0_16 = arith.constant 0 : index
    %c0_17 = arith.constant 0 : index
    %18 = vector.load %arg2[%c2, %c0_16, %c0_17] : memref<4x14x28xbf16, #tpu.memory_space<vmem>>, vector<1x14x28xbf16>
    %19 = vector.shape_cast %18 : vector<1x14x28xbf16> to vector<14x28xbf16>
    %cst_18 = arith.constant dense<0.000000e+00> : vector<14x28xf32>
    %20 = tpu.matmul %19, %2, %cst_18 {dimension_numbers = #tpu.dot_dimension_numbers<[1], [0], [0], [1], [0, 0, 1, 1], [], []>} : vector<14x28xbf16>, vector<28x28xbf16>, vector<14x28xf32> -> vector<14x28xf32>
    %21 = arith.truncf %20 : vector<14x28xf32> to vector<14x28xbf16>
    %c2_19 = arith.constant 2 : index
    %c0_20 = arith.constant 0 : index
    %c0_21 = arith.constant 0 : index
    %22 = vector.load %arg3[%c2_19, %c0_20, %c0_21] : memref<4x28x448xbf16, #tpu.memory_space<vmem>>, vector<1x28x448xbf16>
    %23 = vector.shape_cast %22 : vector<1x28x448xbf16> to vector<28x448xbf16>
    %cst_22 = arith.constant dense<0.000000e+00> : vector<14x448xf32>
    %24 = tpu.matmul %21, %23, %cst_22 {dimension_numbers = #tpu.dot_dimension_numbers<[1], [0], [0], [1], [0, 0, 1, 1], [], []>} : vector<14x28xbf16>, vector<28x448xbf16>, vector<14x448xf32> -> vector<14x448xf32>
    %25 = arith.addf %17, %24 : vector<14x448xf32>
    %c3 = arith.constant 3 : index
    %c0_23 = arith.constant 0 : index
    %c0_24 = arith.constant 0 : index
    %26 = vector.load %arg2[%c3, %c0_23, %c0_24] : memref<4x14x28xbf16, #tpu.memory_space<vmem>>, vector<1x14x28xbf16>
    %27 = vector.shape_cast %26 : vector<1x14x28xbf16> to vector<14x28xbf16>
    %cst_25 = arith.constant dense<0.000000e+00> : vector<14x28xf32>
    %28 = tpu.matmul %27, %2, %cst_25 {dimension_numbers = #tpu.dot_dimension_numbers<[1], [0], [0], [1], [0, 0, 1, 1], [], []>} : vector<14x28xbf16>, vector<28x28xbf16>, vector<14x28xf32> -> vector<14x28xf32>
    %29 = arith.truncf %28 : vector<14x28xf32> to vector<14x28xbf16>
    %c3_26 = arith.constant 3 : index
    %c0_27 = arith.constant 0 : index
    %c0_28 = arith.constant 0 : index
    %30 = vector.load %arg3[%c3_26, %c0_27, %c0_28] : memref<4x28x448xbf16, #tpu.memory_space<vmem>>, vector<1x28x448xbf16>
    %31 = vector.shape_cast %30 : vector<1x28x448xbf16> to vector<28x448xbf16>
    %cst_29 = arith.constant dense<0.000000e+00> : vector<14x448xf32>
    %32 = tpu.matmul %29, %31, %cst_29 {dimension_numbers = #tpu.dot_dimension_numbers<[1], [0], [0], [1], [0, 0, 1, 1], [], []>} : vector<14x28xbf16>, vector<28x448xbf16>, vector<14x448xf32> -> vector<14x448xf32>
    %33 = arith.addf %25, %32 : vector<14x448xf32>
    %c0_30 = arith.constant 0 : index
    %c0_31 = arith.constant 0 : index
    %34 = vector.load %arg4[%c0_30, %c0_31] : memref<1x448xf32, #tpu.memory_space<vmem>>, vector<1x448xf32>
    %35 = vector.broadcast %34 : vector<1x448xf32> to vector<14x448xf32>
    %36 = arith.addf %33, %35 : vector<14x448xf32>
    %cst_32 = arith.constant 0.000000e+00 : f32
    %37 = vector.broadcast %cst_32 : f32 to vector<14x448xf32>
    %38 = arith.maximumf %36, %37 : vector<14x448xf32>
    %39 = arith.truncf %38 : vector<14x448xf32> to vector<14x448xbf16>
    %c0_33 = arith.constant 0 : index
    %c0_34 = arith.constant 0 : index
    %c0_35 = arith.constant 0 : index
    %40 = vector.load %arg5[%c0_33, %c0_34, %c0_35] : memref<4x7x14xbf16, #tpu.memory_space<vmem>>, vector<1x7x14xbf16>
    %41 = vector.shape_cast %40 : vector<1x7x14xbf16> to vector<7x14xbf16>
    %cst_36 = arith.constant dense<0.000000e+00> : vector<7x448xf32>
    %42 = tpu.matmul %41, %39, %cst_36 {dimension_numbers = #tpu.dot_dimension_numbers<[1], [0], [0], [1], [0, 0, 1, 1], [], []>} : vector<7x14xbf16>, vector<14x448xbf16>, vector<7x448xf32> -> vector<7x448xf32>
    %43 = arith.truncf %42 : vector<7x448xf32> to vector<7x448xbf16>
    %c0_37 = arith.constant 0 : index
    %c0_38 = arith.constant 0 : index
    %c0_39 = arith.constant 0 : index
    %44 = vector.load %arg6[%c0_37, %c0_38, %c0_39] : memref<4x448x448xbf16, #tpu.memory_space<vmem>>, vector<1x448x448xbf16>
    %45 = vector.shape_cast %44 : vector<1x448x448xbf16> to vector<448x448xbf16>
    %cst_40 = arith.constant dense<0.000000e+00> : vector<7x448xf32>
    %46 = tpu.matmul %43, %45, %cst_40 {dimension_numbers = #tpu.dot_dimension_numbers<[1], [0], [0], [1], [0, 0, 1, 1], [], []>} : vector<7x448xbf16>, vector<448x448xbf16>, vector<7x448xf32> -> vector<7x448xf32>
    %c1_41 = arith.constant 1 : index
    %c0_42 = arith.constant 0 : index
    %c0_43 = arith.constant 0 : index
    %47 = vector.load %arg5[%c1_41, %c0_42, %c0_43] : memref<4x7x14xbf16, #tpu.memory_space<vmem>>, vector<1x7x14xbf16>
    %48 = vector.shape_cast %47 : vector<1x7x14xbf16> to vector<7x14xbf16>
    %cst_44 = arith.constant dense<0.000000e+00> : vector<7x448xf32>
    %49 = tpu.matmul %48, %39, %cst_44 {dimension_numbers = #tpu.dot_dimension_numbers<[1], [0], [0], [1], [0, 0, 1, 1], [], []>} : vector<7x14xbf16>, vector<14x448xbf16>, vector<7x448xf32> -> vector<7x448xf32>
    %50 = arith.truncf %49 : vector<7x448xf32> to vector<7x448xbf16>
    %c1_45 = arith.constant 1 : index
    %c0_46 = arith.constant 0 : index
    %c0_47 = arith.constant 0 : index
    %51 = vector.load %arg6[%c1_45, %c0_46, %c0_47] : memref<4x448x448xbf16, #tpu.memory_space<vmem>>, vector<1x448x448xbf16>
    %52 = vector.shape_cast %51 : vector<1x448x448xbf16> to vector<448x448xbf16>
    %cst_48 = arith.constant dense<0.000000e+00> : vector<7x448xf32>
    %53 = tpu.matmul %50, %52, %cst_48 {dimension_numbers = #tpu.dot_dimension_numbers<[1], [0], [0], [1], [0, 0, 1, 1], [], []>} : vector<7x448xbf16>, vector<448x448xbf16>, vector<7x448xf32> -> vector<7x448xf32>
    %54 = arith.addf %46, %53 : vector<7x448xf32>
    %c2_49 = arith.constant 2 : index
    %c0_50 = arith.constant 0 : index
    %c0_51 = arith.constant 0 : index
    %55 = vector.load %arg5[%c2_49, %c0_50, %c0_51] : memref<4x7x14xbf16, #tpu.memory_space<vmem>>, vector<1x7x14xbf16>
    %56 = vector.shape_cast %55 : vector<1x7x14xbf16> to vector<7x14xbf16>
    %cst_52 = arith.constant dense<0.000000e+00> : vector<7x448xf32>
    %57 = tpu.matmul %56, %39, %cst_52 {dimension_numbers = #tpu.dot_dimension_numbers<[1], [0], [0], [1], [0, 0, 1, 1], [], []>} : vector<7x14xbf16>, vector<14x448xbf16>, vector<7x448xf32> -> vector<7x448xf32>
    %58 = arith.truncf %57 : vector<7x448xf32> to vector<7x448xbf16>
    %c2_53 = arith.constant 2 : index
    %c0_54 = arith.constant 0 : index
    %c0_55 = arith.constant 0 : index
    %59 = vector.load %arg6[%c2_53, %c0_54, %c0_55] : memref<4x448x448xbf16, #tpu.memory_space<vmem>>, vector<1x448x448xbf16>
    %60 = vector.shape_cast %59 : vector<1x448x448xbf16> to vector<448x448xbf16>
    %cst_56 = arith.constant dense<0.000000e+00> : vector<7x448xf32>
    %61 = tpu.matmul %58, %60, %cst_56 {dimension_numbers = #tpu.dot_dimension_numbers<[1], [0], [0], [1], [0, 0, 1, 1], [], []>} : vector<7x448xbf16>, vector<448x448xbf16>, vector<7x448xf32> -> vector<7x448xf32>
    %62 = arith.addf %54, %61 : vector<7x448xf32>
    %c3_57 = arith.constant 3 : index
    %c0_58 = arith.constant 0 : index
    %c0_59 = arith.constant 0 : index
    %63 = vector.load %arg5[%c3_57, %c0_58, %c0_59] : memref<4x7x14xbf16, #tpu.memory_space<vmem>>, vector<1x7x14xbf16>
    %64 = vector.shape_cast %63 : vector<1x7x14xbf16> to vector<7x14xbf16>
    %cst_60 = arith.constant dense<0.000000e+00> : vector<7x448xf32>
    %65 = tpu.matmul %64, %39, %cst_60 {dimension_numbers = #tpu.dot_dimension_numbers<[1], [0], [0], [1], [0, 0, 1, 1], [], []>} : vector<7x14xbf16>, vector<14x448xbf16>, vector<7x448xf32> -> vector<7x448xf32>
    %66 = arith.truncf %65 : vector<7x448xf32> to vector<7x448xbf16>
    %c3_61 = arith.constant 3 : index
    %c0_62 = arith.constant 0 : index
    %c0_63 = arith.constant 0 : index
    %67 = vector.load %arg6[%c3_61, %c0_62, %c0_63] : memref<4x448x448xbf16, #tpu.memory_space<vmem>>, vector<1x448x448xbf16>
    %68 = vector.shape_cast %67 : vector<1x448x448xbf16> to vector<448x448xbf16>
    %cst_64 = arith.constant dense<0.000000e+00> : vector<7x448xf32>
    %69 = tpu.matmul %66, %68, %cst_64 {dimension_numbers = #tpu.dot_dimension_numbers<[1], [0], [0], [1], [0, 0, 1, 1], [], []>} : vector<7x448xbf16>, vector<448x448xbf16>, vector<7x448xf32> -> vector<7x448xf32>
    %70 = arith.addf %62, %69 : vector<7x448xf32>
    %c0_65 = arith.constant 0 : index
    %c0_66 = arith.constant 0 : index
    %71 = vector.load %arg7[%c0_65, %c0_66] : memref<1x448xf32, #tpu.memory_space<vmem>>, vector<1x448xf32>
    %72 = vector.broadcast %71 : vector<1x448xf32> to vector<7x448xf32>
    %73 = arith.addf %70, %72 : vector<7x448xf32>
    %cst_67 = arith.constant 0.000000e+00 : f32
    %74 = vector.broadcast %cst_67 : f32 to vector<7x448xf32>
    %75 = arith.maximumf %73, %74 : vector<7x448xf32>
    %76 = arith.truncf %75 : vector<7x448xf32> to vector<7x448xbf16>
    %c0_68 = arith.constant 0 : index
    %c0_69 = arith.constant 0 : index
    %c0_70 = arith.constant 0 : index
    %77 = vector.load %arg8[%c0_68, %c0_69, %c0_70] : memref<4x3x7xbf16, #tpu.memory_space<vmem>>, vector<1x3x7xbf16>
    %78 = vector.shape_cast %77 : vector<1x3x7xbf16> to vector<3x7xbf16>
    %cst_71 = arith.constant dense<0.000000e+00> : vector<3x448xf32>
    %79 = tpu.matmul %78, %76, %cst_71 {dimension_numbers = #tpu.dot_dimension_numbers<[1], [0], [0], [1], [0, 0, 1, 1], [], []>} : vector<3x7xbf16>, vector<7x448xbf16>, vector<3x448xf32> -> vector<3x448xf32>
    %80 = arith.truncf %79 : vector<3x448xf32> to vector<3x448xbf16>
    %c0_72 = arith.constant 0 : index
    %c0_73 = arith.constant 0 : index
    %c0_74 = arith.constant 0 : index
    %81 = vector.load %arg9[%c0_72, %c0_73, %c0_74] : memref<4x448x384xbf16, #tpu.memory_space<vmem>>, vector<1x448x384xbf16>
    %82 = vector.shape_cast %81 : vector<1x448x384xbf16> to vector<448x384xbf16>
    %cst_75 = arith.constant dense<0.000000e+00> : vector<3x384xf32>
    %83 = tpu.matmul %80, %82, %cst_75 {dimension_numbers = #tpu.dot_dimension_numbers<[1], [0], [0], [1], [0, 0, 1, 1], [], []>} : vector<3x448xbf16>, vector<448x384xbf16>, vector<3x384xf32> -> vector<3x384xf32>
    %c1_76 = arith.constant 1 : index
    %c0_77 = arith.constant 0 : index
    %c0_78 = arith.constant 0 : index
    %84 = vector.load %arg8[%c1_76, %c0_77, %c0_78] : memref<4x3x7xbf16, #tpu.memory_space<vmem>>, vector<1x3x7xbf16>
    %85 = vector.shape_cast %84 : vector<1x3x7xbf16> to vector<3x7xbf16>
    %cst_79 = arith.constant dense<0.000000e+00> : vector<3x448xf32>
    %86 = tpu.matmul %85, %76, %cst_79 {dimension_numbers = #tpu.dot_dimension_numbers<[1], [0], [0], [1], [0, 0, 1, 1], [], []>} : vector<3x7xbf16>, vector<7x448xbf16>, vector<3x448xf32> -> vector<3x448xf32>
    %87 = arith.truncf %86 : vector<3x448xf32> to vector<3x448xbf16>
    %c1_80 = arith.constant 1 : index
    %c0_81 = arith.constant 0 : index
    %c0_82 = arith.constant 0 : index
    %88 = vector.load %arg9[%c1_80, %c0_81, %c0_82] : memref<4x448x384xbf16, #tpu.memory_space<vmem>>, vector<1x448x384xbf16>
    %89 = vector.shape_cast %88 : vector<1x448x384xbf16> to vector<448x384xbf16>
    %cst_83 = arith.constant dense<0.000000e+00> : vector<3x384xf32>
    %90 = tpu.matmul %87, %89, %cst_83 {dimension_numbers = #tpu.dot_dimension_numbers<[1], [0], [0], [1], [0, 0, 1, 1], [], []>} : vector<3x448xbf16>, vector<448x384xbf16>, vector<3x384xf32> -> vector<3x384xf32>
    %91 = arith.addf %83, %90 : vector<3x384xf32>
    %c2_84 = arith.constant 2 : index
    %c0_85 = arith.constant 0 : index
    %c0_86 = arith.constant 0 : index
    %92 = vector.load %arg8[%c2_84, %c0_85, %c0_86] : memref<4x3x7xbf16, #tpu.memory_space<vmem>>, vector<1x3x7xbf16>
    %93 = vector.shape_cast %92 : vector<1x3x7xbf16> to vector<3x7xbf16>
    %cst_87 = arith.constant dense<0.000000e+00> : vector<3x448xf32>
    %94 = tpu.matmul %93, %76, %cst_87 {dimension_numbers = #tpu.dot_dimension_numbers<[1], [0], [0], [1], [0, 0, 1, 1], [], []>} : vector<3x7xbf16>, vector<7x448xbf16>, vector<3x448xf32> -> vector<3x448xf32>
    %95 = arith.truncf %94 : vector<3x448xf32> to vector<3x448xbf16>
    %c2_88 = arith.constant 2 : index
    %c0_89 = arith.constant 0 : index
    %c0_90 = arith.constant 0 : index
    %96 = vector.load %arg9[%c2_88, %c0_89, %c0_90] : memref<4x448x384xbf16, #tpu.memory_space<vmem>>, vector<1x448x384xbf16>
    %97 = vector.shape_cast %96 : vector<1x448x384xbf16> to vector<448x384xbf16>
    %cst_91 = arith.constant dense<0.000000e+00> : vector<3x384xf32>
    %98 = tpu.matmul %95, %97, %cst_91 {dimension_numbers = #tpu.dot_dimension_numbers<[1], [0], [0], [1], [0, 0, 1, 1], [], []>} : vector<3x448xbf16>, vector<448x384xbf16>, vector<3x384xf32> -> vector<3x384xf32>
    %99 = arith.addf %91, %98 : vector<3x384xf32>
    %c3_92 = arith.constant 3 : index
    %c0_93 = arith.constant 0 : index
    %c0_94 = arith.constant 0 : index
    %100 = vector.load %arg8[%c3_92, %c0_93, %c0_94] : memref<4x3x7xbf16, #tpu.memory_space<vmem>>, vector<1x3x7xbf16>
    %101 = vector.shape_cast %100 : vector<1x3x7xbf16> to vector<3x7xbf16>
    %cst_95 = arith.constant dense<0.000000e+00> : vector<3x448xf32>
    %102 = tpu.matmul %101, %76, %cst_95 {dimension_numbers = #tpu.dot_dimension_numbers<[1], [0], [0], [1], [0, 0, 1, 1], [], []>} : vector<3x7xbf16>, vector<7x448xbf16>, vector<3x448xf32> -> vector<3x448xf32>
    %103 = arith.truncf %102 : vector<3x448xf32> to vector<3x448xbf16>
    %c3_96 = arith.constant 3 : index
    %c0_97 = arith.constant 0 : index
    %c0_98 = arith.constant 0 : index
    %104 = vector.load %arg9[%c3_96, %c0_97, %c0_98] : memref<4x448x384xbf16, #tpu.memory_space<vmem>>, vector<1x448x384xbf16>
    %105 = vector.shape_cast %104 : vector<1x448x384xbf16> to vector<448x384xbf16>
    %cst_99 = arith.constant dense<0.000000e+00> : vector<3x384xf32>
    %106 = tpu.matmul %103, %105, %cst_99 {dimension_numbers = #tpu.dot_dimension_numbers<[1], [0], [0], [1], [0, 0, 1, 1], [], []>} : vector<3x448xbf16>, vector<448x384xbf16>, vector<3x384xf32> -> vector<3x384xf32>
    %107 = arith.addf %99, %106 : vector<3x384xf32>
    %c0_100 = arith.constant 0 : index
    %c0_101 = arith.constant 0 : index
    %108 = vector.load %arg10[%c0_100, %c0_101] : memref<1x384xf32, #tpu.memory_space<vmem>>, vector<1x384xf32>
    %109 = vector.broadcast %108 : vector<1x384xf32> to vector<3x384xf32>
    %110 = arith.addf %107, %109 : vector<3x384xf32>
    %cst_102 = arith.constant 0.000000e+00 : f32
    %111 = vector.broadcast %cst_102 : f32 to vector<3x384xf32>
    %112 = arith.maximumf %110, %111 : vector<3x384xf32>
    %113 = arith.truncf %112 : vector<3x384xf32> to vector<3x384xbf16>
    %c0_103 = arith.constant 0 : index
    %c0_104 = arith.constant 0 : index
    %114 = vector.load %arg12[%c0_103, %c0_104] : memref<1x16xf32, #tpu.memory_space<vmem>>, vector<1x16xf32>
    %115 = vector.extract_strided_slice %113 {offsets = [0, 0], sizes = [1, 384], strides = [1, 1]} : vector<3x384xbf16> to vector<1x384xbf16>
    %c0_105 = arith.constant 0 : index
    %c0_106 = arith.constant 0 : index
    %c0_107 = arith.constant 0 : index
    %116 = vector.load %arg11[%c0_105, %c0_106, %c0_107] : memref<3x384x16xbf16, #tpu.memory_space<vmem>>, vector<1x384x16xbf16>
    %117 = vector.shape_cast %116 : vector<1x384x16xbf16> to vector<384x16xbf16>
    %cst_108 = arith.constant dense<0.000000e+00> : vector<1x16xf32>
    %118 = tpu.matmul %115, %117, %cst_108 {dimension_numbers = #tpu.dot_dimension_numbers<[1], [0], [0], [1], [0, 0, 1, 1], [], []>} : vector<1x384xbf16>, vector<384x16xbf16>, vector<1x16xf32> -> vector<1x16xf32>
    %119 = arith.addf %114, %118 : vector<1x16xf32>
    %120 = vector.extract_strided_slice %113 {offsets = [1, 0], sizes = [1, 384], strides = [1, 1]} : vector<3x384xbf16> to vector<1x384xbf16>
    %c1_109 = arith.constant 1 : index
    %c0_110 = arith.constant 0 : index
    %c0_111 = arith.constant 0 : index
    %121 = vector.load %arg11[%c1_109, %c0_110, %c0_111] : memref<3x384x16xbf16, #tpu.memory_space<vmem>>, vector<1x384x16xbf16>
    %122 = vector.shape_cast %121 : vector<1x384x16xbf16> to vector<384x16xbf16>
    %cst_112 = arith.constant dense<0.000000e+00> : vector<1x16xf32>
    %123 = tpu.matmul %120, %122, %cst_112 {dimension_numbers = #tpu.dot_dimension_numbers<[1], [0], [0], [1], [0, 0, 1, 1], [], []>} : vector<1x384xbf16>, vector<384x16xbf16>, vector<1x16xf32> -> vector<1x16xf32>
    %124 = arith.addf %119, %123 : vector<1x16xf32>
    %125 = vector.extract_strided_slice %113 {offsets = [2, 0], sizes = [1, 384], strides = [1, 1]} : vector<3x384xbf16> to vector<1x384xbf16>
    %c2_113 = arith.constant 2 : index
    %c0_114 = arith.constant 0 : index
    %c0_115 = arith.constant 0 : index
    %126 = vector.load %arg11[%c2_113, %c0_114, %c0_115] : memref<3x384x16xbf16, #tpu.memory_space<vmem>>, vector<1x384x16xbf16>
    %127 = vector.shape_cast %126 : vector<1x384x16xbf16> to vector<384x16xbf16>
    %cst_116 = arith.constant dense<0.000000e+00> : vector<1x16xf32>
    %128 = tpu.matmul %125, %127, %cst_116 {dimension_numbers = #tpu.dot_dimension_numbers<[1], [0], [0], [1], [0, 0, 1, 1], [], []>} : vector<1x384xbf16>, vector<384x16xbf16>, vector<1x16xf32> -> vector<1x16xf32>
    %129 = arith.addf %124, %128 : vector<1x16xf32>
    %130 = vector.extract_strided_slice %129 {offsets = [0, 0], sizes = [1, 8], strides = [1, 1]} : vector<1x16xf32> to vector<1x8xf32>
    %c0_117 = arith.constant 0 : index
    %c0_118 = arith.constant 0 : index
    %c0_119 = arith.constant 0 : index
    %131 = vector.load %arg13[%c0_117, %c0_118, %c0_119] : memref<1x1x8xf32, #tpu.memory_space<vmem>>, vector<1x1x8xf32>
    %132 = vector.shape_cast %131 : vector<1x1x8xf32> to vector<1x8xf32>
    %133 = vector.shape_cast %130 : vector<1x8xf32> to vector<1x1x8xf32>
    tpu.vector_store %arg13[%c0_117, %c0_118, %c0_119], %133 {strides = array<i32>} : memref<1x1x8xf32, #tpu.memory_space<vmem>>, vector<1x1x8xf32>,
    %134 = vector.extract_strided_slice %129 {offsets = [0, 8], sizes = [1, 8], strides = [1, 1]} : vector<1x16xf32> to vector<1x8xf32>
    %c0_120 = arith.constant 0 : index
    %c0_121 = arith.constant 0 : index
    %c0_122 = arith.constant 0 : index
    %135 = vector.load %arg14[%c0_120, %c0_121, %c0_122] : memref<1x1x8xf32, #tpu.memory_space<vmem>>, vector<1x1x8xf32>
    %136 = vector.shape_cast %135 : vector<1x1x8xf32> to vector<1x8xf32>
    %137 = vector.shape_cast %134 : vector<1x8xf32> to vector<1x1x8xf32>
    tpu.vector_store %arg14[%c0_120, %c0_121, %c0_122], %137 {strides = array<i32>} : memref<1x1x8xf32, #tpu.memory_space<vmem>>, vector<1x1x8xf32>,
    return
  }
  func.func @transform_0(%arg0: i32) -> (i32, i32, i32) {
    %c0_i32 = arith.constant 0 : i32
    %c0_i32_0 = arith.constant 0 : i32
    %c0_i32_1 = arith.constant 0 : i32
    return %arg0, %c0_i32, %c0_i32_0 : i32, i32, i32
  }
  func.func @transform_1(%arg0: i32) -> (i32, i32, i32) {
    %c0_i32 = arith.constant 0 : i32
    %c0_i32_0 = arith.constant 0 : i32
    %c0_i32_1 = arith.constant 0 : i32
    %c0_i32_2 = arith.constant 0 : i32
    return %c0_i32, %c0_i32_0, %c0_i32_1 : i32, i32, i32
  }
  func.func @transform_2(%arg0: i32) -> (i32, i32, i32) {
    %c0_i32 = arith.constant 0 : i32
    %c0_i32_0 = arith.constant 0 : i32
    %c0_i32_1 = arith.constant 0 : i32
    %c0_i32_2 = arith.constant 0 : i32
    return %c0_i32, %c0_i32_0, %c0_i32_1 : i32, i32, i32
  }
  func.func @transform_3(%arg0: i32) -> (i32, i32) {
    %c0_i32 = arith.constant 0 : i32
    %c0_i32_0 = arith.constant 0 : i32
    %c0_i32_1 = arith.constant 0 : i32
    return %c0_i32, %c0_i32_0 : i32, i32
  }
  func.func @transform_4(%arg0: i32) -> (i32, i32, i32) {
    %c0_i32 = arith.constant 0 : i32
    %c0_i32_0 = arith.constant 0 : i32
    %c0_i32_1 = arith.constant 0 : i32
    %c0_i32_2 = arith.constant 0 : i32
    return %c0_i32, %c0_i32_0, %c0_i32_1 : i32, i32, i32
  }
  func.func @transform_5(%arg0: i32) -> (i32, i32, i32) {
    %c0_i32 = arith.constant 0 : i32
    %c0_i32_0 = arith.constant 0 : i32
    %c0_i32_1 = arith.constant 0 : i32
    %c0_i32_2 = arith.constant 0 : i32
    return %c0_i32, %c0_i32_0, %c0_i32_1 : i32, i32, i32
  }
  func.func @transform_6(%arg0: i32) -> (i32, i32) {
    %c0_i32 = arith.constant 0 : i32
    %c0_i32_0 = arith.constant 0 : i32
    %c0_i32_1 = arith.constant 0 : i32
    return %c0_i32, %c0_i32_0 : i32, i32
  }
  func.func @transform_7(%arg0: i32) -> (i32, i32, i32) {
    %c0_i32 = arith.constant 0 : i32
    %c0_i32_0 = arith.constant 0 : i32
    %c0_i32_1 = arith.constant 0 : i32
    %c0_i32_2 = arith.constant 0 : i32
    return %c0_i32, %c0_i32_0, %c0_i32_1 : i32, i32, i32
  }
  func.func @transform_8(%arg0: i32) -> (i32, i32, i32) {
    %c0_i32 = arith.constant 0 : i32
    %c0_i32_0 = arith.constant 0 : i32
    %c0_i32_1 = arith.constant 0 : i32
    %c0_i32_2 = arith.constant 0 : i32
    return %c0_i32, %c0_i32_0, %c0_i32_1 : i32, i32, i32
  }
  func.func @transform_9(%arg0: i32) -> (i32, i32) {
    %c0_i32 = arith.constant 0 : i32
    %c0_i32_0 = arith.constant 0 : i32
    %c0_i32_1 = arith.constant 0 : i32
    return %c0_i32, %c0_i32_0 : i32, i32
  }
  func.func @transform_10(%arg0: i32) -> (i32, i32, i32) {
    %c0_i32 = arith.constant 0 : i32
    %c0_i32_0 = arith.constant 0 : i32
    %c0_i32_1 = arith.constant 0 : i32
    %c0_i32_2 = arith.constant 0 : i32
    return %c0_i32, %c0_i32_0, %c0_i32_1 : i32, i32, i32
  }
  func.func @transform_11(%arg0: i32) -> (i32, i32) {
    %c0_i32 = arith.constant 0 : i32
    %c0_i32_0 = arith.constant 0 : i32
    %c0_i32_1 = arith.constant 0 : i32
    return %c0_i32, %c0_i32_0 : i32, i32
  }
  func.func @transform_12(%arg0: i32) -> (i32, i32, i32) {
    %c0_i32 = arith.constant 0 : i32
    %c0_i32_0 = arith.constant 0 : i32
    %c0_i32_1 = arith.constant 0 : i32
    return %arg0, %c0_i32, %c0_i32_0 : i32, i32, i32
  }
  func.func @transform_13(%arg0: i32) -> (i32, i32, i32) {
    %c0_i32 = arith.constant 0 : i32
    %c0_i32_0 = arith.constant 0 : i32
    %c0_i32_1 = arith.constant 0 : i32
    return %arg0, %c0_i32, %c0_i32_0 : i32, i32, i32
  }
}

</mosaic_0001>

<llo_original>
// kernel: vae_encoder_forward.1
$region0: #{vae_encoder_forward.1}
  #allocation0 [shape = 'u32[]', space=smem, size = 0x4, offset = 0x4, fixed_abs, tag = 'smem constant byte address 0x4 - core index']
  #allocation1 [shape = 'u32[144,128]{1,0:T(1,128)}', space=vmem, size = 0x12000, scoped, tag = 'internal scratch']
  %s0 = inlined_call_operand.vmem [shape: f32[2,28,28], index: 0, kind: input, shape index: {}]
  %s1 = inlined_call_operand.vmem [shape: bf16[4,14,28], index: 1, kind: input, shape index: {}]
  %s2 = inlined_call_operand.vmem [shape: bf16[4,28,448], index: 2, kind: input, shape index: {}]
  %s3 = inlined_call_operand.hbm [shape: f32[1,448], index: 3, kind: input, shape index: {}]
  %s4 = inlined_call_operand.vmem [shape: bf16[4,7,14], index: 4, kind: input, shape index: {}]
  %s5 = inlined_call_operand.hbm [shape: bf16[4,448,448], index: 5, kind: input, shape index: {}]
  %s6 = inlined_call_operand.hbm [shape: f32[1,448], index: 6, kind: input, shape index: {}]
  %s7 = inlined_call_operand.vmem [shape: bf16[4,3,7], index: 7, kind: input, shape index: {}]
  %s8 = inlined_call_operand.hbm [shape: bf16[4,448,384], index: 8, kind: input, shape index: {}]
  %s9 = inlined_call_operand.hbm [shape: f32[1,384], index: 9, kind: input, shape index: {}]
  %s10 = inlined_call_operand.vmem [shape: bf16[3,384,16], index: 10, kind: input, shape index: {}]
  %s11 = inlined_call_operand.hbm [shape: f32[1,16], index: 11, kind: input, shape index: {}]
  %s12 = inlined_call_operand.hbm [shape: f32[2,1,8], index: 12, kind: output, shape index: {0}]
  %s13 = inlined_call_operand.hbm [shape: f32[2,1,8], index: 13, kind: output, shape index: {1}]
  %14 = xla_tuple %s12, %s13
  %s15 = sld [smem:[#allocation0]]
  $region113: #{vae_encoder_forward.1} parent=0
    _
  %s17 = ssub.s32 1, %s15
  %s18 = scalar_select 0, %s17, %s15
  $region1: #{vae_encoder_forward.1} parent=0
    #allocation2 [shape = 'u8[2048]{0}', space=vmem, size = 0x800, scoped, tag = 'input window, operand 3, single buffered']
    #allocation3 [shape = 's32[2]{0}', space=sflag, size = 0x8, scoped, tag = 'scoped memory for vae_encoder_forward.1']
    #allocation4 [shape = 's32[2]{0}', space=sflag, size = 0x8, scoped, tag = 'scoped memory for vae_encoder_forward.1']
    #allocation5 [shape = 'u8[1835008]{0}', space=vmem, size = 0x1c0000, scoped, tag = 'input window, operand 5, single buffered']
    #allocation6 [shape = 's32[1]{0}', space=sflag, size = 0x4, scoped, tag = 'scoped memory for vae_encoder_forward.1']
    #allocation7 [shape = 'u8[2048]{0}', space=vmem, size = 0x800, scoped, tag = 'input window, operand 6, single buffered']
    #allocation8 [shape = 'u8[1376256]{0}', space=vmem, size = 0x150000, scoped, tag = 'input window, operand 8, single buffered']
    #allocation9 [shape = 's32[1]{0}', space=sflag, size = 0x4, scoped, tag = 'scoped memory for vae_encoder_forward.1']
    #allocation10 [shape = 'u8[1536]{0}', space=vmem, size = 0x800, scoped, tag = 'input window, operand 9, single buffered']
    #allocation11 [shape = 'u8[512]{0}', space=vmem, size = 0x400, scoped, tag = 'input window, operand 11, single buffered']
    #allocation12 [shape = 's32[1]{0}', space=sflag, size = 0x4, scoped, tag = 'scoped memory for vae_encoder_forward.1']
    #allocation13 [shape = 'u8[1024]{0}', space=vmem, size = 0x400, scoped, tag = 'output window, operand 0']
    #allocation14 [shape = 'u8[1024]{0}', space=vmem, size = 0x400, scoped, tag = 'output window, operand 1']
    #allocation15 [shape = 's32[2]{0}', space=sflag, size = 0x8, scoped, tag = 'scoped memory for vae_encoder_forward.1']
    %19 = vsyncpa [#allocation3], 0
    %20 = vsyncpa [#allocation6], 0
    %21 = vsyncpa [#allocation9], 0
    %22 = vsyncpa [#allocation12], 0
    %23 = vsyncpa [#allocation4], 0
    %s24 = scalar_lea.sflag [#allocation4], 1
    %25 = vsyncpa %s24, 0
    %26 = vsyncpa [#allocation15], 0
    %s27 = scalar_lea.sflag [#allocation15], 1
    %28 = vsyncpa %s27, 0
    loop: start=0, step=1, limit=4
    $region2: #{vae_encoder_forward.1} parent=1 // loop_pre_header
      _
    $region3: #{vae_encoder_forward.1} parent=1 // loop_header
      %s30 = sphi 0, %s34
      %p31 = scmp.ge.s32.totalorder %s30, 4
      %s40 = sphi 0, %s42
      %s43 = sphi 0, %s40
      %s44 = sphi 0, %s43
      %s60 = sphi 0, %s44
      %s64 = sphi 0, %s64
      %s66 = sphi 0, %s64
      %s67 = sphi 0, %s66
      %s81 = sphi 0, %s67
      %s85 = sphi 0, %s85
      %s87 = sphi 0, %s85
      %s88 = sphi 0, %s87
      %s102 = sphi 0, %s88
      %s106 = sphi 0, %s106
      %s108 = sphi 0, %s106
      %s109 = sphi 0, %s108
      %s123 = sphi 0, %s109
      %s127 = sphi 0, %s127
      %s129 = sphi 0, %s127
      %s130 = sphi 0, %s129
      %s144 = sphi 0, %s130
      %s148 = sphi 0, %s148
      %s150 = sphi 0, %s148
      %s151 = sphi 0, %s150
      %s165 = sphi 0, %s151
      %s169 = sphi 0, %s169
      %s171 = sphi 0, %s169
      %s172 = sphi 0, %s171
      %s186 = sphi 0, %s172
      %s190 = sphi 0, %s190
      %s192 = sphi 0, %s190
      %s193 = sphi 0, %s192
      %s207 = sphi 0, %s193
      %s211 = sphi 0, %s211
      %s213 = sphi 0, %s211
      %s214 = sphi 0, %s213
      %s228 = sphi 0, %s214
      %s232 = sphi 0, %s232
      %s234 = sphi 0, %s232
      %s235 = sphi 0, %s234
      %s249 = sphi 0, %s235
      %s253 = sphi 0, %s253
      %s255 = sphi 0, %s253
      %s256 = sphi 0, %s255
      %s270 = sphi 0, %s256
      %s274 = sphi 0, %s274
      %s276 = sphi 0, %s274
      %s277 = sphi 0, %s276
      %s291 = sphi 0, %s277
      %s297 = sphi 0, %s299
      %s300 = sphi 0, %s297
      %s301 = sphi 0, %s300
      %s317 = sphi 0, %s301
      %s323 = sphi 0, %s325
      %s326 = sphi 0, %s323
      %s327 = sphi 0, %s326
      %s343 = sphi 0, %s327
    $region4: #{vae_encoder_forward.1} parent=1 // loop_header_branch
      %33 = sbr.rel (%p31) target = $region8
    $region5: #{vae_encoder_forward.1} parent=1 // loop_body
      %s35 = ssub.s32 %s30, 1
      %s36 = ssub.s32 %s30, 2
      %s37 = sadd.s32 %s30, 1
      %s38 = ssub.s32 %s30, %s37
      %p39 = scmp.eq.s32.totalorder %s38, 0
      %s41 = sadd.s32 %s40, 1
      %s42 = scalar_select %p39, %s40, %s41
      %p45 = pneg %p39
      %p46 = scmp.eq.s32.totalorder %s30, 1
      %p47 = por %p45, %p46
      %p48 = scmp.ne.s32.totalorder %s40, %s43
      %p49 = scmp.eq.s32.totalorder %s30, 0
      %p50 = por %p48, %p49
      %p51 = scmp.ne.s32.totalorder %s40, %s43
      %p52 = scmp.eq.s32.totalorder %s35, 1
      %p53 = por %p51, %p52
      %p54 = scmp.ne.s32.totalorder %s43, %s44
      %p55 = scmp.eq.s32.totalorder %s35, 0
      %p56 = por %p54, %p55
      %p57 = scmp.ne.s32.totalorder %s43, %s44
      %p58 = scmp.eq.s32.totalorder %s36, 1
      %p59 = por %p57, %p58
      %p61 = scmp.ne.s32.totalorder %s44, %s60
      %p62 = scmp.eq.s32.totalorder %s36, 0
      %p63 = por %p61, %p62
      %s65 = sadd.s32 %s64, 1
      %p68 = scmp.eq.s32.totalorder %s30, 1
      %p69 = scmp.ne.s32.totalorder %s64, %s66
      %p70 = scmp.eq.s32.totalorder %s30, 0
      %p71 = por %p69, %p70
      %p72 = scmp.ne.s32.totalorder %s64, %s66
      %p73 = scmp.eq.s32.totalorder %s35, 1
      %p74 = por %p72, %p73
      %p75 = scmp.ne.s32.totalorder %s66, %s67
      %p76 = scmp.eq.s32.totalorder %s35, 0
      %p77 = por %p75, %p76
      %p78 = scmp.ne.s32.totalorder %s66, %s67
      %p79 = scmp.eq.s32.totalorder %s36, 1
      %p80 = por %p78, %p79
      %p82 = scmp.ne.s32.totalorder %s67, %s81
      %p83 = scmp.eq.s32.totalorder %s36, 0
      %p84 = por %p82, %p83
      %s86 = sadd.s32 %s85, 1
      %p89 = scmp.eq.s32.totalorder %s30, 1
      %p90 = scmp.ne.s32.totalorder %s85, %s87
      %p91 = scmp.eq.s32.totalorder %s30, 0
      %p92 = por %p90, %p91
      %p93 = scmp.ne.s32.totalorder %s85, %s87
      %p94 = scmp.eq.s32.totalorder %s35, 1
      %p95 = por %p93, %p94
      %p96 = scmp.ne.s32.totalorder %s87, %s88
      %p97 = scmp.eq.s32.totalorder %s35, 0
      %p98 = por %p96, %p97
      %p99 = scmp.ne.s32.totalorder %s87, %s88
      %p100 = scmp.eq.s32.totalorder %s36, 1
      %p101 = por %p99, %p100
      %p103 = scmp.ne.s32.totalorder %s88, %s102
      %p104 = scmp.eq.s32.totalorder %s36, 0
      %p105 = por %p103, %p104
      %s107 = sadd.s32 %s106, 1
      %p110 = scmp.eq.s32.totalorder %s30, 1
      %p111 = scmp.ne.s32.totalorder %s106, %s108
      %p112 = scmp.eq.s32.totalorder %s30, 0
      %p113 = por %p111, %p112
      %p114 = scmp.ne.s32.totalorder %s106, %s108
      %p115 = scmp.eq.s32.totalorder %s35, 1
      %p116 = por %p114, %p115
      %p117 = scmp.ne.s32.totalorder %s108, %s109
      %p118 = scmp.eq.s32.totalorder %s35, 0
      %p119 = por %p117, %p118
      %p120 = scmp.ne.s32.totalorder %s108, %s109
      %p121 = scmp.eq.s32.totalorder %s36, 1
      %p122 = por %p120, %p121
      %p124 = scmp.ne.s32.totalorder %s109, %s123
      %p125 = scmp.eq.s32.totalorder %s36, 0
      %p126 = por %p124, %p125
      %s128 = sadd.s32 %s127, 1
      %p131 = scmp.eq.s32.totalorder %s30, 1
      %p132 = scmp.ne.s32.totalorder %s127, %s129
      %p133 = scmp.eq.s32.totalorder %s30, 0
      %p134 = por %p132, %p133
      %p135 = scmp.ne.s32.totalorder %s127, %s129
      %p136 = scmp.eq.s32.totalorder %s35, 1
      %p137 = por %p135, %p136
      %p138 = scmp.ne.s32.totalorder %s129, %s130
      %p139 = scmp.eq.s32.totalorder %s35, 0
      %p140 = por %p138, %p139
      %p141 = scmp.ne.s32.totalorder %s129, %s130
      %p142 = scmp.eq.s32.totalorder %s36, 1
      %p143 = por %p141, %p142
      %p145 = scmp.ne.s32.totalorder %s130, %s144
      %p146 = scmp.eq.s32.totalorder %s36, 0
      %p147 = por %p145, %p146
      %s149 = sadd.s32 %s148, 1
      %p152 = scmp.eq.s32.totalorder %s30, 1
      %p153 = scmp.ne.s32.totalorder %s148, %s150
      %p154 = scmp.eq.s32.totalorder %s30, 0
      %p155 = por %p153, %p154
      %p156 = scmp.ne.s32.totalorder %s148, %s150
      %p157 = scmp.eq.s32.totalorder %s35, 1
      %p158 = por %p156, %p157
      %p159 = scmp.ne.s32.totalorder %s150, %s151
      %p160 = scmp.eq.s32.totalorder %s35, 0
      %p161 = por %p159, %p160
      %p162 = scmp.ne.s32.totalorder %s150, %s151
      %p163 = scmp.eq.s32.totalorder %s36, 1
      %p164 = por %p162, %p163
      %p166 = scmp.ne.s32.totalorder %s151, %s165
      %p167 = scmp.eq.s32.totalorder %s36, 0
      %p168 = por %p166, %p167
      %s170 = sadd.s32 %s169, 1
      %p173 = scmp.eq.s32.totalorder %s30, 1
      %p174 = scmp.ne.s32.totalorder %s169, %s171
      %p175 = scmp.eq.s32.totalorder %s30, 0
      %p176 = por %p174, %p175
      %p177 = scmp.ne.s32.totalorder %s169, %s171
      %p178 = scmp.eq.s32.totalorder %s35, 1
      %p179 = por %p177, %p178
      %p180 = scmp.ne.s32.totalorder %s171, %s172
      %p181 = scmp.eq.s32.totalorder %s35, 0
      %p182 = por %p180, %p181
      %p183 = scmp.ne.s32.totalorder %s171, %s172
      %p184 = scmp.eq.s32.totalorder %s36, 1
      %p185 = por %p183, %p184
      %p187 = scmp.ne.s32.totalorder %s172, %s186
      %p188 = scmp.eq.s32.totalorder %s36, 0
      %p189 = por %p187, %p188
      %s191 = sadd.s32 %s190, 1
      %p194 = scmp.eq.s32.totalorder %s30, 1
      %p195 = scmp.ne.s32.totalorder %s190, %s192
      %p196 = scmp.eq.s32.totalorder %s30, 0
      %p197 = por %p195, %p196
      %p198 = scmp.ne.s32.totalorder %s190, %s192
      %p199 = scmp.eq.s32.totalorder %s35, 1
      %p200 = por %p198, %p199
      %p201 = scmp.ne.s32.totalorder %s192, %s193
      %p202 = scmp.eq.s32.totalorder %s35, 0
      %p203 = por %p201, %p202
      %p204 = scmp.ne.s32.totalorder %s192, %s193
      %p205 = scmp.eq.s32.totalorder %s36, 1
      %p206 = por %p204, %p205
      %p208 = scmp.ne.s32.totalorder %s193, %s207
      %p209 = scmp.eq.s32.totalorder %s36, 0
      %p210 = por %p208, %p209
      %s212 = sadd.s32 %s211, 1
      %p215 = scmp.eq.s32.totalorder %s30, 1
      %p216 = scmp.ne.s32.totalorder %s211, %s213
      %p217 = scmp.eq.s32.totalorder %s30, 0
      %p218 = por %p216, %p217
      %p219 = scmp.ne.s32.totalorder %s211, %s213
      %p220 = scmp.eq.s32.totalorder %s35, 1
      %p221 = por %p219, %p220
      %p222 = scmp.ne.s32.totalorder %s213, %s214
      %p223 = scmp.eq.s32.totalorder %s35, 0
      %p224 = por %p222, %p223
      %p225 = scmp.ne.s32.totalorder %s213, %s214
      %p226 = scmp.eq.s32.totalorder %s36, 1
      %p227 = por %p225, %p226
      %p229 = scmp.ne.s32.totalorder %s214, %s228
      %p230 = scmp.eq.s32.totalorder %s36, 0
      %p231 = por %p229, %p230
      %s233 = sadd.s32 %s232, 1
      %p236 = scmp.eq.s32.totalorder %s30, 1
      %p237 = scmp.ne.s32.totalorder %s232, %s234
      %p238 = scmp.eq.s32.totalorder %s30, 0
      %p239 = por %p237, %p238
      %p240 = scmp.ne.s32.totalorder %s232, %s234
      %p241 = scmp.eq.s32.totalorder %s35, 1
      %p242 = por %p240, %p241
      %p243 = scmp.ne.s32.totalorder %s234, %s235
      %p244 = scmp.eq.s32.totalorder %s35, 0
      %p245 = por %p243, %p244
      %p246 = scmp.ne.s32.totalorder %s234, %s235
      %p247 = scmp.eq.s32.totalorder %s36, 1
      %p248 = por %p246, %p247
      %p250 = scmp.ne.s32.totalorder %s235, %s249
      %p251 = scmp.eq.s32.totalorder %s36, 0
      %p252 = por %p250, %p251
      %s254 = sadd.s32 %s253, 1
      %p257 = scmp.eq.s32.totalorder %s30, 1
      %p258 = scmp.ne.s32.totalorder %s253, %s255
      %p259 = scmp.eq.s32.totalorder %s30, 0
      %p260 = por %p258, %p259
      %p261 = scmp.ne.s32.totalorder %s253, %s255
      %p262 = scmp.eq.s32.totalorder %s35, 1
      %p263 = por %p261, %p262
      %p264 = scmp.ne.s32.totalorder %s255, %s256
      %p265 = scmp.eq.s32.totalorder %s35, 0
      %p266 = por %p264, %p265
      %p267 = scmp.ne.s32.totalorder %s255, %s256
      %p268 = scmp.eq.s32.totalorder %s36, 1
      %p269 = por %p267, %p268
      %p271 = scmp.ne.s32.totalorder %s256, %s270
      %p272 = scmp.eq.s32.totalorder %s36, 0
      %p273 = por %p271, %p272
      %s275 = sadd.s32 %s274, 1
      %p278 = scmp.eq.s32.totalorder %s30, 1
      %p279 = scmp.ne.s32.totalorder %s274, %s276
      %p280 = scmp.eq.s32.totalorder %s30, 0
      %p281 = por %p279, %p280
      %p282 = scmp.ne.s32.totalorder %s274, %s276
      %p283 = scmp.eq.s32.totalorder %s35, 1
      %p284 = por %p282, %p283
      %p285 = scmp.ne.s32.totalorder %s276, %s277
      %p286 = scmp.eq.s32.totalorder %s35, 0
      %p287 = por %p285, %p286
      %p288 = scmp.ne.s32.totalorder %s276, %s277
      %p289 = scmp.eq.s32.totalorder %s36, 1
      %p290 = por %p288, %p289
      %p292 = scmp.ne.s32.totalorder %s277, %s291
      %p293 = scmp.eq.s32.totalorder %s36, 0
      %p294 = por %p292, %p293
      %s295 = ssub.s32 %s30, %s37
      %p296 = scmp.eq.s32.totalorder %s295, 0
      %s298 = sadd.s32 %s297, 1
      %s299 = scalar_select %p296, %s297, %s298
      %p302 = pneg %p296
      %p303 = scmp.eq.s32.totalorder %s30, 1
      %p304 = por %p302, %p303
      %p305 = scmp.ne.s32.totalorder %s297, %s300
      %p306 = scmp.eq.s32.totalorder %s30, 0
      %p307 = por %p305, %p306
      %p308 = scmp.ne.s32.totalorder %s297, %s300
      %p309 = scmp.eq.s32.totalorder %s35, 1
      %p310 = por %p308, %p309
      %p311 = scmp.ne.s32.totalorder %s300, %s301
      %p312 = scmp.eq.s32.totalorder %s35, 0
      %p313 = por %p311, %p312
      %p314 = scmp.ne.s32.totalorder %s300, %s301
      %p315 = scmp.eq.s32.totalorder %s36, 1
      %p316 = por %p314, %p315
      %p318 = scmp.ne.s32.totalorder %s301, %s317
      %p319 = scmp.eq.s32.totalorder %s36, 0
      %p320 = por %p318, %p319
      %s321 = ssub.s32 %s30, %s37
      %p322 = scmp.eq.s32.totalorder %s321, 0
      %s324 = sadd.s32 %s323, 1
      %s325 = scalar_select %p322, %s323, %s324
      %p328 = pneg %p322
      %p329 = scmp.eq.s32.totalorder %s30, 1
      %p330 = por %p328, %p329
      %p331 = scmp.ne.s32.totalorder %s323, %s326
      %p332 = scmp.eq.s32.totalorder %s30, 0
      %p333 = por %p331, %p332
      %p334 = scmp.ne.s32.totalorder %s323, %s326
      %p335 = scmp.eq.s32.totalorder %s35, 1
      %p336 = por %p334, %p335
      %p337 = scmp.ne.s32.totalorder %s326, %s327
      %p338 = scmp.eq.s32.totalorder %s35, 0
      %p339 = por %p337, %p338
      %p340 = scmp.ne.s32.totalorder %s326, %s327
      %p341 = scmp.eq.s32.totalorder %s36, 1
      %p342 = por %p340, %p341
      %p344 = scmp.ne.s32.totalorder %s327, %s343
      %p345 = scmp.eq.s32.totalorder %s36, 0
      %p346 = por %p344, %p345
      %p347 = scmp.le.s32.totalorder 1, %s30
      %p348 = scmp.lt.s32.totalorder %s30, 3
      %p349 = pnand %p347, %p348
      %p350 = pneg %p349
      // Predicated region
      $region9: #{vae_encoder_forward.1} parent=5 // pred_check
        _
      $region10: #{vae_encoder_forward.1} parent=5 // pred_check_branch
        %352 = sbr.rel (%p349) target = $region12
      $region11: #{vae_encoder_forward.1} parent=5 // pred_region
        %s353 = ssub.s32 %s30, 1
        // Predicated region
        $region13: #{vae_encoder_forward.1} parent=11 // pred_check
          %p354 = pneg %p77
        $region14: #{vae_encoder_forward.1} parent=11 // pred_check_branch
          %356 = sbr.rel (%p354) target = $region16
        $region15: #{vae_encoder_forward.1} parent=11 // pred_region
          _
        $region16: #{vae_encoder_forward.1} parent=11 // pred_fallthru
          _
        // Predicated region
        $region17: #{vae_encoder_forward.1} parent=11 // pred_check
          %p357 = pneg %p98
        $region18: #{vae_encoder_forward.1} parent=11 // pred_check_branch
          %359 = sbr.rel (%p357) target = $region20
        $region19: #{vae_encoder_forward.1} parent=11 // pred_region
          _
        $region20: #{vae_encoder_forward.1} parent=11 // pred_fallthru
          _
        // Predicated region
        $region21: #{vae_encoder_forward.1} parent=11 // pred_check
          %p360 = pneg %p119
        $region22: #{vae_encoder_forward.1} parent=11 // pred_check_branch
          %362 = sbr.rel (%p360) target = $region24
        $region23: #{vae_encoder_forward.1} parent=11 // pred_region
          %s364 = ssub.s32 64, 64
          %365 = vsyncadd [#allocation3], %s364
          %s367 = sshll.u32 [#allocation2], 4
          %s368 = int_to_ptr.vmem [resolvable:$true] %s367
          %370 = dma.hbm_to_vmem [thread:$0]  %s3, 64, %s368, [#allocation3]
        $region24: #{vae_encoder_forward.1} parent=11 // pred_fallthru
          _
        // Predicated region
        $region25: #{vae_encoder_forward.1} parent=11 // pred_check
          %p371 = pneg %p140
        $region26: #{vae_encoder_forward.1} parent=11 // pred_check_branch
          %373 = sbr.rel (%p371) target = $region28
        $region27: #{vae_encoder_forward.1} parent=11 // pred_region
          _
        $region28: #{vae_encoder_forward.1} parent=11 // pred_fallthru
          _
        // Predicated region
        $region29: #{vae_encoder_forward.1} parent=11 // pred_check
          %p374 = pneg %p161
        $region30: #{vae_encoder_forward.1} parent=11 // pred_check_branch
          %376 = sbr.rel (%p374) target = $region32
        $region31: #{vae_encoder_forward.1} parent=11 // pred_region
          %s378 = ssub.s32 57344, 57344
          %379 = vsyncadd [#allocation6], %s378
          %s380 = sshll.u32 [#allocation5], 4
          %s381 = int_to_ptr.vmem [resolvable:$true] %s380
          %386 = dma.hbm_to_vmem [thread:$0]  %s5, 57344, %s381, [#allocation6], 256, 256, 16
        $region32: #{vae_encoder_forward.1} parent=11 // pred_fallthru
          _
        // Predicated region
        $region33: #{vae_encoder_forward.1} parent=11 // pred_check
          %p387 = pneg %p182
        $region34: #{vae_encoder_forward.1} parent=11 // pred_check_branch
          %389 = sbr.rel (%p387) target = $region36
        $region35: #{vae_encoder_forward.1} parent=11 // pred_region
          %s391 = ssub.s32 64, 64
          %392 = vsyncadd [#allocation6], %s391
          %s394 = sshll.u32 [#allocation7], 4
          %s395 = int_to_ptr.vmem [resolvable:$true] %s394
          %397 = dma.hbm_to_vmem [thread:$0]  %s6, 64, %s395, [#allocation6]
        $region36: #{vae_encoder_forward.1} parent=11 // pred_fallthru
          _
        // Predicated region
        $region37: #{vae_encoder_forward.1} parent=11 // pred_check
          %p398 = pneg %p203
        $region38: #{vae_encoder_forward.1} parent=11 // pred_check_branch
          %400 = sbr.rel (%p398) target = $region40
        $region39: #{vae_encoder_forward.1} parent=11 // pred_region
          _
        $region40: #{vae_encoder_forward.1} parent=11 // pred_fallthru
          _
        // Predicated region
        $region41: #{vae_encoder_forward.1} parent=11 // pred_check
          %p401 = pneg %p224
        $region42: #{vae_encoder_forward.1} parent=11 // pred_check_branch
          %403 = sbr.rel (%p401) target = $region44
        $region43: #{vae_encoder_forward.1} parent=11 // pred_region
          %s405 = ssub.s32 43008, 43008
          %406 = vsyncadd [#allocation9], %s405
          %s407 = sshll.u32 [#allocation8], 4
          %s408 = int_to_ptr.vmem [resolvable:$true] %s407
          %413 = dma.hbm_to_vmem [thread:$0]  %s8, 43008, %s408, [#allocation9], 192, 192, 12
        $region44: #{vae_encoder_forward.1} parent=11 // pred_fallthru
          _
        // Predicated region
        $region45: #{vae_encoder_forward.1} parent=11 // pred_check
          %p414 = pneg %p245
        $region46: #{vae_encoder_forward.1} parent=11 // pred_check_branch
          %416 = sbr.rel (%p414) target = $region48
        $region47: #{vae_encoder_forward.1} parent=11 // pred_region
          %s418 = ssub.s32 48, 48
          %419 = vsyncadd [#allocation9], %s418
          %s421 = sshll.u32 [#allocation10], 4
          %s422 = int_to_ptr.vmem [resolvable:$true] %s421
          %424 = dma.hbm_to_vmem [thread:$0]  %s9, 48, %s422, [#allocation9]
        $region48: #{vae_encoder_forward.1} parent=11 // pred_fallthru
          _
        // Predicated region
        $region49: #{vae_encoder_forward.1} parent=11 // pred_check
          %p425 = pneg %p266
        $region50: #{vae_encoder_forward.1} parent=11 // pred_check_branch
          %427 = sbr.rel (%p425) target = $region52
        $region51: #{vae_encoder_forward.1} parent=11 // pred_region
          _
        $region52: #{vae_encoder_forward.1} parent=11 // pred_fallthru
          _
        // Predicated region
        $region53: #{vae_encoder_forward.1} parent=11 // pred_check
          %p428 = pneg %p287
        $region54: #{vae_encoder_forward.1} parent=11 // pred_check_branch
          %430 = sbr.rel (%p428) target = $region56
        $region55: #{vae_encoder_forward.1} parent=11 // pred_region
          %s432 = ssub.s32 16, 16
          %433 = vsyncadd [#allocation12], %s432
          %s435 = sshll.u32 [#allocation11], 4
          %s436 = int_to_ptr.vmem [resolvable:$true] %s435
          %438 = dma.hbm_to_vmem [thread:$0]  %s11, 16, %s436, [#allocation12]
        $region56: #{vae_encoder_forward.1} parent=11 // pred_fallthru
          _
      $region12: #{vae_encoder_forward.1} parent=5 // pred_fallthru
        _
      %p439 = scmp.lt.s32.totalorder %s30, 2
      // Predicated region
      $region57: #{vae_encoder_forward.1} parent=5 // pred_check
        %p440 = pneg %p439
      $region58: #{vae_encoder_forward.1} parent=5 // pred_check_branch
        %442 = sbr.rel (%p440) target = $region60
      $region59: #{vae_encoder_forward.1} parent=5 // pred_region
        // Predicated region
        $region61: #{vae_encoder_forward.1} parent=59 // pred_check
          %p443 = pneg %p50
        $region62: #{vae_encoder_forward.1} parent=59 // pred_check_branch
          %445 = sbr.rel (%p443) target = $region64
        $region63: #{vae_encoder_forward.1} parent=59 // pred_region
          %p446 = scmp.lt.s32.totalorder %s30, 1
          %s447 = scalar_select %p446, %s30, 1
          %s448 = smul.addr %s447, 4
          %s449 = smul.addr %s448, 8
          %s450 = scalar_lea.vmem %s0, %s449
        $region64: #{vae_encoder_forward.1} parent=59 // pred_fallthru
          _
      $region60: #{vae_encoder_forward.1} parent=5 // pred_fallthru
        _
      %p451 = scmp.le.s32.totalorder 1, %s30
      %p452 = scmp.lt.s32.totalorder %s30, 3
      %p453 = pnand %p451, %p452
      %p454 = pneg %p453
      // Predicated region
      $region65: #{vae_encoder_forward.1} parent=5 // pred_check
        _
      $region66: #{vae_encoder_forward.1} parent=5 // pred_check_branch
        %456 = sbr.rel (%p453) target = $region68
      $region67: #{vae_encoder_forward.1} parent=5 // pred_region
        %s457 = ssub.s32 %s30, 1
        // Predicated region
        $region69: #{vae_encoder_forward.1} parent=67 // pred_check
          %p458 = pneg %p119
        $region70: #{vae_encoder_forward.1} parent=67 // pred_check_branch
          %460 = sbr.rel (%p458) target = $region72
        $region71: #{vae_encoder_forward.1} parent=67 // pred_region
          %461 = dma.done [#allocation3], 64
        $region72: #{vae_encoder_forward.1} parent=67 // pred_fallthru
          _
        // Predicated region
        $region73: #{vae_encoder_forward.1} parent=67 // pred_check
          %p462 = pneg %p161
        $region74: #{vae_encoder_forward.1} parent=67 // pred_check_branch
          %464 = sbr.rel (%p462) target = $region76
        $region75: #{vae_encoder_forward.1} parent=67 // pred_region
          %465 = dma.done [#allocation6], 57344
        $region76: #{vae_encoder_forward.1} parent=67 // pred_fallthru
          _
        // Predicated region
        $region77: #{vae_encoder_forward.1} parent=67 // pred_check
          %p466 = pneg %p182
        $region78: #{vae_encoder_forward.1} parent=67 // pred_check_branch
          %468 = sbr.rel (%p466) target = $region80
        $region79: #{vae_encoder_forward.1} parent=67 // pred_region
          %469 = dma.done [#allocation6], 64
        $region80: #{vae_encoder_forward.1} parent=67 // pred_fallthru
          _
        // Predicated region
        $region81: #{vae_encoder_forward.1} parent=67 // pred_check
          %p470 = pneg %p224
        $region82: #{vae_encoder_forward.1} parent=67 // pred_check_branch
          %472 = sbr.rel (%p470) target = $region84
        $region83: #{vae_encoder_forward.1} parent=67 // pred_region
          %473 = dma.done [#allocation9], 43008
        $region84: #{vae_encoder_forward.1} parent=67 // pred_fallthru
          _
        // Predicated region
        $region85: #{vae_encoder_forward.1} parent=67 // pred_check
          %p474 = pneg %p245
        $region86: #{vae_encoder_forward.1} parent=67 // pred_check_branch
          %476 = sbr.rel (%p474) target = $region88
        $region87: #{vae_encoder_forward.1} parent=67 // pred_region
          %477 = dma.done [#allocation9], 48
        $region88: #{vae_encoder_forward.1} parent=67 // pred_fallthru
          _
        // Predicated region
        $region89: #{vae_encoder_forward.1} parent=67 // pred_check
          %p478 = pneg %p287
        $region90: #{vae_encoder_forward.1} parent=67 // pred_check_branch
          %480 = sbr.rel (%p478) target = $region92
        $region91: #{vae_encoder_forward.1} parent=67 // pred_region
          %481 = dma.done [#allocation12], 16
        $region92: #{vae_encoder_forward.1} parent=67 // pred_fallthru
          _
        %p482 = scmp.lt.s32.totalorder %s35, 1
        %s483 = scalar_select %p482, %s35, 1
        %s484 = smul.addr %s483, 4
        %s485 = smul.addr %s484, 8
        %s486 = scalar_lea.vmem %s0, %s485
        %p487 = pneg %p56
        %p488 = pneg %p53
        %p489 = pneg %p77
        %p490 = pneg %p74
        %p491 = pneg %p98
        %p492 = pneg %p95
        %p493 = pneg %p119
        %p494 = pneg %p116
        %p495 = pneg %p140
        %p496 = pneg %p137
        %p497 = pneg %p161
        %p498 = pneg %p158
        %p499 = pneg %p182
        %p500 = pneg %p179
        %p501 = pneg %p203
        %p502 = pneg %p200
        %p503 = pneg %p224
        %p504 = pneg %p221
        %p505 = pneg %p245
        %p506 = pneg %p242
        %p507 = pneg %p266
        %p508 = pneg %p263
        %p509 = pneg %p287
        %p510 = pneg %p284
        %p511 = pneg %p313
        %p512 = pneg %p310
        %s513 = sand.u32 %s300, 1
        %s514 = scalar_lea.sflag [#allocation4], %s513
        %s515 = sand.u32 %s300, 1
        %s516 = scalar_lea.vmem [#allocation13], %s515
        %p517 = pneg %p339
        %p518 = pneg %p336
        %s519 = sand.u32 %s326, 1
        %s520 = scalar_lea.sflag [#allocation15], %s519
        %s521 = sand.u32 %s326, 1
        %s522 = scalar_lea.vmem [#allocation14], %s521
        %p523 = scmp.lt.s32.totalorder %s35, 1
        %s524 = scalar_select %p523, %s35, 1
        %s525 = smul.addr %s524, 4
        %s526 = smul.addr %s525, 8
        %s527 = scalar_lea.vmem %s0, %s526
        %v529 = vld [vmem:[%s527] sm:$0xff]
        %v530 = vld [vmem:[%s527 + $0x8] sm:$0xff]
        %v531 = vld [vmem:[%s527 + $0x10] sm:$0xff]
        %v532 = vld [vmem:[%s527 + $0x18] sm:$0xf]
        %v533 = vpack.c.bf16 %v530, %v529
        %v534 = vpack.c.bf16 %v532, %v531
        %v535 = vld [vmem:[%s1] sm:$0xf]
        %v536 = vld [vmem:[%s1 + $0x4] sm:$0x7]
        %v539 = vunpack.c.l.b16 %v535
        %v540 = vunpack.c.l.b16 %v536
        %v541 = vpack.c.b16 %v540, %v539
        %vm542 = vcmask 228352
        %v544 = vsel %vm542, %v541, 0
        %vm546 = vcmask 1045504
        %v548 = vsel %vm546, %v534, 0
        %550 = vmatprep.subr.bf16.mxu0 0
        %551 = vmatpush1.bf16.msra.mxu0 %v533
        %552 = vmatprep.subr.bf16.mxu0 0
        %553 = vmatpush1.bf16.msra.mxu0 %v548
        %554 = vmatprep.subr.bf16.mxu0 0
        %555 = vmatpush1.bf16.msra.mxu0 0
        %556 = vmatprep.subr.bf16.mxu0 0
        %557 = vmatpush1.bf16.msra.mxu0 0
        %558 = vmatprep.subr.bf16.mxu0 0
        %559 = vmatpush1.bf16.msra.mxu0 0
        %560 = vmatprep.subr.bf16.mxu0 0
        %561 = vmatpush1.bf16.msra.mxu0 0
        %562 = vmatprep.subr.bf16.mxu0 0
        %563 = vmatpush1.bf16.msra.mxu0 0
        %564 = vmatprep.subr.bf16.mxu0 0
        %565 = vmatpush1.bf16.msra.mxu0 0
        %566 = vmatprep.subr.bf16.mxu0 0
        %567 = vmatpush1.bf16.msra.mxu0 0
        %568 = vmatprep.subr.bf16.mxu0 0
        %569 = vmatpush1.bf16.msra.mxu0 0
        %570 = vmatprep.subr.bf16.mxu0 0
        %571 = vmatpush1.bf16.msra.mxu0 0
        %572 = vmatprep.subr.bf16.mxu0 0
        %573 = vmatpush1.bf16.msra.mxu0 0
        %574 = vmatprep.subr.bf16.mxu0 0
        %575 = vmatpush1.bf16.msra.mxu0 0
        %576 = vmatprep.subr.bf16.mxu0 0
        %577 = vmatpush1.bf16.msra.mxu0 0
        %578 = vmatprep.subr.bf16.mxu0 0
        %579 = vmatpush1.bf16.msra.mxu0 0
        %580 = vmatprep.subr.bf16.mxu0 0
        %581 = vmatpush1.bf16.msra.mxu0 0
        %582 = vmatprep.mubr.bf16.mxu0 0
        %583 = vmatmul.mubr.bf16.gmra.mrb[0].mxu0 %v544
        %v584 = vpop.f32.mrb[0].mxu0
        %v585 = vadd.f32 0.0, %v584
        %v586 = vpop.f32.mrb[0].mxu0
        %v587 = vpop.f32.mrb[0].mxu0
        %v588 = vadd.f32 0.0, %v587
        %v589 = vpop.f32.mrb[0].mxu0
        %590 = vdwg.mxu0
        %v591 = vpack.c.bf16 %v588, %v585
        %v592 = vld [vmem:[%s2] sm:$0xff]
        %v593 = vld [vmem:[%s2 + $0x8] sm:$0xff]
        %v594 = vld [vmem:[%s2 + $0x10] sm:$0xff]
        %v595 = vld [vmem:[%s2 + $0x18] sm:$0xff]
        %v596 = vld [vmem:[%s2 + $0x20] sm:$0xff]
        %v597 = vld [vmem:[%s2 + $0x28] sm:$0xff]
        %v598 = vld [vmem:[%s2 + $0x30] sm:$0x33]
        %v599 = vld [vmem:[%s2 + $0x38] sm:$0x33]
        %s600 = scalar_lea.vmem %s1, 8
        %v601 = vld [vmem:[%s600] sm:$0xf]
        %v602 = vld [vmem:[%s600 + $0x4] sm:$0x7]
        %v605 = vunpack.c.l.b16 %v601
        %v606 = vunpack.c.l.b16 %v602
        %v607 = vpack.c.b16 %v606, %v605
        %v609 = vsel %vm542, %v607, 0
        %611 = vmatprep.subr.bf16.mxu0 0
        %612 = vmatpush1.bf16.msra.mxu0 %v533
        %613 = vmatprep.subr.bf16.mxu0 0
        %614 = vmatpush1.bf16.msra.mxu0 %v548
        %615 = vmatprep.subr.bf16.mxu0 0
        %616 = vmatpush1.bf16.msra.mxu0 0
        %617 = vmatprep.subr.bf16.mxu0 0
        %618 = vmatpush1.bf16.msra.mxu0 0
        %619 = vmatprep.subr.bf16.mxu0 0
        %620 = vmatpush1.bf16.msra.mxu0 0
        %621 = vmatprep.subr.bf16.mxu0 0
        %622 = vmatpush1.bf16.msra.mxu0 0
        %623 = vmatprep.subr.bf16.mxu0 0
        %624 = vmatpush1.bf16.msra.mxu0 0
        %625 = vmatprep.subr.bf16.mxu0 0
        %626 = vmatpush1.bf16.msra.mxu0 0
        %627 = vmatprep.subr.bf16.mxu0 0
        %628 = vmatpush1.bf16.msra.mxu0 0
        %629 = vmatprep.subr.bf16.mxu0 0
        %630 = vmatpush1.bf16.msra.mxu0 0
        %631 = vmatprep.subr.bf16.mxu0 0
        %632 = vmatpush1.bf16.msra.mxu0 0
        %633 = vmatprep.subr.bf16.mxu0 0
        %634 = vmatpush1.bf16.msra.mxu0 0
        %635 = vmatprep.subr.bf16.mxu0 0
        %636 = vmatpush1.bf16.msra.mxu0 0
        %637 = vmatprep.subr.bf16.mxu0 0
        %638 = vmatpush1.bf16.msra.mxu0 0
        %639 = vmatprep.subr.bf16.mxu0 0
        %640 = vmatpush1.bf16.msra.mxu0 0
        %641 = vmatprep.subr.bf16.mxu0 0
        %642 = vmatpush1.bf16.msra.mxu0 0
        %643 = vmatprep.mubr.bf16.mxu0 0
        %644 = vmatmul.mubr.bf16.gmra.mrb[0].mxu0 %v609
        %v645 = vpop.f32.mrb[0].mxu0
        %v646 = vadd.f32 0.0, %v645
        %v647 = vpop.f32.mrb[0].mxu0
        %v648 = vpop.f32.mrb[0].mxu0
        %v649 = vadd.f32 0.0, %v648
        %v650 = vpop.f32.mrb[0].mxu0
        %651 = vdwg.mxu0
        %v652 = vpack.c.bf16 %v649, %v646
        %s653 = scalar_lea.vmem %s2, 64
        %v654 = vld [vmem:[%s653] sm:$0xff]
        %v655 = vld [vmem:[%s653 + $0x8] sm:$0xff]
        %v656 = vld [vmem:[%s653 + $0x10] sm:$0xff]
        %v657 = vld [vmem:[%s653 + $0x18] sm:$0xff]
        %v658 = vld [vmem:[%s653 + $0x20] sm:$0xff]
        %v659 = vld [vmem:[%s653 + $0x28] sm:$0xff]
        %v660 = vld [vmem:[%s653 + $0x30] sm:$0x33]
        %v661 = vld [vmem:[%s653 + $0x38] sm:$0x33]
        %v670 = vunpack.c.l.b16 %v654
        %v671 = vunpack.c.h.b16 %v654
        %v672 = vunpack.c.l.b16 %v655
        %v673 = vunpack.c.h.b16 %v655
        %v674 = vunpack.c.l.b16 %v656
        %v675 = vunpack.c.h.b16 %v656
        %v676 = vunpack.c.l.b16 %v657
        %v677 = vunpack.c.h.b16 %v657
        %v678 = vunpack.c.l.b16 %v658
        %v679 = vunpack.c.h.b16 %v658
        %v680 = vunpack.c.l.b16 %v659
        %v681 = vunpack.c.h.b16 %v659
        %v682 = vunpack.c.l.b16 %v660
        %v683 = vunpack.c.h.b16 %v660
        %v684 = vunpack.c.l.b16 %v661
        %v685 = vunpack.c.h.b16 %v661
        %v686 = vpack.c.b16 %v674, %v670
        %v687 = vpack.c.b16 %v675, %v671
        %v688 = vpack.c.b16 %v676, %v672
        %v689 = vpack.c.b16 %v677, %v673
        %v690 = vpack.c.b16 %v682, %v678
        %v691 = vpack.c.b16 %v683, %v679
        %v692 = vpack.c.b16 %v684, %v680
        %v693 = vpack.c.b16 %v685, %v681
        %v699 = vsel %vm542, %v652, 0
        %v702 = vsel %vm546, %v690, 0
        %v705 = vsel %vm546, %v691, 0
        %v708 = vsel %vm546, %v692, 0
        %v711 = vsel %vm546, %v693, 0
        %713 = vmatprep.subr.bf16.mxu0 %v687
        %714 = vmatpush1.bf16.msra.mxu0 %v686
        %715 = vmatprep.subr.bf16.mxu0 %v705
        %716 = vmatpush1.bf16.msra.mxu0 %v702
        %717 = vmatprep.subr.bf16.mxu0 0
        %718 = vmatpush1.bf16.msra.mxu0 0
        %719 = vmatprep.subr.bf16.mxu0 0
        %720 = vmatpush1.bf16.msra.mxu0 0
        %721 = vmatprep.subr.bf16.mxu0 0
        %722 = vmatpush1.bf16.msra.mxu0 0
        %723 = vmatprep.subr.bf16.mxu0 0
        %724 = vmatpush1.bf16.msra.mxu0 0
        %725 = vmatprep.subr.bf16.mxu0 0
        %726 = vmatpush1.bf16.msra.mxu0 0
        %727 = vmatprep.subr.bf16.mxu0 0
        %728 = vmatpush1.bf16.msra.mxu0 0
        %729 = vmatprep.subr.bf16.mxu0 0
        %730 = vmatpush1.bf16.msra.mxu0 0
        %731 = vmatprep.subr.bf16.mxu0 0
        %732 = vmatpush1.bf16.msra.mxu0 0
        %733 = vmatprep.subr.bf16.mxu0 0
        %734 = vmatpush1.bf16.msra.mxu0 0
        %735 = vmatprep.subr.bf16.mxu0 0
        %736 = vmatpush1.bf16.msra.mxu0 0
        %737 = vmatprep.subr.bf16.mxu0 0
        %738 = vmatpush1.bf16.msra.mxu0 0
        %739 = vmatprep.subr.bf16.mxu0 0
        %740 = vmatpush1.bf16.msra.mxu0 0
        %741 = vmatprep.subr.bf16.mxu0 0
        %742 = vmatpush1.bf16.msra.mxu0 0
        %743 = vmatprep.subr.bf16.mxu0 0
        %744 = vmatpush1.bf16.msra.mxu0 0
        %745 = vmatprep.mubr.bf16.mxu0 0
        %746 = vmatmul.mubr.bf16.gmra.mrb[0].mxu0 %v699
        %v747 = vpop.f32.mrb[0].mxu0
        %v748 = vadd.f32 0.0, %v747
        %v749 = vpop.f32.mrb[0].mxu0
        %v750 = vadd.f32 0.0, %v749
        %v751 = vpop.f32.mrb[0].mxu0
        %v752 = vadd.f32 0.0, %v751
        %v753 = vpop.f32.mrb[0].mxu0
        %v754 = vadd.f32 0.0, %v753
        %755 = vdwg.mxu0
        %756 = vmatprep.subr.bf16.mxu0 %v689
        %757 = vmatpush1.bf16.msra.mxu0 %v688
        %758 = vmatprep.subr.bf16.mxu0 %v711
        %759 = vmatpush1.bf16.msra.mxu0 %v708
        %760 = vmatprep.subr.bf16.mxu0 0
        %761 = vmatpush1.bf16.msra.mxu0 0
        %762 = vmatprep.subr.bf16.mxu0 0
        %763 = vmatpush1.bf16.msra.mxu0 0
        %764 = vmatprep.subr.bf16.mxu0 0
        %765 = vmatpush1.bf16.msra.mxu0 0
        %766 = vmatprep.subr.bf16.mxu0 0
        %767 = vmatpush1.bf16.msra.mxu0 0
        %768 = vmatprep.subr.bf16.mxu0 0
        %769 = vmatpush1.bf16.msra.mxu0 0
        %770 = vmatprep.subr.bf16.mxu0 0
        %771 = vmatpush1.bf16.msra.mxu0 0
        %772 = vmatprep.subr.bf16.mxu0 0
        %773 = vmatpush1.bf16.msra.mxu0 0
        %774 = vmatprep.subr.bf16.mxu0 0
        %775 = vmatpush1.bf16.msra.mxu0 0
        %776 = vmatprep.subr.bf16.mxu0 0
        %777 = vmatpush1.bf16.msra.mxu0 0
        %778 = vmatprep.subr.bf16.mxu0 0
        %779 = vmatpush1.bf16.msra.mxu0 0
        %780 = vmatprep.subr.bf16.mxu0 0
        %781 = vmatpush1.bf16.msra.mxu0 0
        %782 = vmatprep.subr.bf16.mxu0 0
        %783 = vmatpush1.bf16.msra.mxu0 0
        %784 = vmatprep.subr.bf16.mxu0 0
        %785 = vmatpush1.bf16.msra.mxu0 0
        %786 = vmatprep.subr.bf16.mxu0 0
        %787 = vmatpush1.bf16.msra.mxu0 0
        %788 = vmatprep.mubr.bf16.mxu0 0
        %789 = vmatmul.mubr.bf16.gmra.mrb[0].mxu0 %v699
        %v790 = vpop.f32.mrb[0].mxu0
        %v791 = vadd.f32 0.0, %v790
        %v792 = vpop.f32.mrb[0].mxu0
        %v793 = vadd.f32 0.0, %v792
        %v794 = vpop.f32.mrb[0].mxu0
        %v795 = vadd.f32 0.0, %v794
        %v796 = vpop.f32.mrb[0].mxu0
        %v797 = vadd.f32 0.0, %v796
        %798 = vdwg.mxu0
        %v807 = vunpack.c.l.b16 %v592
        %v808 = vunpack.c.h.b16 %v592
        %v809 = vunpack.c.l.b16 %v593
        %v810 = vunpack.c.h.b16 %v593
        %v811 = vunpack.c.l.b16 %v594
        %v812 = vunpack.c.h.b16 %v594
        %v813 = vunpack.c.l.b16 %v595
        %v814 = vunpack.c.h.b16 %v595
        %v815 = vunpack.c.l.b16 %v596
        %v816 = vunpack.c.h.b16 %v596
        %v817 = vunpack.c.l.b16 %v597
        %v818 = vunpack.c.h.b16 %v597
        %v819 = vunpack.c.l.b16 %v598
        %v820 = vunpack.c.h.b16 %v598
        %v821 = vunpack.c.l.b16 %v599
        %v822 = vunpack.c.h.b16 %v599
        %v823 = vpack.c.b16 %v811, %v807
        %v824 = vpack.c.b16 %v812, %v808
        %v825 = vpack.c.b16 %v813, %v809
        %v826 = vpack.c.b16 %v814, %v810
        %v827 = vpack.c.b16 %v819, %v815
        %v828 = vpack.c.b16 %v820, %v816
        %v829 = vpack.c.b16 %v821, %v817
        %v830 = vpack.c.b16 %v822, %v818
        %v836 = vsel %vm542, %v591, 0
        %v839 = vsel %vm546, %v827, 0
        %v842 = vsel %vm546, %v828, 0
        %v845 = vsel %vm546, %v829, 0
        %v848 = vsel %vm546, %v830, 0
        %850 = vmatprep.subr.bf16.mxu0 %v824
        %851 = vmatpush1.bf16.msra.mxu0 %v823
        %852 = vmatprep.subr.bf16.mxu0 %v842
        %853 = vmatpush1.bf16.msra.mxu0 %v839
        %854 = vmatprep.subr.bf16.mxu0 0
        %855 = vmatpush1.bf16.msra.mxu0 0
        %856 = vmatprep.subr.bf16.mxu0 0
        %857 = vmatpush1.bf16.msra.mxu0 0
        %858 = vmatprep.subr.bf16.mxu0 0
        %859 = vmatpush1.bf16.msra.mxu0 0
        %860 = vmatprep.subr.bf16.mxu0 0
        %861 = vmatpush1.bf16.msra.mxu0 0
        %862 = vmatprep.subr.bf16.mxu0 0
        %863 = vmatpush1.bf16.msra.mxu0 0
        %864 = vmatprep.subr.bf16.mxu0 0
        %865 = vmatpush1.bf16.msra.mxu0 0
        %866 = vmatprep.subr.bf16.mxu0 0
        %867 = vmatpush1.bf16.msra.mxu0 0
        %868 = vmatprep.subr.bf16.mxu0 0
        %869 = vmatpush1.bf16.msra.mxu0 0
        %870 = vmatprep.subr.bf16.mxu0 0
        %871 = vmatpush1.bf16.msra.mxu0 0
        %872 = vmatprep.subr.bf16.mxu0 0
        %873 = vmatpush1.bf16.msra.mxu0 0
        %874 = vmatprep.subr.bf16.mxu0 0
        %875 = vmatpush1.bf16.msra.mxu0 0
        %876 = vmatprep.subr.bf16.mxu0 0
        %877 = vmatpush1.bf16.msra.mxu0 0
        %878 = vmatprep.subr.bf16.mxu0 0
        %879 = vmatpush1.bf16.msra.mxu0 0
        %880 = vmatprep.subr.bf16.mxu0 0
        %881 = vmatpush1.bf16.msra.mxu0 0
        %882 = vmatprep.mubr.bf16.mxu0 0
        %883 = vmatmul.mubr.bf16.gmra.mrb[0].mxu0 %v836
        %v884 = vpop.f32.mrb[0].mxu0
        %v885 = vadd.f32 %v748, %v884
        %v886 = vpop.f32.mrb[0].mxu0
        %v887 = vadd.f32 %v750, %v886
        %v888 = vpop.f32.mrb[0].mxu0
        %v889 = vadd.f32 %v752, %v888
        %v890 = vpop.f32.mrb[0].mxu0
        %v891 = vadd.f32 %v754, %v890
        %892 = vdwg.mxu0
        %893 = vmatprep.subr.bf16.mxu0 %v826
        %894 = vmatpush1.bf16.msra.mxu0 %v825
        %895 = vmatprep.subr.bf16.mxu0 %v848
        %896 = vmatpush1.bf16.msra.mxu0 %v845
        %897 = vmatprep.subr.bf16.mxu0 0
        %898 = vmatpush1.bf16.msra.mxu0 0
        %899 = vmatprep.subr.bf16.mxu0 0
        %900 = vmatpush1.bf16.msra.mxu0 0
        %901 = vmatprep.subr.bf16.mxu0 0
        %902 = vmatpush1.bf16.msra.mxu0 0
        %903 = vmatprep.subr.bf16.mxu0 0
        %904 = vmatpush1.bf16.msra.mxu0 0
        %905 = vmatprep.subr.bf16.mxu0 0
        %906 = vmatpush1.bf16.msra.mxu0 0
        %907 = vmatprep.subr.bf16.mxu0 0
        %908 = vmatpush1.bf16.msra.mxu0 0
        %909 = vmatprep.subr.bf16.mxu0 0
        %910 = vmatpush1.bf16.msra.mxu0 0
        %911 = vmatprep.subr.bf16.mxu0 0
        %912 = vmatpush1.bf16.msra.mxu0 0
        %913 = vmatprep.subr.bf16.mxu0 0
        %914 = vmatpush1.bf16.msra.mxu0 0
        %915 = vmatprep.subr.bf16.mxu0 0
        %916 = vmatpush1.bf16.msra.mxu0 0
        %917 = vmatprep.subr.bf16.mxu0 0
        %918 = vmatpush1.bf16.msra.mxu0 0
        %919 = vmatprep.subr.bf16.mxu0 0
        %920 = vmatpush1.bf16.msra.mxu0 0
        %921 = vmatprep.subr.bf16.mxu0 0
        %922 = vmatpush1.bf16.msra.mxu0 0
        %923 = vmatprep.subr.bf16.mxu0 0
        %924 = vmatpush1.bf16.msra.mxu0 0
        %925 = vmatprep.mubr.bf16.mxu0 0
        %926 = vmatmul.mubr.bf16.gmra.mrb[0].mxu0 %v836
        %v927 = vpop.f32.mrb[0].mxu0
        %v928 = vadd.f32 %v791, %v927
        %v929 = vpop.f32.mrb[0].mxu0
        %v930 = vadd.f32 %v793, %v929
        %v931 = vpop.f32.mrb[0].mxu0
        %v932 = vadd.f32 %v795, %v931
        %v933 = vpop.f32.mrb[0].mxu0
        %v934 = vadd.f32 %v797, %v933
        %935 = vdwg.mxu0
        %s936 = scalar_lea.vmem %s1, 16
        %v937 = vld [vmem:[%s936] sm:$0xf]
        %v938 = vld [vmem:[%s936 + $0x4] sm:$0x7]
        %v941 = vunpack.c.l.b16 %v937
        %v942 = vunpack.c.l.b16 %v938
        %v943 = vpack.c.b16 %v942, %v941
        %v945 = vsel %vm542, %v943, 0
        %947 = vmatprep.subr.bf16.mxu0 0
        %948 = vmatpush1.bf16.msra.mxu0 %v533
        %949 = vmatprep.subr.bf16.mxu0 0
        %950 = vmatpush1.bf16.msra.mxu0 %v548
        %951 = vmatprep.subr.bf16.mxu0 0
        %952 = vmatpush1.bf16.msra.mxu0 0
        %953 = vmatprep.subr.bf16.mxu0 0
        %954 = vmatpush1.bf16.msra.mxu0 0
        %955 = vmatprep.subr.bf16.mxu0 0
        %956 = vmatpush1.bf16.msra.mxu0 0
        %957 = vmatprep.subr.bf16.mxu0 0
        %958 = vmatpush1.bf16.msra.mxu0 0
        %959 = vmatprep.subr.bf16.mxu0 0
        %960 = vmatpush1.bf16.msra.mxu0 0
        %961 = vmatprep.subr.bf16.mxu0 0
        %962 = vmatpush1.bf16.msra.mxu0 0
        %963 = vmatprep.subr.bf16.mxu0 0
        %964 = vmatpush1.bf16.msra.mxu0 0
        %965 = vmatprep.subr.bf16.mxu0 0
        %966 = vmatpush1.bf16.msra.mxu0 0
        %967 = vmatprep.subr.bf16.mxu0 0
        %968 = vmatpush1.bf16.msra.mxu0 0
        %969 = vmatprep.subr.bf16.mxu0 0
        %970 = vmatpush1.bf16.msra.mxu0 0
        %971 = vmatprep.subr.bf16.mxu0 0
        %972 = vmatpush1.bf16.msra.mxu0 0
        %973 = vmatprep.subr.bf16.mxu0 0
        %974 = vmatpush1.bf16.msra.mxu0 0
        %975 = vmatprep.subr.bf16.mxu0 0
        %976 = vmatpush1.bf16.msra.mxu0 0
        %977 = vmatprep.subr.bf16.mxu0 0
        %978 = vmatpush1.bf16.msra.mxu0 0
        %979 = vmatprep.mubr.bf16.mxu0 0
        %980 = vmatmul.mubr.bf16.gmra.mrb[0].mxu0 %v945
        %v981 = vpop.f32.mrb[0].mxu0
        %v982 = vadd.f32 0.0, %v981
        %v983 = vpop.f32.mrb[0].mxu0
        %v984 = vpop.f32.mrb[0].mxu0
        %v985 = vadd.f32 0.0, %v984
        %v986 = vpop.f32.mrb[0].mxu0
        %987 = vdwg.mxu0
        %v988 = vpack.c.bf16 %v985, %v982
        %s989 = scalar_lea.vmem %s2, 128
        %v990 = vld [vmem:[%s989] sm:$0xff]
        %v991 = vld [vmem:[%s989 + $0x8] sm:$0xff]
        %v992 = vld [vmem:[%s989 + $0x10] sm:$0xff]
        %v993 = vld [vmem:[%s989 + $0x18] sm:$0xff]
        %v994 = vld [vmem:[%s989 + $0x20] sm:$0xff]
        %v995 = vld [vmem:[%s989 + $0x28] sm:$0xff]
        %v996 = vld [vmem:[%s989 + $0x30] sm:$0x33]
        %v997 = vld [vmem:[%s989 + $0x38] sm:$0x33]
        %v1006 = vunpack.c.l.b16 %v990
        %v1007 = vunpack.c.h.b16 %v990
        %v1008 = vunpack.c.l.b16 %v991
        %v1009 = vunpack.c.h.b16 %v991
        %v1010 = vunpack.c.l.b16 %v992
        %v1011 = vunpack.c.h.b16 %v992
        %v1012 = vunpack.c.l.b16 %v993
        %v1013 = vunpack.c.h.b16 %v993
        %v1014 = vunpack.c.l.b16 %v994
        %v1015 = vunpack.c.h.b16 %v994
        %v1016 = vunpack.c.l.b16 %v995
        %v1017 = vunpack.c.h.b16 %v995
        %v1018 = vunpack.c.l.b16 %v996
        %v1019 = vunpack.c.h.b16 %v996
        %v1020 = vunpack.c.l.b16 %v997
        %v1021 = vunpack.c.h.b16 %v997
        %v1022 = vpack.c.b16 %v1010, %v1006
        %v1023 = vpack.c.b16 %v1011, %v1007
        %v1024 = vpack.c.b16 %v1012, %v1008
        %v1025 = vpack.c.b16 %v1013, %v1009
        %v1026 = vpack.c.b16 %v1018, %v1014
        %v1027 = vpack.c.b16 %v1019, %v1015
        %v1028 = vpack.c.b16 %v1020, %v1016
        %v1029 = vpack.c.b16 %v1021, %v1017
        %v1035 = vsel %vm542, %v988, 0
        %v1038 = vsel %vm546, %v1026, 0
        %v1041 = vsel %vm546, %v1027, 0
        %v1044 = vsel %vm546, %v1028, 0
        %v1047 = vsel %vm546, %v1029, 0
        %1049 = vmatprep.subr.bf16.mxu0 %v1023
        %1050 = vmatpush1.bf16.msra.mxu0 %v1022
        %1051 = vmatprep.subr.bf16.mxu0 %v1041
        %1052 = vmatpush1.bf16.msra.mxu0 %v1038
        %1053 = vmatprep.subr.bf16.mxu0 0
        %1054 = vmatpush1.bf16.msra.mxu0 0
        %1055 = vmatprep.subr.bf16.mxu0 0
        %1056 = vmatpush1.bf16.msra.mxu0 0
        %1057 = vmatprep.subr.bf16.mxu0 0
        %1058 = vmatpush1.bf16.msra.mxu0 0
        %1059 = vmatprep.subr.bf16.mxu0 0
        %1060 = vmatpush1.bf16.msra.mxu0 0
        %1061 = vmatprep.subr.bf16.mxu0 0
        %1062 = vmatpush1.bf16.msra.mxu0 0
        %1063 = vmatprep.subr.bf16.mxu0 0
        %1064 = vmatpush1.bf16.msra.mxu0 0
        %1065 = vmatprep.subr.bf16.mxu0 0
        %1066 = vmatpush1.bf16.msra.mxu0 0
        %1067 = vmatprep.subr.bf16.mxu0 0
        %1068 = vmatpush1.bf16.msra.mxu0 0
        %1069 = vmatprep.subr.bf16.mxu0 0
        %1070 = vmatpush1.bf16.msra.mxu0 0
        %1071 = vmatprep.subr.bf16.mxu0 0
        %1072 = vmatpush1.bf16.msra.mxu0 0
        %1073 = vmatprep.subr.bf16.mxu0 0
        %1074 = vmatpush1.bf16.msra.mxu0 0
        %1075 = vmatprep.subr.bf16.mxu0 0
        %1076 = vmatpush1.bf16.msra.mxu0 0
        %1077 = vmatprep.subr.bf16.mxu0 0
        %1078 = vmatpush1.bf16.msra.mxu0 0
        %1079 = vmatprep.subr.bf16.mxu0 0
        %1080 = vmatpush1.bf16.msra.mxu0 0
        %1081 = vmatprep.mubr.bf16.mxu0 0
        %1082 = vmatmul.mubr.bf16.gmra.mrb[0].mxu0 %v1035
        %v1083 = vpop.f32.mrb[0].mxu0
        %v1084 = vadd.f32 0.0, %v1083
        %v1085 = vpop.f32.mrb[0].mxu0
        %v1086 = vadd.f32 0.0, %v1085
        %v1087 = vpop.f32.mrb[0].mxu0
        %v1088 = vadd.f32 0.0, %v1087
        %v1089 = vpop.f32.mrb[0].mxu0
        %v1090 = vadd.f32 0.0, %v1089
        %1091 = vdwg.mxu0
        %1092 = vmatprep.subr.bf16.mxu0 %v1025
        %1093 = vmatpush1.bf16.msra.mxu0 %v1024
        %1094 = vmatprep.subr.bf16.mxu0 %v1047
        %1095 = vmatpush1.bf16.msra.mxu0 %v1044
        %1096 = vmatprep.subr.bf16.mxu0 0
        %1097 = vmatpush1.bf16.msra.mxu0 0
        %1098 = vmatprep.subr.bf16.mxu0 0
        %1099 = vmatpush1.bf16.msra.mxu0 0
        %1100 = vmatprep.subr.bf16.mxu0 0
        %1101 = vmatpush1.bf16.msra.mxu0 0
        %1102 = vmatprep.subr.bf16.mxu0 0
        %1103 = vmatpush1.bf16.msra.mxu0 0
        %1104 = vmatprep.subr.bf16.mxu0 0
        %1105 = vmatpush1.bf16.msra.mxu0 0
        %1106 = vmatprep.subr.bf16.mxu0 0
        %1107 = vmatpush1.bf16.msra.mxu0 0
        %1108 = vmatprep.subr.bf16.mxu0 0
        %1109 = vmatpush1.bf16.msra.mxu0 0
        %1110 = vmatprep.subr.bf16.mxu0 0
        %1111 = vmatpush1.bf16.msra.mxu0 0
        %1112 = vmatprep.subr.bf16.mxu0 0
        %1113 = vmatpush1.bf16.msra.mxu0 0
        %1114 = vmatprep.subr.bf16.mxu0 0
        %1115 = vmatpush1.bf16.msra.mxu0 0
        %1116 = vmatprep.subr.bf16.mxu0 0
        %1117 = vmatpush1.bf16.msra.mxu0 0
        %1118 = vmatprep.subr.bf16.mxu0 0
        %1119 = vmatpush1.bf16.msra.mxu0 0
        %1120 = vmatprep.subr.bf16.mxu0 0
        %1121 = vmatpush1.bf16.msra.mxu0 0
        %1122 = vmatprep.subr.bf16.mxu0 0
        %1123 = vmatpush1.bf16.msra.mxu0 0
        %1124 = vmatprep.mubr.bf16.mxu0 0
        %1125 = vmatmul.mubr.bf16.gmra.mrb[0].mxu0 %v1035
        %v1126 = vpop.f32.mrb[0].mxu0
        %v1127 = vadd.f32 0.0, %v1126
        %v1128 = vpop.f32.mrb[0].mxu0
        %v1129 = vadd.f32 0.0, %v1128
        %v1130 = vpop.f32.mrb[0].mxu0
        %v1131 = vadd.f32 0.0, %v1130
        %v1132 = vpop.f32.mrb[0].mxu0
        %v1133 = vadd.f32 0.0, %v1132
        %1134 = vdwg.mxu0
        %v1135 = vadd.f32 %v885, %v1084
        %v1136 = vadd.f32 %v887, %v1086
        %v1137 = vadd.f32 %v928, %v1127
        %v1138 = vadd.f32 %v930, %v1129
        %v1139 = vadd.f32 %v889, %v1088
        %v1140 = vadd.f32 %v891, %v1090
        %v1141 = vadd.f32 %v932, %v1131
        %v1142 = vadd.f32 %v934, %v1133
        %s1143 = scalar_lea.vmem %s1, 24
        %v1144 = vld [vmem:[%s1143] sm:$0xf]
        %v1145 = vld [vmem:[%s1143 + $0x4] sm:$0x7]
        %v1148 = vunpack.c.l.b16 %v1144
        %v1149 = vunpack.c.l.b16 %v1145
        %v1150 = vpack.c.b16 %v1149, %v1148
        %v1152 = vsel %vm542, %v1150, 0
        %1154 = vmatprep.subr.bf16.mxu0 0
        %1155 = vmatpush1.bf16.msra.mxu0 %v533
        %1156 = vmatprep.subr.bf16.mxu0 0
        %1157 = vmatpush1.bf16.msra.mxu0 %v548
        %1158 = vmatprep.subr.bf16.mxu0 0
        %1159 = vmatpush1.bf16.msra.mxu0 0
        %1160 = vmatprep.subr.bf16.mxu0 0
        %1161 = vmatpush1.bf16.msra.mxu0 0
        %1162 = vmatprep.subr.bf16.mxu0 0
        %1163 = vmatpush1.bf16.msra.mxu0 0
        %1164 = vmatprep.subr.bf16.mxu0 0
        %1165 = vmatpush1.bf16.msra.mxu0 0
        %1166 = vmatprep.subr.bf16.mxu0 0
        %1167 = vmatpush1.bf16.msra.mxu0 0
        %1168 = vmatprep.subr.bf16.mxu0 0
        %1169 = vmatpush1.bf16.msra.mxu0 0
        %1170 = vmatprep.subr.bf16.mxu0 0
        %1171 = vmatpush1.bf16.msra.mxu0 0
        %1172 = vmatprep.subr.bf16.mxu0 0
        %1173 = vmatpush1.bf16.msra.mxu0 0
        %1174 = vmatprep.subr.bf16.mxu0 0
        %1175 = vmatpush1.bf16.msra.mxu0 0
        %1176 = vmatprep.subr.bf16.mxu0 0
        %1177 = vmatpush1.bf16.msra.mxu0 0
        %1178 = vmatprep.subr.bf16.mxu0 0
        %1179 = vmatpush1.bf16.msra.mxu0 0
        %1180 = vmatprep.subr.bf16.mxu0 0
        %1181 = vmatpush1.bf16.msra.mxu0 0
        %1182 = vmatprep.subr.bf16.mxu0 0
        %1183 = vmatpush1.bf16.msra.mxu0 0
        %1184 = vmatprep.subr.bf16.mxu0 0
        %1185 = vmatpush1.bf16.msra.mxu0 0
        %1186 = vmatprep.mubr.bf16.mxu0 0
        %1187 = vmatmul.mubr.bf16.gmra.mrb[0].mxu0 %v1152
        %v1188 = vpop.f32.mrb[0].mxu0
        %v1189 = vadd.f32 0.0, %v1188
        %v1190 = vpop.f32.mrb[0].mxu0
        %v1191 = vpop.f32.mrb[0].mxu0
        %v1192 = vadd.f32 0.0, %v1191
        %v1193 = vpop.f32.mrb[0].mxu0
        %1194 = vdwg.mxu0
        %v1195 = vpack.c.bf16 %v1192, %v1189
        %s1196 = scalar_lea.vmem %s2, 192
        %v1197 = vld [vmem:[%s1196] sm:$0xff]
        %v1198 = vld [vmem:[%s1196 + $0x8] sm:$0xff]
        %v1199 = vld [vmem:[%s1196 + $0x10] sm:$0xff]
        %v1200 = vld [vmem:[%s1196 + $0x18] sm:$0xff]
        %v1201 = vld [vmem:[%s1196 + $0x20] sm:$0xff]
        %v1202 = vld [vmem:[%s1196 + $0x28] sm:$0xff]
        %v1203 = vld [vmem:[%s1196 + $0x30] sm:$0x33]
        %v1204 = vld [vmem:[%s1196 + $0x38] sm:$0x33]
        %v1213 = vunpack.c.l.b16 %v1197
        %v1214 = vunpack.c.h.b16 %v1197
        %v1215 = vunpack.c.l.b16 %v1198
        %v1216 = vunpack.c.h.b16 %v1198
        %v1217 = vunpack.c.l.b16 %v1199
        %v1218 = vunpack.c.h.b16 %v1199
        %v1219 = vunpack.c.l.b16 %v1200
        %v1220 = vunpack.c.h.b16 %v1200
        %v1221 = vunpack.c.l.b16 %v1201
        %v1222 = vunpack.c.h.b16 %v1201
        %v1223 = vunpack.c.l.b16 %v1202
        %v1224 = vunpack.c.h.b16 %v1202
        %v1225 = vunpack.c.l.b16 %v1203
        %v1226 = vunpack.c.h.b16 %v1203
        %v1227 = vunpack.c.l.b16 %v1204
        %v1228 = vunpack.c.h.b16 %v1204
        %v1229 = vpack.c.b16 %v1217, %v1213
        %v1230 = vpack.c.b16 %v1218, %v1214
        %v1231 = vpack.c.b16 %v1219, %v1215
        %v1232 = vpack.c.b16 %v1220, %v1216
        %v1233 = vpack.c.b16 %v1225, %v1221
        %v1234 = vpack.c.b16 %v1226, %v1222
        %v1235 = vpack.c.b16 %v1227, %v1223
        %v1236 = vpack.c.b16 %v1228, %v1224
        %v1242 = vsel %vm542, %v1195, 0
        %v1245 = vsel %vm546, %v1233, 0
        %v1248 = vsel %vm546, %v1234, 0
        %v1251 = vsel %vm546, %v1235, 0
        %v1254 = vsel %vm546, %v1236, 0
        %1256 = vmatprep.subr.bf16.mxu0 %v1230
        %1257 = vmatpush1.bf16.msra.mxu0 %v1229
        %1258 = vmatprep.subr.bf16.mxu0 %v1248
        %1259 = vmatpush1.bf16.msra.mxu0 %v1245
        %1260 = vmatprep.subr.bf16.mxu0 0
        %1261 = vmatpush1.bf16.msra.mxu0 0
        %1262 = vmatprep.subr.bf16.mxu0 0
        %1263 = vmatpush1.bf16.msra.mxu0 0
        %1264 = vmatprep.subr.bf16.mxu0 0
        %1265 = vmatpush1.bf16.msra.mxu0 0
        %1266 = vmatprep.subr.bf16.mxu0 0
        %1267 = vmatpush1.bf16.msra.mxu0 0
        %1268 = vmatprep.subr.bf16.mxu0 0
        %1269 = vmatpush1.bf16.msra.mxu0 0
        %1270 = vmatprep.subr.bf16.mxu0 0
        %1271 = vmatpush1.bf16.msra.mxu0 0
        %1272 = vmatprep.subr.bf16.mxu0 0
        %1273 = vmatpush1.bf16.msra.mxu0 0
        %1274 = vmatprep.subr.bf16.mxu0 0
        %1275 = vmatpush1.bf16.msra.mxu0 0
        %1276 = vmatprep.subr.bf16.mxu0 0
        %1277 = vmatpush1.bf16.msra.mxu0 0
        %1278 = vmatprep.subr.bf16.mxu0 0
        %1279 = vmatpush1.bf16.msra.mxu0 0
        %1280 = vmatprep.subr.bf16.mxu0 0
        %1281 = vmatpush1.bf16.msra.mxu0 0
        %1282 = vmatprep.subr.bf16.mxu0 0
        %1283 = vmatpush1.bf16.msra.mxu0 0
        %1284 = vmatprep.subr.bf16.mxu0 0
        %1285 = vmatpush1.bf16.msra.mxu0 0
        %1286 = vmatprep.subr.bf16.mxu0 0
        %1287 = vmatpush1.bf16.msra.mxu0 0
        %1288 = vmatprep.mubr.bf16.mxu0 0
        %1289 = vmatmul.mubr.bf16.gmra.mrb[0].mxu0 %v1242
        %v1290 = vpop.f32.mrb[0].mxu0
        %v1291 = vadd.f32 0.0, %v1290
        %v1292 = vpop.f32.mrb[0].mxu0
        %v1293 = vadd.f32 0.0, %v1292
        %v1294 = vpop.f32.mrb[0].mxu0
        %v1295 = vadd.f32 0.0, %v1294
        %v1296 = vpop.f32.mrb[0].mxu0
        %v1297 = vadd.f32 0.0, %v1296
        %1298 = vdwg.mxu0
        %1299 = vmatprep.subr.bf16.mxu0 %v1232
        %1300 = vmatpush1.bf16.msra.mxu0 %v1231
        %1301 = vmatprep.subr.bf16.mxu0 %v1254
        %1302 = vmatpush1.bf16.msra.mxu0 %v1251
        %1303 = vmatprep.subr.bf16.mxu0 0
        %1304 = vmatpush1.bf16.msra.mxu0 0
        %1305 = vmatprep.subr.bf16.mxu0 0
        %1306 = vmatpush1.bf16.msra.mxu0 0
        %1307 = vmatprep.subr.bf16.mxu0 0
        %1308 = vmatpush1.bf16.msra.mxu0 0
        %1309 = vmatprep.subr.bf16.mxu0 0
        %1310 = vmatpush1.bf16.msra.mxu0 0
        %1311 = vmatprep.subr.bf16.mxu0 0
        %1312 = vmatpush1.bf16.msra.mxu0 0
        %1313 = vmatprep.subr.bf16.mxu0 0
        %1314 = vmatpush1.bf16.msra.mxu0 0
        %1315 = vmatprep.subr.bf16.mxu0 0
        %1316 = vmatpush1.bf16.msra.mxu0 0
        %1317 = vmatprep.subr.bf16.mxu0 0
        %1318 = vmatpush1.bf16.msra.mxu0 0
        %1319 = vmatprep.subr.bf16.mxu0 0
        %1320 = vmatpush1.bf16.msra.mxu0 0
        %1321 = vmatprep.subr.bf16.mxu0 0
        %1322 = vmatpush1.bf16.msra.mxu0 0
        %1323 = vmatprep.subr.bf16.mxu0 0
        %1324 = vmatpush1.bf16.msra.mxu0 0
        %1325 = vmatprep.subr.bf16.mxu0 0
        %1326 = vmatpush1.bf16.msra.mxu0 0
        %1327 = vmatprep.subr.bf16.mxu0 0
        %1328 = vmatpush1.bf16.msra.mxu0 0
        %1329 = vmatprep.subr.bf16.mxu0 0
        %1330 = vmatpush1.bf16.msra.mxu0 0
        %1331 = vmatprep.mubr.bf16.mxu0 0
        %1332 = vmatmul.mubr.bf16.gmra.mrb[0].mxu0 %v1242
        %v1333 = vpop.f32.mrb[0].mxu0
        %v1334 = vadd.f32 0.0, %v1333
        %v1335 = vpop.f32.mrb[0].mxu0
        %v1336 = vadd.f32 0.0, %v1335
        %v1337 = vpop.f32.mrb[0].mxu0
        %v1338 = vadd.f32 0.0, %v1337
        %v1339 = vpop.f32.mrb[0].mxu0
        %v1340 = vadd.f32 0.0, %v1339
        %1341 = vdwg.mxu0
        %v1342 = vadd.f32 %v1135, %v1291
        %v1343 = vadd.f32 %v1136, %v1293
        %v1344 = vadd.f32 %v1137, %v1334
        %v1345 = vadd.f32 %v1138, %v1336
        %v1346 = vadd.f32 %v1139, %v1295
        %v1347 = vadd.f32 %v1140, %v1297
        %v1348 = vadd.f32 %v1141, %v1338
        %v1349 = vadd.f32 %v1142, %v1340
        %v1350 = vld [vmem:[#allocation2] sm:$0xf]
        %v1352 = vlaneseq
        %v1353 = vshrl.u32 %v1352, 7
        %v1354 = vsub.s32 0, %v1353
        %v1355 = vrot.slane %v1350, %v1354
        %v1356 = vlaneseq
        %v1357 = vshrl.u32 %v1356, 7
        %v1358 = vsub.s32 1, %v1357
        %v1359 = vrot.slane %v1350, %v1358
        %v1360 = vlaneseq
        %v1361 = vshrl.u32 %v1360, 7
        %v1362 = vsub.s32 2, %v1361
        %v1363 = vrot.slane %v1350, %v1362
        %v1364 = vlaneseq
        %v1365 = vshrl.u32 %v1364, 7
        %v1366 = vsub.s32 3, %v1365
        %v1367 = vrot.slane %v1350, %v1366
        %v1372 = vadd.f32 %v1342, %v1355
        %v1373 = vadd.f32 %v1343, %v1359
        %v1374 = vadd.f32 %v1344, %v1363
        %v1375 = vadd.f32 %v1345, %v1367
        %v1376 = vadd.f32 %v1346, %v1355
        %v1377 = vadd.f32 %v1347, %v1359
        %v1378 = vadd.f32 %v1348, %v1363
        %v1379 = vadd.f32 %v1349, %v1367
        %v1380 = vmax.f32 %v1372, 0.0
        %v1381 = vmax.f32 %v1373, 0.0
        %v1382 = vmax.f32 %v1374, 0.0
        %v1383 = vmax.f32 %v1375, 0.0
        %v1384 = vmax.f32 %v1376, 0.0
        %v1385 = vmax.f32 %v1377, 0.0
        %v1386 = vmax.f32 %v1378, 0.0
        %v1387 = vmax.f32 %v1379, 0.0
        %v1388 = vpack.c.bf16 %v1384, %v1380
        %v1389 = vpack.c.bf16 %v1385, %v1381
        %v1390 = vpack.c.bf16 %v1386, %v1382
        %v1391 = vpack.c.bf16 %v1387, %v1383
        %v1392 = vld [vmem:[%s4] sm:$0xf]
        %vm1393 = vcmask 113664
        %v1395 = vsel %vm1393, %v1392, 0
        %vm1397 = vcmask 1046528
        %v1399 = vsel %vm1397, %v1388, 0
        %v1402 = vsel %vm1397, %v1389, 0
        %v1405 = vsel %vm1397, %v1390, 0
        %v1408 = vsel %vm1397, %v1391, 0
        %1410 = vmatprep.subr.bf16.mxu0 %v1402
        %1411 = vmatpush1.bf16.msra.mxu0 %v1399
        %1412 = vmatprep.subr.bf16.mxu0 0
        %1413 = vmatpush1.bf16.msra.mxu0 0
        %1414 = vmatprep.subr.bf16.mxu0 0
        %1415 = vmatpush1.bf16.msra.mxu0 0
        %1416 = vmatprep.subr.bf16.mxu0 0
        %1417 = vmatpush1.bf16.msra.mxu0 0
        %1418 = vmatprep.subr.bf16.mxu0 0
        %1419 = vmatpush1.bf16.msra.mxu0 0
        %1420 = vmatprep.subr.bf16.mxu0 0
        %1421 = vmatpush1.bf16.msra.mxu0 0
        %1422 = vmatprep.subr.bf16.mxu0 0
        %1423 = vmatpush1.bf16.msra.mxu0 0
        %1424 = vmatprep.subr.bf16.mxu0 0
        %1425 = vmatpush1.bf16.msra.mxu0 0
        %1426 = vmatprep.subr.bf16.mxu0 0
        %1427 = vmatpush1.bf16.msra.mxu0 0
        %1428 = vmatprep.subr.bf16.mxu0 0
        %1429 = vmatpush1.bf16.msra.mxu0 0
        %1430 = vmatprep.subr.bf16.mxu0 0
        %1431 = vmatpush1.bf16.msra.mxu0 0
        %1432 = vmatprep.subr.bf16.mxu0 0
        %1433 = vmatpush1.bf16.msra.mxu0 0
        %1434 = vmatprep.subr.bf16.mxu0 0
        %1435 = vmatpush1.bf16.msra.mxu0 0
        %1436 = vmatprep.subr.bf16.mxu0 0
        %1437 = vmatpush1.bf16.msra.mxu0 0
        %1438 = vmatprep.subr.bf16.mxu0 0
        %1439 = vmatpush1.bf16.msra.mxu0 0
        %1440 = vmatprep.subr.bf16.mxu0 0
        %1441 = vmatpush1.bf16.msra.mxu0 0
        %1442 = vmatprep.mubr.bf16.mxu0 0
        %1443 = vmatmul.mubr.bf16.gmra.mrb[0].mxu0 %v1395
        %v1444 = vpop.f32.mrb[0].mxu0
        %v1445 = vadd.f32 0.0, %v1444
        %v1446 = vpop.f32.mrb[0].mxu0
        %v1447 = vadd.f32 0.0, %v1446
        %v1448 = vpop.f32.mrb[0].mxu0
        %v1449 = vpop.f32.mrb[0].mxu0
        %1450 = vdwg.mxu0
        %1451 = vmatprep.subr.bf16.mxu0 %v1408
        %1452 = vmatpush1.bf16.msra.mxu0 %v1405
        %1453 = vmatprep.subr.bf16.mxu0 0
        %1454 = vmatpush1.bf16.msra.mxu0 0
        %1455 = vmatprep.subr.bf16.mxu0 0
        %1456 = vmatpush1.bf16.msra.mxu0 0
        %1457 = vmatprep.subr.bf16.mxu0 0
        %1458 = vmatpush1.bf16.msra.mxu0 0
        %1459 = vmatprep.subr.bf16.mxu0 0
        %1460 = vmatpush1.bf16.msra.mxu0 0
        %1461 = vmatprep.subr.bf16.mxu0 0
        %1462 = vmatpush1.bf16.msra.mxu0 0
        %1463 = vmatprep.subr.bf16.mxu0 0
        %1464 = vmatpush1.bf16.msra.mxu0 0
        %1465 = vmatprep.subr.bf16.mxu0 0
        %1466 = vmatpush1.bf16.msra.mxu0 0
        %1467 = vmatprep.subr.bf16.mxu0 0
        %1468 = vmatpush1.bf16.msra.mxu0 0
        %1469 = vmatprep.subr.bf16.mxu0 0
        %1470 = vmatpush1.bf16.msra.mxu0 0
        %1471 = vmatprep.subr.bf16.mxu0 0
        %1472 = vmatpush1.bf16.msra.mxu0 0
        %1473 = vmatprep.subr.bf16.mxu0 0
        %1474 = vmatpush1.bf16.msra.mxu0 0
        %1475 = vmatprep.subr.bf16.mxu0 0
        %1476 = vmatpush1.bf16.msra.mxu0 0
        %1477 = vmatprep.subr.bf16.mxu0 0
        %1478 = vmatpush1.bf16.msra.mxu0 0
        %1479 = vmatprep.subr.bf16.mxu0 0
        %1480 = vmatpush1.bf16.msra.mxu0 0
        %1481 = vmatprep.subr.bf16.mxu0 0
        %1482 = vmatpush1.bf16.msra.mxu0 0
        %1483 = vmatprep.mubr.bf16.mxu0 0
        %1484 = vmatmul.mubr.bf16.gmra.mrb[0].mxu0 %v1395
        %v1485 = vpop.f32.mrb[0].mxu0
        %v1486 = vadd.f32 0.0, %v1485
        %v1487 = vpop.f32.mrb[0].mxu0
        %v1488 = vadd.f32 0.0, %v1487
        %v1489 = vpop.f32.mrb[0].mxu0
        %v1490 = vpop.f32.mrb[0].mxu0
        %1491 = vdwg.mxu0
        %v1492 = vpack.c.bf16 %v1445, %v1445
        %v1493 = vpack.c.bf16 %v1447, %v1447
        %v1494 = vpack.c.bf16 %v1486, %v1486
        %v1495 = vpack.c.bf16 %v1488, %v1488
        %v1496 = vld [vmem:[#allocation5] sm:$0xff]
        %v1497 = vld [vmem:[#allocation5 + $0x8] sm:$0xff]
        %v1498 = vld [vmem:[#allocation5 + $0x10] sm:$0xff]
        %v1499 = vld [vmem:[#allocation5 + $0x18] sm:$0xff]
        %v1500 = vld [vmem:[#allocation5 + $0x20] sm:$0xff]
        %v1501 = vld [vmem:[#allocation5 + $0x28] sm:$0xff]
        %v1502 = vld [vmem:[#allocation5 + $0x30] sm:$0xff]
        %v1503 = vld [vmem:[#allocation5 + $0x38] sm:$0xff]
        %v1504 = vld [vmem:[#allocation5 + $0x40] sm:$0xff]
        %v1505 = vld [vmem:[#allocation5 + $0x48] sm:$0xff]
        %v1506 = vld [vmem:[#allocation5 + $0x50] sm:$0xff]
        %v1507 = vld [vmem:[#allocation5 + $0x58] sm:$0xff]
        %v1508 = vld [vmem:[#allocation5 + $0x60] sm:$0xff]
        %v1509 = vld [vmem:[#allocation5 + $0x68] sm:$0xff]
        %v1510 = vld [vmem:[#allocation5 + $0x70] sm:$0xff]
        %v1511 = vld [vmem:[#allocation5 + $0x78] sm:$0xff]
        %v1512 = vld [vmem:[#allocation5 + $0x80] sm:$0xff]
        %v1513 = vld [vmem:[#allocation5 + $0x88] sm:$0xff]
        %v1514 = vld [vmem:[#allocation5 + $0x90] sm:$0xff]
        %v1515 = vld [vmem:[#allocation5 + $0x98] sm:$0xff]
        %v1516 = vld [vmem:[#allocation5 + $0xa0] sm:$0xff]
        %v1517 = vld [vmem:[#allocation5 + $0xa8] sm:$0xff]
        %v1518 = vld [vmem:[#allocation5 + $0xb0] sm:$0xff]
        %v1519 = vld [vmem:[#allocation5 + $0xb8] sm:$0xff]
        %v1520 = vld [vmem:[#allocation5 + $0xc0] sm:$0xff]
        %v1521 = vld [vmem:[#allocation5 + $0xc8] sm:$0xff]
        %v1522 = vld [vmem:[#allocation5 + $0xd0] sm:$0xff]
        %v1523 = vld [vmem:[#allocation5 + $0xd8] sm:$0xff]
        %v1524 = vld [vmem:[#allocation5 + $0xe0] sm:$0xff]
        %v1525 = vld [vmem:[#allocation5 + $0xe8] sm:$0xff]
        %v1526 = vld [vmem:[#allocation5 + $0xf0] sm:$0xff]
        %v1527 = vld [vmem:[#allocation5 + $0xf8] sm:$0xff]
        %v1528 = vld [vmem:[#allocation5 + $0x100] sm:$0xff]
        %v1529 = vld [vmem:[#allocation5 + $0x108] sm:$0xff]
        %v1530 = vld [vmem:[#allocation5 + $0x110] sm:$0xff]
        %v1531 = vld [vmem:[#allocation5 + $0x118] sm:$0xff]
        %v1532 = vld [vmem:[#allocation5 + $0x120] sm:$0xff]
        %v1533 = vld [vmem:[#allocation5 + $0x128] sm:$0xff]
        %v1534 = vld [vmem:[#allocation5 + $0x130] sm:$0xff]
        %v1535 = vld [vmem:[#allocation5 + $0x138] sm:$0xff]
        %v1536 = vld [vmem:[#allocation5 + $0x140] sm:$0xff]
        %v1537 = vld [vmem:[#allocation5 + $0x148] sm:$0xff]
        %v1538 = vld [vmem:[#allocation5 + $0x150] sm:$0xff]
        %v1539 = vld [vmem:[#allocation5 + $0x158] sm:$0xff]
        %v1540 = vld [vmem:[#allocation5 + $0x160] sm:$0xff]
        %v1541 = vld [vmem:[#allocation5 + $0x168] sm:$0xff]
        %v1542 = vld [vmem:[#allocation5 + $0x170] sm:$0xff]
        %v1543 = vld [vmem:[#allocation5 + $0x178] sm:$0xff]
        %v1544 = vld [vmem:[#allocation5 + $0x180] sm:$0xff]
        %v1545 = vld [vmem:[#allocation5 + $0x188] sm:$0xff]
        %v1546 = vld [vmem:[#allocation5 + $0x190] sm:$0xff]
        %v1547 = vld [vmem:[#allocation5 + $0x198] sm:$0xff]
        %v1548 = vld [vmem:[#allocation5 + $0x1a0] sm:$0xff]
        %v1549 = vld [vmem:[#allocation5 + $0x1a8] sm:$0xff]
        %v1550 = vld [vmem:[#allocation5 + $0x1b0] sm:$0xff]
        %v1551 = vld [vmem:[#allocation5 + $0x1b8] sm:$0xff]
        %v1552 = vld [vmem:[#allocation5 + $0x1c0] sm:$0xff]
        %v1553 = vld [vmem:[#allocation5 + $0x1c8] sm:$0xff]
        %v1554 = vld [vmem:[#allocation5 + $0x1d0] sm:$0xff]
        %v1555 = vld [vmem:[#allocation5 + $0x1d8] sm:$0xff]
        %v1556 = vld [vmem:[#allocation5 + $0x1e0] sm:$0xff]
        %v1557 = vld [vmem:[#allocation5 + $0x1e8] sm:$0xff]
        %v1558 = vld [vmem:[#allocation5 + $0x1f0] sm:$0xff]
        %v1559 = vld [vmem:[#allocation5 + $0x1f8] sm:$0xff]
        %v1560 = vld [vmem:[#allocation5 + $0x200] sm:$0xff]
        %v1561 = vld [vmem:[#allocation5 + $0x208] sm:$0xff]
        %v1562 = vld [vmem:[#allocation5 + $0x210] sm:$0xff]
        %v1563 = vld [vmem:[#allocation5 + $0x218] sm:$0xff]
        %v1564 = vld [vmem:[#allocation5 + $0x220] sm:$0xff]
        %v1565 = vld [vmem:[#allocation5 + $0x228] sm:$0xff]
        %v1566 = vld [vmem:[#allocation5 + $0x230] sm:$0xff]
        %v1567 = vld [vmem:[#allocation5 + $0x238] sm:$0xff]
        %v1568 = vld [vmem:[#allocation5 + $0x240] sm:$0xff]
        %v1569 = vld [vmem:[#allocation5 + $0x248] sm:$0xff]
        %v1570 = vld [vmem:[#allocation5 + $0x250] sm:$0xff]
        %v1571 = vld [vmem:[#allocation5 + $0x258] sm:$0xff]
        %v1572 = vld [vmem:[#allocation5 + $0x260] sm:$0xff]
        %v1573 = vld [vmem:[#allocation5 + $0x268] sm:$0xff]
        %v1574 = vld [vmem:[#allocation5 + $0x270] sm:$0xff]
        %v1575 = vld [vmem:[#allocation5 + $0x278] sm:$0xff]
        %v1576 = vld [vmem:[#allocation5 + $0x280] sm:$0xff]
        %v1577 = vld [vmem:[#allocation5 + $0x288] sm:$0xff]
        %v1578 = vld [vmem:[#allocation5 + $0x290] sm:$0xff]
        %v1579 = vld [vmem:[#allocation5 + $0x298] sm:$0xff]
        %v1580 = vld [vmem:[#allocation5 + $0x2a0] sm:$0xff]
        %v1581 = vld [vmem:[#allocation5 + $0x2a8] sm:$0xff]
        %v1582 = vld [vmem:[#allocation5 + $0x2b0] sm:$0xff]
        %v1583 = vld [vmem:[#allocation5 + $0x2b8] sm:$0xff]
        %v1584 = vld [vmem:[#allocation5 + $0x2c0] sm:$0xff]
        %v1585 = vld [vmem:[#allocation5 + $0x2c8] sm:$0xff]
        %v1586 = vld [vmem:[#allocation5 + $0x2d0] sm:$0xff]
        %v1587 = vld [vmem:[#allocation5 + $0x2d8] sm:$0xff]
        %v1588 = vld [vmem:[#allocation5 + $0x2e0] sm:$0xff]
        %v1589 = vld [vmem:[#allocation5 + $0x2e8] sm:$0xff]
        %v1590 = vld [vmem:[#allocation5 + $0x2f0] sm:$0xff]
        %v1591 = vld [vmem:[#allocation5 + $0x2f8] sm:$0xff]
        %v1592 = vld [vmem:[#allocation5 + $0x300] sm:$0xff]
        %v1593 = vld [vmem:[#allocation5 + $0x308] sm:$0xff]
        %v1594 = vld [vmem:[#allocation5 + $0x310] sm:$0xff]
        %v1595 = vld [vmem:[#allocation5 + $0x318] sm:$0xff]
        %v1596 = vld [vmem:[#allocation5 + $0x320] sm:$0xff]
        %v1597 = vld [vmem:[#allocation5 + $0x328] sm:$0xff]
        %v1598 = vld [vmem:[#allocation5 + $0x330] sm:$0xff]
        %v1599 = vld [vmem:[#allocation5 + $0x338] sm:$0xff]
        %v1600 = vld [vmem:[#allocation5 + $0x340] sm:$0xff]
        %v1601 = vld [vmem:[#allocation5 + $0x348] sm:$0xff]
        %v1602 = vld [vmem:[#allocation5 + $0x350] sm:$0xff]
        %v1603 = vld [vmem:[#allocation5 + $0x358] sm:$0xff]
        %v1604 = vld [vmem:[#allocation5 + $0x360] sm:$0xff]
        %v1605 = vld [vmem:[#allocation5 + $0x368] sm:$0xff]
        %v1606 = vld [vmem:[#allocation5 + $0x370] sm:$0xff]
        %v1607 = vld [vmem:[#allocation5 + $0x378] sm:$0xff]
        %s1608 = scalar_lea.vmem %s4, 4
        %v1609 = vld [vmem:[%s1608] sm:$0xf]
        %v1611 = vsel %vm1393, %v1609, 0
        %1613 = vmatprep.subr.bf16.mxu0 %v1402
        %1614 = vmatpush1.bf16.msra.mxu0 %v1399
        %1615 = vmatprep.subr.bf16.mxu0 0
        %1616 = vmatpush1.bf16.msra.mxu0 0
        %1617 = vmatprep.subr.bf16.mxu0 0
        %1618 = vmatpush1.bf16.msra.mxu0 0
        %1619 = vmatprep.subr.bf16.mxu0 0
        %1620 = vmatpush1.bf16.msra.mxu0 0
        %1621 = vmatprep.subr.bf16.mxu0 0
        %1622 = vmatpush1.bf16.msra.mxu0 0
        %1623 = vmatprep.subr.bf16.mxu0 0
        %1624 = vmatpush1.bf16.msra.mxu0 0
        %1625 = vmatprep.subr.bf16.mxu0 0
        %1626 = vmatpush1.bf16.msra.mxu0 0
        %1627 = vmatprep.subr.bf16.mxu0 0
        %1628 = vmatpush1.bf16.msra.mxu0 0
        %1629 = vmatprep.subr.bf16.mxu0 0
        %1630 = vmatpush1.bf16.msra.mxu0 0
        %1631 = vmatprep.subr.bf16.mxu0 0
        %1632 = vmatpush1.bf16.msra.mxu0 0
        %1633 = vmatprep.subr.bf16.mxu0 0
        %1634 = vmatpush1.bf16.msra.mxu0 0
        %1635 = vmatprep.subr.bf16.mxu0 0
        %1636 = vmatpush1.bf16.msra.mxu0 0
        %1637 = vmatprep.subr.bf16.mxu0 0
        %1638 = vmatpush1.bf16.msra.mxu0 0
        %1639 = vmatprep.subr.bf16.mxu0 0
        %1640 = vmatpush1.bf16.msra.mxu0 0
        %1641 = vmatprep.subr.bf16.mxu0 0
        %1642 = vmatpush1.bf16.msra.mxu0 0
        %1643 = vmatprep.subr.bf16.mxu0 0
        %1644 = vmatpush1.bf16.msra.mxu0 0
        %1645 = vmatprep.mubr.bf16.mxu0 0
        %1646 = vmatmul.mubr.bf16.gmra.mrb[0].mxu0 %v1611
        %v1647 = vpop.f32.mrb[0].mxu0
        %v1648 = vadd.f32 0.0, %v1647
        %v1649 = vpop.f32.mrb[0].mxu0
        %v1650 = vadd.f32 0.0, %v1649
        %v1651 = vpop.f32.mrb[0].mxu0
        %v1652 = vpop.f32.mrb[0].mxu0
        %1653 = vdwg.mxu0
        %1654 = vmatprep.subr.bf16.mxu0 %v1408
        %1655 = vmatpush1.bf16.msra.mxu0 %v1405
        %1656 = vmatprep.subr.bf16.mxu0 0
        %1657 = vmatpush1.bf16.msra.mxu0 0
        %1658 = vmatprep.subr.bf16.mxu0 0
        %1659 = vmatpush1.bf16.msra.mxu0 0
        %1660 = vmatprep.subr.bf16.mxu0 0
        %1661 = vmatpush1.bf16.msra.mxu0 0
        %1662 = vmatprep.subr.bf16.mxu0 0
        %1663 = vmatpush1.bf16.msra.mxu0 0
        %1664 = vmatprep.subr.bf16.mxu0 0
        %1665 = vmatpush1.bf16.msra.mxu0 0
        %1666 = vmatprep.subr.bf16.mxu0 0
        %1667 = vmatpush1.bf16.msra.mxu0 0
        %1668 = vmatprep.subr.bf16.mxu0 0
        %1669 = vmatpush1.bf16.msra.mxu0 0
        %1670 = vmatprep.subr.bf16.mxu0 0
        %1671 = vmatpush1.bf16.msra.mxu0 0
        %1672 = vmatprep.subr.bf16.mxu0 0
        %1673 = vmatpush1.bf16.msra.mxu0 0
        %1674 = vmatprep.subr.bf16.mxu0 0
        %1675 = vmatpush1.bf16.msra.mxu0 0
        %1676 = vmatprep.subr.bf16.mxu0 0
        %1677 = vmatpush1.bf16.msra.mxu0 0
        %1678 = vmatprep.subr.bf16.mxu0 0
        %1679 = vmatpush1.bf16.msra.mxu0 0
        %1680 = vmatprep.subr.bf16.mxu0 0
        %1681 = vmatpush1.bf16.msra.mxu0 0
        %1682 = vmatprep.subr.bf16.mxu0 0
        %1683 = vmatpush1.bf16.msra.mxu0 0
        %1684 = vmatprep.subr.bf16.mxu0 0
        %1685 = vmatpush1.bf16.msra.mxu0 0
        %1686 = vmatprep.mubr.bf16.mxu0 0
        %1687 = vmatmul.mubr.bf16.gmra.mrb[0].mxu0 %v1611
        %v1688 = vpop.f32.mrb[0].mxu0
        %v1689 = vadd.f32 0.0, %v1688
        %v1690 = vpop.f32.mrb[0].mxu0
        %v1691 = vadd.f32 0.0, %v1690
        %v1692 = vpop.f32.mrb[0].mxu0
        %v1693 = vpop.f32.mrb[0].mxu0
        %1694 = vdwg.mxu0
        %v1695 = vpack.c.bf16 %v1648, %v1648
        %v1696 = vpack.c.bf16 %v1650, %v1650
        %v1697 = vpack.c.bf16 %v1689, %v1689
        %v1698 = vpack.c.bf16 %v1691, %v1691
        %s1699 = scalar_lea.vmem [#allocation5], 896
        %v1700 = vld [vmem:[%s1699] sm:$0xff]
        %v1701 = vld [vmem:[%s1699 + $0x8] sm:$0xff]
        %v1702 = vld [vmem:[%s1699 + $0x10] sm:$0xff]
        %v1703 = vld [vmem:[%s1699 + $0x18] sm:$0xff]
        %v1704 = vld [vmem:[%s1699 + $0x20] sm:$0xff]
        %v1705 = vld [vmem:[%s1699 + $0x28] sm:$0xff]
        %v1706 = vld [vmem:[%s1699 + $0x30] sm:$0xff]
        %v1707 = vld [vmem:[%s1699 + $0x38] sm:$0xff]
        %v1708 = vld [vmem:[%s1699 + $0x40] sm:$0xff]
        %v1709 = vld [vmem:[%s1699 + $0x48] sm:$0xff]
        %v1710 = vld [vmem:[%s1699 + $0x50] sm:$0xff]
        %v1711 = vld [vmem:[%s1699 + $0x58] sm:$0xff]
        %v1712 = vld [vmem:[%s1699 + $0x60] sm:$0xff]
        %v1713 = vld [vmem:[%s1699 + $0x68] sm:$0xff]
        %v1714 = vld [vmem:[%s1699 + $0x70] sm:$0xff]
        %v1715 = vld [vmem:[%s1699 + $0x78] sm:$0xff]
        %v1716 = vld [vmem:[%s1699 + $0x80] sm:$0xff]
        %v1717 = vld [vmem:[%s1699 + $0x88] sm:$0xff]
        %v1718 = vld [vmem:[%s1699 + $0x90] sm:$0xff]
        %v1719 = vld [vmem:[%s1699 + $0x98] sm:$0xff]
        %v1720 = vld [vmem:[%s1699 + $0xa0] sm:$0xff]
        %v1721 = vld [vmem:[%s1699 + $0xa8] sm:$0xff]
        %v1722 = vld [vmem:[%s1699 + $0xb0] sm:$0xff]
        %v1723 = vld [vmem:[%s1699 + $0xb8] sm:$0xff]
        %v1724 = vld [vmem:[%s1699 + $0xc0] sm:$0xff]
        %v1725 = vld [vmem:[%s1699 + $0xc8] sm:$0xff]
        %v1726 = vld [vmem:[%s1699 + $0xd0] sm:$0xff]
        %v1727 = vld [vmem:[%s1699 + $0xd8] sm:$0xff]
        %v1728 = vld [vmem:[%s1699 + $0xe0] sm:$0xff]
        %v1729 = vld [vmem:[%s1699 + $0xe8] sm:$0xff]
        %v1730 = vld [vmem:[%s1699 + $0xf0] sm:$0xff]
        %v1731 = vld [vmem:[%s1699 + $0xf8] sm:$0xff]
        %v1732 = vld [vmem:[%s1699 + $0x100] sm:$0xff]
        %v1733 = vld [vmem:[%s1699 + $0x108] sm:$0xff]
        %v1734 = vld [vmem:[%s1699 + $0x110] sm:$0xff]
        %v1735 = vld [vmem:[%s1699 + $0x118] sm:$0xff]
        %v1736 = vld [vmem:[%s1699 + $0x120] sm:$0xff]
        %v1737 = vld [vmem:[%s1699 + $0x128] sm:$0xff]
        %v1738 = vld [vmem:[%s1699 + $0x130] sm:$0xff]
        %v1739 = vld [vmem:[%s1699 + $0x138] sm:$0xff]
        %v1740 = vld [vmem:[%s1699 + $0x140] sm:$0xff]
        %v1741 = vld [vmem:[%s1699 + $0x148] sm:$0xff]
        %v1742 = vld [vmem:[%s1699 + $0x150] sm:$0xff]
        %v1743 = vld [vmem:[%s1699 + $0x158] sm:$0xff]
        %v1744 = vld [vmem:[%s1699 + $0x160] sm:$0xff]
        %v1745 = vld [vmem:[%s1699 + $0x168] sm:$0xff]
        %v1746 = vld [vmem:[%s1699 + $0x170] sm:$0xff]
        %v1747 = vld [vmem:[%s1699 + $0x178] sm:$0xff]
        %v1748 = vld [vmem:[%s1699 + $0x180] sm:$0xff]
        %v1749 = vld [vmem:[%s1699 + $0x188] sm:$0xff]
        %v1750 = vld [vmem:[%s1699 + $0x190] sm:$0xff]
        %v1751 = vld [vmem:[%s1699 + $0x198] sm:$0xff]
        %v1752 = vld [vmem:[%s1699 + $0x1a0] sm:$0xff]
        %v1753 = vld [vmem:[%s1699 + $0x1a8] sm:$0xff]
        %v1754 = vld [vmem:[%s1699 + $0x1b0] sm:$0xff]
        %v1755 = vld [vmem:[%s1699 + $0x1b8] sm:$0xff]
        %v1756 = vld [vmem:[%s1699 + $0x1c0] sm:$0xff]
        %v1757 = vld [vmem:[%s1699 + $0x1c8] sm:$0xff]
        %v1758 = vld [vmem:[%s1699 + $0x1d0] sm:$0xff]
        %v1759 = vld [vmem:[%s1699 + $0x1d8] sm:$0xff]
        %v1760 = vld [vmem:[%s1699 + $0x1e0] sm:$0xff]
        %v1761 = vld [vmem:[%s1699 + $0x1e8] sm:$0xff]
        %v1762 = vld [vmem:[%s1699 + $0x1f0] sm:$0xff]
        %v1763 = vld [vmem:[%s1699 + $0x1f8] sm:$0xff]
        %v1764 = vld [vmem:[%s1699 + $0x200] sm:$0xff]
        %v1765 = vld [vmem:[%s1699 + $0x208] sm:$0xff]
        %v1766 = vld [vmem:[%s1699 + $0x210] sm:$0xff]
        %v1767 = vld [vmem:[%s1699 + $0x218] sm:$0xff]
        %v1768 = vld [vmem:[%s1699 + $0x220] sm:$0xff]
        %v1769 = vld [vmem:[%s1699 + $0x228] sm:$0xff]
        %v1770 = vld [vmem:[%s1699 + $0x230] sm:$0xff]
        %v1771 = vld [vmem:[%s1699 + $0x238] sm:$0xff]
        %v1772 = vld [vmem:[%s1699 + $0x240] sm:$0xff]
        %v1773 = vld [vmem:[%s1699 + $0x248] sm:$0xff]
        %v1774 = vld [vmem:[%s1699 + $0x250] sm:$0xff]
        %v1775 = vld [vmem:[%s1699 + $0x258] sm:$0xff]
        %v1776 = vld [vmem:[%s1699 + $0x260] sm:$0xff]
        %v1777 = vld [vmem:[%s1699 + $0x268] sm:$0xff]
        %v1778 = vld [vmem:[%s1699 + $0x270] sm:$0xff]
        %v1779 = vld [vmem:[%s1699 + $0x278] sm:$0xff]
        %v1780 = vld [vmem:[%s1699 + $0x280] sm:$0xff]
        %v1781 = vld [vmem:[%s1699 + $0x288] sm:$0xff]
        %v1782 = vld [vmem:[%s1699 + $0x290] sm:$0xff]
        %v1783 = vld [vmem:[%s1699 + $0x298] sm:$0xff]
        %v1784 = vld [vmem:[%s1699 + $0x2a0] sm:$0xff]
        %v1785 = vld [vmem:[%s1699 + $0x2a8] sm:$0xff]
        %v1786 = vld [vmem:[%s1699 + $0x2b0] sm:$0xff]
        %v1787 = vld [vmem:[%s1699 + $0x2b8] sm:$0xff]
        %v1788 = vld [vmem:[%s1699 + $0x2c0] sm:$0xff]
        %v1789 = vld [vmem:[%s1699 + $0x2c8] sm:$0xff]
        %v1790 = vld [vmem:[%s1699 + $0x2d0] sm:$0xff]
        %v1791 = vld [vmem:[%s1699 + $0x2d8] sm:$0xff]
        %v1792 = vld [vmem:[%s1699 + $0x2e0] sm:$0xff]
        %v1793 = vld [vmem:[%s1699 + $0x2e8] sm:$0xff]
        %v1794 = vld [vmem:[%s1699 + $0x2f0] sm:$0xff]
        %v1795 = vld [vmem:[%s1699 + $0x2f8] sm:$0xff]
        %v1796 = vld [vmem:[%s1699 + $0x300] sm:$0xff]
        %v1797 = vld [vmem:[%s1699 + $0x308] sm:$0xff]
        %v1798 = vld [vmem:[%s1699 + $0x310] sm:$0xff]
        %v1799 = vld [vmem:[%s1699 + $0x318] sm:$0xff]
        %v1800 = vld [vmem:[%s1699 + $0x320] sm:$0xff]
        %v1801 = vld [vmem:[%s1699 + $0x328] sm:$0xff]
        %v1802 = vld [vmem:[%s1699 + $0x330] sm:$0xff]
        %v1803 = vld [vmem:[%s1699 + $0x338] sm:$0xff]
        %v1804 = vld [vmem:[%s1699 + $0x340] sm:$0xff]
        %v1805 = vld [vmem:[%s1699 + $0x348] sm:$0xff]
        %v1806 = vld [vmem:[%s1699 + $0x350] sm:$0xff]
        %v1807 = vld [vmem:[%s1699 + $0x358] sm:$0xff]
        %v1808 = vld [vmem:[%s1699 + $0x360] sm:$0xff]
        %v1809 = vld [vmem:[%s1699 + $0x368] sm:$0xff]
        %v1810 = vld [vmem:[%s1699 + $0x370] sm:$0xff]
        %v1811 = vld [vmem:[%s1699 + $0x378] sm:$0xff]
        %v1924 = vunpack.c.l.b16 %v1700
        %v1925 = vunpack.c.h.b16 %v1700
        %v1926 = vunpack.c.l.b16 %v1701
        %v1927 = vunpack.c.h.b16 %v1701
        %v1928 = vunpack.c.l.b16 %v1702
        %v1929 = vunpack.c.h.b16 %v1702
        %v1930 = vunpack.c.l.b16 %v1703
        %v1931 = vunpack.c.h.b16 %v1703
        %v1932 = vunpack.c.l.b16 %v1704
        %v1933 = vunpack.c.h.b16 %v1704
        %v1934 = vunpack.c.l.b16 %v1705
        %v1935 = vunpack.c.h.b16 %v1705
        %v1936 = vunpack.c.l.b16 %v1706
        %v1937 = vunpack.c.h.b16 %v1706
        %v1938 = vunpack.c.l.b16 %v1707
        %v1939 = vunpack.c.h.b16 %v1707
        %v1940 = vunpack.c.l.b16 %v1708
        %v1941 = vunpack.c.h.b16 %v1708
        %v1942 = vunpack.c.l.b16 %v1709
        %v1943 = vunpack.c.h.b16 %v1709
        %v1944 = vunpack.c.l.b16 %v1710
        %v1945 = vunpack.c.h.b16 %v1710
        %v1946 = vunpack.c.l.b16 %v1711
        %v1947 = vunpack.c.h.b16 %v1711
        %v1948 = vunpack.c.l.b16 %v1712
        %v1949 = vunpack.c.h.b16 %v1712
        %v1950 = vunpack.c.l.b16 %v1713
        %v1951 = vunpack.c.h.b16 %v1713
        %v1952 = vunpack.c.l.b16 %v1714
        %v1953 = vunpack.c.h.b16 %v1714
        %v1954 = vunpack.c.l.b16 %v1715
        %v1955 = vunpack.c.h.b16 %v1715
        %v1956 = vunpack.c.l.b16 %v1716
        %v1957 = vunpack.c.h.b16 %v1716
        %v1958 = vunpack.c.l.b16 %v1717
        %v1959 = vunpack.c.h.b16 %v1717
        %v1960 = vunpack.c.l.b16 %v1718
        %v1961 = vunpack.c.h.b16 %v1718
        %v1962 = vunpack.c.l.b16 %v1719
        %v1963 = vunpack.c.h.b16 %v1719
        %v1964 = vunpack.c.l.b16 %v1720
        %v1965 = vunpack.c.h.b16 %v1720
        %v1966 = vunpack.c.l.b16 %v1721
        %v1967 = vunpack.c.h.b16 %v1721
        %v1968 = vunpack.c.l.b16 %v1722
        %v1969 = vunpack.c.h.b16 %v1722
        %v1970 = vunpack.c.l.b16 %v1723
        %v1971 = vunpack.c.h.b16 %v1723
        %v1972 = vunpack.c.l.b16 %v1724
        %v1973 = vunpack.c.h.b16 %v1724
        %v1974 = vunpack.c.l.b16 %v1725
        %v1975 = vunpack.c.h.b16 %v1725
        %v1976 = vunpack.c.l.b16 %v1726
        %v1977 = vunpack.c.h.b16 %v1726
        %v1978 = vunpack.c.l.b16 %v1727
        %v1979 = vunpack.c.h.b16 %v1727
        %v1980 = vunpack.c.l.b16 %v1728
        %v1981 = vunpack.c.h.b16 %v1728
        %v1982 = vunpack.c.l.b16 %v1729
        %v1983 = vunpack.c.h.b16 %v1729
        %v1984 = vunpack.c.l.b16 %v1730
        %v1985 = vunpack.c.h.b16 %v1730
        %v1986 = vunpack.c.l.b16 %v1731
        %v1987 = vunpack.c.h.b16 %v1731
        %v1988 = vunpack.c.l.b16 %v1732
        %v1989 = vunpack.c.h.b16 %v1732
        %v1990 = vunpack.c.l.b16 %v1733
        %v1991 = vunpack.c.h.b16 %v1733
        %v1992 = vunpack.c.l.b16 %v1734
        %v1993 = vunpack.c.h.b16 %v1734
        %v1994 = vunpack.c.l.b16 %v1735
        %v1995 = vunpack.c.h.b16 %v1735
        %v1996 = vunpack.c.l.b16 %v1736
        %v1997 = vunpack.c.h.b16 %v1736
        %v1998 = vunpack.c.l.b16 %v1737
        %v1999 = vunpack.c.h.b16 %v1737
        %v2000 = vunpack.c.l.b16 %v1738
        %v2001 = vunpack.c.h.b16 %v1738
        %v2002 = vunpack.c.l.b16 %v1739
        %v2003 = vunpack.c.h.b16 %v1739
        %v2004 = vunpack.c.l.b16 %v1740
        %v2005 = vunpack.c.h.b16 %v1740
        %v2006 = vunpack.c.l.b16 %v1741
        %v2007 = vunpack.c.h.b16 %v1741
        %v2008 = vunpack.c.l.b16 %v1742
        %v2009 = vunpack.c.h.b16 %v1742
        %v2010 = vunpack.c.l.b16 %v1743
        %v2011 = vunpack.c.h.b16 %v1743
        %v2012 = vunpack.c.l.b16 %v1744
        %v2013 = vunpack.c.h.b16 %v1744
        %v2014 = vunpack.c.l.b16 %v1745
        %v2015 = vunpack.c.h.b16 %v1745
        %v2016 = vunpack.c.l.b16 %v1746
        %v2017 = vunpack.c.h.b16 %v1746
        %v2018 = vunpack.c.l.b16 %v1747
        %v2019 = vunpack.c.h.b16 %v1747
        %v2020 = vunpack.c.l.b16 %v1748
        %v2021 = vunpack.c.h.b16 %v1748
        %v2022 = vunpack.c.l.b16 %v1749
        %v2023 = vunpack.c.h.b16 %v1749
        %v2024 = vunpack.c.l.b16 %v1750
        %v2025 = vunpack.c.h.b16 %v1750
        %v2026 = vunpack.c.l.b16 %v1751
        %v2027 = vunpack.c.h.b16 %v1751
        %v2028 = vunpack.c.l.b16 %v1752
        %v2029 = vunpack.c.h.b16 %v1752
        %v2030 = vunpack.c.l.b16 %v1753
        %v2031 = vunpack.c.h.b16 %v1753
        %v2032 = vunpack.c.l.b16 %v1754
        %v2033 = vunpack.c.h.b16 %v1754
        %v2034 = vunpack.c.l.b16 %v1755
        %v2035 = vunpack.c.h.b16 %v1755
        %v2036 = vunpack.c.l.b16 %v1756
        %v2037 = vunpack.c.h.b16 %v1756
        %v2038 = vunpack.c.l.b16 %v1757
        %v2039 = vunpack.c.h.b16 %v1757
        %v2040 = vunpack.c.l.b16 %v1758
        %v2041 = vunpack.c.h.b16 %v1758
        %v2042 = vunpack.c.l.b16 %v1759
        %v2043 = vunpack.c.h.b16 %v1759
        %v2044 = vunpack.c.l.b16 %v1760
        %v2045 = vunpack.c.h.b16 %v1760
        %v2046 = vunpack.c.l.b16 %v1761
        %v2047 = vunpack.c.h.b16 %v1761
        %v2048 = vunpack.c.l.b16 %v1762
        %v2049 = vunpack.c.h.b16 %v1762
        %v2050 = vunpack.c.l.b16 %v1763
        %v2051 = vunpack.c.h.b16 %v1763
        %v2052 = vunpack.c.l.b16 %v1764
        %v2053 = vunpack.c.h.b16 %v1764
        %v2054 = vunpack.c.l.b16 %v1765
        %v2055 = vunpack.c.h.b16 %v1765
        %v2056 = vunpack.c.l.b16 %v1766
        %v2057 = vunpack.c.h.b16 %v1766
        %v2058 = vunpack.c.l.b16 %v1767
        %v2059 = vunpack.c.h.b16 %v1767
        %v2060 = vunpack.c.l.b16 %v1768
        %v2061 = vunpack.c.h.b16 %v1768
        %v2062 = vunpack.c.l.b16 %v1769
        %v2063 = vunpack.c.h.b16 %v1769
        %v2064 = vunpack.c.l.b16 %v1770
        %v2065 = vunpack.c.h.b16 %v1770
        %v2066 = vunpack.c.l.b16 %v1771
        %v2067 = vunpack.c.h.b16 %v1771
        %v2068 = vunpack.c.l.b16 %v1772
        %v2069 = vunpack.c.h.b16 %v1772
        %v2070 = vunpack.c.l.b16 %v1773
        %v2071 = vunpack.c.h.b16 %v1773
        %v2072 = vunpack.c.l.b16 %v1774
        %v2073 = vunpack.c.h.b16 %v1774
        %v2074 = vunpack.c.l.b16 %v1775
        %v2075 = vunpack.c.h.b16 %v1775
        %v2076 = vunpack.c.l.b16 %v1776
        %v2077 = vunpack.c.h.b16 %v1776
        %v2078 = vunpack.c.l.b16 %v1777
        %v2079 = vunpack.c.h.b16 %v1777
        %v2080 = vunpack.c.l.b16 %v1778
        %v2081 = vunpack.c.h.b16 %v1778
        %v2082 = vunpack.c.l.b16 %v1779
        %v2083 = vunpack.c.h.b16 %v1779
        %v2084 = vunpack.c.l.b16 %v1780
        %v2085 = vunpack.c.h.b16 %v1780
        %v2086 = vunpack.c.l.b16 %v1781
        %v2087 = vunpack.c.h.b16 %v1781
        %v2088 = vunpack.c.l.b16 %v1782
        %v2089 = vunpack.c.h.b16 %v1782
        %v2090 = vunpack.c.l.b16 %v1783
        %v2091 = vunpack.c.h.b16 %v1783
        %v2092 = vunpack.c.l.b16 %v1784
        %v2093 = vunpack.c.h.b16 %v1784
        %v2094 = vunpack.c.l.b16 %v1785
        %v2095 = vunpack.c.h.b16 %v1785
        %v2096 = vunpack.c.l.b16 %v1786
        %v2097 = vunpack.c.h.b16 %v1786
        %v2098 = vunpack.c.l.b16 %v1787
        %v2099 = vunpack.c.h.b16 %v1787
        %v2100 = vunpack.c.l.b16 %v1788
        %v2101 = vunpack.c.h.b16 %v1788
        %v2102 = vunpack.c.l.b16 %v1789
        %v2103 = vunpack.c.h.b16 %v1789
        %v2104 = vunpack.c.l.b16 %v1790
        %v2105 = vunpack.c.h.b16 %v1790
        %v2106 = vunpack.c.l.b16 %v1791
        %v2107 = vunpack.c.h.b16 %v1791
        %v2108 = vunpack.c.l.b16 %v1792
        %v2109 = vunpack.c.h.b16 %v1792
        %v2110 = vunpack.c.l.b16 %v1793
        %v2111 = vunpack.c.h.b16 %v1793
        %v2112 = vunpack.c.l.b16 %v1794
        %v2113 = vunpack.c.h.b16 %v1794
        %v2114 = vunpack.c.l.b16 %v1795
        %v2115 = vunpack.c.h.b16 %v1795
        %v2116 = vunpack.c.l.b16 %v1796
        %v2117 = vunpack.c.h.b16 %v1796
        %v2118 = vunpack.c.l.b16 %v1797
        %v2119 = vunpack.c.h.b16 %v1797
        %v2120 = vunpack.c.l.b16 %v1798
        %v2121 = vunpack.c.h.b16 %v1798
        %v2122 = vunpack.c.l.b16 %v1799
        %v2123 = vunpack.c.h.b16 %v1799
        %v2124 = vunpack.c.l.b16 %v1800
        %v2125 = vunpack.c.h.b16 %v1800
        %v2126 = vunpack.c.l.b16 %v1801
        %v2127 = vunpack.c.h.b16 %v1801
        %v2128 = vunpack.c.l.b16 %v1802
        %v2129 = vunpack.c.h.b16 %v1802
        %v2130 = vunpack.c.l.b16 %v1803
        %v2131 = vunpack.c.h.b16 %v1803
        %v2132 = vunpack.c.l.b16 %v1804
        %v2133 = vunpack.c.h.b16 %v1804
        %v2134 = vunpack.c.l.b16 %v1805
        %v2135 = vunpack.c.h.b16 %v1805
        %v2136 = vunpack.c.l.b16 %v1806
        %v2137 = vunpack.c.h.b16 %v1806
        %v2138 = vunpack.c.l.b16 %v1807
        %v2139 = vunpack.c.h.b16 %v1807
        %v2140 = vunpack.c.l.b16 %v1808
        %v2141 = vunpack.c.h.b16 %v1808
        %v2142 = vunpack.c.l.b16 %v1809
        %v2143 = vunpack.c.h.b16 %v1809
        %v2144 = vunpack.c.l.b16 %v1810
        %v2145 = vunpack.c.h.b16 %v1810
        %v2146 = vunpack.c.l.b16 %v1811
        %v2147 = vunpack.c.h.b16 %v1811
        %v2148 = vpack.c.b16 %v1928, %v1924
        %v2149 = vpack.c.b16 %v1929, %v1925
        %v2150 = vpack.c.b16 %v1930, %v1926
        %v2151 = vpack.c.b16 %v1931, %v1927
        %v2152 = vpack.c.b16 %v1936, %v1932
        %v2153 = vpack.c.b16 %v1937, %v1933
        %v2154 = vpack.c.b16 %v1938, %v1934
        %v2155 = vpack.c.b16 %v1939, %v1935
        %v2156 = vpack.c.b16 %v1944, %v1940
        %v2157 = vpack.c.b16 %v1945, %v1941
        %v2158 = vpack.c.b16 %v1946, %v1942
        %v2159 = vpack.c.b16 %v1947, %v1943
        %v2160 = vpack.c.b16 %v1952, %v1948
        %v2161 = vpack.c.b16 %v1953, %v1949
        %v2162 = vpack.c.b16 %v1954, %v1950
        %v2163 = vpack.c.b16 %v1955, %v1951
        %v2164 = vpack.c.b16 %v1960, %v1956
        %v2165 = vpack.c.b16 %v1961, %v1957
        %v2166 = vpack.c.b16 %v1962, %v1958
        %v2167 = vpack.c.b16 %v1963, %v1959
        %v2168 = vpack.c.b16 %v1968, %v1964
        %v2169 = vpack.c.b16 %v1969, %v1965
        %v2170 = vpack.c.b16 %v1970, %v1966
        %v2171 = vpack.c.b16 %v1971, %v1967
        %v2172 = vpack.c.b16 %v1976, %v1972
        %v2173 = vpack.c.b16 %v1977, %v1973
        %v2174 = vpack.c.b16 %v1978, %v1974
        %v2175 = vpack.c.b16 %v1979, %v1975
        %v2176 = vpack.c.b16 %v1984, %v1980
        %v2177 = vpack.c.b16 %v1985, %v1981
        %v2178 = vpack.c.b16 %v1986, %v1982
        %v2179 = vpack.c.b16 %v1987, %v1983
        %v2180 = vpack.c.b16 %v1992, %v1988
        %v2181 = vpack.c.b16 %v1993, %v1989
        %v2182 = vpack.c.b16 %v1994, %v1990
        %v2183 = vpack.c.b16 %v1995, %v1991
        %v2184 = vpack.c.b16 %v2000, %v1996
        %v2185 = vpack.c.b16 %v2001, %v1997
        %v2186 = vpack.c.b16 %v2002, %v1998
        %v2187 = vpack.c.b16 %v2003, %v1999
        %v2188 = vpack.c.b16 %v2008, %v2004
        %v2189 = vpack.c.b16 %v2009, %v2005
        %v2190 = vpack.c.b16 %v2010, %v2006
        %v2191 = vpack.c.b16 %v2011, %v2007
        %v2192 = vpack.c.b16 %v2016, %v2012
        %v2193 = vpack.c.b16 %v2017, %v2013
        %v2194 = vpack.c.b16 %v2018, %v2014
        %v2195 = vpack.c.b16 %v2019, %v2015
        %v2196 = vpack.c.b16 %v2024, %v2020
        %v2197 = vpack.c.b16 %v2025, %v2021
        %v2198 = vpack.c.b16 %v2026, %v2022
        %v2199 = vpack.c.b16 %v2027, %v2023
        %v2200 = vpack.c.b16 %v2032, %v2028
        %v2201 = vpack.c.b16 %v2033, %v2029
        %v2202 = vpack.c.b16 %v2034, %v2030
        %v2203 = vpack.c.b16 %v2035, %v2031
        %v2204 = vpack.c.b16 %v2040, %v2036
        %v2205 = vpack.c.b16 %v2041, %v2037
        %v2206 = vpack.c.b16 %v2042, %v2038
        %v2207 = vpack.c.b16 %v2043, %v2039
        %v2208 = vpack.c.b16 %v2048, %v2044
        %v2209 = vpack.c.b16 %v2049, %v2045
        %v2210 = vpack.c.b16 %v2050, %v2046
        %v2211 = vpack.c.b16 %v2051, %v2047
        %v2212 = vpack.c.b16 %v2056, %v2052
        %v2213 = vpack.c.b16 %v2057, %v2053
        %v2214 = vpack.c.b16 %v2058, %v2054
        %v2215 = vpack.c.b16 %v2059, %v2055
        %v2216 = vpack.c.b16 %v2064, %v2060
        %v2217 = vpack.c.b16 %v2065, %v2061
        %v2218 = vpack.c.b16 %v2066, %v2062
        %v2219 = vpack.c.b16 %v2067, %v2063
        %v2220 = vpack.c.b16 %v2072, %v2068
        %v2221 = vpack.c.b16 %v2073, %v2069
        %v2222 = vpack.c.b16 %v2074, %v2070
        %v2223 = vpack.c.b16 %v2075, %v2071
        %v2224 = vpack.c.b16 %v2080, %v2076
        %v2225 = vpack.c.b16 %v2081, %v2077
        %v2226 = vpack.c.b16 %v2082, %v2078
        %v2227 = vpack.c.b16 %v2083, %v2079
        %v2228 = vpack.c.b16 %v2088, %v2084
        %v2229 = vpack.c.b16 %v2089, %v2085
        %v2230 = vpack.c.b16 %v2090, %v2086
        %v2231 = vpack.c.b16 %v2091, %v2087
        %v2232 = vpack.c.b16 %v2096, %v2092
        %v2233 = vpack.c.b16 %v2097, %v2093
        %v2234 = vpack.c.b16 %v2098, %v2094
        %v2235 = vpack.c.b16 %v2099, %v2095
        %v2236 = vpack.c.b16 %v2104, %v2100
        %v2237 = vpack.c.b16 %v2105, %v2101
        %v2238 = vpack.c.b16 %v2106, %v2102
        %v2239 = vpack.c.b16 %v2107, %v2103
        %v2240 = vpack.c.b16 %v2112, %v2108
        %v2241 = vpack.c.b16 %v2113, %v2109
        %v2242 = vpack.c.b16 %v2114, %v2110
        %v2243 = vpack.c.b16 %v2115, %v2111
        %v2244 = vpack.c.b16 %v2120, %v2116
        %v2245 = vpack.c.b16 %v2121, %v2117
        %v2246 = vpack.c.b16 %v2122, %v2118
        %v2247 = vpack.c.b16 %v2123, %v2119
        %v2248 = vpack.c.b16 %v2128, %v2124
        %v2249 = vpack.c.b16 %v2129, %v2125
        %v2250 = vpack.c.b16 %v2130, %v2126
        %v2251 = vpack.c.b16 %v2131, %v2127
        %v2252 = vpack.c.b16 %v2136, %v2132
        %v2253 = vpack.c.b16 %v2137, %v2133
        %v2254 = vpack.c.b16 %v2138, %v2134
        %v2255 = vpack.c.b16 %v2139, %v2135
        %v2256 = vpack.c.b16 %v2144, %v2140
        %v2257 = vpack.c.b16 %v2145, %v2141
        %v2258 = vpack.c.b16 %v2146, %v2142
        %v2259 = vpack.c.b16 %v2147, %v2143
        %vm2372 = vcmask 523264
        %v2374 = vsel %vm2372, %v1698, 0
        %2376 = vmatprep.subr.bf16.mxu0 %v2149
        %2377 = vmatpush1.bf16.msra.mxu0 %v2148
        %2378 = vmatprep.subr.bf16.mxu0 %v2153
        %2379 = vmatpush1.bf16.msra.mxu0 %v2152
        %2380 = vmatprep.subr.bf16.mxu0 %v2157
        %2381 = vmatpush1.bf16.msra.mxu0 %v2156
        %2382 = vmatprep.subr.bf16.mxu0 %v2161
        %2383 = vmatpush1.bf16.msra.mxu0 %v2160
        %2384 = vmatprep.subr.bf16.mxu0 %v2165
        %2385 = vmatpush1.bf16.msra.mxu0 %v2164
        %2386 = vmatprep.subr.bf16.mxu0 %v2169
        %2387 = vmatpush1.bf16.msra.mxu0 %v2168
        %2388 = vmatprep.subr.bf16.mxu0 %v2173
        %2389 = vmatpush1.bf16.msra.mxu0 %v2172
        %2390 = vmatprep.subr.bf16.mxu0 %v2177
        %2391 = vmatpush1.bf16.msra.mxu0 %v2176
        %2392 = vmatprep.subr.bf16.mxu0 %v2181
        %2393 = vmatpush1.bf16.msra.mxu0 %v2180
        %2394 = vmatprep.subr.bf16.mxu0 %v2185
        %2395 = vmatpush1.bf16.msra.mxu0 %v2184
        %2396 = vmatprep.subr.bf16.mxu0 %v2189
        %2397 = vmatpush1.bf16.msra.mxu0 %v2188
        %2398 = vmatprep.subr.bf16.mxu0 %v2193
        %2399 = vmatpush1.bf16.msra.mxu0 %v2192
        %2400 = vmatprep.subr.bf16.mxu0 %v2197
        %2401 = vmatpush1.bf16.msra.mxu0 %v2196
        %2402 = vmatprep.subr.bf16.mxu0 %v2201
        %2403 = vmatpush1.bf16.msra.mxu0 %v2200
        %2404 = vmatprep.subr.bf16.mxu0 %v2205
        %2405 = vmatpush1.bf16.msra.mxu0 %v2204
        %2406 = vmatprep.subr.bf16.mxu0 %v2209
        %2407 = vmatpush1.bf16.msra.mxu0 %v2208
        %2408 = vmatprep.mubr.bf16.mxu0 %v1696
        %2409 = vmatmul.mubr.bf16.gmra.mrb[0].mxu0 %v1695
        %v2410 = vpop.f32.mrb[0].mxu0
        %v2411 = vadd.f32 0.0, %v2410
        %v2412 = vpop.f32.mrb[0].mxu0
        %v2413 = vadd.f32 0.0, %v2412
        %v2414 = vpop.f32.mrb[0].mxu0
        %v2415 = vpop.f32.mrb[0].mxu0
        %2416 = vdwg.mxu0
        %2417 = vmatprep.subr.bf16.mxu0 %v2213
        %2418 = vmatpush1.bf16.msra.mxu0 %v2212
        %2419 = vmatprep.subr.bf16.mxu0 %v2217
        %2420 = vmatpush1.bf16.msra.mxu0 %v2216
        %2421 = vmatprep.subr.bf16.mxu0 %v2221
        %2422 = vmatpush1.bf16.msra.mxu0 %v2220
        %2423 = vmatprep.subr.bf16.mxu0 %v2225
        %2424 = vmatpush1.bf16.msra.mxu0 %v2224
        %2425 = vmatprep.subr.bf16.mxu0 %v2229
        %2426 = vmatpush1.bf16.msra.mxu0 %v2228
        %2427 = vmatprep.subr.bf16.mxu0 %v2233
        %2428 = vmatpush1.bf16.msra.mxu0 %v2232
        %2429 = vmatprep.subr.bf16.mxu0 %v2237
        %2430 = vmatpush1.bf16.msra.mxu0 %v2236
        %2431 = vmatprep.subr.bf16.mxu0 %v2241
        %2432 = vmatpush1.bf16.msra.mxu0 %v2240
        %2433 = vmatprep.subr.bf16.mxu0 %v2245
        %2434 = vmatpush1.bf16.msra.mxu0 %v2244
        %2435 = vmatprep.subr.bf16.mxu0 %v2249
        %2436 = vmatpush1.bf16.msra.mxu0 %v2248
        %2437 = vmatprep.subr.bf16.mxu0 %v2253
        %2438 = vmatpush1.bf16.msra.mxu0 %v2252
        %2439 = vmatprep.subr.bf16.mxu0 %v2257
        %2440 = vmatpush1.bf16.msra.mxu0 %v2256
        %2441 = vmatprep.subr.bf16.mxu0 0
        %2442 = vmatpush1.bf16.msra.mxu0 0
        %2443 = vmatprep.subr.bf16.mxu0 0
        %2444 = vmatpush1.bf16.msra.mxu0 0
        %2445 = vmatprep.subr.bf16.mxu0 0
        %2446 = vmatpush1.bf16.msra.mxu0 0
        %2447 = vmatprep.subr.bf16.mxu0 0
        %2448 = vmatpush1.bf16.msra.mxu0 0
        %2449 = vmatprep.mubr.bf16.mxu0 %v2374
        %2450 = vmatmul.mubr.bf16.gmra.mrb[0].mxu0 %v1697
        %v2451 = vpop.f32.mrb[0].mxu0
        %v2452 = vadd.f32 %v2411, %v2451
        %v2453 = vpop.f32.mrb[0].mxu0
        %v2454 = vadd.f32 %v2413, %v2453
        %v2455 = vpop.f32.mrb[0].mxu0
        %v2456 = vpop.f32.mrb[0].mxu0
        %2457 = vdwg.mxu0
        %2458 = vmatprep.subr.bf16.mxu0 %v2151
        %2459 = vmatpush1.bf16.msra.mxu0 %v2150
        %2460 = vmatprep.subr.bf16.mxu0 %v2155
        %2461 = vmatpush1.bf16.msra.mxu0 %v2154
        %2462 = vmatprep.subr.bf16.mxu0 %v2159
        %2463 = vmatpush1.bf16.msra.mxu0 %v2158
        %2464 = vmatprep.subr.bf16.mxu0 %v2163
        %2465 = vmatpush1.bf16.msra.mxu0 %v2162
        %2466 = vmatprep.subr.bf16.mxu0 %v2167
        %2467 = vmatpush1.bf16.msra.mxu0 %v2166
        %2468 = vmatprep.subr.bf16.mxu0 %v2171
        %2469 = vmatpush1.bf16.msra.mxu0 %v2170
        %2470 = vmatprep.subr.bf16.mxu0 %v2175
        %2471 = vmatpush1.bf16.msra.mxu0 %v2174
        %2472 = vmatprep.subr.bf16.mxu0 %v2179
        %2473 = vmatpush1.bf16.msra.mxu0 %v2178
        %2474 = vmatprep.subr.bf16.mxu0 %v2183
        %2475 = vmatpush1.bf16.msra.mxu0 %v2182
        %2476 = vmatprep.subr.bf16.mxu0 %v2187
        %2477 = vmatpush1.bf16.msra.mxu0 %v2186
        %2478 = vmatprep.subr.bf16.mxu0 %v2191
        %2479 = vmatpush1.bf16.msra.mxu0 %v2190
        %2480 = vmatprep.subr.bf16.mxu0 %v2195
        %2481 = vmatpush1.bf16.msra.mxu0 %v2194
        %2482 = vmatprep.subr.bf16.mxu0 %v2199
        %2483 = vmatpush1.bf16.msra.mxu0 %v2198
        %2484 = vmatprep.subr.bf16.mxu0 %v2203
        %2485 = vmatpush1.bf16.msra.mxu0 %v2202
        %2486 = vmatprep.subr.bf16.mxu0 %v2207
        %2487 = vmatpush1.bf16.msra.mxu0 %v2206
        %2488 = vmatprep.subr.bf16.mxu0 %v2211
        %2489 = vmatpush1.bf16.msra.mxu0 %v2210
        %2490 = vmatprep.mubr.bf16.mxu0 %v1696
        %2491 = vmatmul.mubr.bf16.gmra.mrb[0].mxu0 %v1695
        %v2492 = vpop.f32.mrb[0].mxu0
        %v2493 = vadd.f32 0.0, %v2492
        %v2494 = vpop.f32.mrb[0].mxu0
        %v2495 = vadd.f32 0.0, %v2494
        %v2496 = vpop.f32.mrb[0].mxu0
        %v2497 = vpop.f32.mrb[0].mxu0
        %2498 = vdwg.mxu0
        %2499 = vmatprep.subr.bf16.mxu0 %v2215
        %2500 = vmatpush1.bf16.msra.mxu0 %v2214
        %2501 = vmatprep.subr.bf16.mxu0 %v2219
        %2502 = vmatpush1.bf16.msra.mxu0 %v2218
        %2503 = vmatprep.subr.bf16.mxu0 %v2223
        %2504 = vmatpush1.bf16.msra.mxu0 %v2222
        %2505 = vmatprep.subr.bf16.mxu0 %v2227
        %2506 = vmatpush1.bf16.msra.mxu0 %v2226
        %2507 = vmatprep.subr.bf16.mxu0 %v2231
        %2508 = vmatpush1.bf16.msra.mxu0 %v2230
        %2509 = vmatprep.subr.bf16.mxu0 %v2235
        %2510 = vmatpush1.bf16.msra.mxu0 %v2234
        %2511 = vmatprep.subr.bf16.mxu0 %v2239
        %2512 = vmatpush1.bf16.msra.mxu0 %v2238
        %2513 = vmatprep.subr.bf16.mxu0 %v2243
        %2514 = vmatpush1.bf16.msra.mxu0 %v2242
        %2515 = vmatprep.subr.bf16.mxu0 %v2247
        %2516 = vmatpush1.bf16.msra.mxu0 %v2246
        %2517 = vmatprep.subr.bf16.mxu0 %v2251
        %2518 = vmatpush1.bf16.msra.mxu0 %v2250
        %2519 = vmatprep.subr.bf16.mxu0 %v2255
        %2520 = vmatpush1.bf16.msra.mxu0 %v2254
        %2521 = vmatprep.subr.bf16.mxu0 %v2259
        %2522 = vmatpush1.bf16.msra.mxu0 %v2258
        %2523 = vmatprep.subr.bf16.mxu0 0
        %2524 = vmatpush1.bf16.msra.mxu0 0
        %2525 = vmatprep.subr.bf16.mxu0 0
        %2526 = vmatpush1.bf16.msra.mxu0 0
        %2527 = vmatprep.subr.bf16.mxu0 0
        %2528 = vmatpush1.bf16.msra.mxu0 0
        %2529 = vmatprep.subr.bf16.mxu0 0
        %2530 = vmatpush1.bf16.msra.mxu0 0
        %2531 = vmatprep.mubr.bf16.mxu0 %v2374
        %2532 = vmatmul.mubr.bf16.gmra.mrb[0].mxu0 %v1697
        %v2533 = vpop.f32.mrb[0].mxu0
        %v2534 = vadd.f32 %v2493, %v2533
        %v2535 = vpop.f32.mrb[0].mxu0
        %v2536 = vadd.f32 %v2495, %v2535
        %v2537 = vpop.f32.mrb[0].mxu0
        %v2538 = vpop.f32.mrb[0].mxu0
        %2539 = vdwg.mxu0
        %v2652 = vunpack.c.l.b16 %v1496
        %v2653 = vunpack.c.h.b16 %v1496
        %v2654 = vunpack.c.l.b16 %v1497
        %v2655 = vunpack.c.h.b16 %v1497
        %v2656 = vunpack.c.l.b16 %v1498
        %v2657 = vunpack.c.h.b16 %v1498
        %v2658 = vunpack.c.l.b16 %v1499
        %v2659 = vunpack.c.h.b16 %v1499
        %v2660 = vunpack.c.l.b16 %v1500
        %v2661 = vunpack.c.h.b16 %v1500
        %v2662 = vunpack.c.l.b16 %v1501
        %v2663 = vunpack.c.h.b16 %v1501
        %v2664 = vunpack.c.l.b16 %v1502
        %v2665 = vunpack.c.h.b16 %v1502
        %v2666 = vunpack.c.l.b16 %v1503
        %v2667 = vunpack.c.h.b16 %v1503
        %v2668 = vunpack.c.l.b16 %v1504
        %v2669 = vunpack.c.h.b16 %v1504
        %v2670 = vunpack.c.l.b16 %v1505
        %v2671 = vunpack.c.h.b16 %v1505
        %v2672 = vunpack.c.l.b16 %v1506
        %v2673 = vunpack.c.h.b16 %v1506
        %v2674 = vunpack.c.l.b16 %v1507
        %v2675 = vunpack.c.h.b16 %v1507
        %v2676 = vunpack.c.l.b16 %v1508
        %v2677 = vunpack.c.h.b16 %v1508
        %v2678 = vunpack.c.l.b16 %v1509
        %v2679 = vunpack.c.h.b16 %v1509
        %v2680 = vunpack.c.l.b16 %v1510
        %v2681 = vunpack.c.h.b16 %v1510
        %v2682 = vunpack.c.l.b16 %v1511
        %v2683 = vunpack.c.h.b16 %v1511
        %v2684 = vunpack.c.l.b16 %v1512
        %v2685 = vunpack.c.h.b16 %v1512
        %v2686 = vunpack.c.l.b16 %v1513
        %v2687 = vunpack.c.h.b16 %v1513
        %v2688 = vunpack.c.l.b16 %v1514
        %v2689 = vunpack.c.h.b16 %v1514
        %v2690 = vunpack.c.l.b16 %v1515
        %v2691 = vunpack.c.h.b16 %v1515
        %v2692 = vunpack.c.l.b16 %v1516
        %v2693 = vunpack.c.h.b16 %v1516
        %v2694 = vunpack.c.l.b16 %v1517
        %v2695 = vunpack.c.h.b16 %v1517
        %v2696 = vunpack.c.l.b16 %v1518
        %v2697 = vunpack.c.h.b16 %v1518
        %v2698 = vunpack.c.l.b16 %v1519
        %v2699 = vunpack.c.h.b16 %v1519
        %v2700 = vunpack.c.l.b16 %v1520
        %v2701 = vunpack.c.h.b16 %v1520
        %v2702 = vunpack.c.l.b16 %v1521
        %v2703 = vunpack.c.h.b16 %v1521
        %v2704 = vunpack.c.l.b16 %v1522
        %v2705 = vunpack.c.h.b16 %v1522
        %v2706 = vunpack.c.l.b16 %v1523
        %v2707 = vunpack.c.h.b16 %v1523
        %v2708 = vunpack.c.l.b16 %v1524
        %v2709 = vunpack.c.h.b16 %v1524
        %v2710 = vunpack.c.l.b16 %v1525
        %v2711 = vunpack.c.h.b16 %v1525
        %v2712 = vunpack.c.l.b16 %v1526
        %v2713 = vunpack.c.h.b16 %v1526
        %v2714 = vunpack.c.l.b16 %v1527
        %v2715 = vunpack.c.h.b16 %v1527
        %v2716 = vunpack.c.l.b16 %v1528
        %v2717 = vunpack.c.h.b16 %v1528
        %v2718 = vunpack.c.l.b16 %v1529
        %v2719 = vunpack.c.h.b16 %v1529
        %v2720 = vunpack.c.l.b16 %v1530
        %v2721 = vunpack.c.h.b16 %v1530
        %v2722 = vunpack.c.l.b16 %v1531
        %v2723 = vunpack.c.h.b16 %v1531
        %v2724 = vunpack.c.l.b16 %v1532
        %v2725 = vunpack.c.h.b16 %v1532
        %v2726 = vunpack.c.l.b16 %v1533
        %v2727 = vunpack.c.h.b16 %v1533
        %v2728 = vunpack.c.l.b16 %v1534
        %v2729 = vunpack.c.h.b16 %v1534
        %v2730 = vunpack.c.l.b16 %v1535
        %v2731 = vunpack.c.h.b16 %v1535
        %v2732 = vunpack.c.l.b16 %v1536
        %v2733 = vunpack.c.h.b16 %v1536
        %v2734 = vunpack.c.l.b16 %v1537
        %v2735 = vunpack.c.h.b16 %v1537
        %v2736 = vunpack.c.l.b16 %v1538
        %v2737 = vunpack.c.h.b16 %v1538
        %v2738 = vunpack.c.l.b16 %v1539
        %v2739 = vunpack.c.h.b16 %v1539
        %v2740 = vunpack.c.l.b16 %v1540
        %v2741 = vunpack.c.h.b16 %v1540
        %v2742 = vunpack.c.l.b16 %v1541
        %v2743 = vunpack.c.h.b16 %v1541
        %v2744 = vunpack.c.l.b16 %v1542
        %v2745 = vunpack.c.h.b16 %v1542
        %v2746 = vunpack.c.l.b16 %v1543
        %v2747 = vunpack.c.h.b16 %v1543
        %v2748 = vunpack.c.l.b16 %v1544
        %v2749 = vunpack.c.h.b16 %v1544
        %v2750 = vunpack.c.l.b16 %v1545
        %v2751 = vunpack.c.h.b16 %v1545
        %v2752 = vunpack.c.l.b16 %v1546
        %v2753 = vunpack.c.h.b16 %v1546
        %v2754 = vunpack.c.l.b16 %v1547
        %v2755 = vunpack.c.h.b16 %v1547
        %v2756 = vunpack.c.l.b16 %v1548
        %v2757 = vunpack.c.h.b16 %v1548
        %v2758 = vunpack.c.l.b16 %v1549
        %v2759 = vunpack.c.h.b16 %v1549
        %v2760 = vunpack.c.l.b16 %v1550
        %v2761 = vunpack.c.h.b16 %v1550
        %v2762 = vunpack.c.l.b16 %v1551
        %v2763 = vunpack.c.h.b16 %v1551
        %v2764 = vunpack.c.l.b16 %v1552
        %v2765 = vunpack.c.h.b16 %v1552
        %v2766 = vunpack.c.l.b16 %v1553
        %v2767 = vunpack.c.h.b16 %v1553
        %v2768 = vunpack.c.l.b16 %v1554
        %v2769 = vunpack.c.h.b16 %v1554
        %v2770 = vunpack.c.l.b16 %v1555
        %v2771 = vunpack.c.h.b16 %v1555
        %v2772 = vunpack.c.l.b16 %v1556
        %v2773 = vunpack.c.h.b16 %v1556
        %v2774 = vunpack.c.l.b16 %v1557
        %v2775 = vunpack.c.h.b16 %v1557
        %v2776 = vunpack.c.l.b16 %v1558
        %v2777 = vunpack.c.h.b16 %v1558
        %v2778 = vunpack.c.l.b16 %v1559
        %v2779 = vunpack.c.h.b16 %v1559
        %v2780 = vunpack.c.l.b16 %v1560
        %v2781 = vunpack.c.h.b16 %v1560
        %v2782 = vunpack.c.l.b16 %v1561
        %v2783 = vunpack.c.h.b16 %v1561
        %v2784 = vunpack.c.l.b16 %v1562
        %v2785 = vunpack.c.h.b16 %v1562
        %v2786 = vunpack.c.l.b16 %v1563
        %v2787 = vunpack.c.h.b16 %v1563
        %v2788 = vunpack.c.l.b16 %v1564
        %v2789 = vunpack.c.h.b16 %v1564
        %v2790 = vunpack.c.l.b16 %v1565
        %v2791 = vunpack.c.h.b16 %v1565
        %v2792 = vunpack.c.l.b16 %v1566
        %v2793 = vunpack.c.h.b16 %v1566
        %v2794 = vunpack.c.l.b16 %v1567
        %v2795 = vunpack.c.h.b16 %v1567
        %v2796 = vunpack.c.l.b16 %v1568
        %v2797 = vunpack.c.h.b16 %v1568
        %v2798 = vunpack.c.l.b16 %v1569
        %v2799 = vunpack.c.h.b16 %v1569
        %v2800 = vunpack.c.l.b16 %v1570
        %v2801 = vunpack.c.h.b16 %v1570
        %v2802 = vunpack.c.l.b16 %v1571
        %v2803 = vunpack.c.h.b16 %v1571
        %v2804 = vunpack.c.l.b16 %v1572
        %v2805 = vunpack.c.h.b16 %v1572
        %v2806 = vunpack.c.l.b16 %v1573
        %v2807 = vunpack.c.h.b16 %v1573
        %v2808 = vunpack.c.l.b16 %v1574
        %v2809 = vunpack.c.h.b16 %v1574
        %v2810 = vunpack.c.l.b16 %v1575
        %v2811 = vunpack.c.h.b16 %v1575
        %v2812 = vunpack.c.l.b16 %v1576
        %v2813 = vunpack.c.h.b16 %v1576
        %v2814 = vunpack.c.l.b16 %v1577
        %v2815 = vunpack.c.h.b16 %v1577
        %v2816 = vunpack.c.l.b16 %v1578
        %v2817 = vunpack.c.h.b16 %v1578
        %v2818 = vunpack.c.l.b16 %v1579
        %v2819 = vunpack.c.h.b16 %v1579
        %v2820 = vunpack.c.l.b16 %v1580
        %v2821 = vunpack.c.h.b16 %v1580
        %v2822 = vunpack.c.l.b16 %v1581
        %v2823 = vunpack.c.h.b16 %v1581
        %v2824 = vunpack.c.l.b16 %v1582
        %v2825 = vunpack.c.h.b16 %v1582
        %v2826 = vunpack.c.l.b16 %v1583
        %v2827 = vunpack.c.h.b16 %v1583
        %v2828 = vunpack.c.l.b16 %v1584
        %v2829 = vunpack.c.h.b16 %v1584
        %v2830 = vunpack.c.l.b16 %v1585
        %v2831 = vunpack.c.h.b16 %v1585
        %v2832 = vunpack.c.l.b16 %v1586
        %v2833 = vunpack.c.h.b16 %v1586
        %v2834 = vunpack.c.l.b16 %v1587
        %v2835 = vunpack.c.h.b16 %v1587
        %v2836 = vunpack.c.l.b16 %v1588
        %v2837 = vunpack.c.h.b16 %v1588
        %v2838 = vunpack.c.l.b16 %v1589
        %v2839 = vunpack.c.h.b16 %v1589
        %v2840 = vunpack.c.l.b16 %v1590
        %v2841 = vunpack.c.h.b16 %v1590
        %v2842 = vunpack.c.l.b16 %v1591
        %v2843 = vunpack.c.h.b16 %v1591
        %v2844 = vunpack.c.l.b16 %v1592
        %v2845 = vunpack.c.h.b16 %v1592
        %v2846 = vunpack.c.l.b16 %v1593
        %v2847 = vunpack.c.h.b16 %v1593
        %v2848 = vunpack.c.l.b16 %v1594
        %v2849 = vunpack.c.h.b16 %v1594
        %v2850 = vunpack.c.l.b16 %v1595
        %v2851 = vunpack.c.h.b16 %v1595
        %v2852 = vunpack.c.l.b16 %v1596
        %v2853 = vunpack.c.h.b16 %v1596
        %v2854 = vunpack.c.l.b16 %v1597
        %v2855 = vunpack.c.h.b16 %v1597
        %v2856 = vunpack.c.l.b16 %v1598
        %v2857 = vunpack.c.h.b16 %v1598
        %v2858 = vunpack.c.l.b16 %v1599
        %v2859 = vunpack.c.h.b16 %v1599
        %v2860 = vunpack.c.l.b16 %v1600
        %v2861 = vunpack.c.h.b16 %v1600
        %v2862 = vunpack.c.l.b16 %v1601
        %v2863 = vunpack.c.h.b16 %v1601
        %v2864 = vunpack.c.l.b16 %v1602
        %v2865 = vunpack.c.h.b16 %v1602
        %v2866 = vunpack.c.l.b16 %v1603
        %v2867 = vunpack.c.h.b16 %v1603
        %v2868 = vunpack.c.l.b16 %v1604
        %v2869 = vunpack.c.h.b16 %v1604
        %v2870 = vunpack.c.l.b16 %v1605
        %v2871 = vunpack.c.h.b16 %v1605
        %v2872 = vunpack.c.l.b16 %v1606
        %v2873 = vunpack.c.h.b16 %v1606
        %v2874 = vunpack.c.l.b16 %v1607
        %v2875 = vunpack.c.h.b16 %v1607
        %v2876 = vpack.c.b16 %v2656, %v2652
        %v2877 = vpack.c.b16 %v2657, %v2653
        %v2878 = vpack.c.b16 %v2658, %v2654
        %v2879 = vpack.c.b16 %v2659, %v2655
        %v2880 = vpack.c.b16 %v2664, %v2660
        %v2881 = vpack.c.b16 %v2665, %v2661
        %v2882 = vpack.c.b16 %v2666, %v2662
        %v2883 = vpack.c.b16 %v2667, %v2663
        %v2884 = vpack.c.b16 %v2672, %v2668
        %v2885 = vpack.c.b16 %v2673, %v2669
        %v2886 = vpack.c.b16 %v2674, %v2670
        %v2887 = vpack.c.b16 %v2675, %v2671
        %v2888 = vpack.c.b16 %v2680, %v2676
        %v2889 = vpack.c.b16 %v2681, %v2677
        %v2890 = vpack.c.b16 %v2682, %v2678
        %v2891 = vpack.c.b16 %v2683, %v2679
        %v2892 = vpack.c.b16 %v2688, %v2684
        %v2893 = vpack.c.b16 %v2689, %v2685
        %v2894 = vpack.c.b16 %v2690, %v2686
        %v2895 = vpack.c.b16 %v2691, %v2687
        %v2896 = vpack.c.b16 %v2696, %v2692
        %v2897 = vpack.c.b16 %v2697, %v2693
        %v2898 = vpack.c.b16 %v2698, %v2694
        %v2899 = vpack.c.b16 %v2699, %v2695
        %v2900 = vpack.c.b16 %v2704, %v2700
        %v2901 = vpack.c.b16 %v2705, %v2701
        %v2902 = vpack.c.b16 %v2706, %v2702
        %v2903 = vpack.c.b16 %v2707, %v2703
        %v2904 = vpack.c.b16 %v2712, %v2708
        %v2905 = vpack.c.b16 %v2713, %v2709
        %v2906 = vpack.c.b16 %v2714, %v2710
        %v2907 = vpack.c.b16 %v2715, %v2711
        %v2908 = vpack.c.b16 %v2720, %v2716
        %v2909 = vpack.c.b16 %v2721, %v2717
        %v2910 = vpack.c.b16 %v2722, %v2718
        %v2911 = vpack.c.b16 %v2723, %v2719
        %v2912 = vpack.c.b16 %v2728, %v2724
        %v2913 = vpack.c.b16 %v2729, %v2725
        %v2914 = vpack.c.b16 %v2730, %v2726
        %v2915 = vpack.c.b16 %v2731, %v2727
        %v2916 = vpack.c.b16 %v2736, %v2732
        %v2917 = vpack.c.b16 %v2737, %v2733
        %v2918 = vpack.c.b16 %v2738, %v2734
        %v2919 = vpack.c.b16 %v2739, %v2735
        %v2920 = vpack.c.b16 %v2744, %v2740
        %v2921 = vpack.c.b16 %v2745, %v2741
        %v2922 = vpack.c.b16 %v2746, %v2742
        %v2923 = vpack.c.b16 %v2747, %v2743
        %v2924 = vpack.c.b16 %v2752, %v2748
        %v2925 = vpack.c.b16 %v2753, %v2749
        %v2926 = vpack.c.b16 %v2754, %v2750
        %v2927 = vpack.c.b16 %v2755, %v2751
        %v2928 = vpack.c.b16 %v2760, %v2756
        %v2929 = vpack.c.b16 %v2761, %v2757
        %v2930 = vpack.c.b16 %v2762, %v2758
        %v2931 = vpack.c.b16 %v2763, %v2759
        %v2932 = vpack.c.b16 %v2768, %v2764
        %v2933 = vpack.c.b16 %v2769, %v2765
        %v2934 = vpack.c.b16 %v2770, %v2766
        %v2935 = vpack.c.b16 %v2771, %v2767
        %v2936 = vpack.c.b16 %v2776, %v2772
        %v2937 = vpack.c.b16 %v2777, %v2773
        %v2938 = vpack.c.b16 %v2778, %v2774
        %v2939 = vpack.c.b16 %v2779, %v2775
        %v2940 = vpack.c.b16 %v2784, %v2780
        %v2941 = vpack.c.b16 %v2785, %v2781
        %v2942 = vpack.c.b16 %v2786, %v2782
        %v2943 = vpack.c.b16 %v2787, %v2783
        %v2944 = vpack.c.b16 %v2792, %v2788
        %v2945 = vpack.c.b16 %v2793, %v2789
        %v2946 = vpack.c.b16 %v2794, %v2790
        %v2947 = vpack.c.b16 %v2795, %v2791
        %v2948 = vpack.c.b16 %v2800, %v2796
        %v2949 = vpack.c.b16 %v2801, %v2797
        %v2950 = vpack.c.b16 %v2802, %v2798
        %v2951 = vpack.c.b16 %v2803, %v2799
        %v2952 = vpack.c.b16 %v2808, %v2804
        %v2953 = vpack.c.b16 %v2809, %v2805
        %v2954 = vpack.c.b16 %v2810, %v2806
        %v2955 = vpack.c.b16 %v2811, %v2807
        %v2956 = vpack.c.b16 %v2816, %v2812
        %v2957 = vpack.c.b16 %v2817, %v2813
        %v2958 = vpack.c.b16 %v2818, %v2814
        %v2959 = vpack.c.b16 %v2819, %v2815
        %v2960 = vpack.c.b16 %v2824, %v2820
        %v2961 = vpack.c.b16 %v2825, %v2821
        %v2962 = vpack.c.b16 %v2826, %v2822
        %v2963 = vpack.c.b16 %v2827, %v2823
        %v2964 = vpack.c.b16 %v2832, %v2828
        %v2965 = vpack.c.b16 %v2833, %v2829
        %v2966 = vpack.c.b16 %v2834, %v2830
        %v2967 = vpack.c.b16 %v2835, %v2831
        %v2968 = vpack.c.b16 %v2840, %v2836
        %v2969 = vpack.c.b16 %v2841, %v2837
        %v2970 = vpack.c.b16 %v2842, %v2838
        %v2971 = vpack.c.b16 %v2843, %v2839
        %v2972 = vpack.c.b16 %v2848, %v2844
        %v2973 = vpack.c.b16 %v2849, %v2845
        %v2974 = vpack.c.b16 %v2850, %v2846
        %v2975 = vpack.c.b16 %v2851, %v2847
        %v2976 = vpack.c.b16 %v2856, %v2852
        %v2977 = vpack.c.b16 %v2857, %v2853
        %v2978 = vpack.c.b16 %v2858, %v2854
        %v2979 = vpack.c.b16 %v2859, %v2855
        %v2980 = vpack.c.b16 %v2864, %v2860
        %v2981 = vpack.c.b16 %v2865, %v2861
        %v2982 = vpack.c.b16 %v2866, %v2862
        %v2983 = vpack.c.b16 %v2867, %v2863
        %v2984 = vpack.c.b16 %v2872, %v2868
        %v2985 = vpack.c.b16 %v2873, %v2869
        %v2986 = vpack.c.b16 %v2874, %v2870
        %v2987 = vpack.c.b16 %v2875, %v2871
        %v3101 = vsel %vm2372, %v1495, 0
        %3103 = vmatprep.subr.bf16.mxu0 %v2877
        %3104 = vmatpush1.bf16.msra.mxu0 %v2876
        %3105 = vmatprep.subr.bf16.mxu0 %v2881
        %3106 = vmatpush1.bf16.msra.mxu0 %v2880
        %3107 = vmatprep.subr.bf16.mxu0 %v2885
        %3108 = vmatpush1.bf16.msra.mxu0 %v2884
        %3109 = vmatprep.subr.bf16.mxu0 %v2889
        %3110 = vmatpush1.bf16.msra.mxu0 %v2888
        %3111 = vmatprep.subr.bf16.mxu0 %v2893
        %3112 = vmatpush1.bf16.msra.mxu0 %v2892
        %3113 = vmatprep.subr.bf16.mxu0 %v2897
        %3114 = vmatpush1.bf16.msra.mxu0 %v2896
        %3115 = vmatprep.subr.bf16.mxu0 %v2901
        %3116 = vmatpush1.bf16.msra.mxu0 %v2900
        %3117 = vmatprep.subr.bf16.mxu0 %v2905
        %3118 = vmatpush1.bf16.msra.mxu0 %v2904
        %3119 = vmatprep.subr.bf16.mxu0 %v2909
        %3120 = vmatpush1.bf16.msra.mxu0 %v2908
        %3121 = vmatprep.subr.bf16.mxu0 %v2913
        %3122 = vmatpush1.bf16.msra.mxu0 %v2912
        %3123 = vmatprep.subr.bf16.mxu0 %v2917
        %3124 = vmatpush1.bf16.msra.mxu0 %v2916
        %3125 = vmatprep.subr.bf16.mxu0 %v2921
        %3126 = vmatpush1.bf16.msra.mxu0 %v2920
        %3127 = vmatprep.subr.bf16.mxu0 %v2925
        %3128 = vmatpush1.bf16.msra.mxu0 %v2924
        %3129 = vmatprep.subr.bf16.mxu0 %v2929
        %3130 = vmatpush1.bf16.msra.mxu0 %v2928
        %3131 = vmatprep.subr.bf16.mxu0 %v2933
        %3132 = vmatpush1.bf16.msra.mxu0 %v2932
        %3133 = vmatprep.subr.bf16.mxu0 %v2937
        %3134 = vmatpush1.bf16.msra.mxu0 %v2936
        %3135 = vmatprep.mubr.bf16.mxu0 %v1493
        %3136 = vmatmul.mubr.bf16.gmra.mrb[0].mxu0 %v1492
        %v3137 = vpop.f32.mrb[0].mxu0
        %v3138 = vadd.f32 %v2452, %v3137
        %v3139 = vpop.f32.mrb[0].mxu0
        %v3140 = vadd.f32 %v2454, %v3139
        %v3141 = vpop.f32.mrb[0].mxu0
        %v3142 = vpop.f32.mrb[0].mxu0
        %3143 = vdwg.mxu0
        %3144 = vmatprep.subr.bf16.mxu0 %v2941
        %3145 = vmatpush1.bf16.msra.mxu0 %v2940
        %3146 = vmatprep.subr.bf16.mxu0 %v2945
        %3147 = vmatpush1.bf16.msra.mxu0 %v2944
        %3148 = vmatprep.subr.bf16.mxu0 %v2949
        %3149 = vmatpush1.bf16.msra.mxu0 %v2948
        %3150 = vmatprep.subr.bf16.mxu0 %v2953
        %3151 = vmatpush1.bf16.msra.mxu0 %v2952
        %3152 = vmatprep.subr.bf16.mxu0 %v2957
        %3153 = vmatpush1.bf16.msra.mxu0 %v2956
        %3154 = vmatprep.subr.bf16.mxu0 %v2961
        %3155 = vmatpush1.bf16.msra.mxu0 %v2960
        %3156 = vmatprep.subr.bf16.mxu0 %v2965
        %3157 = vmatpush1.bf16.msra.mxu0 %v2964
        %3158 = vmatprep.subr.bf16.mxu0 %v2969
        %3159 = vmatpush1.bf16.msra.mxu0 %v2968
        %3160 = vmatprep.subr.bf16.mxu0 %v2973
        %3161 = vmatpush1.bf16.msra.mxu0 %v2972
        %3162 = vmatprep.subr.bf16.mxu0 %v2977
        %3163 = vmatpush1.bf16.msra.mxu0 %v2976
        %3164 = vmatprep.subr.bf16.mxu0 %v2981
        %3165 = vmatpush1.bf16.msra.mxu0 %v2980
        %3166 = vmatprep.subr.bf16.mxu0 %v2985
        %3167 = vmatpush1.bf16.msra.mxu0 %v2984
        %3168 = vmatprep.subr.bf16.mxu0 0
        %3169 = vmatpush1.bf16.msra.mxu0 0
        %3170 = vmatprep.subr.bf16.mxu0 0
        %3171 = vmatpush1.bf16.msra.mxu0 0
        %3172 = vmatprep.subr.bf16.mxu0 0
        %3173 = vmatpush1.bf16.msra.mxu0 0
        %3174 = vmatprep.subr.bf16.mxu0 0
        %3175 = vmatpush1.bf16.msra.mxu0 0
        %3176 = vmatprep.mubr.bf16.mxu0 %v3101
        %3177 = vmatmul.mubr.bf16.gmra.mrb[0].mxu0 %v1494
        %v3178 = vpop.f32.mrb[0].mxu0
        %v3179 = vadd.f32 %v3138, %v3178
        %v3180 = vpop.f32.mrb[0].mxu0
        %v3181 = vadd.f32 %v3140, %v3180
        %v3182 = vpop.f32.mrb[0].mxu0
        %v3183 = vpop.f32.mrb[0].mxu0
        %3184 = vdwg.mxu0
        %3185 = vmatprep.subr.bf16.mxu0 %v2879
        %3186 = vmatpush1.bf16.msra.mxu0 %v2878
        %3187 = vmatprep.subr.bf16.mxu0 %v2883
        %3188 = vmatpush1.bf16.msra.mxu0 %v2882
        %3189 = vmatprep.subr.bf16.mxu0 %v2887
        %3190 = vmatpush1.bf16.msra.mxu0 %v2886
        %3191 = vmatprep.subr.bf16.mxu0 %v2891
        %3192 = vmatpush1.bf16.msra.mxu0 %v2890
        %3193 = vmatprep.subr.bf16.mxu0 %v2895
        %3194 = vmatpush1.bf16.msra.mxu0 %v2894
        %3195 = vmatprep.subr.bf16.mxu0 %v2899
        %3196 = vmatpush1.bf16.msra.mxu0 %v2898
        %3197 = vmatprep.subr.bf16.mxu0 %v2903
        %3198 = vmatpush1.bf16.msra.mxu0 %v2902
        %3199 = vmatprep.subr.bf16.mxu0 %v2907
        %3200 = vmatpush1.bf16.msra.mxu0 %v2906
        %3201 = vmatprep.subr.bf16.mxu0 %v2911
        %3202 = vmatpush1.bf16.msra.mxu0 %v2910
        %3203 = vmatprep.subr.bf16.mxu0 %v2915
        %3204 = vmatpush1.bf16.msra.mxu0 %v2914
        %3205 = vmatprep.subr.bf16.mxu0 %v2919
        %3206 = vmatpush1.bf16.msra.mxu0 %v2918
        %3207 = vmatprep.subr.bf16.mxu0 %v2923
        %3208 = vmatpush1.bf16.msra.mxu0 %v2922
        %3209 = vmatprep.subr.bf16.mxu0 %v2927
        %3210 = vmatpush1.bf16.msra.mxu0 %v2926
        %3211 = vmatprep.subr.bf16.mxu0 %v2931
        %3212 = vmatpush1.bf16.msra.mxu0 %v2930
        %3213 = vmatprep.subr.bf16.mxu0 %v2935
        %3214 = vmatpush1.bf16.msra.mxu0 %v2934
        %3215 = vmatprep.subr.bf16.mxu0 %v2939
        %3216 = vmatpush1.bf16.msra.mxu0 %v2938
        %3217 = vmatprep.mubr.bf16.mxu0 %v1493
        %3218 = vmatmul.mubr.bf16.gmra.mrb[0].mxu0 %v1492
        %v3219 = vpop.f32.mrb[0].mxu0
        %v3220 = vadd.f32 %v2534, %v3219
        %v3221 = vpop.f32.mrb[0].mxu0
        %v3222 = vadd.f32 %v2536, %v3221
        %v3223 = vpop.f32.mrb[0].mxu0
        %v3224 = vpop.f32.mrb[0].mxu0
        %3225 = vdwg.mxu0
        %3226 = vmatprep.subr.bf16.mxu0 %v2943
        %3227 = vmatpush1.bf16.msra.mxu0 %v2942
        %3228 = vmatprep.subr.bf16.mxu0 %v2947
        %3229 = vmatpush1.bf16.msra.mxu0 %v2946
        %3230 = vmatprep.subr.bf16.mxu0 %v2951
        %3231 = vmatpush1.bf16.msra.mxu0 %v2950
        %3232 = vmatprep.subr.bf16.mxu0 %v2955
        %3233 = vmatpush1.bf16.msra.mxu0 %v2954
        %3234 = vmatprep.subr.bf16.mxu0 %v2959
        %3235 = vmatpush1.bf16.msra.mxu0 %v2958
        %3236 = vmatprep.subr.bf16.mxu0 %v2963
        %3237 = vmatpush1.bf16.msra.mxu0 %v2962
        %3238 = vmatprep.subr.bf16.mxu0 %v2967
        %3239 = vmatpush1.bf16.msra.mxu0 %v2966
        %3240 = vmatprep.subr.bf16.mxu0 %v2971
        %3241 = vmatpush1.bf16.msra.mxu0 %v2970
        %3242 = vmatprep.subr.bf16.mxu0 %v2975
        %3243 = vmatpush1.bf16.msra.mxu0 %v2974
        %3244 = vmatprep.subr.bf16.mxu0 %v2979
        %3245 = vmatpush1.bf16.msra.mxu0 %v2978
        %3246 = vmatprep.subr.bf16.mxu0 %v2983
        %3247 = vmatpush1.bf16.msra.mxu0 %v2982
        %3248 = vmatprep.subr.bf16.mxu0 %v2987
        %3249 = vmatpush1.bf16.msra.mxu0 %v2986
        %3250 = vmatprep.subr.bf16.mxu0 0
        %3251 = vmatpush1.bf16.msra.mxu0 0
        %3252 = vmatprep.subr.bf16.mxu0 0
        %3253 = vmatpush1.bf16.msra.mxu0 0
        %3254 = vmatprep.subr.bf16.mxu0 0
        %3255 = vmatpush1.bf16.msra.mxu0 0
        %3256 = vmatprep.subr.bf16.mxu0 0
        %3257 = vmatpush1.bf16.msra.mxu0 0
        %3258 = vmatprep.mubr.bf16.mxu0 %v3101
        %3259 = vmatmul.mubr.bf16.gmra.mrb[0].mxu0 %v1494
        %v3260 = vpop.f32.mrb[0].mxu0
        %v3261 = vadd.f32 %v3220, %v3260
        %v3262 = vpop.f32.mrb[0].mxu0
        %v3263 = vadd.f32 %v3222, %v3262
        %v3264 = vpop.f32.mrb[0].mxu0
        %v3265 = vpop.f32.mrb[0].mxu0
        %3266 = vdwg.mxu0
        %s3267 = scalar_lea.vmem %s4, 8
        %v3268 = vld [vmem:[%s3267] sm:$0xf]
        %v3270 = vsel %vm1393, %v3268, 0
        %3272 = vmatprep.subr.bf16.mxu0 %v1402
        %3273 = vmatpush1.bf16.msra.mxu0 %v1399
        %3274 = vmatprep.subr.bf16.mxu0 0
        %3275 = vmatpush1.bf16.msra.mxu0 0
        %3276 = vmatprep.subr.bf16.mxu0 0
        %3277 = vmatpush1.bf16.msra.mxu0 0
        %3278 = vmatprep.subr.bf16.mxu0 0
        %3279 = vmatpush1.bf16.msra.mxu0 0
        %3280 = vmatprep.subr.bf16.mxu0 0
        %3281 = vmatpush1.bf16.msra.mxu0 0
        %3282 = vmatprep.subr.bf16.mxu0 0
        %3283 = vmatpush1.bf16.msra.mxu0 0
        %3284 = vmatprep.subr.bf16.mxu0 0
        %3285 = vmatpush1.bf16.msra.mxu0 0
        %3286 = vmatprep.subr.bf16.mxu0 0
        %3287 = vmatpush1.bf16.msra.mxu0 0
        %3288 = vmatprep.subr.bf16.mxu0 0
        %3289 = vmatpush1.bf16.msra.mxu0 0
        %3290 = vmatprep.subr.bf16.mxu0 0
        %3291 = vmatpush1.bf16.msra.mxu0 0
        %3292 = vmatprep.subr.bf16.mxu0 0
        %3293 = vmatpush1.bf16.msra.mxu0 0
        %3294 = vmatprep.subr.bf16.mxu0 0
        %3295 = vmatpush1.bf16.msra.mxu0 0
        %3296 = vmatprep.subr.bf16.mxu0 0
        %3297 = vmatpush1.bf16.msra.mxu0 0
        %3298 = vmatprep.subr.bf16.mxu0 0
        %3299 = vmatpush1.bf16.msra.mxu0 0
        %3300 = vmatprep.subr.bf16.mxu0 0
        %3301 = vmatpush1.bf16.msra.mxu0 0
        %3302 = vmatprep.subr.bf16.mxu0 0
        %3303 = vmatpush1.bf16.msra.mxu0 0
        %3304 = vmatprep.mubr.bf16.mxu0 0
        %3305 = vmatmul.mubr.bf16.gmra.mrb[0].mxu0 %v3270
        %v3306 = vpop.f32.mrb[0].mxu0
        %v3307 = vadd.f32 0.0, %v3306
        %v3308 = vpop.f32.mrb[0].mxu0
        %v3309 = vadd.f32 0.0, %v3308
        %v3310 = vpop.f32.mrb[0].mxu0
        %v3311 = vpop.f32.mrb[0].mxu0
        %3312 = vdwg.mxu0
        %3313 = vmatprep.subr.bf16.mxu0 %v1408
        %3314 = vmatpush1.bf16.msra.mxu0 %v1405
        %3315 = vmatprep.subr.bf16.mxu0 0
        %3316 = vmatpush1.bf16.msra.mxu0 0
        %3317 = vmatprep.subr.bf16.mxu0 0
        %3318 = vmatpush1.bf16.msra.mxu0 0
        %3319 = vmatprep.subr.bf16.mxu0 0
        %3320 = vmatpush1.bf16.msra.mxu0 0
        %3321 = vmatprep.subr.bf16.mxu0 0
        %3322 = vmatpush1.bf16.msra.mxu0 0
        %3323 = vmatprep.subr.bf16.mxu0 0
        %3324 = vmatpush1.bf16.msra.mxu0 0
        %3325 = vmatprep.subr.bf16.mxu0 0
        %3326 = vmatpush1.bf16.msra.mxu0 0
        %3327 = vmatprep.subr.bf16.mxu0 0
        %3328 = vmatpush1.bf16.msra.mxu0 0
        %3329 = vmatprep.subr.bf16.mxu0 0
        %3330 = vmatpush1.bf16.msra.mxu0 0
        %3331 = vmatprep.subr.bf16.mxu0 0
        %3332 = vmatpush1.bf16.msra.mxu0 0
        %3333 = vmatprep.subr.bf16.mxu0 0
        %3334 = vmatpush1.bf16.msra.mxu0 0
        %3335 = vmatprep.subr.bf16.mxu0 0
        %3336 = vmatpush1.bf16.msra.mxu0 0
        %3337 = vmatprep.subr.bf16.mxu0 0
        %3338 = vmatpush1.bf16.msra.mxu0 0
        %3339 = vmatprep.subr.bf16.mxu0 0
        %3340 = vmatpush1.bf16.msra.mxu0 0
        %3341 = vmatprep.subr.bf16.mxu0 0
        %3342 = vmatpush1.bf16.msra.mxu0 0
        %3343 = vmatprep.subr.bf16.mxu0 0
        %3344 = vmatpush1.bf16.msra.mxu0 0
        %3345 = vmatprep.mubr.bf16.mxu0 0
        %3346 = vmatmul.mubr.bf16.gmra.mrb[0].mxu0 %v3270
        %v3347 = vpop.f32.mrb[0].mxu0
        %v3348 = vadd.f32 0.0, %v3347
        %v3349 = vpop.f32.mrb[0].mxu0
        %v3350 = vadd.f32 0.0, %v3349
        %v3351 = vpop.f32.mrb[0].mxu0
        %v3352 = vpop.f32.mrb[0].mxu0
        %3353 = vdwg.mxu0
        %v3354 = vpack.c.bf16 %v3307, %v3307
        %v3355 = vpack.c.bf16 %v3309, %v3309
        %v3356 = vpack.c.bf16 %v3348, %v3348
        %v3357 = vpack.c.bf16 %v3350, %v3350
        %s3358 = scalar_lea.vmem [#allocation5], 1792
        %v3359 = vld [vmem:[%s3358] sm:$0xff]
        %v3360 = vld [vmem:[%s3358 + $0x8] sm:$0xff]
        %v3361 = vld [vmem:[%s3358 + $0x10] sm:$0xff]
        %v3362 = vld [vmem:[%s3358 + $0x18] sm:$0xff]
        %v3363 = vld [vmem:[%s3358 + $0x20] sm:$0xff]
        %v3364 = vld [vmem:[%s3358 + $0x28] sm:$0xff]
        %v3365 = vld [vmem:[%s3358 + $0x30] sm:$0xff]
        %v3366 = vld [vmem:[%s3358 + $0x38] sm:$0xff]
        %v3367 = vld [vmem:[%s3358 + $0x40] sm:$0xff]
        %v3368 = vld [vmem:[%s3358 + $0x48] sm:$0xff]
        %v3369 = vld [vmem:[%s3358 + $0x50] sm:$0xff]
        %v3370 = vld [vmem:[%s3358 + $0x58] sm:$0xff]
        %v3371 = vld [vmem:[%s3358 + $0x60] sm:$0xff]
        %v3372 = vld [vmem:[%s3358 + $0x68] sm:$0xff]
        %v3373 = vld [vmem:[%s3358 + $0x70] sm:$0xff]
        %v3374 = vld [vmem:[%s3358 + $0x78] sm:$0xff]
        %v3375 = vld [vmem:[%s3358 + $0x80] sm:$0xff]
        %v3376 = vld [vmem:[%s3358 + $0x88] sm:$0xff]
        %v3377 = vld [vmem:[%s3358 + $0x90] sm:$0xff]
        %v3378 = vld [vmem:[%s3358 + $0x98] sm:$0xff]
        %v3379 = vld [vmem:[%s3358 + $0xa0] sm:$0xff]
        %v3380 = vld [vmem:[%s3358 + $0xa8] sm:$0xff]
        %v3381 = vld [vmem:[%s3358 + $0xb0] sm:$0xff]
        %v3382 = vld [vmem:[%s3358 + $0xb8] sm:$0xff]
        %v3383 = vld [vmem:[%s3358 + $0xc0] sm:$0xff]
        %v3384 = vld [vmem:[%s3358 + $0xc8] sm:$0xff]
        %v3385 = vld [vmem:[%s3358 + $0xd0] sm:$0xff]
        %v3386 = vld [vmem:[%s3358 + $0xd8] sm:$0xff]
        %v3387 = vld [vmem:[%s3358 + $0xe0] sm:$0xff]
        %v3388 = vld [vmem:[%s3358 + $0xe8] sm:$0xff]
        %v3389 = vld [vmem:[%s3358 + $0xf0] sm:$0xff]
        %v3390 = vld [vmem:[%s3358 + $0xf8] sm:$0xff]
        %v3391 = vld [vmem:[%s3358 + $0x100] sm:$0xff]
        %v3392 = vld [vmem:[%s3358 + $0x108] sm:$0xff]
        %v3393 = vld [vmem:[%s3358 + $0x110] sm:$0xff]
        %v3394 = vld [vmem:[%s3358 + $0x118] sm:$0xff]
        %v3395 = vld [vmem:[%s3358 + $0x120] sm:$0xff]
        %v3396 = vld [vmem:[%s3358 + $0x128] sm:$0xff]
        %v3397 = vld [vmem:[%s3358 + $0x130] sm:$0xff]
        %v3398 = vld [vmem:[%s3358 + $0x138] sm:$0xff]
        %v3399 = vld [vmem:[%s3358 + $0x140] sm:$0xff]
        %v3400 = vld [vmem:[%s3358 + $0x148] sm:$0xff]
        %v3401 = vld [vmem:[%s3358 + $0x150] sm:$0xff]
        %v3402 = vld [vmem:[%s3358 + $0x158] sm:$0xff]
        %v3403 = vld [vmem:[%s3358 + $0x160] sm:$0xff]
        %v3404 = vld [vmem:[%s3358 + $0x168] sm:$0xff]
        %v3405 = vld [vmem:[%s3358 + $0x170] sm:$0xff]
        %v3406 = vld [vmem:[%s3358 + $0x178] sm:$0xff]
        %v3407 = vld [vmem:[%s3358 + $0x180] sm:$0xff]
        %v3408 = vld [vmem:[%s3358 + $0x188] sm:$0xff]
        %v3409 = vld [vmem:[%s3358 + $0x190] sm:$0xff]
        %v3410 = vld [vmem:[%s3358 + $0x198] sm:$0xff]
        %v3411 = vld [vmem:[%s3358 + $0x1a0] sm:$0xff]
        %v3412 = vld [vmem:[%s3358 + $0x1a8] sm:$0xff]
        %v3413 = vld [vmem:[%s3358 + $0x1b0] sm:$0xff]
        %v3414 = vld [vmem:[%s3358 + $0x1b8] sm:$0xff]
        %v3415 = vld [vmem:[%s3358 + $0x1c0] sm:$0xff]
        %v3416 = vld [vmem:[%s3358 + $0x1c8] sm:$0xff]
        %v3417 = vld [vmem:[%s3358 + $0x1d0] sm:$0xff]
        %v3418 = vld [vmem:[%s3358 + $0x1d8] sm:$0xff]
        %v3419 = vld [vmem:[%s3358 + $0x1e0] sm:$0xff]
        %v3420 = vld [vmem:[%s3358 + $0x1e8] sm:$0xff]
        %v3421 = vld [vmem:[%s3358 + $0x1f0] sm:$0xff]
        %v3422 = vld [vmem:[%s3358 + $0x1f8] sm:$0xff]
        %v3423 = vld [vmem:[%s3358 + $0x200] sm:$0xff]
        %v3424 = vld [vmem:[%s3358 + $0x208] sm:$0xff]
        %v3425 = vld [vmem:[%s3358 + $0x210] sm:$0xff]
        %v3426 = vld [vmem:[%s3358 + $0x218] sm:$0xff]
        %v3427 = vld [vmem:[%s3358 + $0x220] sm:$0xff]
        %v3428 = vld [vmem:[%s3358 + $0x228] sm:$0xff]
        %v3429 = vld [vmem:[%s3358 + $0x230] sm:$0xff]
        %v3430 = vld [vmem:[%s3358 + $0x238] sm:$0xff]
        %v3431 = vld [vmem:[%s3358 + $0x240] sm:$0xff]
        %v3432 = vld [vmem:[%s3358 + $0x248] sm:$0xff]
        %v3433 = vld [vmem:[%s3358 + $0x250] sm:$0xff]
        %v3434 = vld [vmem:[%s3358 + $0x258] sm:$0xff]
        %v3435 = vld [vmem:[%s3358 + $0x260] sm:$0xff]
        %v3436 = vld [vmem:[%s3358 + $0x268] sm:$0xff]
        %v3437 = vld [vmem:[%s3358 + $0x270] sm:$0xff]
        %v3438 = vld [vmem:[%s3358 + $0x278] sm:$0xff]
        %v3439 = vld [vmem:[%s3358 + $0x280] sm:$0xff]
        %v3440 = vld [vmem:[%s3358 + $0x288] sm:$0xff]
        %v3441 = vld [vmem:[%s3358 + $0x290] sm:$0xff]
        %v3442 = vld [vmem:[%s3358 + $0x298] sm:$0xff]
        %v3443 = vld [vmem:[%s3358 + $0x2a0] sm:$0xff]
        %v3444 = vld [vmem:[%s3358 + $0x2a8] sm:$0xff]
        %v3445 = vld [vmem:[%s3358 + $0x2b0] sm:$0xff]
        %v3446 = vld [vmem:[%s3358 + $0x2b8] sm:$0xff]
        %v3447 = vld [vmem:[%s3358 + $0x2c0] sm:$0xff]
        %v3448 = vld [vmem:[%s3358 + $0x2c8] sm:$0xff]
        %v3449 = vld [vmem:[%s3358 + $0x2d0] sm:$0xff]
        %v3450 = vld [vmem:[%s3358 + $0x2d8] sm:$0xff]
        %v3451 = vld [vmem:[%s3358 + $0x2e0] sm:$0xff]
        %v3452 = vld [vmem:[%s3358 + $0x2e8] sm:$0xff]
        %v3453 = vld [vmem:[%s3358 + $0x2f0] sm:$0xff]
        %v3454 = vld [vmem:[%s3358 + $0x2f8] sm:$0xff]
        %v3455 = vld [vmem:[%s3358 + $0x300] sm:$0xff]
        %v3456 = vld [vmem:[%s3358 + $0x308] sm:$0xff]
        %v3457 = vld [vmem:[%s3358 + $0x310] sm:$0xff]
        %v3458 = vld [vmem:[%s3358 + $0x318] sm:$0xff]
        %v3459 = vld [vmem:[%s3358 + $0x320] sm:$0xff]
        %v3460 = vld [vmem:[%s3358 + $0x328] sm:$0xff]
        %v3461 = vld [vmem:[%s3358 + $0x330] sm:$0xff]
        %v3462 = vld [vmem:[%s3358 + $0x338] sm:$0xff]
        %v3463 = vld [vmem:[%s3358 + $0x340] sm:$0xff]
        %v3464 = vld [vmem:[%s3358 + $0x348] sm:$0xff]
        %v3465 = vld [vmem:[%s3358 + $0x350] sm:$0xff]
        %v3466 = vld [vmem:[%s3358 + $0x358] sm:$0xff]
        %v3467 = vld [vmem:[%s3358 + $0x360] sm:$0xff]
        %v3468 = vld [vmem:[%s3358 + $0x368] sm:$0xff]
        %v3469 = vld [vmem:[%s3358 + $0x370] sm:$0xff]
        %v3470 = vld [vmem:[%s3358 + $0x378] sm:$0xff]
        %v3583 = vunpack.c.l.b16 %v3359
        %v3584 = vunpack.c.h.b16 %v3359
        %v3585 = vunpack.c.l.b16 %v3360
        %v3586 = vunpack.c.h.b16 %v3360
        %v3587 = vunpack.c.l.b16 %v3361
        %v3588 = vunpack.c.h.b16 %v3361
        %v3589 = vunpack.c.l.b16 %v3362
        %v3590 = vunpack.c.h.b16 %v3362
        %v3591 = vunpack.c.l.b16 %v3363
        %v3592 = vunpack.c.h.b16 %v3363
        %v3593 = vunpack.c.l.b16 %v3364
        %v3594 = vunpack.c.h.b16 %v3364
        %v3595 = vunpack.c.l.b16 %v3365
        %v3596 = vunpack.c.h.b16 %v3365
        %v3597 = vunpack.c.l.b16 %v3366
        %v3598 = vunpack.c.h.b16 %v3366
        %v3599 = vunpack.c.l.b16 %v3367
        %v3600 = vunpack.c.h.b16 %v3367
        %v3601 = vunpack.c.l.b16 %v3368
        %v3602 = vunpack.c.h.b16 %v3368
        %v3603 = vunpack.c.l.b16 %v3369
        %v3604 = vunpack.c.h.b16 %v3369
        %v3605 = vunpack.c.l.b16 %v3370
        %v3606 = vunpack.c.h.b16 %v3370
        %v3607 = vunpack.c.l.b16 %v3371
        %v3608 = vunpack.c.h.b16 %v3371
        %v3609 = vunpack.c.l.b16 %v3372
        %v3610 = vunpack.c.h.b16 %v3372
        %v3611 = vunpack.c.l.b16 %v3373
        %v3612 = vunpack.c.h.b16 %v3373
        %v3613 = vunpack.c.l.b16 %v3374
        %v3614 = vunpack.c.h.b16 %v3374
        %v3615 = vunpack.c.l.b16 %v3375
        %v3616 = vunpack.c.h.b16 %v3375
        %v3617 = vunpack.c.l.b16 %v3376
        %v3618 = vunpack.c.h.b16 %v3376
        %v3619 = vunpack.c.l.b16 %v3377
        %v3620 = vunpack.c.h.b16 %v3377
        %v3621 = vunpack.c.l.b16 %v3378
        %v3622 = vunpack.c.h.b16 %v3378
        %v3623 = vunpack.c.l.b16 %v3379
        %v3624 = vunpack.c.h.b16 %v3379
        %v3625 = vunpack.c.l.b16 %v3380
        %v3626 = vunpack.c.h.b16 %v3380
        %v3627 = vunpack.c.l.b16 %v3381
        %v3628 = vunpack.c.h.b16 %v3381
        %v3629 = vunpack.c.l.b16 %v3382
        %v3630 = vunpack.c.h.b16 %v3382
        %v3631 = vunpack.c.l.b16 %v3383
        %v3632 = vunpack.c.h.b16 %v3383
        %v3633 = vunpack.c.l.b16 %v3384
        %v3634 = vunpack.c.h.b16 %v3384
        %v3635 = vunpack.c.l.b16 %v3385
        %v3636 = vunpack.c.h.b16 %v3385
        %v3637 = vunpack.c.l.b16 %v3386
        %v3638 = vunpack.c.h.b16 %v3386
        %v3639 = vunpack.c.l.b16 %v3387
        %v3640 = vunpack.c.h.b16 %v3387
        %v3641 = vunpack.c.l.b16 %v3388
        %v3642 = vunpack.c.h.b16 %v3388
        %v3643 = vunpack.c.l.b16 %v3389
        %v3644 = vunpack.c.h.b16 %v3389
        %v3645 = vunpack.c.l.b16 %v3390
        %v3646 = vunpack.c.h.b16 %v3390
        %v3647 = vunpack.c.l.b16 %v3391
        %v3648 = vunpack.c.h.b16 %v3391
        %v3649 = vunpack.c.l.b16 %v3392
        %v3650 = vunpack.c.h.b16 %v3392
        %v3651 = vunpack.c.l.b16 %v3393
        %v3652 = vunpack.c.h.b16 %v3393
        %v3653 = vunpack.c.l.b16 %v3394
        %v3654 = vunpack.c.h.b16 %v3394
        %v3655 = vunpack.c.l.b16 %v3395
        %v3656 = vunpack.c.h.b16 %v3395
        %v3657 = vunpack.c.l.b16 %v3396
        %v3658 = vunpack.c.h.b16 %v3396
        %v3659 = vunpack.c.l.b16 %v3397
        %v3660 = vunpack.c.h.b16 %v3397
        %v3661 = vunpack.c.l.b16 %v3398
        %v3662 = vunpack.c.h.b16 %v3398
        %v3663 = vunpack.c.l.b16 %v3399
        %v3664 = vunpack.c.h.b16 %v3399
        %v3665 = vunpack.c.l.b16 %v3400
        %v3666 = vunpack.c.h.b16 %v3400
        %v3667 = vunpack.c.l.b16 %v3401
        %v3668 = vunpack.c.h.b16 %v3401
        %v3669 = vunpack.c.l.b16 %v3402
        %v3670 = vunpack.c.h.b16 %v3402
        %v3671 = vunpack.c.l.b16 %v3403
        %v3672 = vunpack.c.h.b16 %v3403
        %v3673 = vunpack.c.l.b16 %v3404
        %v3674 = vunpack.c.h.b16 %v3404
        %v3675 = vunpack.c.l.b16 %v3405
        %v3676 = vunpack.c.h.b16 %v3405
        %v3677 = vunpack.c.l.b16 %v3406
        %v3678 = vunpack.c.h.b16 %v3406
        %v3679 = vunpack.c.l.b16 %v3407
        %v3680 = vunpack.c.h.b16 %v3407
        %v3681 = vunpack.c.l.b16 %v3408
        %v3682 = vunpack.c.h.b16 %v3408
        %v3683 = vunpack.c.l.b16 %v3409
        %v3684 = vunpack.c.h.b16 %v3409
        %v3685 = vunpack.c.l.b16 %v3410
        %v3686 = vunpack.c.h.b16 %v3410
        %v3687 = vunpack.c.l.b16 %v3411
        %v3688 = vunpack.c.h.b16 %v3411
        %v3689 = vunpack.c.l.b16 %v3412
        %v3690 = vunpack.c.h.b16 %v3412
        %v3691 = vunpack.c.l.b16 %v3413
        %v3692 = vunpack.c.h.b16 %v3413
        %v3693 = vunpack.c.l.b16 %v3414
        %v3694 = vunpack.c.h.b16 %v3414
        %v3695 = vunpack.c.l.b16 %v3415
        %v3696 = vunpack.c.h.b16 %v3415
        %v3697 = vunpack.c.l.b16 %v3416
        %v3698 = vunpack.c.h.b16 %v3416
        %v3699 = vunpack.c.l.b16 %v3417
        %v3700 = vunpack.c.h.b16 %v3417
        %v3701 = vunpack.c.l.b16 %v3418
        %v3702 = vunpack.c.h.b16 %v3418
        %v3703 = vunpack.c.l.b16 %v3419
        %v3704 = vunpack.c.h.b16 %v3419
        %v3705 = vunpack.c.l.b16 %v3420
        %v3706 = vunpack.c.h.b16 %v3420
        %v3707 = vunpack.c.l.b16 %v3421
        %v3708 = vunpack.c.h.b16 %v3421
        %v3709 = vunpack.c.l.b16 %v3422
        %v3710 = vunpack.c.h.b16 %v3422
        %v3711 = vunpack.c.l.b16 %v3423
        %v3712 = vunpack.c.h.b16 %v3423
        %v3713 = vunpack.c.l.b16 %v3424
        %v3714 = vunpack.c.h.b16 %v3424
        %v3715 = vunpack.c.l.b16 %v3425
        %v3716 = vunpack.c.h.b16 %v3425
        %v3717 = vunpack.c.l.b16 %v3426
        %v3718 = vunpack.c.h.b16 %v3426
        %v3719 = vunpack.c.l.b16 %v3427
        %v3720 = vunpack.c.h.b16 %v3427
        %v3721 = vunpack.c.l.b16 %v3428
        %v3722 = vunpack.c.h.b16 %v3428
        %v3723 = vunpack.c.l.b16 %v3429
        %v3724 = vunpack.c.h.b16 %v3429
        %v3725 = vunpack.c.l.b16 %v3430
        %v3726 = vunpack.c.h.b16 %v3430
        %v3727 = vunpack.c.l.b16 %v3431
        %v3728 = vunpack.c.h.b16 %v3431
        %v3729 = vunpack.c.l.b16 %v3432
        %v3730 = vunpack.c.h.b16 %v3432
        %v3731 = vunpack.c.l.b16 %v3433
        %v3732 = vunpack.c.h.b16 %v3433
        %v3733 = vunpack.c.l.b16 %v3434
        %v3734 = vunpack.c.h.b16 %v3434
        %v3735 = vunpack.c.l.b16 %v3435
        %v3736 = vunpack.c.h.b16 %v3435
        %v3737 = vunpack.c.l.b16 %v3436
        %v3738 = vunpack.c.h.b16 %v3436
        %v3739 = vunpack.c.l.b16 %v3437
        %v3740 = vunpack.c.h.b16 %v3437
        %v3741 = vunpack.c.l.b16 %v3438
        %v3742 = vunpack.c.h.b16 %v3438
        %v3743 = vunpack.c.l.b16 %v3439
        %v3744 = vunpack.c.h.b16 %v3439
        %v3745 = vunpack.c.l.b16 %v3440
        %v3746 = vunpack.c.h.b16 %v3440
        %v3747 = vunpack.c.l.b16 %v3441
        %v3748 = vunpack.c.h.b16 %v3441
        %v3749 = vunpack.c.l.b16 %v3442
        %v3750 = vunpack.c.h.b16 %v3442
        %v3751 = vunpack.c.l.b16 %v3443
        %v3752 = vunpack.c.h.b16 %v3443
        %v3753 = vunpack.c.l.b16 %v3444
        %v3754 = vunpack.c.h.b16 %v3444
        %v3755 = vunpack.c.l.b16 %v3445
        %v3756 = vunpack.c.h.b16 %v3445
        %v3757 = vunpack.c.l.b16 %v3446
        %v3758 = vunpack.c.h.b16 %v3446
        %v3759 = vunpack.c.l.b16 %v3447
        %v3760 = vunpack.c.h.b16 %v3447
        %v3761 = vunpack.c.l.b16 %v3448
        %v3762 = vunpack.c.h.b16 %v3448
        %v3763 = vunpack.c.l.b16 %v3449
        %v3764 = vunpack.c.h.b16 %v3449
        %v3765 = vunpack.c.l.b16 %v3450
        %v3766 = vunpack.c.h.b16 %v3450
        %v3767 = vunpack.c.l.b16 %v3451
        %v3768 = vunpack.c.h.b16 %v3451
        %v3769 = vunpack.c.l.b16 %v3452
        %v3770 = vunpack.c.h.b16 %v3452
        %v3771 = vunpack.c.l.b16 %v3453
        %v3772 = vunpack.c.h.b16 %v3453
        %v3773 = vunpack.c.l.b16 %v3454
        %v3774 = vunpack.c.h.b16 %v3454
        %v3775 = vunpack.c.l.b16 %v3455
        %v3776 = vunpack.c.h.b16 %v3455
        %v3777 = vunpack.c.l.b16 %v3456
        %v3778 = vunpack.c.h.b16 %v3456
        %v3779 = vunpack.c.l.b16 %v3457
        %v3780 = vunpack.c.h.b16 %v3457
        %v3781 = vunpack.c.l.b16 %v3458
        %v3782 = vunpack.c.h.b16 %v3458
        %v3783 = vunpack.c.l.b16 %v3459
        %v3784 = vunpack.c.h.b16 %v3459
        %v3785 = vunpack.c.l.b16 %v3460
        %v3786 = vunpack.c.h.b16 %v3460
        %v3787 = vunpack.c.l.b16 %v3461
        %v3788 = vunpack.c.h.b16 %v3461
        %v3789 = vunpack.c.l.b16 %v3462
        %v3790 = vunpack.c.h.b16 %v3462
        %v3791 = vunpack.c.l.b16 %v3463
        %v3792 = vunpack.c.h.b16 %v3463
        %v3793 = vunpack.c.l.b16 %v3464
        %v3794 = vunpack.c.h.b16 %v3464
        %v3795 = vunpack.c.l.b16 %v3465
        %v3796 = vunpack.c.h.b16 %v3465
        %v3797 = vunpack.c.l.b16 %v3466
        %v3798 = vunpack.c.h.b16 %v3466
        %v3799 = vunpack.c.l.b16 %v3467
        %v3800 = vunpack.c.h.b16 %v3467
        %v3801 = vunpack.c.l.b16 %v3468
        %v3802 = vunpack.c.h.b16 %v3468
        %v3803 = vunpack.c.l.b16 %v3469
        %v3804 = vunpack.c.h.b16 %v3469
        %v3805 = vunpack.c.l.b16 %v3470
        %v3806 = vunpack.c.h.b16 %v3470
        %v3807 = vpack.c.b16 %v3587, %v3583
        %v3808 = vpack.c.b16 %v3588, %v3584
        %v3809 = vpack.c.b16 %v3589, %v3585
        %v3810 = vpack.c.b16 %v3590, %v3586
        %v3811 = vpack.c.b16 %v3595, %v3591
        %v3812 = vpack.c.b16 %v3596, %v3592
        %v3813 = vpack.c.b16 %v3597, %v3593
        %v3814 = vpack.c.b16 %v3598, %v3594
        %v3815 = vpack.c.b16 %v3603, %v3599
        %v3816 = vpack.c.b16 %v3604, %v3600
        %v3817 = vpack.c.b16 %v3605, %v3601
        %v3818 = vpack.c.b16 %v3606, %v3602
        %v3819 = vpack.c.b16 %v3611, %v3607
        %v3820 = vpack.c.b16 %v3612, %v3608
        %v3821 = vpack.c.b16 %v3613, %v3609
        %v3822 = vpack.c.b16 %v3614, %v3610
        %v3823 = vpack.c.b16 %v3619, %v3615
        %v3824 = vpack.c.b16 %v3620, %v3616
        %v3825 = vpack.c.b16 %v3621, %v3617
        %v3826 = vpack.c.b16 %v3622, %v3618
        %v3827 = vpack.c.b16 %v3627, %v3623
        %v3828 = vpack.c.b16 %v3628, %v3624
        %v3829 = vpack.c.b16 %v3629, %v3625
        %v3830 = vpack.c.b16 %v3630, %v3626
        %v3831 = vpack.c.b16 %v3635, %v3631
        %v3832 = vpack.c.b16 %v3636, %v3632
        %v3833 = vpack.c.b16 %v3637, %v3633
        %v3834 = vpack.c.b16 %v3638, %v3634
        %v3835 = vpack.c.b16 %v3643, %v3639
        %v3836 = vpack.c.b16 %v3644, %v3640
        %v3837 = vpack.c.b16 %v3645, %v3641
        %v3838 = vpack.c.b16 %v3646, %v3642
        %v3839 = vpack.c.b16 %v3651, %v3647
        %v3840 = vpack.c.b16 %v3652, %v3648
        %v3841 = vpack.c.b16 %v3653, %v3649
        %v3842 = vpack.c.b16 %v3654, %v3650
        %v3843 = vpack.c.b16 %v3659, %v3655
        %v3844 = vpack.c.b16 %v3660, %v3656
        %v3845 = vpack.c.b16 %v3661, %v3657
        %v3846 = vpack.c.b16 %v3662, %v3658
        %v3847 = vpack.c.b16 %v3667, %v3663
        %v3848 = vpack.c.b16 %v3668, %v3664
        %v3849 = vpack.c.b16 %v3669, %v3665
        %v3850 = vpack.c.b16 %v3670, %v3666
        %v3851 = vpack.c.b16 %v3675, %v3671
        %v3852 = vpack.c.b16 %v3676, %v3672
        %v3853 = vpack.c.b16 %v3677, %v3673
        %v3854 = vpack.c.b16 %v3678, %v3674
        %v3855 = vpack.c.b16 %v3683, %v3679
        %v3856 = vpack.c.b16 %v3684, %v3680
        %v3857 = vpack.c.b16 %v3685, %v3681
        %v3858 = vpack.c.b16 %v3686, %v3682
        %v3859 = vpack.c.b16 %v3691, %v3687
        %v3860 = vpack.c.b16 %v3692, %v3688
        %v3861 = vpack.c.b16 %v3693, %v3689
        %v3862 = vpack.c.b16 %v3694, %v3690
        %v3863 = vpack.c.b16 %v3699, %v3695
        %v3864 = vpack.c.b16 %v3700, %v3696
        %v3865 = vpack.c.b16 %v3701, %v3697
        %v3866 = vpack.c.b16 %v3702, %v3698
        %v3867 = vpack.c.b16 %v3707, %v3703
        %v3868 = vpack.c.b16 %v3708, %v3704
        %v3869 = vpack.c.b16 %v3709, %v3705
        %v3870 = vpack.c.b16 %v3710, %v3706
        %v3871 = vpack.c.b16 %v3715, %v3711
        %v3872 = vpack.c.b16 %v3716, %v3712
        %v3873 = vpack.c.b16 %v3717, %v3713
        %v3874 = vpack.c.b16 %v3718, %v3714
        %v3875 = vpack.c.b16 %v3723, %v3719
        %v3876 = vpack.c.b16 %v3724, %v3720
        %v3877 = vpack.c.b16 %v3725, %v3721
        %v3878 = vpack.c.b16 %v3726, %v3722
        %v3879 = vpack.c.b16 %v3731, %v3727
        %v3880 = vpack.c.b16 %v3732, %v3728
        %v3881 = vpack.c.b16 %v3733, %v3729
        %v3882 = vpack.c.b16 %v3734, %v3730
        %v3883 = vpack.c.b16 %v3739, %v3735
        %v3884 = vpack.c.b16 %v3740, %v3736
        %v3885 = vpack.c.b16 %v3741, %v3737
        %v3886 = vpack.c.b16 %v3742, %v3738
        %v3887 = vpack.c.b16 %v3747, %v3743
        %v3888 = vpack.c.b16 %v3748, %v3744
        %v3889 = vpack.c.b16 %v3749, %v3745
        %v3890 = vpack.c.b16 %v3750, %v3746
        %v3891 = vpack.c.b16 %v3755, %v3751
        %v3892 = vpack.c.b16 %v3756, %v3752
        %v3893 = vpack.c.b16 %v3757, %v3753
        %v3894 = vpack.c.b16 %v3758, %v3754
        %v3895 = vpack.c.b16 %v3763, %v3759
        %v3896 = vpack.c.b16 %v3764, %v3760
        %v3897 = vpack.c.b16 %v3765, %v3761
        %v3898 = vpack.c.b16 %v3766, %v3762
        %v3899 = vpack.c.b16 %v3771, %v3767
        %v3900 = vpack.c.b16 %v3772, %v3768
        %v3901 = vpack.c.b16 %v3773, %v3769
        %v3902 = vpack.c.b16 %v3774, %v3770
        %v3903 = vpack.c.b16 %v3779, %v3775
        %v3904 = vpack.c.b16 %v3780, %v3776
        %v3905 = vpack.c.b16 %v3781, %v3777
        %v3906 = vpack.c.b16 %v3782, %v3778
        %v3907 = vpack.c.b16 %v3787, %v3783
        %v3908 = vpack.c.b16 %v3788, %v3784
        %v3909 = vpack.c.b16 %v3789, %v3785
        %v3910 = vpack.c.b16 %v3790, %v3786
        %v3911 = vpack.c.b16 %v3795, %v3791
        %v3912 = vpack.c.b16 %v3796, %v3792
        %v3913 = vpack.c.b16 %v3797, %v3793
        %v3914 = vpack.c.b16 %v3798, %v3794
        %v3915 = vpack.c.b16 %v3803, %v3799
        %v3916 = vpack.c.b16 %v3804, %v3800
        %v3917 = vpack.c.b16 %v3805, %v3801
        %v3918 = vpack.c.b16 %v3806, %v3802
        %v4032 = vsel %vm2372, %v3357, 0
        %4034 = vmatprep.subr.bf16.mxu0 %v3808
        %4035 = vmatpush1.bf16.msra.mxu0 %v3807
        %4036 = vmatprep.subr.bf16.mxu0 %v3812
        %4037 = vmatpush1.bf16.msra.mxu0 %v3811
        %4038 = vmatprep.subr.bf16.mxu0 %v3816
        %4039 = vmatpush1.bf16.msra.mxu0 %v3815
        %4040 = vmatprep.subr.bf16.mxu0 %v3820
        %4041 = vmatpush1.bf16.msra.mxu0 %v3819
        %4042 = vmatprep.subr.bf16.mxu0 %v3824
        %4043 = vmatpush1.bf16.msra.mxu0 %v3823
        %4044 = vmatprep.subr.bf16.mxu0 %v3828
        %4045 = vmatpush1.bf16.msra.mxu0 %v3827
        %4046 = vmatprep.subr.bf16.mxu0 %v3832
        %4047 = vmatpush1.bf16.msra.mxu0 %v3831
        %4048 = vmatprep.subr.bf16.mxu0 %v3836
        %4049 = vmatpush1.bf16.msra.mxu0 %v3835
        %4050 = vmatprep.subr.bf16.mxu0 %v3840
        %4051 = vmatpush1.bf16.msra.mxu0 %v3839
        %4052 = vmatprep.subr.bf16.mxu0 %v3844
        %4053 = vmatpush1.bf16.msra.mxu0 %v3843
        %4054 = vmatprep.subr.bf16.mxu0 %v3848
        %4055 = vmatpush1.bf16.msra.mxu0 %v3847
        %4056 = vmatprep.subr.bf16.mxu0 %v3852
        %4057 = vmatpush1.bf16.msra.mxu0 %v3851
        %4058 = vmatprep.subr.bf16.mxu0 %v3856
        %4059 = vmatpush1.bf16.msra.mxu0 %v3855
        %4060 = vmatprep.subr.bf16.mxu0 %v3860
        %4061 = vmatpush1.bf16.msra.mxu0 %v3859
        %4062 = vmatprep.subr.bf16.mxu0 %v3864
        %4063 = vmatpush1.bf16.msra.mxu0 %v3863
        %4064 = vmatprep.subr.bf16.mxu0 %v3868
        %4065 = vmatpush1.bf16.msra.mxu0 %v3867
        %4066 = vmatprep.mubr.bf16.mxu0 %v3355
        %4067 = vmatmul.mubr.bf16.gmra.mrb[0].mxu0 %v3354
        %v4068 = vpop.f32.mrb[0].mxu0
        %v4069 = vadd.f32 0.0, %v4068
        %v4070 = vpop.f32.mrb[0].mxu0
        %v4071 = vadd.f32 0.0, %v4070
        %v4072 = vpop.f32.mrb[0].mxu0
        %v4073 = vpop.f32.mrb[0].mxu0
        %4074 = vdwg.mxu0
        %4075 = vmatprep.subr.bf16.mxu0 %v3872
        %4076 = vmatpush1.bf16.msra.mxu0 %v3871
        %4077 = vmatprep.subr.bf16.mxu0 %v3876
        %4078 = vmatpush1.bf16.msra.mxu0 %v3875
        %4079 = vmatprep.subr.bf16.mxu0 %v3880
        %4080 = vmatpush1.bf16.msra.mxu0 %v3879
        %4081 = vmatprep.subr.bf16.mxu0 %v3884
        %4082 = vmatpush1.bf16.msra.mxu0 %v3883
        %4083 = vmatprep.subr.bf16.mxu0 %v3888
        %4084 = vmatpush1.bf16.msra.mxu0 %v3887
        %4085 = vmatprep.subr.bf16.mxu0 %v3892
        %4086 = vmatpush1.bf16.msra.mxu0 %v3891
        %4087 = vmatprep.subr.bf16.mxu0 %v3896
        %4088 = vmatpush1.bf16.msra.mxu0 %v3895
        %4089 = vmatprep.subr.bf16.mxu0 %v3900
        %4090 = vmatpush1.bf16.msra.mxu0 %v3899
        %4091 = vmatprep.subr.bf16.mxu0 %v3904
        %4092 = vmatpush1.bf16.msra.mxu0 %v3903
        %4093 = vmatprep.subr.bf16.mxu0 %v3908
        %4094 = vmatpush1.bf16.msra.mxu0 %v3907
        %4095 = vmatprep.subr.bf16.mxu0 %v3912
        %4096 = vmatpush1.bf16.msra.mxu0 %v3911
        %4097 = vmatprep.subr.bf16.mxu0 %v3916
        %4098 = vmatpush1.bf16.msra.mxu0 %v3915
        %4099 = vmatprep.subr.bf16.mxu0 0
        %4100 = vmatpush1.bf16.msra.mxu0 0
        %4101 = vmatprep.subr.bf16.mxu0 0
        %4102 = vmatpush1.bf16.msra.mxu0 0
        %4103 = vmatprep.subr.bf16.mxu0 0
        %4104 = vmatpush1.bf16.msra.mxu0 0
        %4105 = vmatprep.subr.bf16.mxu0 0
        %4106 = vmatpush1.bf16.msra.mxu0 0
        %4107 = vmatprep.mubr.bf16.mxu0 %v4032
        %4108 = vmatmul.mubr.bf16.gmra.mrb[0].mxu0 %v3356
        %v4109 = vpop.f32.mrb[0].mxu0
        %v4110 = vadd.f32 %v4069, %v4109
        %v4111 = vpop.f32.mrb[0].mxu0
        %v4112 = vadd.f32 %v4071, %v4111
        %v4113 = vpop.f32.mrb[0].mxu0
        %v4114 = vpop.f32.mrb[0].mxu0
        %4115 = vdwg.mxu0
        %4116 = vmatprep.subr.bf16.mxu0 %v3810
        %4117 = vmatpush1.bf16.msra.mxu0 %v3809
        %4118 = vmatprep.subr.bf16.mxu0 %v3814
        %4119 = vmatpush1.bf16.msra.mxu0 %v3813
        %4120 = vmatprep.subr.bf16.mxu0 %v3818
        %4121 = vmatpush1.bf16.msra.mxu0 %v3817
        %4122 = vmatprep.subr.bf16.mxu0 %v3822
        %4123 = vmatpush1.bf16.msra.mxu0 %v3821
        %4124 = vmatprep.subr.bf16.mxu0 %v3826
        %4125 = vmatpush1.bf16.msra.mxu0 %v3825
        %4126 = vmatprep.subr.bf16.mxu0 %v3830
        %4127 = vmatpush1.bf16.msra.mxu0 %v3829
        %4128 = vmatprep.subr.bf16.mxu0 %v3834
        %4129 = vmatpush1.bf16.msra.mxu0 %v3833
        %4130 = vmatprep.subr.bf16.mxu0 %v3838
        %4131 = vmatpush1.bf16.msra.mxu0 %v3837
        %4132 = vmatprep.subr.bf16.mxu0 %v3842
        %4133 = vmatpush1.bf16.msra.mxu0 %v3841
        %4134 = vmatprep.subr.bf16.mxu0 %v3846
        %4135 = vmatpush1.bf16.msra.mxu0 %v3845
        %4136 = vmatprep.subr.bf16.mxu0 %v3850
        %4137 = vmatpush1.bf16.msra.mxu0 %v3849
        %4138 = vmatprep.subr.bf16.mxu0 %v3854
        %4139 = vmatpush1.bf16.msra.mxu0 %v3853
        %4140 = vmatprep.subr.bf16.mxu0 %v3858
        %4141 = vmatpush1.bf16.msra.mxu0 %v3857
        %4142 = vmatprep.subr.bf16.mxu0 %v3862
        %4143 = vmatpush1.bf16.msra.mxu0 %v3861
        %4144 = vmatprep.subr.bf16.mxu0 %v3866
        %4145 = vmatpush1.bf16.msra.mxu0 %v3865
        %4146 = vmatprep.subr.bf16.mxu0 %v3870
        %4147 = vmatpush1.bf16.msra.mxu0 %v3869
        %4148 = vmatprep.mubr.bf16.mxu0 %v3355
        %4149 = vmatmul.mubr.bf16.gmra.mrb[0].mxu0 %v3354
        %v4150 = vpop.f32.mrb[0].mxu0
        %v4151 = vadd.f32 0.0, %v4150
        %v4152 = vpop.f32.mrb[0].mxu0
        %v4153 = vadd.f32 0.0, %v4152
        %v4154 = vpop.f32.mrb[0].mxu0
        %v4155 = vpop.f32.mrb[0].mxu0
        %4156 = vdwg.mxu0
        %4157 = vmatprep.subr.bf16.mxu0 %v3874
        %4158 = vmatpush1.bf16.msra.mxu0 %v3873
        %4159 = vmatprep.subr.bf16.mxu0 %v3878
        %4160 = vmatpush1.bf16.msra.mxu0 %v3877
        %4161 = vmatprep.subr.bf16.mxu0 %v3882
        %4162 = vmatpush1.bf16.msra.mxu0 %v3881
        %4163 = vmatprep.subr.bf16.mxu0 %v3886
        %4164 = vmatpush1.bf16.msra.mxu0 %v3885
        %4165 = vmatprep.subr.bf16.mxu0 %v3890
        %4166 = vmatpush1.bf16.msra.mxu0 %v3889
        %4167 = vmatprep.subr.bf16.mxu0 %v3894
        %4168 = vmatpush1.bf16.msra.mxu0 %v3893
        %4169 = vmatprep.subr.bf16.mxu0 %v3898
        %4170 = vmatpush1.bf16.msra.mxu0 %v3897
        %4171 = vmatprep.subr.bf16.mxu0 %v3902
        %4172 = vmatpush1.bf16.msra.mxu0 %v3901
        %4173 = vmatprep.subr.bf16.mxu0 %v3906
        %4174 = vmatpush1.bf16.msra.mxu0 %v3905
        %4175 = vmatprep.subr.bf16.mxu0 %v3910
        %4176 = vmatpush1.bf16.msra.mxu0 %v3909
        %4177 = vmatprep.subr.bf16.mxu0 %v3914
        %4178 = vmatpush1.bf16.msra.mxu0 %v3913
        %4179 = vmatprep.subr.bf16.mxu0 %v3918
        %4180 = vmatpush1.bf16.msra.mxu0 %v3917
        %4181 = vmatprep.subr.bf16.mxu0 0
        %4182 = vmatpush1.bf16.msra.mxu0 0
        %4183 = vmatprep.subr.bf16.mxu0 0
        %4184 = vmatpush1.bf16.msra.mxu0 0
        %4185 = vmatprep.subr.bf16.mxu0 0
        %4186 = vmatpush1.bf16.msra.mxu0 0
        %4187 = vmatprep.subr.bf16.mxu0 0
        %4188 = vmatpush1.bf16.msra.mxu0 0
        %4189 = vmatprep.mubr.bf16.mxu0 %v4032
        %4190 = vmatmul.mubr.bf16.gmra.mrb[0].mxu0 %v3356
        %v4191 = vpop.f32.mrb[0].mxu0
        %v4192 = vadd.f32 %v4151, %v4191
        %v4193 = vpop.f32.mrb[0].mxu0
        %v4194 = vadd.f32 %v4153, %v4193
        %v4195 = vpop.f32.mrb[0].mxu0
        %v4196 = vpop.f32.mrb[0].mxu0
        %4197 = vdwg.mxu0
        %v4198 = vadd.f32 %v3179, %v4110
        %v4199 = vadd.f32 %v3181, %v4112
        %v4200 = vadd.f32 %v3261, %v4192
        %v4201 = vadd.f32 %v3263, %v4194
        %s4202 = scalar_lea.vmem %s4, 12
        %v4203 = vld [vmem:[%s4202] sm:$0xf]
        %v4205 = vsel %vm1393, %v4203, 0
        %4207 = vmatprep.subr.bf16.mxu0 %v1402
        %4208 = vmatpush1.bf16.msra.mxu0 %v1399
        %4209 = vmatprep.subr.bf16.mxu0 0
        %4210 = vmatpush1.bf16.msra.mxu0 0
        %4211 = vmatprep.subr.bf16.mxu0 0
        %4212 = vmatpush1.bf16.msra.mxu0 0
        %4213 = vmatprep.subr.bf16.mxu0 0
        %4214 = vmatpush1.bf16.msra.mxu0 0
        %4215 = vmatprep.subr.bf16.mxu0 0
        %4216 = vmatpush1.bf16.msra.mxu0 0
        %4217 = vmatprep.subr.bf16.mxu0 0
        %4218 = vmatpush1.bf16.msra.mxu0 0
        %4219 = vmatprep.subr.bf16.mxu0 0
        %4220 = vmatpush1.bf16.msra.mxu0 0
        %4221 = vmatprep.subr.bf16.mxu0 0
        %4222 = vmatpush1.bf16.msra.mxu0 0
        %4223 = vmatprep.subr.bf16.mxu0 0
        %4224 = vmatpush1.bf16.msra.mxu0 0
        %4225 = vmatprep.subr.bf16.mxu0 0
        %4226 = vmatpush1.bf16.msra.mxu0 0
        %4227 = vmatprep.subr.bf16.mxu0 0
        %4228 = vmatpush1.bf16.msra.mxu0 0
        %4229 = vmatprep.subr.bf16.mxu0 0
        %4230 = vmatpush1.bf16.msra.mxu0 0
        %4231 = vmatprep.subr.bf16.mxu0 0
        %4232 = vmatpush1.bf16.msra.mxu0 0
        %4233 = vmatprep.subr.bf16.mxu0 0
        %4234 = vmatpush1.bf16.msra.mxu0 0
        %4235 = vmatprep.subr.bf16.mxu0 0
        %4236 = vmatpush1.bf16.msra.mxu0 0
        %4237 = vmatprep.subr.bf16.mxu0 0
        %4238 = vmatpush1.bf16.msra.mxu0 0
        %4239 = vmatprep.mubr.bf16.mxu0 0
        %4240 = vmatmul.mubr.bf16.gmra.mrb[0].mxu0 %v4205
        %v4241 = vpop.f32.mrb[0].mxu0
        %v4242 = vadd.f32 0.0, %v4241
        %v4243 = vpop.f32.mrb[0].mxu0
        %v4244 = vadd.f32 0.0, %v4243
        %v4245 = vpop.f32.mrb[0].mxu0
        %v4246 = vpop.f32.mrb[0].mxu0
        %4247 = vdwg.mxu0
        %4248 = vmatprep.subr.bf16.mxu0 %v1408
        %4249 = vmatpush1.bf16.msra.mxu0 %v1405
        %4250 = vmatprep.subr.bf16.mxu0 0
        %4251 = vmatpush1.bf16.msra.mxu0 0
        %4252 = vmatprep.subr.bf16.mxu0 0
        %4253 = vmatpush1.bf16.msra.mxu0 0
        %4254 = vmatprep.subr.bf16.mxu0 0
        %4255 = vmatpush1.bf16.msra.mxu0 0
        %4256 = vmatprep.subr.bf16.mxu0 0
        %4257 = vmatpush1.bf16.msra.mxu0 0
        %4258 = vmatprep.subr.bf16.mxu0 0
        %4259 = vmatpush1.bf16.msra.mxu0 0
        %4260 = vmatprep.subr.bf16.mxu0 0
        %4261 = vmatpush1.bf16.msra.mxu0 0
        %4262 = vmatprep.subr.bf16.mxu0 0
        %4263 = vmatpush1.bf16.msra.mxu0 0
        %4264 = vmatprep.subr.bf16.mxu0 0
        %4265 = vmatpush1.bf16.msra.mxu0 0
        %4266 = vmatprep.subr.bf16.mxu0 0
        %4267 = vmatpush1.bf16.msra.mxu0 0
        %4268 = vmatprep.subr.bf16.mxu0 0
        %4269 = vmatpush1.bf16.msra.mxu0 0
        %4270 = vmatprep.subr.bf16.mxu0 0
        %4271 = vmatpush1.bf16.msra.mxu0 0
        %4272 = vmatprep.subr.bf16.mxu0 0
        %4273 = vmatpush1.bf16.msra.mxu0 0
        %4274 = vmatprep.subr.bf16.mxu0 0
        %4275 = vmatpush1.bf16.msra.mxu0 0
        %4276 = vmatprep.subr.bf16.mxu0 0
        %4277 = vmatpush1.bf16.msra.mxu0 0
        %4278 = vmatprep.subr.bf16.mxu0 0
        %4279 = vmatpush1.bf16.msra.mxu0 0
        %4280 = vmatprep.mubr.bf16.mxu0 0
        %4281 = vmatmul.mubr.bf16.gmra.mrb[0].mxu0 %v4205
        %v4282 = vpop.f32.mrb[0].mxu0
        %v4283 = vadd.f32 0.0, %v4282
        %v4284 = vpop.f32.mrb[0].mxu0
        %v4285 = vadd.f32 0.0, %v4284
        %v4286 = vpop.f32.mrb[0].mxu0
        %v4287 = vpop.f32.mrb[0].mxu0
        %4288 = vdwg.mxu0
        %v4289 = vpack.c.bf16 %v4242, %v4242
        %v4290 = vpack.c.bf16 %v4244, %v4244
        %v4291 = vpack.c.bf16 %v4283, %v4283
        %v4292 = vpack.c.bf16 %v4285, %v4285
        %s4293 = scalar_lea.vmem [#allocation5], 2688
        %v4294 = vld [vmem:[%s4293] sm:$0xff]
        %v4295 = vld [vmem:[%s4293 + $0x8] sm:$0xff]
        %v4296 = vld [vmem:[%s4293 + $0x10] sm:$0xff]
        %v4297 = vld [vmem:[%s4293 + $0x18] sm:$0xff]
        %v4298 = vld [vmem:[%s4293 + $0x20] sm:$0xff]
        %v4299 = vld [vmem:[%s4293 + $0x28] sm:$0xff]
        %v4300 = vld [vmem:[%s4293 + $0x30] sm:$0xff]
        %v4301 = vld [vmem:[%s4293 + $0x38] sm:$0xff]
        %v4302 = vld [vmem:[%s4293 + $0x40] sm:$0xff]
        %v4303 = vld [vmem:[%s4293 + $0x48] sm:$0xff]
        %v4304 = vld [vmem:[%s4293 + $0x50] sm:$0xff]
        %v4305 = vld [vmem:[%s4293 + $0x58] sm:$0xff]
        %v4306 = vld [vmem:[%s4293 + $0x60] sm:$0xff]
        %v4307 = vld [vmem:[%s4293 + $0x68] sm:$0xff]
        %v4308 = vld [vmem:[%s4293 + $0x70] sm:$0xff]
        %v4309 = vld [vmem:[%s4293 + $0x78] sm:$0xff]
        %v4310 = vld [vmem:[%s4293 + $0x80] sm:$0xff]
        %v4311 = vld [vmem:[%s4293 + $0x88] sm:$0xff]
        %v4312 = vld [vmem:[%s4293 + $0x90] sm:$0xff]
        %v4313 = vld [vmem:[%s4293 + $0x98] sm:$0xff]
        %v4314 = vld [vmem:[%s4293 + $0xa0] sm:$0xff]
        %v4315 = vld [vmem:[%s4293 + $0xa8] sm:$0xff]
        %v4316 = vld [vmem:[%s4293 + $0xb0] sm:$0xff]
        %v4317 = vld [vmem:[%s4293 + $0xb8] sm:$0xff]
        %v4318 = vld [vmem:[%s4293 + $0xc0] sm:$0xff]
        %v4319 = vld [vmem:[%s4293 + $0xc8] sm:$0xff]
        %v4320 = vld [vmem:[%s4293 + $0xd0] sm:$0xff]
        %v4321 = vld [vmem:[%s4293 + $0xd8] sm:$0xff]
        %v4322 = vld [vmem:[%s4293 + $0xe0] sm:$0xff]
        %v4323 = vld [vmem:[%s4293 + $0xe8] sm:$0xff]
        %v4324 = vld [vmem:[%s4293 + $0xf0] sm:$0xff]
        %v4325 = vld [vmem:[%s4293 + $0xf8] sm:$0xff]
        %v4326 = vld [vmem:[%s4293 + $0x100] sm:$0xff]
        %v4327 = vld [vmem:[%s4293 + $0x108] sm:$0xff]
        %v4328 = vld [vmem:[%s4293 + $0x110] sm:$0xff]
        %v4329 = vld [vmem:[%s4293 + $0x118] sm:$0xff]
        %v4330 = vld [vmem:[%s4293 + $0x120] sm:$0xff]
        %v4331 = vld [vmem:[%s4293 + $0x128] sm:$0xff]
        %v4332 = vld [vmem:[%s4293 + $0x130] sm:$0xff]
        %v4333 = vld [vmem:[%s4293 + $0x138] sm:$0xff]
        %v4334 = vld [vmem:[%s4293 + $0x140] sm:$0xff]
        %v4335 = vld [vmem:[%s4293 + $0x148] sm:$0xff]
        %v4336 = vld [vmem:[%s4293 + $0x150] sm:$0xff]
        %v4337 = vld [vmem:[%s4293 + $0x158] sm:$0xff]
        %v4338 = vld [vmem:[%s4293 + $0x160] sm:$0xff]
        %v4339 = vld [vmem:[%s4293 + $0x168] sm:$0xff]
        %v4340 = vld [vmem:[%s4293 + $0x170] sm:$0xff]
        %v4341 = vld [vmem:[%s4293 + $0x178] sm:$0xff]
        %v4342 = vld [vmem:[%s4293 + $0x180] sm:$0xff]
        %v4343 = vld [vmem:[%s4293 + $0x188] sm:$0xff]
        %v4344 = vld [vmem:[%s4293 + $0x190] sm:$0xff]
        %v4345 = vld [vmem:[%s4293 + $0x198] sm:$0xff]
        %v4346 = vld [vmem:[%s4293 + $0x1a0] sm:$0xff]
        %v4347 = vld [vmem:[%s4293 + $0x1a8] sm:$0xff]
        %v4348 = vld [vmem:[%s4293 + $0x1b0] sm:$0xff]
        %v4349 = vld [vmem:[%s4293 + $0x1b8] sm:$0xff]
        %v4350 = vld [vmem:[%s4293 + $0x1c0] sm:$0xff]
        %v4351 = vld [vmem:[%s4293 + $0x1c8] sm:$0xff]
        %v4352 = vld [vmem:[%s4293 + $0x1d0] sm:$0xff]
        %v4353 = vld [vmem:[%s4293 + $0x1d8] sm:$0xff]
        %v4354 = vld [vmem:[%s4293 + $0x1e0] sm:$0xff]
        %v4355 = vld [vmem:[%s4293 + $0x1e8] sm:$0xff]
        %v4356 = vld [vmem:[%s4293 + $0x1f0] sm:$0xff]
        %v4357 = vld [vmem:[%s4293 + $0x1f8] sm:$0xff]
        %v4358 = vld [vmem:[%s4293 + $0x200] sm:$0xff]
        %v4359 = vld [vmem:[%s4293 + $0x208] sm:$0xff]
        %v4360 = vld [vmem:[%s4293 + $0x210] sm:$0xff]
        %v4361 = vld [vmem:[%s4293 + $0x218] sm:$0xff]
        %v4362 = vld [vmem:[%s4293 + $0x220] sm:$0xff]
        %v4363 = vld [vmem:[%s4293 + $0x228] sm:$0xff]
        %v4364 = vld [vmem:[%s4293 + $0x230] sm:$0xff]
        %v4365 = vld [vmem:[%s4293 + $0x238] sm:$0xff]
        %v4366 = vld [vmem:[%s4293 + $0x240] sm:$0xff]
        %v4367 = vld [vmem:[%s4293 + $0x248] sm:$0xff]
        %v4368 = vld [vmem:[%s4293 + $0x250] sm:$0xff]
        %v4369 = vld [vmem:[%s4293 + $0x258] sm:$0xff]
        %v4370 = vld [vmem:[%s4293 + $0x260] sm:$0xff]
        %v4371 = vld [vmem:[%s4293 + $0x268] sm:$0xff]
        %v4372 = vld [vmem:[%s4293 + $0x270] sm:$0xff]
        %v4373 = vld [vmem:[%s4293 + $0x278] sm:$0xff]
        %v4374 = vld [vmem:[%s4293 + $0x280] sm:$0xff]
        %v4375 = vld [vmem:[%s4293 + $0x288] sm:$0xff]
        %v4376 = vld [vmem:[%s4293 + $0x290] sm:$0xff]
        %v4377 = vld [vmem:[%s4293 + $0x298] sm:$0xff]
        %v4378 = vld [vmem:[%s4293 + $0x2a0] sm:$0xff]
        %v4379 = vld [vmem:[%s4293 + $0x2a8] sm:$0xff]
        %v4380 = vld [vmem:[%s4293 + $0x2b0] sm:$0xff]
        %v4381 = vld [vmem:[%s4293 + $0x2b8] sm:$0xff]
        %v4382 = vld [vmem:[%s4293 + $0x2c0] sm:$0xff]
        %v4383 = vld [vmem:[%s4293 + $0x2c8] sm:$0xff]
        %v4384 = vld [vmem:[%s4293 + $0x2d0] sm:$0xff]
        %v4385 = vld [vmem:[%s4293 + $0x2d8] sm:$0xff]
        %v4386 = vld [vmem:[%s4293 + $0x2e0] sm:$0xff]
        %v4387 = vld [vmem:[%s4293 + $0x2e8] sm:$0xff]
        %v4388 = vld [vmem:[%s4293 + $0x2f0] sm:$0xff]
        %v4389 = vld [vmem:[%s4293 + $0x2f8] sm:$0xff]
        %v4390 = vld [vmem:[%s4293 + $0x300] sm:$0xff]
        %v4391 = vld [vmem:[%s4293 + $0x308] sm:$0xff]
        %v4392 = vld [vmem:[%s4293 + $0x310] sm:$0xff]
        %v4393 = vld [vmem:[%s4293 + $0x318] sm:$0xff]
        %v4394 = vld [vmem:[%s4293 + $0x320] sm:$0xff]
        %v4395 = vld [vmem:[%s4293 + $0x328] sm:$0xff]
        %v4396 = vld [vmem:[%s4293 + $0x330] sm:$0xff]
        %v4397 = vld [vmem:[%s4293 + $0x338] sm:$0xff]
        %v4398 = vld [vmem:[%s4293 + $0x340] sm:$0xff]
        %v4399 = vld [vmem:[%s4293 + $0x348] sm:$0xff]
        %v4400 = vld [vmem:[%s4293 + $0x350] sm:$0xff]
        %v4401 = vld [vmem:[%s4293 + $0x358] sm:$0xff]
        %v4402 = vld [vmem:[%s4293 + $0x360] sm:$0xff]
        %v4403 = vld [vmem:[%s4293 + $0x368] sm:$0xff]
        %v4404 = vld [vmem:[%s4293 + $0x370] sm:$0xff]
        %v4405 = vld [vmem:[%s4293 + $0x378] sm:$0xff]
        %v4518 = vunpack.c.l.b16 %v4294
        %v4519 = vunpack.c.h.b16 %v4294
        %v4520 = vunpack.c.l.b16 %v4295
        %v4521 = vunpack.c.h.b16 %v4295
        %v4522 = vunpack.c.l.b16 %v4296
        %v4523 = vunpack.c.h.b16 %v4296
        %v4524 = vunpack.c.l.b16 %v4297
        %v4525 = vunpack.c.h.b16 %v4297
        %v4526 = vunpack.c.l.b16 %v4298
        %v4527 = vunpack.c.h.b16 %v4298
        %v4528 = vunpack.c.l.b16 %v4299
        %v4529 = vunpack.c.h.b16 %v4299
        %v4530 = vunpack.c.l.b16 %v4300
        %v4531 = vunpack.c.h.b16 %v4300
        %v4532 = vunpack.c.l.b16 %v4301
        %v4533 = vunpack.c.h.b16 %v4301
        %v4534 = vunpack.c.l.b16 %v4302
        %v4535 = vunpack.c.h.b16 %v4302
        %v4536 = vunpack.c.l.b16 %v4303
        %v4537 = vunpack.c.h.b16 %v4303
        %v4538 = vunpack.c.l.b16 %v4304
        %v4539 = vunpack.c.h.b16 %v4304
        %v4540 = vunpack.c.l.b16 %v4305
        %v4541 = vunpack.c.h.b16 %v4305
        %v4542 = vunpack.c.l.b16 %v4306
        %v4543 = vunpack.c.h.b16 %v4306
        %v4544 = vunpack.c.l.b16 %v4307
        %v4545 = vunpack.c.h.b16 %v4307
        %v4546 = vunpack.c.l.b16 %v4308
        %v4547 = vunpack.c.h.b16 %v4308
        %v4548 = vunpack.c.l.b16 %v4309
        %v4549 = vunpack.c.h.b16 %v4309
        %v4550 = vunpack.c.l.b16 %v4310
        %v4551 = vunpack.c.h.b16 %v4310
        %v4552 = vunpack.c.l.b16 %v4311
        %v4553 = vunpack.c.h.b16 %v4311
        %v4554 = vunpack.c.l.b16 %v4312
        %v4555 = vunpack.c.h.b16 %v4312
        %v4556 = vunpack.c.l.b16 %v4313
        %v4557 = vunpack.c.h.b16 %v4313
        %v4558 = vunpack.c.l.b16 %v4314
        %v4559 = vunpack.c.h.b16 %v4314
        %v4560 = vunpack.c.l.b16 %v4315
        %v4561 = vunpack.c.h.b16 %v4315
        %v4562 = vunpack.c.l.b16 %v4316
        %v4563 = vunpack.c.h.b16 %v4316
        %v4564 = vunpack.c.l.b16 %v4317
        %v4565 = vunpack.c.h.b16 %v4317
        %v4566 = vunpack.c.l.b16 %v4318
        %v4567 = vunpack.c.h.b16 %v4318
        %v4568 = vunpack.c.l.b16 %v4319
        %v4569 = vunpack.c.h.b16 %v4319
        %v4570 = vunpack.c.l.b16 %v4320
        %v4571 = vunpack.c.h.b16 %v4320
        %v4572 = vunpack.c.l.b16 %v4321
        %v4573 = vunpack.c.h.b16 %v4321
        %v4574 = vunpack.c.l.b16 %v4322
        %v4575 = vunpack.c.h.b16 %v4322
        %v4576 = vunpack.c.l.b16 %v4323
        %v4577 = vunpack.c.h.b16 %v4323
        %v4578 = vunpack.c.l.b16 %v4324
        %v4579 = vunpack.c.h.b16 %v4324
        %v4580 = vunpack.c.l.b16 %v4325
        %v4581 = vunpack.c.h.b16 %v4325
        %v4582 = vunpack.c.l.b16 %v4326
        %v4583 = vunpack.c.h.b16 %v4326
        %v4584 = vunpack.c.l.b16 %v4327
        %v4585 = vunpack.c.h.b16 %v4327
        %v4586 = vunpack.c.l.b16 %v4328
        %v4587 = vunpack.c.h.b16 %v4328
        %v4588 = vunpack.c.l.b16 %v4329
        %v4589 = vunpack.c.h.b16 %v4329
        %v4590 = vunpack.c.l.b16 %v4330
        %v4591 = vunpack.c.h.b16 %v4330
        %v4592 = vunpack.c.l.b16 %v4331
        %v4593 = vunpack.c.h.b16 %v4331
        %v4594 = vunpack.c.l.b16 %v4332
        %v4595 = vunpack.c.h.b16 %v4332
        %v4596 = vunpack.c.l.b16 %v4333
        %v4597 = vunpack.c.h.b16 %v4333
        %v4598 = vunpack.c.l.b16 %v4334
        %v4599 = vunpack.c.h.b16 %v4334
        %v4600 = vunpack.c.l.b16 %v4335
        %v4601 = vunpack.c.h.b16 %v4335
        %v4602 = vunpack.c.l.b16 %v4336
        %v4603 = vunpack.c.h.b16 %v4336
        %v4604 = vunpack.c.l.b16 %v4337
        %v4605 = vunpack.c.h.b16 %v4337
        %v4606 = vunpack.c.l.b16 %v4338
        %v4607 = vunpack.c.h.b16 %v4338
        %v4608 = vunpack.c.l.b16 %v4339
        %v4609 = vunpack.c.h.b16 %v4339
        %v4610 = vunpack.c.l.b16 %v4340
        %v4611 = vunpack.c.h.b16 %v4340
        %v4612 = vunpack.c.l.b16 %v4341
        %v4613 = vunpack.c.h.b16 %v4341
        %v4614 = vunpack.c.l.b16 %v4342
        %v4615 = vunpack.c.h.b16 %v4342
        %v4616 = vunpack.c.l.b16 %v4343
        %v4617 = vunpack.c.h.b16 %v4343
        %v4618 = vunpack.c.l.b16 %v4344
        %v4619 = vunpack.c.h.b16 %v4344
        %v4620 = vunpack.c.l.b16 %v4345
        %v4621 = vunpack.c.h.b16 %v4345
        %v4622 = vunpack.c.l.b16 %v4346
        %v4623 = vunpack.c.h.b16 %v4346
        %v4624 = vunpack.c.l.b16 %v4347
        %v4625 = vunpack.c.h.b16 %v4347
        %v4626 = vunpack.c.l.b16 %v4348
        %v4627 = vunpack.c.h.b16 %v4348
        %v4628 = vunpack.c.l.b16 %v4349
        %v4629 = vunpack.c.h.b16 %v4349
        %v4630 = vunpack.c.l.b16 %v4350
        %v4631 = vunpack.c.h.b16 %v4350
        %v4632 = vunpack.c.l.b16 %v4351
        %v4633 = vunpack.c.h.b16 %v4351
        %v4634 = vunpack.c.l.b16 %v4352
        %v4635 = vunpack.c.h.b16 %v4352
        %v4636 = vunpack.c.l.b16 %v4353
        %v4637 = vunpack.c.h.b16 %v4353
        %v4638 = vunpack.c.l.b16 %v4354
        %v4639 = vunpack.c.h.b16 %v4354
        %v4640 = vunpack.c.l.b16 %v4355
        %v4641 = vunpack.c.h.b16 %v4355
        %v4642 = vunpack.c.l.b16 %v4356
        %v4643 = vunpack.c.h.b16 %v4356
        %v4644 = vunpack.c.l.b16 %v4357
        %v4645 = vunpack.c.h.b16 %v4357
        %v4646 = vunpack.c.l.b16 %v4358
        %v4647 = vunpack.c.h.b16 %v4358
        %v4648 = vunpack.c.l.b16 %v4359
        %v4649 = vunpack.c.h.b16 %v4359
        %v4650 = vunpack.c.l.b16 %v4360
        %v4651 = vunpack.c.h.b16 %v4360
        %v4652 = vunpack.c.l.b16 %v4361
        %v4653 = vunpack.c.h.b16 %v4361
        %v4654 = vunpack.c.l.b16 %v4362
        %v4655 = vunpack.c.h.b16 %v4362
        %v4656 = vunpack.c.l.b16 %v4363
        %v4657 = vunpack.c.h.b16 %v4363
        %v4658 = vunpack.c.l.b16 %v4364
        %v4659 = vunpack.c.h.b16 %v4364
        %v4660 = vunpack.c.l.b16 %v4365
        %v4661 = vunpack.c.h.b16 %v4365
        %v4662 = vunpack.c.l.b16 %v4366
        %v4663 = vunpack.c.h.b16 %v4366
        %v4664 = vunpack.c.l.b16 %v4367
        %v4665 = vunpack.c.h.b16 %v4367
        %v4666 = vunpack.c.l.b16 %v4368
        %v4667 = vunpack.c.h.b16 %v4368
        %v4668 = vunpack.c.l.b16 %v4369
        %v4669 = vunpack.c.h.b16 %v4369
        %v4670 = vunpack.c.l.b16 %v4370
        %v4671 = vunpack.c.h.b16 %v4370
        %v4672 = vunpack.c.l.b16 %v4371
        %v4673 = vunpack.c.h.b16 %v4371
        %v4674 = vunpack.c.l.b16 %v4372
        %v4675 = vunpack.c.h.b16 %v4372
        %v4676 = vunpack.c.l.b16 %v4373
        %v4677 = vunpack.c.h.b16 %v4373
        %v4678 = vunpack.c.l.b16 %v4374
        %v4679 = vunpack.c.h.b16 %v4374
        %v4680 = vunpack.c.l.b16 %v4375
        %v4681 = vunpack.c.h.b16 %v4375
        %v4682 = vunpack.c.l.b16 %v4376
        %v4683 = vunpack.c.h.b16 %v4376
        %v4684 = vunpack.c.l.b16 %v4377
        %v4685 = vunpack.c.h.b16 %v4377
        %v4686 = vunpack.c.l.b16 %v4378
        %v4687 = vunpack.c.h.b16 %v4378
        %v4688 = vunpack.c.l.b16 %v4379
        %v4689 = vunpack.c.h.b16 %v4379
        %v4690 = vunpack.c.l.b16 %v4380
        %v4691 = vunpack.c.h.b16 %v4380
        %v4692 = vunpack.c.l.b16 %v4381
        %v4693 = vunpack.c.h.b16 %v4381
        %v4694 = vunpack.c.l.b16 %v4382
        %v4695 = vunpack.c.h.b16 %v4382
        %v4696 = vunpack.c.l.b16 %v4383
        %v4697 = vunpack.c.h.b16 %v4383
        %v4698 = vunpack.c.l.b16 %v4384
        %v4699 = vunpack.c.h.b16 %v4384
        %v4700 = vunpack.c.l.b16 %v4385
        %v4701 = vunpack.c.h.b16 %v4385
        %v4702 = vunpack.c.l.b16 %v4386
        %v4703 = vunpack.c.h.b16 %v4386
        %v4704 = vunpack.c.l.b16 %v4387
        %v4705 = vunpack.c.h.b16 %v4387
        %v4706 = vunpack.c.l.b16 %v4388
        %v4707 = vunpack.c.h.b16 %v4388
        %v4708 = vunpack.c.l.b16 %v4389
        %v4709 = vunpack.c.h.b16 %v4389
        %v4710 = vunpack.c.l.b16 %v4390
        %v4711 = vunpack.c.h.b16 %v4390
        %v4712 = vunpack.c.l.b16 %v4391
        %v4713 = vunpack.c.h.b16 %v4391
        %v4714 = vunpack.c.l.b16 %v4392
        %v4715 = vunpack.c.h.b16 %v4392
        %v4716 = vunpack.c.l.b16 %v4393
        %v4717 = vunpack.c.h.b16 %v4393
        %v4718 = vunpack.c.l.b16 %v4394
        %v4719 = vunpack.c.h.b16 %v4394
        %v4720 = vunpack.c.l.b16 %v4395
        %v4721 = vunpack.c.h.b16 %v4395
        %v4722 = vunpack.c.l.b16 %v4396
        %v4723 = vunpack.c.h.b16 %v4396
        %v4724 = vunpack.c.l.b16 %v4397
        %v4725 = vunpack.c.h.b16 %v4397
        %v4726 = vunpack.c.l.b16 %v4398
        %v4727 = vunpack.c.h.b16 %v4398
        %v4728 = vunpack.c.l.b16 %v4399
        %v4729 = vunpack.c.h.b16 %v4399
        %v4730 = vunpack.c.l.b16 %v4400
        %v4731 = vunpack.c.h.b16 %v4400
        %v4732 = vunpack.c.l.b16 %v4401
        %v4733 = vunpack.c.h.b16 %v4401
        %v4734 = vunpack.c.l.b16 %v4402
        %v4735 = vunpack.c.h.b16 %v4402
        %v4736 = vunpack.c.l.b16 %v4403
        %v4737 = vunpack.c.h.b16 %v4403
        %v4738 = vunpack.c.l.b16 %v4404
        %v4739 = vunpack.c.h.b16 %v4404
        %v4740 = vunpack.c.l.b16 %v4405
        %v4741 = vunpack.c.h.b16 %v4405
        %v4742 = vpack.c.b16 %v4522, %v4518
        %v4743 = vpack.c.b16 %v4523, %v4519
        %v4744 = vpack.c.b16 %v4524, %v4520
        %v4745 = vpack.c.b16 %v4525, %v4521
        %v4746 = vpack.c.b16 %v4530, %v4526
        %v4747 = vpack.c.b16 %v4531, %v4527
        %v4748 = vpack.c.b16 %v4532, %v4528
        %v4749 = vpack.c.b16 %v4533, %v4529
        %v4750 = vpack.c.b16 %v4538, %v4534
        %v4751 = vpack.c.b16 %v4539, %v4535
        %v4752 = vpack.c.b16 %v4540, %v4536
        %v4753 = vpack.c.b16 %v4541, %v4537
        %v4754 = vpack.c.b16 %v4546, %v4542
        %v4755 = vpack.c.b16 %v4547, %v4543
        %v4756 = vpack.c.b16 %v4548, %v4544
        %v4757 = vpack.c.b16 %v4549, %v4545
        %v4758 = vpack.c.b16 %v4554, %v4550
        %v4759 = vpack.c.b16 %v4555, %v4551
        %v4760 = vpack.c.b16 %v4556, %v4552
        %v4761 = vpack.c.b16 %v4557, %v4553
        %v4762 = vpack.c.b16 %v4562, %v4558
        %v4763 = vpack.c.b16 %v4563, %v4559
        %v4764 = vpack.c.b16 %v4564, %v4560
        %v4765 = vpack.c.b16 %v4565, %v4561
        %v4766 = vpack.c.b16 %v4570, %v4566
        %v4767 = vpack.c.b16 %v4571, %v4567
        %v4768 = vpack.c.b16 %v4572, %v4568
        %v4769 = vpack.c.b16 %v4573, %v4569
        %v4770 = vpack.c.b16 %v4578, %v4574
        %v4771 = vpack.c.b16 %v4579, %v4575
        %v4772 = vpack.c.b16 %v4580, %v4576
        %v4773 = vpack.c.b16 %v4581, %v4577
        %v4774 = vpack.c.b16 %v4586, %v4582
        %v4775 = vpack.c.b16 %v4587, %v4583
        %v4776 = vpack.c.b16 %v4588, %v4584
        %v4777 = vpack.c.b16 %v4589, %v4585
        %v4778 = vpack.c.b16 %v4594, %v4590
        %v4779 = vpack.c.b16 %v4595, %v4591
        %v4780 = vpack.c.b16 %v4596, %v4592
        %v4781 = vpack.c.b16 %v4597, %v4593
        %v4782 = vpack.c.b16 %v4602, %v4598
        %v4783 = vpack.c.b16 %v4603, %v4599
        %v4784 = vpack.c.b16 %v4604, %v4600
        %v4785 = vpack.c.b16 %v4605, %v4601
        %v4786 = vpack.c.b16 %v4610, %v4606
        %v4787 = vpack.c.b16 %v4611, %v4607
        %v4788 = vpack.c.b16 %v4612, %v4608
        %v4789 = vpack.c.b16 %v4613, %v4609
        %v4790 = vpack.c.b16 %v4618, %v4614
        %v4791 = vpack.c.b16 %v4619, %v4615
        %v4792 = vpack.c.b16 %v4620, %v4616
        %v4793 = vpack.c.b16 %v4621, %v4617
        %v4794 = vpack.c.b16 %v4626, %v4622
        %v4795 = vpack.c.b16 %v4627, %v4623
        %v4796 = vpack.c.b16 %v4628, %v4624
        %v4797 = vpack.c.b16 %v4629, %v4625
        %v4798 = vpack.c.b16 %v4634, %v4630
        %v4799 = vpack.c.b16 %v4635, %v4631
        %v4800 = vpack.c.b16 %v4636, %v4632
        %v4801 = vpack.c.b16 %v4637, %v4633
        %v4802 = vpack.c.b16 %v4642, %v4638
        %v4803 = vpack.c.b16 %v4643, %v4639
        %v4804 = vpack.c.b16 %v4644, %v4640
        %v4805 = vpack.c.b16 %v4645, %v4641
        %v4806 = vpack.c.b16 %v4650, %v4646
        %v4807 = vpack.c.b16 %v4651, %v4647
        %v4808 = vpack.c.b16 %v4652, %v4648
        %v4809 = vpack.c.b16 %v4653, %v4649
        %v4810 = vpack.c.b16 %v4658, %v4654
        %v4811 = vpack.c.b16 %v4659, %v4655
        %v4812 = vpack.c.b16 %v4660, %v4656
        %v4813 = vpack.c.b16 %v4661, %v4657
        %v4814 = vpack.c.b16 %v4666, %v4662
        %v4815 = vpack.c.b16 %v4667, %v4663
        %v4816 = vpack.c.b16 %v4668, %v4664
        %v4817 = vpack.c.b16 %v4669, %v4665
        %v4818 = vpack.c.b16 %v4674, %v4670
        %v4819 = vpack.c.b16 %v4675, %v4671
        %v4820 = vpack.c.b16 %v4676, %v4672
        %v4821 = vpack.c.b16 %v4677, %v4673
        %v4822 = vpack.c.b16 %v4682, %v4678
        %v4823 = vpack.c.b16 %v4683, %v4679
        %v4824 = vpack.c.b16 %v4684, %v4680
        %v4825 = vpack.c.b16 %v4685, %v4681
        %v4826 = vpack.c.b16 %v4690, %v4686
        %v4827 = vpack.c.b16 %v4691, %v4687
        %v4828 = vpack.c.b16 %v4692, %v4688
        %v4829 = vpack.c.b16 %v4693, %v4689
        %v4830 = vpack.c.b16 %v4698, %v4694
        %v4831 = vpack.c.b16 %v4699, %v4695
        %v4832 = vpack.c.b16 %v4700, %v4696
        %v4833 = vpack.c.b16 %v4701, %v4697
        %v4834 = vpack.c.b16 %v4706, %v4702
        %v4835 = vpack.c.b16 %v4707, %v4703
        %v4836 = vpack.c.b16 %v4708, %v4704
        %v4837 = vpack.c.b16 %v4709, %v4705
        %v4838 = vpack.c.b16 %v4714, %v4710
        %v4839 = vpack.c.b16 %v4715, %v4711
        %v4840 = vpack.c.b16 %v4716, %v4712
        %v4841 = vpack.c.b16 %v4717, %v4713
        %v4842 = vpack.c.b16 %v4722, %v4718
        %v4843 = vpack.c.b16 %v4723, %v4719
        %v4844 = vpack.c.b16 %v4724, %v4720
        %v4845 = vpack.c.b16 %v4725, %v4721
        %v4846 = vpack.c.b16 %v4730, %v4726
        %v4847 = vpack.c.b16 %v4731, %v4727
        %v4848 = vpack.c.b16 %v4732, %v4728
        %v4849 = vpack.c.b16 %v4733, %v4729
        %v4850 = vpack.c.b16 %v4738, %v4734
        %v4851 = vpack.c.b16 %v4739, %v4735
        %v4852 = vpack.c.b16 %v4740, %v4736
        %v4853 = vpack.c.b16 %v4741, %v4737
        %v4967 = vsel %vm2372, %v4292, 0
        %4969 = vmatprep.subr.bf16.mxu0 %v4743
        %4970 = vmatpush1.bf16.msra.mxu0 %v4742
        %4971 = vmatprep.subr.bf16.mxu0 %v4747
        %4972 = vmatpush1.bf16.msra.mxu0 %v4746
        %4973 = vmatprep.subr.bf16.mxu0 %v4751
        %4974 = vmatpush1.bf16.msra.mxu0 %v4750
        %4975 = vmatprep.subr.bf16.mxu0 %v4755
        %4976 = vmatpush1.bf16.msra.mxu0 %v4754
        %4977 = vmatprep.subr.bf16.mxu0 %v4759
        %4978 = vmatpush1.bf16.msra.mxu0 %v4758
        %4979 = vmatprep.subr.bf16.mxu0 %v4763
        %4980 = vmatpush1.bf16.msra.mxu0 %v4762
        %4981 = vmatprep.subr.bf16.mxu0 %v4767
        %4982 = vmatpush1.bf16.msra.mxu0 %v4766
        %4983 = vmatprep.subr.bf16.mxu0 %v4771
        %4984 = vmatpush1.bf16.msra.mxu0 %v4770
        %4985 = vmatprep.subr.bf16.mxu0 %v4775
        %4986 = vmatpush1.bf16.msra.mxu0 %v4774
        %4987 = vmatprep.subr.bf16.mxu0 %v4779
        %4988 = vmatpush1.bf16.msra.mxu0 %v4778
        %4989 = vmatprep.subr.bf16.mxu0 %v4783
        %4990 = vmatpush1.bf16.msra.mxu0 %v4782
        %4991 = vmatprep.subr.bf16.mxu0 %v4787
        %4992 = vmatpush1.bf16.msra.mxu0 %v4786
        %4993 = vmatprep.subr.bf16.mxu0 %v4791
        %4994 = vmatpush1.bf16.msra.mxu0 %v4790
        %4995 = vmatprep.subr.bf16.mxu0 %v4795
        %4996 = vmatpush1.bf16.msra.mxu0 %v4794
        %4997 = vmatprep.subr.bf16.mxu0 %v4799
        %4998 = vmatpush1.bf16.msra.mxu0 %v4798
        %4999 = vmatprep.subr.bf16.mxu0 %v4803
        %5000 = vmatpush1.bf16.msra.mxu0 %v4802
        %5001 = vmatprep.mubr.bf16.mxu0 %v4290
        %5002 = vmatmul.mubr.bf16.gmra.mrb[0].mxu0 %v4289
        %v5003 = vpop.f32.mrb[0].mxu0
        %v5004 = vadd.f32 0.0, %v5003
        %v5005 = vpop.f32.mrb[0].mxu0
        %v5006 = vadd.f32 0.0, %v5005
        %v5007 = vpop.f32.mrb[0].mxu0
        %v5008 = vpop.f32.mrb[0].mxu0
        %5009 = vdwg.mxu0
        %5010 = vmatprep.subr.bf16.mxu0 %v4807
        %5011 = vmatpush1.bf16.msra.mxu0 %v4806
        %5012 = vmatprep.subr.bf16.mxu0 %v4811
        %5013 = vmatpush1.bf16.msra.mxu0 %v4810
        %5014 = vmatprep.subr.bf16.mxu0 %v4815
        %5015 = vmatpush1.bf16.msra.mxu0 %v4814
        %5016 = vmatprep.subr.bf16.mxu0 %v4819
        %5017 = vmatpush1.bf16.msra.mxu0 %v4818
        %5018 = vmatprep.subr.bf16.mxu0 %v4823
        %5019 = vmatpush1.bf16.msra.mxu0 %v4822
        %5020 = vmatprep.subr.bf16.mxu0 %v4827
        %5021 = vmatpush1.bf16.msra.mxu0 %v4826
        %5022 = vmatprep.subr.bf16.mxu0 %v4831
        %5023 = vmatpush1.bf16.msra.mxu0 %v4830
        %5024 = vmatprep.subr.bf16.mxu0 %v4835
        %5025 = vmatpush1.bf16.msra.mxu0 %v4834
        %5026 = vmatprep.subr.bf16.mxu0 %v4839
        %5027 = vmatpush1.bf16.msra.mxu0 %v4838
        %5028 = vmatprep.subr.bf16.mxu0 %v4843
        %5029 = vmatpush1.bf16.msra.mxu0 %v4842
        %5030 = vmatprep.subr.bf16.mxu0 %v4847
        %5031 = vmatpush1.bf16.msra.mxu0 %v4846
        %5032 = vmatprep.subr.bf16.mxu0 %v4851
        %5033 = vmatpush1.bf16.msra.mxu0 %v4850
        %5034 = vmatprep.subr.bf16.mxu0 0
        %5035 = vmatpush1.bf16.msra.mxu0 0
        %5036 = vmatprep.subr.bf16.mxu0 0
        %5037 = vmatpush1.bf16.msra.mxu0 0
        %5038 = vmatprep.subr.bf16.mxu0 0
        %5039 = vmatpush1.bf16.msra.mxu0 0
        %5040 = vmatprep.subr.bf16.mxu0 0
        %5041 = vmatpush1.bf16.msra.mxu0 0
        %5042 = vmatprep.mubr.bf16.mxu0 %v4967
        %5043 = vmatmul.mubr.bf16.gmra.mrb[0].mxu0 %v4291
        %v5044 = vpop.f32.mrb[0].mxu0
        %v5045 = vadd.f32 %v5004, %v5044
        %v5046 = vpop.f32.mrb[0].mxu0
        %v5047 = vadd.f32 %v5006, %v5046
        %v5048 = vpop.f32.mrb[0].mxu0
        %v5049 = vpop.f32.mrb[0].mxu0
        %5050 = vdwg.mxu0
        %5051 = vmatprep.subr.bf16.mxu0 %v4745
        %5052 = vmatpush1.bf16.msra.mxu0 %v4744
        %5053 = vmatprep.subr.bf16.mxu0 %v4749
        %5054 = vmatpush1.bf16.msra.mxu0 %v4748
        %5055 = vmatprep.subr.bf16.mxu0 %v4753
        %5056 = vmatpush1.bf16.msra.mxu0 %v4752
        %5057 = vmatprep.subr.bf16.mxu0 %v4757
        %5058 = vmatpush1.bf16.msra.mxu0 %v4756
        %5059 = vmatprep.subr.bf16.mxu0 %v4761
        %5060 = vmatpush1.bf16.msra.mxu0 %v4760
        %5061 = vmatprep.subr.bf16.mxu0 %v4765
        %5062 = vmatpush1.bf16.msra.mxu0 %v4764
        %5063 = vmatprep.subr.bf16.mxu0 %v4769
        %5064 = vmatpush1.bf16.msra.mxu0 %v4768
        %5065 = vmatprep.subr.bf16.mxu0 %v4773
        %5066 = vmatpush1.bf16.msra.mxu0 %v4772
        %5067 = vmatprep.subr.bf16.mxu0 %v4777
        %5068 = vmatpush1.bf16.msra.mxu0 %v4776
        %5069 = vmatprep.subr.bf16.mxu0 %v4781
        %5070 = vmatpush1.bf16.msra.mxu0 %v4780
        %5071 = vmatprep.subr.bf16.mxu0 %v4785
        %5072 = vmatpush1.bf16.msra.mxu0 %v4784
        %5073 = vmatprep.subr.bf16.mxu0 %v4789
        %5074 = vmatpush1.bf16.msra.mxu0 %v4788
        %5075 = vmatprep.subr.bf16.mxu0 %v4793
        %5076 = vmatpush1.bf16.msra.mxu0 %v4792
        %5077 = vmatprep.subr.bf16.mxu0 %v4797
        %5078 = vmatpush1.bf16.msra.mxu0 %v4796
        %5079 = vmatprep.subr.bf16.mxu0 %v4801
        %5080 = vmatpush1.bf16.msra.mxu0 %v4800
        %5081 = vmatprep.subr.bf16.mxu0 %v4805
        %5082 = vmatpush1.bf16.msra.mxu0 %v4804
        %5083 = vmatprep.mubr.bf16.mxu0 %v4290
        %5084 = vmatmul.mubr.bf16.gmra.mrb[0].mxu0 %v4289
        %v5085 = vpop.f32.mrb[0].mxu0
        %v5086 = vadd.f32 0.0, %v5085
        %v5087 = vpop.f32.mrb[0].mxu0
        %v5088 = vadd.f32 0.0, %v5087
        %v5089 = vpop.f32.mrb[0].mxu0
        %v5090 = vpop.f32.mrb[0].mxu0
        %5091 = vdwg.mxu0
        %5092 = vmatprep.subr.bf16.mxu0 %v4809
        %5093 = vmatpush1.bf16.msra.mxu0 %v4808
        %5094 = vmatprep.subr.bf16.mxu0 %v4813
        %5095 = vmatpush1.bf16.msra.mxu0 %v4812
        %5096 = vmatprep.subr.bf16.mxu0 %v4817
        %5097 = vmatpush1.bf16.msra.mxu0 %v4816
        %5098 = vmatprep.subr.bf16.mxu0 %v4821
        %5099 = vmatpush1.bf16.msra.mxu0 %v4820
        %5100 = vmatprep.subr.bf16.mxu0 %v4825
        %5101 = vmatpush1.bf16.msra.mxu0 %v4824
        %5102 = vmatprep.subr.bf16.mxu0 %v4829
        %5103 = vmatpush1.bf16.msra.mxu0 %v4828
        %5104 = vmatprep.subr.bf16.mxu0 %v4833
        %5105 = vmatpush1.bf16.msra.mxu0 %v4832
        %5106 = vmatprep.subr.bf16.mxu0 %v4837
        %5107 = vmatpush1.bf16.msra.mxu0 %v4836
        %5108 = vmatprep.subr.bf16.mxu0 %v4841
        %5109 = vmatpush1.bf16.msra.mxu0 %v4840
        %5110 = vmatprep.subr.bf16.mxu0 %v4845
        %5111 = vmatpush1.bf16.msra.mxu0 %v4844
        %5112 = vmatprep.subr.bf16.mxu0 %v4849
        %5113 = vmatpush1.bf16.msra.mxu0 %v4848
        %5114 = vmatprep.subr.bf16.mxu0 %v4853
        %5115 = vmatpush1.bf16.msra.mxu0 %v4852
        %5116 = vmatprep.subr.bf16.mxu0 0
        %5117 = vmatpush1.bf16.msra.mxu0 0
        %5118 = vmatprep.subr.bf16.mxu0 0
        %5119 = vmatpush1.bf16.msra.mxu0 0
        %5120 = vmatprep.subr.bf16.mxu0 0
        %5121 = vmatpush1.bf16.msra.mxu0 0
        %5122 = vmatprep.subr.bf16.mxu0 0
        %5123 = vmatpush1.bf16.msra.mxu0 0
        %5124 = vmatprep.mubr.bf16.mxu0 %v4967
        %5125 = vmatmul.mubr.bf16.gmra.mrb[0].mxu0 %v4291
        %v5126 = vpop.f32.mrb[0].mxu0
        %v5127 = vadd.f32 %v5086, %v5126
        %v5128 = vpop.f32.mrb[0].mxu0
        %v5129 = vadd.f32 %v5088, %v5128
        %v5130 = vpop.f32.mrb[0].mxu0
        %v5131 = vpop.f32.mrb[0].mxu0
        %5132 = vdwg.mxu0
        %v5133 = vadd.f32 %v4198, %v5045
        %v5134 = vadd.f32 %v4199, %v5047
        %v5135 = vadd.f32 %v4200, %v5127
        %v5136 = vadd.f32 %v4201, %v5129
        %v5137 = vld [vmem:[#allocation7] sm:$0xf]
        %v5139 = vlaneseq
        %v5140 = vshrl.u32 %v5139, 7
        %v5141 = vsub.s32 0, %v5140
        %v5142 = vrot.slane %v5137, %v5141
        %v5143 = vlaneseq
        %v5144 = vshrl.u32 %v5143, 7
        %v5145 = vsub.s32 1, %v5144
        %v5146 = vrot.slane %v5137, %v5145
        %v5147 = vlaneseq
        %v5148 = vshrl.u32 %v5147, 7
        %v5149 = vsub.s32 2, %v5148
        %v5150 = vrot.slane %v5137, %v5149
        %v5151 = vlaneseq
        %v5152 = vshrl.u32 %v5151, 7
        %v5153 = vsub.s32 3, %v5152
        %v5154 = vrot.slane %v5137, %v5153
        %v5159 = vadd.f32 %v5133, %v5142
        %v5160 = vadd.f32 %v5134, %v5146
        %v5161 = vadd.f32 %v5135, %v5150
        %v5162 = vadd.f32 %v5136, %v5154
        %v5163 = vmax.f32 %v5159, 0.0
        %v5164 = vmax.f32 %v5160, 0.0
        %v5165 = vmax.f32 %v5161, 0.0
        %v5166 = vmax.f32 %v5162, 0.0
        %v5167 = vpack.c.bf16 %v5163, %v5163
        %v5168 = vpack.c.bf16 %v5164, %v5164
        %v5169 = vpack.c.bf16 %v5165, %v5165
        %v5170 = vpack.c.bf16 %v5166, %v5166
        %v5171 = vld [vmem:[%s7] sm:$0x3]
        %vm5172 = vcmask 56320
        %v5174 = vsel %vm5172, %v5171, 0
        %vm5176 = vcmask 1042432
        %vm5177 = vcmask 1043456
        %v5178 = vsel %vm5176, 4294967295, 65535
        %v5179 = vsel %vm5177, %v5178, 0
        %v5181 = vand.u32 %v5167, %v5179
        %v5184 = vand.u32 %v5168, %v5179
        %v5187 = vand.u32 %v5169, %v5179
        %v5190 = vand.u32 %v5170, %v5179
        %5192 = vmatprep.subr.bf16.mxu0 %v5184
        %5193 = vmatpush1.bf16.msra.mxu0 %v5181
        %5194 = vmatprep.subr.bf16.mxu0 0
        %5195 = vmatpush1.bf16.msra.mxu0 0
        %5196 = vmatprep.subr.bf16.mxu0 0
        %5197 = vmatpush1.bf16.msra.mxu0 0
        %5198 = vmatprep.subr.bf16.mxu0 0
        %5199 = vmatpush1.bf16.msra.mxu0 0
        %5200 = vmatprep.subr.bf16.mxu0 0
        %5201 = vmatpush1.bf16.msra.mxu0 0
        %5202 = vmatprep.subr.bf16.mxu0 0
        %5203 = vmatpush1.bf16.msra.mxu0 0
        %5204 = vmatprep.subr.bf16.mxu0 0
        %5205 = vmatpush1.bf16.msra.mxu0 0
        %5206 = vmatprep.subr.bf16.mxu0 0
        %5207 = vmatpush1.bf16.msra.mxu0 0
        %5208 = vmatprep.subr.bf16.mxu0 0
        %5209 = vmatpush1.bf16.msra.mxu0 0
        %5210 = vmatprep.subr.bf16.mxu0 0
        %5211 = vmatpush1.bf16.msra.mxu0 0
        %5212 = vmatprep.subr.bf16.mxu0 0
        %5213 = vmatpush1.bf16.msra.mxu0 0
        %5214 = vmatprep.subr.bf16.mxu0 0
        %5215 = vmatpush1.bf16.msra.mxu0 0
        %5216 = vmatprep.subr.bf16.mxu0 0
        %5217 = vmatpush1.bf16.msra.mxu0 0
        %5218 = vmatprep.subr.bf16.mxu0 0
        %5219 = vmatpush1.bf16.msra.mxu0 0
        %5220 = vmatprep.subr.bf16.mxu0 0
        %5221 = vmatpush1.bf16.msra.mxu0 0
        %5222 = vmatprep.subr.bf16.mxu0 0
        %5223 = vmatpush1.bf16.msra.mxu0 0
        %5224 = vmatprep.mubr.bf16.mxu0 0
        %5225 = vmatmul.mubr.bf16.gmra.mrb[0].mxu0 %v5174
        %v5226 = vpop.f32.mrb[0].mxu0
        %v5227 = vadd.f32 0.0, %v5226
        %v5228 = vpop.f32.mrb[0].mxu0
        %v5229 = vadd.f32 0.0, %v5228
        %v5230 = vpop.f32.mrb[0].mxu0
        %v5231 = vpop.f32.mrb[0].mxu0
        %5232 = vdwg.mxu0
        %5233 = vmatprep.subr.bf16.mxu0 %v5190
        %5234 = vmatpush1.bf16.msra.mxu0 %v5187
        %5235 = vmatprep.subr.bf16.mxu0 0
        %5236 = vmatpush1.bf16.msra.mxu0 0
        %5237 = vmatprep.subr.bf16.mxu0 0
        %5238 = vmatpush1.bf16.msra.mxu0 0
        %5239 = vmatprep.subr.bf16.mxu0 0
        %5240 = vmatpush1.bf16.msra.mxu0 0
        %5241 = vmatprep.subr.bf16.mxu0 0
        %5242 = vmatpush1.bf16.msra.mxu0 0
        %5243 = vmatprep.subr.bf16.mxu0 0
        %5244 = vmatpush1.bf16.msra.mxu0 0
        %5245 = vmatprep.subr.bf16.mxu0 0
        %5246 = vmatpush1.bf16.msra.mxu0 0
        %5247 = vmatprep.subr.bf16.mxu0 0
        %5248 = vmatpush1.bf16.msra.mxu0 0
        %5249 = vmatprep.subr.bf16.mxu0 0
        %5250 = vmatpush1.bf16.msra.mxu0 0
        %5251 = vmatprep.subr.bf16.mxu0 0
        %5252 = vmatpush1.bf16.msra.mxu0 0
        %5253 = vmatprep.subr.bf16.mxu0 0
        %5254 = vmatpush1.bf16.msra.mxu0 0
        %5255 = vmatprep.subr.bf16.mxu0 0
        %5256 = vmatpush1.bf16.msra.mxu0 0
        %5257 = vmatprep.subr.bf16.mxu0 0
        %5258 = vmatpush1.bf16.msra.mxu0 0
        %5259 = vmatprep.subr.bf16.mxu0 0
        %5260 = vmatpush1.bf16.msra.mxu0 0
        %5261 = vmatprep.subr.bf16.mxu0 0
        %5262 = vmatpush1.bf16.msra.mxu0 0
        %5263 = vmatprep.subr.bf16.mxu0 0
        %5264 = vmatpush1.bf16.msra.mxu0 0
        %5265 = vmatprep.mubr.bf16.mxu0 0
        %5266 = vmatmul.mubr.bf16.gmra.mrb[0].mxu0 %v5174
        %v5267 = vpop.f32.mrb[0].mxu0
        %v5268 = vadd.f32 0.0, %v5267
        %v5269 = vpop.f32.mrb[0].mxu0
        %v5270 = vadd.f32 0.0, %v5269
        %v5271 = vpop.f32.mrb[0].mxu0
        %v5272 = vpop.f32.mrb[0].mxu0
        %5273 = vdwg.mxu0
        %v5274 = vpack.c.bf16 %v5227, %v5227
        %v5275 = vpack.c.bf16 %v5229, %v5229
        %v5276 = vpack.c.bf16 %v5268, %v5268
        %v5277 = vpack.c.bf16 %v5270, %v5270
        %v5278 = vld [vmem:[#allocation8] sm:$0xff]
        %v5279 = vld [vmem:[#allocation8 + $0x8] sm:$0xf]
        %v5280 = vld [vmem:[#allocation8 + $0xc] sm:$0xff]
        %v5281 = vld [vmem:[#allocation8 + $0x14] sm:$0xf]
        %v5282 = vld [vmem:[#allocation8 + $0x18] sm:$0xff]
        %v5283 = vld [vmem:[#allocation8 + $0x20] sm:$0xf]
        %v5284 = vld [vmem:[#allocation8 + $0x24] sm:$0xff]
        %v5285 = vld [vmem:[#allocation8 + $0x2c] sm:$0xf]
        %v5286 = vld [vmem:[#allocation8 + $0x30] sm:$0xff]
        %v5287 = vld [vmem:[#allocation8 + $0x38] sm:$0xf]
        %v5288 = vld [vmem:[#allocation8 + $0x3c] sm:$0xff]
        %v5289 = vld [vmem:[#allocation8 + $0x44] sm:$0xf]
        %v5290 = vld [vmem:[#allocation8 + $0x48] sm:$0xff]
        %v5291 = vld [vmem:[#allocation8 + $0x50] sm:$0xf]
        %v5292 = vld [vmem:[#allocation8 + $0x54] sm:$0xff]
        %v5293 = vld [vmem:[#allocation8 + $0x5c] sm:$0xf]
        %v5294 = vld [vmem:[#allocation8 + $0x60] sm:$0xff]
        %v5295 = vld [vmem:[#allocation8 + $0x68] sm:$0xf]
        %v5296 = vld [vmem:[#allocation8 + $0x6c] sm:$0xff]
        %v5297 = vld [vmem:[#allocation8 + $0x74] sm:$0xf]
        %v5298 = vld [vmem:[#allocation8 + $0x78] sm:$0xff]
        %v5299 = vld [vmem:[#allocation8 + $0x80] sm:$0xf]
        %v5300 = vld [vmem:[#allocation8 + $0x84] sm:$0xff]
        %v5301 = vld [vmem:[#allocation8 + $0x8c] sm:$0xf]
        %v5302 = vld [vmem:[#allocation8 + $0x90] sm:$0xff]
        %v5303 = vld [vmem:[#allocation8 + $0x98] sm:$0xf]
        %v5304 = vld [vmem:[#allocation8 + $0x9c] sm:$0xff]
        %v5305 = vld [vmem:[#allocation8 + $0xa4] sm:$0xf]
        %v5306 = vld [vmem:[#allocation8 + $0xa8] sm:$0xff]
        %v5307 = vld [vmem:[#allocation8 + $0xb0] sm:$0xf]
        %v5308 = vld [vmem:[#allocation8 + $0xb4] sm:$0xff]
        %v5309 = vld [vmem:[#allocation8 + $0xbc] sm:$0xf]
        %v5310 = vld [vmem:[#allocation8 + $0xc0] sm:$0xff]
        %v5311 = vld [vmem:[#allocation8 + $0xc8] sm:$0xf]
        %v5312 = vld [vmem:[#allocation8 + $0xcc] sm:$0xff]
        %v5313 = vld [vmem:[#allocation8 + $0xd4] sm:$0xf]
        %v5314 = vld [vmem:[#allocation8 + $0xd8] sm:$0xff]
        %v5315 = vld [vmem:[#allocation8 + $0xe0] sm:$0xf]
        %v5316 = vld [vmem:[#allocation8 + $0xe4] sm:$0xff]
        %v5317 = vld [vmem:[#allocation8 + $0xec] sm:$0xf]
        %v5318 = vld [vmem:[#allocation8 + $0xf0] sm:$0xff]
        %v5319 = vld [vmem:[#allocation8 + $0xf8] sm:$0xf]
        %v5320 = vld [vmem:[#allocation8 + $0xfc] sm:$0xff]
        %v5321 = vld [vmem:[#allocation8 + $0x104] sm:$0xf]
        %v5322 = vld [vmem:[#allocation8 + $0x108] sm:$0xff]
        %v5323 = vld [vmem:[#allocation8 + $0x110] sm:$0xf]
        %v5324 = vld [vmem:[#allocation8 + $0x114] sm:$0xff]
        %v5325 = vld [vmem:[#allocation8 + $0x11c] sm:$0xf]
        %v5326 = vld [vmem:[#allocation8 + $0x120] sm:$0xff]
        %v5327 = vld [vmem:[#allocation8 + $0x128] sm:$0xf]
        %v5328 = vld [vmem:[#allocation8 + $0x12c] sm:$0xff]
        %v5329 = vld [vmem:[#allocation8 + $0x134] sm:$0xf]
        %v5330 = vld [vmem:[#allocation8 + $0x138] sm:$0xff]
        %v5331 = vld [vmem:[#allocation8 + $0x140] sm:$0xf]
        %v5332 = vld [vmem:[#allocation8 + $0x144] sm:$0xff]
        %v5333 = vld [vmem:[#allocation8 + $0x14c] sm:$0xf]
        %v5334 = vld [vmem:[#allocation8 + $0x150] sm:$0xff]
        %v5335 = vld [vmem:[#allocation8 + $0x158] sm:$0xf]
        %v5336 = vld [vmem:[#allocation8 + $0x15c] sm:$0xff]
        %v5337 = vld [vmem:[#allocation8 + $0x164] sm:$0xf]
        %v5338 = vld [vmem:[#allocation8 + $0x168] sm:$0xff]
        %v5339 = vld [vmem:[#allocation8 + $0x170] sm:$0xf]
        %v5340 = vld [vmem:[#allocation8 + $0x174] sm:$0xff]
        %v5341 = vld [vmem:[#allocation8 + $0x17c] sm:$0xf]
        %v5342 = vld [vmem:[#allocation8 + $0x180] sm:$0xff]
        %v5343 = vld [vmem:[#allocation8 + $0x188] sm:$0xf]
        %v5344 = vld [vmem:[#allocation8 + $0x18c] sm:$0xff]
        %v5345 = vld [vmem:[#allocation8 + $0x194] sm:$0xf]
        %v5346 = vld [vmem:[#allocation8 + $0x198] sm:$0xff]
        %v5347 = vld [vmem:[#allocation8 + $0x1a0] sm:$0xf]
        %v5348 = vld [vmem:[#allocation8 + $0x1a4] sm:$0xff]
        %v5349 = vld [vmem:[#allocation8 + $0x1ac] sm:$0xf]
        %v5350 = vld [vmem:[#allocation8 + $0x1b0] sm:$0xff]
        %v5351 = vld [vmem:[#allocation8 + $0x1b8] sm:$0xf]
        %v5352 = vld [vmem:[#allocation8 + $0x1bc] sm:$0xff]
        %v5353 = vld [vmem:[#allocation8 + $0x1c4] sm:$0xf]
        %v5354 = vld [vmem:[#allocation8 + $0x1c8] sm:$0xff]
        %v5355 = vld [vmem:[#allocation8 + $0x1d0] sm:$0xf]
        %v5356 = vld [vmem:[#allocation8 + $0x1d4] sm:$0xff]
        %v5357 = vld [vmem:[#allocation8 + $0x1dc] sm:$0xf]
        %v5358 = vld [vmem:[#allocation8 + $0x1e0] sm:$0xff]
        %v5359 = vld [vmem:[#allocation8 + $0x1e8] sm:$0xf]
        %v5360 = vld [vmem:[#allocation8 + $0x1ec] sm:$0xff]
        %v5361 = vld [vmem:[#allocation8 + $0x1f4] sm:$0xf]
        %v5362 = vld [vmem:[#allocation8 + $0x1f8] sm:$0xff]
        %v5363 = vld [vmem:[#allocation8 + $0x200] sm:$0xf]
        %v5364 = vld [vmem:[#allocation8 + $0x204] sm:$0xff]
        %v5365 = vld [vmem:[#allocation8 + $0x20c] sm:$0xf]
        %v5366 = vld [vmem:[#allocation8 + $0x210] sm:$0xff]
        %v5367 = vld [vmem:[#allocation8 + $0x218] sm:$0xf]
        %v5368 = vld [vmem:[#allocation8 + $0x21c] sm:$0xff]
        %v5369 = vld [vmem:[#allocation8 + $0x224] sm:$0xf]
        %v5370 = vld [vmem:[#allocation8 + $0x228] sm:$0xff]
        %v5371 = vld [vmem:[#allocation8 + $0x230] sm:$0xf]
        %v5372 = vld [vmem:[#allocation8 + $0x234] sm:$0xff]
        %v5373 = vld [vmem:[#allocation8 + $0x23c] sm:$0xf]
        %v5374 = vld [vmem:[#allocation8 + $0x240] sm:$0xff]
        %v5375 = vld [vmem:[#allocation8 + $0x248] sm:$0xf]
        %v5376 = vld [vmem:[#allocation8 + $0x24c] sm:$0xff]
        %v5377 = vld [vmem:[#allocation8 + $0x254] sm:$0xf]
        %v5378 = vld [vmem:[#allocation8 + $0x258] sm:$0xff]
        %v5379 = vld [vmem:[#allocation8 + $0x260] sm:$0xf]
        %v5380 = vld [vmem:[#allocation8 + $0x264] sm:$0xff]
        %v5381 = vld [vmem:[#allocation8 + $0x26c] sm:$0xf]
        %v5382 = vld [vmem:[#allocation8 + $0x270] sm:$0xff]
        %v5383 = vld [vmem:[#allocation8 + $0x278] sm:$0xf]
        %v5384 = vld [vmem:[#allocation8 + $0x27c] sm:$0xff]
        %v5385 = vld [vmem:[#allocation8 + $0x284] sm:$0xf]
        %v5386 = vld [vmem:[#allocation8 + $0x288] sm:$0xff]
        %v5387 = vld [vmem:[#allocation8 + $0x290] sm:$0xf]
        %v5388 = vld [vmem:[#allocation8 + $0x294] sm:$0xff]
        %v5389 = vld [vmem:[#allocation8 + $0x29c] sm:$0xf]
        %s5390 = scalar_lea.vmem %s7, 2
        %v5391 = vld [vmem:[%s5390] sm:$0x3]
        %v5393 = vsel %vm5172, %v5391, 0
        %5395 = vmatprep.subr.bf16.mxu0 %v5184
        %5396 = vmatpush1.bf16.msra.mxu0 %v5181
        %5397 = vmatprep.subr.bf16.mxu0 0
        %5398 = vmatpush1.bf16.msra.mxu0 0
        %5399 = vmatprep.subr.bf16.mxu0 0
        %5400 = vmatpush1.bf16.msra.mxu0 0
        %5401 = vmatprep.subr.bf16.mxu0 0
        %5402 = vmatpush1.bf16.msra.mxu0 0
        %5403 = vmatprep.subr.bf16.mxu0 0
        %5404 = vmatpush1.bf16.msra.mxu0 0
        %5405 = vmatprep.subr.bf16.mxu0 0
        %5406 = vmatpush1.bf16.msra.mxu0 0
        %5407 = vmatprep.subr.bf16.mxu0 0
        %5408 = vmatpush1.bf16.msra.mxu0 0
        %5409 = vmatprep.subr.bf16.mxu0 0
        %5410 = vmatpush1.bf16.msra.mxu0 0
        %5411 = vmatprep.subr.bf16.mxu0 0
        %5412 = vmatpush1.bf16.msra.mxu0 0
        %5413 = vmatprep.subr.bf16.mxu0 0
        %5414 = vmatpush1.bf16.msra.mxu0 0
        %5415 = vmatprep.subr.bf16.mxu0 0
        %5416 = vmatpush1.bf16.msra.mxu0 0
        %5417 = vmatprep.subr.bf16.mxu0 0
        %5418 = vmatpush1.bf16.msra.mxu0 0
        %5419 = vmatprep.subr.bf16.mxu0 0
        %5420 = vmatpush1.bf16.msra.mxu0 0
        %5421 = vmatprep.subr.bf16.mxu0 0
        %5422 = vmatpush1.bf16.msra.mxu0 0
        %5423 = vmatprep.subr.bf16.mxu0 0
        %5424 = vmatpush1.bf16.msra.mxu0 0
        %5425 = vmatprep.subr.bf16.mxu0 0
        %5426 = vmatpush1.bf16.msra.mxu0 0
        %5427 = vmatprep.mubr.bf16.mxu0 0
        %5428 = vmatmul.mubr.bf16.gmra.mrb[0].mxu0 %v5393
        %v5429 = vpop.f32.mrb[0].mxu0
        %v5430 = vadd.f32 0.0, %v5429
        %v5431 = vpop.f32.mrb[0].mxu0
        %v5432 = vadd.f32 0.0, %v5431
        %v5433 = vpop.f32.mrb[0].mxu0
        %v5434 = vpop.f32.mrb[0].mxu0
        %5435 = vdwg.mxu0
        %5436 = vmatprep.subr.bf16.mxu0 %v5190
        %5437 = vmatpush1.bf16.msra.mxu0 %v5187
        %5438 = vmatprep.subr.bf16.mxu0 0
        %5439 = vmatpush1.bf16.msra.mxu0 0
        %5440 = vmatprep.subr.bf16.mxu0 0
        %5441 = vmatpush1.bf16.msra.mxu0 0
        %5442 = vmatprep.subr.bf16.mxu0 0
        %5443 = vmatpush1.bf16.msra.mxu0 0
        %5444 = vmatprep.subr.bf16.mxu0 0
        %5445 = vmatpush1.bf16.msra.mxu0 0
        %5446 = vmatprep.subr.bf16.mxu0 0
        %5447 = vmatpush1.bf16.msra.mxu0 0
        %5448 = vmatprep.subr.bf16.mxu0 0
        %5449 = vmatpush1.bf16.msra.mxu0 0
        %5450 = vmatprep.subr.bf16.mxu0 0
        %5451 = vmatpush1.bf16.msra.mxu0 0
        %5452 = vmatprep.subr.bf16.mxu0 0
        %5453 = vmatpush1.bf16.msra.mxu0 0
        %5454 = vmatprep.subr.bf16.mxu0 0
        %5455 = vmatpush1.bf16.msra.mxu0 0
        %5456 = vmatprep.subr.bf16.mxu0 0
        %5457 = vmatpush1.bf16.msra.mxu0 0
        %5458 = vmatprep.subr.bf16.mxu0 0
        %5459 = vmatpush1.bf16.msra.mxu0 0
        %5460 = vmatprep.subr.bf16.mxu0 0
        %5461 = vmatpush1.bf16.msra.mxu0 0
        %5462 = vmatprep.subr.bf16.mxu0 0
        %5463 = vmatpush1.bf16.msra.mxu0 0
        %5464 = vmatprep.subr.bf16.mxu0 0
        %5465 = vmatpush1.bf16.msra.mxu0 0
        %5466 = vmatprep.subr.bf16.mxu0 0
        %5467 = vmatpush1.bf16.msra.mxu0 0
        %5468 = vmatprep.mubr.bf16.mxu0 0
        %5469 = vmatmul.mubr.bf16.gmra.mrb[0].mxu0 %v5393
        %v5470 = vpop.f32.mrb[0].mxu0
        %v5471 = vadd.f32 0.0, %v5470
        %v5472 = vpop.f32.mrb[0].mxu0
        %v5473 = vadd.f32 0.0, %v5472
        %v5474 = vpop.f32.mrb[0].mxu0
        %v5475 = vpop.f32.mrb[0].mxu0
        %5476 = vdwg.mxu0
        %v5477 = vpack.c.bf16 %v5430, %v5430
        %v5478 = vpack.c.bf16 %v5432, %v5432
        %v5479 = vpack.c.bf16 %v5471, %v5471
        %v5480 = vpack.c.bf16 %v5473, %v5473
        %s5481 = scalar_lea.vmem [#allocation8], 672
        %v5482 = vld [vmem:[%s5481] sm:$0xff]
        %v5483 = vld [vmem:[%s5481 + $0x8] sm:$0xf]
        %v5484 = vld [vmem:[%s5481 + $0xc] sm:$0xff]
        %v5485 = vld [vmem:[%s5481 + $0x14] sm:$0xf]
        %v5486 = vld [vmem:[%s5481 + $0x18] sm:$0xff]
        %v5487 = vld [vmem:[%s5481 + $0x20] sm:$0xf]
        %v5488 = vld [vmem:[%s5481 + $0x24] sm:$0xff]
        %v5489 = vld [vmem:[%s5481 + $0x2c] sm:$0xf]
        %v5490 = vld [vmem:[%s5481 + $0x30] sm:$0xff]
        %v5491 = vld [vmem:[%s5481 + $0x38] sm:$0xf]
        %v5492 = vld [vmem:[%s5481 + $0x3c] sm:$0xff]
        %v5493 = vld [vmem:[%s5481 + $0x44] sm:$0xf]
        %v5494 = vld [vmem:[%s5481 + $0x48] sm:$0xff]
        %v5495 = vld [vmem:[%s5481 + $0x50] sm:$0xf]
        %v5496 = vld [vmem:[%s5481 + $0x54] sm:$0xff]
        %v5497 = vld [vmem:[%s5481 + $0x5c] sm:$0xf]
        %v5498 = vld [vmem:[%s5481 + $0x60] sm:$0xff]
        %v5499 = vld [vmem:[%s5481 + $0x68] sm:$0xf]
        %v5500 = vld [vmem:[%s5481 + $0x6c] sm:$0xff]
        %v5501 = vld [vmem:[%s5481 + $0x74] sm:$0xf]
        %v5502 = vld [vmem:[%s5481 + $0x78] sm:$0xff]
        %v5503 = vld [vmem:[%s5481 + $0x80] sm:$0xf]
        %v5504 = vld [vmem:[%s5481 + $0x84] sm:$0xff]
        %v5505 = vld [vmem:[%s5481 + $0x8c] sm:$0xf]
        %v5506 = vld [vmem:[%s5481 + $0x90] sm:$0xff]
        %v5507 = vld [vmem:[%s5481 + $0x98] sm:$0xf]
        %v5508 = vld [vmem:[%s5481 + $0x9c] sm:$0xff]
        %v5509 = vld [vmem:[%s5481 + $0xa4] sm:$0xf]
        %v5510 = vld [vmem:[%s5481 + $0xa8] sm:$0xff]
        %v5511 = vld [vmem:[%s5481 + $0xb0] sm:$0xf]
        %v5512 = vld [vmem:[%s5481 + $0xb4] sm:$0xff]
        %v5513 = vld [vmem:[%s5481 + $0xbc] sm:$0xf]
        %v5514 = vld [vmem:[%s5481 + $0xc0] sm:$0xff]
        %v5515 = vld [vmem:[%s5481 + $0xc8] sm:$0xf]
        %v5516 = vld [vmem:[%s5481 + $0xcc] sm:$0xff]
        %v5517 = vld [vmem:[%s5481 + $0xd4] sm:$0xf]
        %v5518 = vld [vmem:[%s5481 + $0xd8] sm:$0xff]
        %v5519 = vld [vmem:[%s5481 + $0xe0] sm:$0xf]
        %v5520 = vld [vmem:[%s5481 + $0xe4] sm:$0xff]
        %v5521 = vld [vmem:[%s5481 + $0xec] sm:$0xf]
        %v5522 = vld [vmem:[%s5481 + $0xf0] sm:$0xff]
        %v5523 = vld [vmem:[%s5481 + $0xf8] sm:$0xf]
        %v5524 = vld [vmem:[%s5481 + $0xfc] sm:$0xff]
        %v5525 = vld [vmem:[%s5481 + $0x104] sm:$0xf]
        %v5526 = vld [vmem:[%s5481 + $0x108] sm:$0xff]
        %v5527 = vld [vmem:[%s5481 + $0x110] sm:$0xf]
        %v5528 = vld [vmem:[%s5481 + $0x114] sm:$0xff]
        %v5529 = vld [vmem:[%s5481 + $0x11c] sm:$0xf]
        %v5530 = vld [vmem:[%s5481 + $0x120] sm:$0xff]
        %v5531 = vld [vmem:[%s5481 + $0x128] sm:$0xf]
        %v5532 = vld [vmem:[%s5481 + $0x12c] sm:$0xff]
        %v5533 = vld [vmem:[%s5481 + $0x134] sm:$0xf]
        %v5534 = vld [vmem:[%s5481 + $0x138] sm:$0xff]
        %v5535 = vld [vmem:[%s5481 + $0x140] sm:$0xf]
        %v5536 = vld [vmem:[%s5481 + $0x144] sm:$0xff]
        %v5537 = vld [vmem:[%s5481 + $0x14c] sm:$0xf]
        %v5538 = vld [vmem:[%s5481 + $0x150] sm:$0xff]
        %v5539 = vld [vmem:[%s5481 + $0x158] sm:$0xf]
        %v5540 = vld [vmem:[%s5481 + $0x15c] sm:$0xff]
        %v5541 = vld [vmem:[%s5481 + $0x164] sm:$0xf]
        %v5542 = vld [vmem:[%s5481 + $0x168] sm:$0xff]
        %v5543 = vld [vmem:[%s5481 + $0x170] sm:$0xf]
        %v5544 = vld [vmem:[%s5481 + $0x174] sm:$0xff]
        %v5545 = vld [vmem:[%s5481 + $0x17c] sm:$0xf]
        %v5546 = vld [vmem:[%s5481 + $0x180] sm:$0xff]
        %v5547 = vld [vmem:[%s5481 + $0x188] sm:$0xf]
        %v5548 = vld [vmem:[%s5481 + $0x18c] sm:$0xff]
        %v5549 = vld [vmem:[%s5481 + $0x194] sm:$0xf]
        %v5550 = vld [vmem:[%s5481 + $0x198] sm:$0xff]
        %v5551 = vld [vmem:[%s5481 + $0x1a0] sm:$0xf]
        %v5552 = vld [vmem:[%s5481 + $0x1a4] sm:$0xff]
        %v5553 = vld [vmem:[%s5481 + $0x1ac] sm:$0xf]
        %v5554 = vld [vmem:[%s5481 + $0x1b0] sm:$0xff]
        %v5555 = vld [vmem:[%s5481 + $0x1b8] sm:$0xf]
        %v5556 = vld [vmem:[%s5481 + $0x1bc] sm:$0xff]
        %v5557 = vld [vmem:[%s5481 + $0x1c4] sm:$0xf]
        %v5558 = vld [vmem:[%s5481 + $0x1c8] sm:$0xff]
        %v5559 = vld [vmem:[%s5481 + $0x1d0] sm:$0xf]
        %v5560 = vld [vmem:[%s5481 + $0x1d4] sm:$0xff]
        %v5561 = vld [vmem:[%s5481 + $0x1dc] sm:$0xf]
        %v5562 = vld [vmem:[%s5481 + $0x1e0] sm:$0xff]
        %v5563 = vld [vmem:[%s5481 + $0x1e8] sm:$0xf]
        %v5564 = vld [vmem:[%s5481 + $0x1ec] sm:$0xff]
        %v5565 = vld [vmem:[%s5481 + $0x1f4] sm:$0xf]
        %v5566 = vld [vmem:[%s5481 + $0x1f8] sm:$0xff]
        %v5567 = vld [vmem:[%s5481 + $0x200] sm:$0xf]
        %v5568 = vld [vmem:[%s5481 + $0x204] sm:$0xff]
        %v5569 = vld [vmem:[%s5481 + $0x20c] sm:$0xf]
        %v5570 = vld [vmem:[%s5481 + $0x210] sm:$0xff]
        %v5571 = vld [vmem:[%s5481 + $0x218] sm:$0xf]
        %v5572 = vld [vmem:[%s5481 + $0x21c] sm:$0xff]
        %v5573 = vld [vmem:[%s5481 + $0x224] sm:$0xf]
        %v5574 = vld [vmem:[%s5481 + $0x228] sm:$0xff]
        %v5575 = vld [vmem:[%s5481 + $0x230] sm:$0xf]
        %v5576 = vld [vmem:[%s5481 + $0x234] sm:$0xff]
        %v5577 = vld [vmem:[%s5481 + $0x23c] sm:$0xf]
        %v5578 = vld [vmem:[%s5481 + $0x240] sm:$0xff]
        %v5579 = vld [vmem:[%s5481 + $0x248] sm:$0xf]
        %v5580 = vld [vmem:[%s5481 + $0x24c] sm:$0xff]
        %v5581 = vld [vmem:[%s5481 + $0x254] sm:$0xf]
        %v5582 = vld [vmem:[%s5481 + $0x258] sm:$0xff]
        %v5583 = vld [vmem:[%s5481 + $0x260] sm:$0xf]
        %v5584 = vld [vmem:[%s5481 + $0x264] sm:$0xff]
        %v5585 = vld [vmem:[%s5481 + $0x26c] sm:$0xf]
        %v5586 = vld [vmem:[%s5481 + $0x270] sm:$0xff]
        %v5587 = vld [vmem:[%s5481 + $0x278] sm:$0xf]
        %v5588 = vld [vmem:[%s5481 + $0x27c] sm:$0xff]
        %v5589 = vld [vmem:[%s5481 + $0x284] sm:$0xf]
        %v5590 = vld [vmem:[%s5481 + $0x288] sm:$0xff]
        %v5591 = vld [vmem:[%s5481 + $0x290] sm:$0xf]
        %v5592 = vld [vmem:[%s5481 + $0x294] sm:$0xff]
        %v5593 = vld [vmem:[%s5481 + $0x29c] sm:$0xf]
        %v5706 = vunpack.c.l.b16 %v5482
        %v5707 = vunpack.c.h.b16 %v5482
        %v5708 = vunpack.c.l.b16 %v5483
        %v5709 = vunpack.c.l.b16 %v5484
        %v5710 = vunpack.c.h.b16 %v5484
        %v5711 = vunpack.c.l.b16 %v5485
        %v5712 = vunpack.c.l.b16 %v5486
        %v5713 = vunpack.c.h.b16 %v5486
        %v5714 = vunpack.c.l.b16 %v5487
        %v5715 = vunpack.c.l.b16 %v5488
        %v5716 = vunpack.c.h.b16 %v5488
        %v5717 = vunpack.c.l.b16 %v5489
        %v5718 = vunpack.c.l.b16 %v5490
        %v5719 = vunpack.c.h.b16 %v5490
        %v5720 = vunpack.c.l.b16 %v5491
        %v5721 = vunpack.c.l.b16 %v5492
        %v5722 = vunpack.c.h.b16 %v5492
        %v5723 = vunpack.c.l.b16 %v5493
        %v5724 = vunpack.c.l.b16 %v5494
        %v5725 = vunpack.c.h.b16 %v5494
        %v5726 = vunpack.c.l.b16 %v5495
        %v5727 = vunpack.c.l.b16 %v5496
        %v5728 = vunpack.c.h.b16 %v5496
        %v5729 = vunpack.c.l.b16 %v5497
        %v5730 = vunpack.c.l.b16 %v5498
        %v5731 = vunpack.c.h.b16 %v5498
        %v5732 = vunpack.c.l.b16 %v5499
        %v5733 = vunpack.c.l.b16 %v5500
        %v5734 = vunpack.c.h.b16 %v5500
        %v5735 = vunpack.c.l.b16 %v5501
        %v5736 = vunpack.c.l.b16 %v5502
        %v5737 = vunpack.c.h.b16 %v5502
        %v5738 = vunpack.c.l.b16 %v5503
        %v5739 = vunpack.c.l.b16 %v5504
        %v5740 = vunpack.c.h.b16 %v5504
        %v5741 = vunpack.c.l.b16 %v5505
        %v5742 = vunpack.c.l.b16 %v5506
        %v5743 = vunpack.c.h.b16 %v5506
        %v5744 = vunpack.c.l.b16 %v5507
        %v5745 = vunpack.c.l.b16 %v5508
        %v5746 = vunpack.c.h.b16 %v5508
        %v5747 = vunpack.c.l.b16 %v5509
        %v5748 = vunpack.c.l.b16 %v5510
        %v5749 = vunpack.c.h.b16 %v5510
        %v5750 = vunpack.c.l.b16 %v5511
        %v5751 = vunpack.c.l.b16 %v5512
        %v5752 = vunpack.c.h.b16 %v5512
        %v5753 = vunpack.c.l.b16 %v5513
        %v5754 = vunpack.c.l.b16 %v5514
        %v5755 = vunpack.c.h.b16 %v5514
        %v5756 = vunpack.c.l.b16 %v5515
        %v5757 = vunpack.c.l.b16 %v5516
        %v5758 = vunpack.c.h.b16 %v5516
        %v5759 = vunpack.c.l.b16 %v5517
        %v5760 = vunpack.c.l.b16 %v5518
        %v5761 = vunpack.c.h.b16 %v5518
        %v5762 = vunpack.c.l.b16 %v5519
        %v5763 = vunpack.c.l.b16 %v5520
        %v5764 = vunpack.c.h.b16 %v5520
        %v5765 = vunpack.c.l.b16 %v5521
        %v5766 = vunpack.c.l.b16 %v5522
        %v5767 = vunpack.c.h.b16 %v5522
        %v5768 = vunpack.c.l.b16 %v5523
        %v5769 = vunpack.c.l.b16 %v5524
        %v5770 = vunpack.c.h.b16 %v5524
        %v5771 = vunpack.c.l.b16 %v5525
        %v5772 = vunpack.c.l.b16 %v5526
        %v5773 = vunpack.c.h.b16 %v5526
        %v5774 = vunpack.c.l.b16 %v5527
        %v5775 = vunpack.c.l.b16 %v5528
        %v5776 = vunpack.c.h.b16 %v5528
        %v5777 = vunpack.c.l.b16 %v5529
        %v5778 = vunpack.c.l.b16 %v5530
        %v5779 = vunpack.c.h.b16 %v5530
        %v5780 = vunpack.c.l.b16 %v5531
        %v5781 = vunpack.c.l.b16 %v5532
        %v5782 = vunpack.c.h.b16 %v5532
        %v5783 = vunpack.c.l.b16 %v5533
        %v5784 = vunpack.c.l.b16 %v5534
        %v5785 = vunpack.c.h.b16 %v5534
        %v5786 = vunpack.c.l.b16 %v5535
        %v5787 = vunpack.c.l.b16 %v5536
        %v5788 = vunpack.c.h.b16 %v5536
        %v5789 = vunpack.c.l.b16 %v5537
        %v5790 = vunpack.c.l.b16 %v5538
        %v5791 = vunpack.c.h.b16 %v5538
        %v5792 = vunpack.c.l.b16 %v5539
        %v5793 = vunpack.c.l.b16 %v5540
        %v5794 = vunpack.c.h.b16 %v5540
        %v5795 = vunpack.c.l.b16 %v5541
        %v5796 = vunpack.c.l.b16 %v5542
        %v5797 = vunpack.c.h.b16 %v5542
        %v5798 = vunpack.c.l.b16 %v5543
        %v5799 = vunpack.c.l.b16 %v5544
        %v5800 = vunpack.c.h.b16 %v5544
        %v5801 = vunpack.c.l.b16 %v5545
        %v5802 = vunpack.c.l.b16 %v5546
        %v5803 = vunpack.c.h.b16 %v5546
        %v5804 = vunpack.c.l.b16 %v5547
        %v5805 = vunpack.c.l.b16 %v5548
        %v5806 = vunpack.c.h.b16 %v5548
        %v5807 = vunpack.c.l.b16 %v5549
        %v5808 = vunpack.c.l.b16 %v5550
        %v5809 = vunpack.c.h.b16 %v5550
        %v5810 = vunpack.c.l.b16 %v5551
        %v5811 = vunpack.c.l.b16 %v5552
        %v5812 = vunpack.c.h.b16 %v5552
        %v5813 = vunpack.c.l.b16 %v5553
        %v5814 = vunpack.c.l.b16 %v5554
        %v5815 = vunpack.c.h.b16 %v5554
        %v5816 = vunpack.c.l.b16 %v5555
        %v5817 = vunpack.c.l.b16 %v5556
        %v5818 = vunpack.c.h.b16 %v5556
        %v5819 = vunpack.c.l.b16 %v5557
        %v5820 = vunpack.c.l.b16 %v5558
        %v5821 = vunpack.c.h.b16 %v5558
        %v5822 = vunpack.c.l.b16 %v5559
        %v5823 = vunpack.c.l.b16 %v5560
        %v5824 = vunpack.c.h.b16 %v5560
        %v5825 = vunpack.c.l.b16 %v5561
        %v5826 = vunpack.c.l.b16 %v5562
        %v5827 = vunpack.c.h.b16 %v5562
        %v5828 = vunpack.c.l.b16 %v5563
        %v5829 = vunpack.c.l.b16 %v5564
        %v5830 = vunpack.c.h.b16 %v5564
        %v5831 = vunpack.c.l.b16 %v5565
        %v5832 = vunpack.c.l.b16 %v5566
        %v5833 = vunpack.c.h.b16 %v5566
        %v5834 = vunpack.c.l.b16 %v5567
        %v5835 = vunpack.c.l.b16 %v5568
        %v5836 = vunpack.c.h.b16 %v5568
        %v5837 = vunpack.c.l.b16 %v5569
        %v5838 = vunpack.c.l.b16 %v5570
        %v5839 = vunpack.c.h.b16 %v5570
        %v5840 = vunpack.c.l.b16 %v5571
        %v5841 = vunpack.c.l.b16 %v5572
        %v5842 = vunpack.c.h.b16 %v5572
        %v5843 = vunpack.c.l.b16 %v5573
        %v5844 = vunpack.c.l.b16 %v5574
        %v5845 = vunpack.c.h.b16 %v5574
        %v5846 = vunpack.c.l.b16 %v5575
        %v5847 = vunpack.c.l.b16 %v5576
        %v5848 = vunpack.c.h.b16 %v5576
        %v5849 = vunpack.c.l.b16 %v5577
        %v5850 = vunpack.c.l.b16 %v5578
        %v5851 = vunpack.c.h.b16 %v5578
        %v5852 = vunpack.c.l.b16 %v5579
        %v5853 = vunpack.c.l.b16 %v5580
        %v5854 = vunpack.c.h.b16 %v5580
        %v5855 = vunpack.c.l.b16 %v5581
        %v5856 = vunpack.c.l.b16 %v5582
        %v5857 = vunpack.c.h.b16 %v5582
        %v5858 = vunpack.c.l.b16 %v5583
        %v5859 = vunpack.c.l.b16 %v5584
        %v5860 = vunpack.c.h.b16 %v5584
        %v5861 = vunpack.c.l.b16 %v5585
        %v5862 = vunpack.c.l.b16 %v5586
        %v5863 = vunpack.c.h.b16 %v5586
        %v5864 = vunpack.c.l.b16 %v5587
        %v5865 = vunpack.c.l.b16 %v5588
        %v5866 = vunpack.c.h.b16 %v5588
        %v5867 = vunpack.c.l.b16 %v5589
        %v5868 = vunpack.c.l.b16 %v5590
        %v5869 = vunpack.c.h.b16 %v5590
        %v5870 = vunpack.c.l.b16 %v5591
        %v5871 = vunpack.c.l.b16 %v5592
        %v5872 = vunpack.c.h.b16 %v5592
        %v5873 = vunpack.c.l.b16 %v5593
        %v5874 = vpack.c.b16 %v5709, %v5706
        %v5875 = vpack.c.b16 %v5710, %v5707
        %v5876 = vpack.c.b16 %v5711, %v5708
        %v5877 = vpack.c.b16 %v5715, %v5712
        %v5878 = vpack.c.b16 %v5716, %v5713
        %v5879 = vpack.c.b16 %v5717, %v5714
        %v5880 = vpack.c.b16 %v5721, %v5718
        %v5881 = vpack.c.b16 %v5722, %v5719
        %v5882 = vpack.c.b16 %v5723, %v5720
        %v5883 = vpack.c.b16 %v5727, %v5724
        %v5884 = vpack.c.b16 %v5728, %v5725
        %v5885 = vpack.c.b16 %v5729, %v5726
        %v5886 = vpack.c.b16 %v5733, %v5730
        %v5887 = vpack.c.b16 %v5734, %v5731
        %v5888 = vpack.c.b16 %v5735, %v5732
        %v5889 = vpack.c.b16 %v5739, %v5736
        %v5890 = vpack.c.b16 %v5740, %v5737
        %v5891 = vpack.c.b16 %v5741, %v5738
        %v5892 = vpack.c.b16 %v5745, %v5742
        %v5893 = vpack.c.b16 %v5746, %v5743
        %v5894 = vpack.c.b16 %v5747, %v5744
        %v5895 = vpack.c.b16 %v5751, %v5748
        %v5896 = vpack.c.b16 %v5752, %v5749
        %v5897 = vpack.c.b16 %v5753, %v5750
        %v5898 = vpack.c.b16 %v5757, %v5754
        %v5899 = vpack.c.b16 %v5758, %v5755
        %v5900 = vpack.c.b16 %v5759, %v5756
        %v5901 = vpack.c.b16 %v5763, %v5760
        %v5902 = vpack.c.b16 %v5764, %v5761
        %v5903 = vpack.c.b16 %v5765, %v5762
        %v5904 = vpack.c.b16 %v5769, %v5766
        %v5905 = vpack.c.b16 %v5770, %v5767
        %v5906 = vpack.c.b16 %v5771, %v5768
        %v5907 = vpack.c.b16 %v5775, %v5772
        %v5908 = vpack.c.b16 %v5776, %v5773
        %v5909 = vpack.c.b16 %v5777, %v5774
        %v5910 = vpack.c.b16 %v5781, %v5778
        %v5911 = vpack.c.b16 %v5782, %v5779
        %v5912 = vpack.c.b16 %v5783, %v5780
        %v5913 = vpack.c.b16 %v5787, %v5784
        %v5914 = vpack.c.b16 %v5788, %v5785
        %v5915 = vpack.c.b16 %v5789, %v5786
        %v5916 = vpack.c.b16 %v5793, %v5790
        %v5917 = vpack.c.b16 %v5794, %v5791
        %v5918 = vpack.c.b16 %v5795, %v5792
        %v5919 = vpack.c.b16 %v5799, %v5796
        %v5920 = vpack.c.b16 %v5800, %v5797
        %v5921 = vpack.c.b16 %v5801, %v5798
        %v5922 = vpack.c.b16 %v5805, %v5802
        %v5923 = vpack.c.b16 %v5806, %v5803
        %v5924 = vpack.c.b16 %v5807, %v5804
        %v5925 = vpack.c.b16 %v5811, %v5808
        %v5926 = vpack.c.b16 %v5812, %v5809
        %v5927 = vpack.c.b16 %v5813, %v5810
        %v5928 = vpack.c.b16 %v5817, %v5814
        %v5929 = vpack.c.b16 %v5818, %v5815
        %v5930 = vpack.c.b16 %v5819, %v5816
        %v5931 = vpack.c.b16 %v5823, %v5820
        %v5932 = vpack.c.b16 %v5824, %v5821
        %v5933 = vpack.c.b16 %v5825, %v5822
        %v5934 = vpack.c.b16 %v5829, %v5826
        %v5935 = vpack.c.b16 %v5830, %v5827
        %v5936 = vpack.c.b16 %v5831, %v5828
        %v5937 = vpack.c.b16 %v5835, %v5832
        %v5938 = vpack.c.b16 %v5836, %v5833
        %v5939 = vpack.c.b16 %v5837, %v5834
        %v5940 = vpack.c.b16 %v5841, %v5838
        %v5941 = vpack.c.b16 %v5842, %v5839
        %v5942 = vpack.c.b16 %v5843, %v5840
        %v5943 = vpack.c.b16 %v5847, %v5844
        %v5944 = vpack.c.b16 %v5848, %v5845
        %v5945 = vpack.c.b16 %v5849, %v5846
        %v5946 = vpack.c.b16 %v5853, %v5850
        %v5947 = vpack.c.b16 %v5854, %v5851
        %v5948 = vpack.c.b16 %v5855, %v5852
        %v5949 = vpack.c.b16 %v5859, %v5856
        %v5950 = vpack.c.b16 %v5860, %v5857
        %v5951 = vpack.c.b16 %v5861, %v5858
        %v5952 = vpack.c.b16 %v5865, %v5862
        %v5953 = vpack.c.b16 %v5866, %v5863
        %v5954 = vpack.c.b16 %v5867, %v5864
        %v5955 = vpack.c.b16 %v5871, %v5868
        %v5956 = vpack.c.b16 %v5872, %v5869
        %v5957 = vpack.c.b16 %v5873, %v5870
        %v6043 = vsel %vm2372, %v5480, 0
        %6045 = vmatprep.subr.bf16.mxu0 %v5875
        %6046 = vmatpush1.bf16.msra.mxu0 %v5874
        %6047 = vmatprep.subr.bf16.mxu0 %v5878
        %6048 = vmatpush1.bf16.msra.mxu0 %v5877
        %6049 = vmatprep.subr.bf16.mxu0 %v5881
        %6050 = vmatpush1.bf16.msra.mxu0 %v5880
        %6051 = vmatprep.subr.bf16.mxu0 %v5884
        %6052 = vmatpush1.bf16.msra.mxu0 %v5883
        %6053 = vmatprep.subr.bf16.mxu0 %v5887
        %6054 = vmatpush1.bf16.msra.mxu0 %v5886
        %6055 = vmatprep.subr.bf16.mxu0 %v5890
        %6056 = vmatpush1.bf16.msra.mxu0 %v5889
        %6057 = vmatprep.subr.bf16.mxu0 %v5893
        %6058 = vmatpush1.bf16.msra.mxu0 %v5892
        %6059 = vmatprep.subr.bf16.mxu0 %v5896
        %6060 = vmatpush1.bf16.msra.mxu0 %v5895
        %6061 = vmatprep.subr.bf16.mxu0 %v5899
        %6062 = vmatpush1.bf16.msra.mxu0 %v5898
        %6063 = vmatprep.subr.bf16.mxu0 %v5902
        %6064 = vmatpush1.bf16.msra.mxu0 %v5901
        %6065 = vmatprep.subr.bf16.mxu0 %v5905
        %6066 = vmatpush1.bf16.msra.mxu0 %v5904
        %6067 = vmatprep.subr.bf16.mxu0 %v5908
        %6068 = vmatpush1.bf16.msra.mxu0 %v5907
        %6069 = vmatprep.subr.bf16.mxu0 %v5911
        %6070 = vmatpush1.bf16.msra.mxu0 %v5910
        %6071 = vmatprep.subr.bf16.mxu0 %v5914
        %6072 = vmatpush1.bf16.msra.mxu0 %v5913
        %6073 = vmatprep.subr.bf16.mxu0 %v5917
        %6074 = vmatpush1.bf16.msra.mxu0 %v5916
        %6075 = vmatprep.subr.bf16.mxu0 %v5920
        %6076 = vmatpush1.bf16.msra.mxu0 %v5919
        %6077 = vmatprep.mubr.bf16.mxu0 %v5478
        %6078 = vmatmul.mubr.bf16.gmra.mrb[0].mxu0 %v5477
        %v6079 = vpop.f32.mrb[0].mxu0
        %v6080 = vadd.f32 0.0, %v6079
        %v6081 = vpop.f32.mrb[0].mxu0
        %v6082 = vadd.f32 0.0, %v6081
        %v6083 = vpop.f32.mrb[0].mxu0
        %v6084 = vpop.f32.mrb[0].mxu0
        %6085 = vdwg.mxu0
        %6086 = vmatprep.subr.bf16.mxu0 %v5923
        %6087 = vmatpush1.bf16.msra.mxu0 %v5922
        %6088 = vmatprep.subr.bf16.mxu0 %v5926
        %6089 = vmatpush1.bf16.msra.mxu0 %v5925
        %6090 = vmatprep.subr.bf16.mxu0 %v5929
        %6091 = vmatpush1.bf16.msra.mxu0 %v5928
        %6092 = vmatprep.subr.bf16.mxu0 %v5932
        %6093 = vmatpush1.bf16.msra.mxu0 %v5931
        %6094 = vmatprep.subr.bf16.mxu0 %v5935
        %6095 = vmatpush1.bf16.msra.mxu0 %v5934
        %6096 = vmatprep.subr.bf16.mxu0 %v5938
        %6097 = vmatpush1.bf16.msra.mxu0 %v5937
        %6098 = vmatprep.subr.bf16.mxu0 %v5941
        %6099 = vmatpush1.bf16.msra.mxu0 %v5940
        %6100 = vmatprep.subr.bf16.mxu0 %v5944
        %6101 = vmatpush1.bf16.msra.mxu0 %v5943
        %6102 = vmatprep.subr.bf16.mxu0 %v5947
        %6103 = vmatpush1.bf16.msra.mxu0 %v5946
        %6104 = vmatprep.subr.bf16.mxu0 %v5950
        %6105 = vmatpush1.bf16.msra.mxu0 %v5949
        %6106 = vmatprep.subr.bf16.mxu0 %v5953
        %6107 = vmatpush1.bf16.msra.mxu0 %v5952
        %6108 = vmatprep.subr.bf16.mxu0 %v5956
        %6109 = vmatpush1.bf16.msra.mxu0 %v5955
        %6110 = vmatprep.subr.bf16.mxu0 0
        %6111 = vmatpush1.bf16.msra.mxu0 0
        %6112 = vmatprep.subr.bf16.mxu0 0
        %6113 = vmatpush1.bf16.msra.mxu0 0
        %6114 = vmatprep.subr.bf16.mxu0 0
        %6115 = vmatpush1.bf16.msra.mxu0 0
        %6116 = vmatprep.subr.bf16.mxu0 0
        %6117 = vmatpush1.bf16.msra.mxu0 0
        %6118 = vmatprep.mubr.bf16.mxu0 %v6043
        %6119 = vmatmul.mubr.bf16.gmra.mrb[0].mxu0 %v5479
        %v6120 = vpop.f32.mrb[0].mxu0
        %v6121 = vadd.f32 %v6080, %v6120
        %v6122 = vpop.f32.mrb[0].mxu0
        %v6123 = vadd.f32 %v6082, %v6122
        %v6124 = vpop.f32.mrb[0].mxu0
        %v6125 = vpop.f32.mrb[0].mxu0
        %6126 = vdwg.mxu0
        %6127 = vmatprep.subr.bf16.mxu0 0
        %6128 = vmatpush1.bf16.msra.mxu0 %v5876
        %6129 = vmatprep.subr.bf16.mxu0 0
        %6130 = vmatpush1.bf16.msra.mxu0 %v5879
        %6131 = vmatprep.subr.bf16.mxu0 0
        %6132 = vmatpush1.bf16.msra.mxu0 %v5882
        %6133 = vmatprep.subr.bf16.mxu0 0
        %6134 = vmatpush1.bf16.msra.mxu0 %v5885
        %6135 = vmatprep.subr.bf16.mxu0 0
        %6136 = vmatpush1.bf16.msra.mxu0 %v5888
        %6137 = vmatprep.subr.bf16.mxu0 0
        %6138 = vmatpush1.bf16.msra.mxu0 %v5891
        %6139 = vmatprep.subr.bf16.mxu0 0
        %6140 = vmatpush1.bf16.msra.mxu0 %v5894
        %6141 = vmatprep.subr.bf16.mxu0 0
        %6142 = vmatpush1.bf16.msra.mxu0 %v5897
        %6143 = vmatprep.subr.bf16.mxu0 0
        %6144 = vmatpush1.bf16.msra.mxu0 %v5900
        %6145 = vmatprep.subr.bf16.mxu0 0
        %6146 = vmatpush1.bf16.msra.mxu0 %v5903
        %6147 = vmatprep.subr.bf16.mxu0 0
        %6148 = vmatpush1.bf16.msra.mxu0 %v5906
        %6149 = vmatprep.subr.bf16.mxu0 0
        %6150 = vmatpush1.bf16.msra.mxu0 %v5909
        %6151 = vmatprep.subr.bf16.mxu0 0
        %6152 = vmatpush1.bf16.msra.mxu0 %v5912
        %6153 = vmatprep.subr.bf16.mxu0 0
        %6154 = vmatpush1.bf16.msra.mxu0 %v5915
        %6155 = vmatprep.subr.bf16.mxu0 0
        %6156 = vmatpush1.bf16.msra.mxu0 %v5918
        %6157 = vmatprep.subr.bf16.mxu0 0
        %6158 = vmatpush1.bf16.msra.mxu0 %v5921
        %6159 = vmatprep.mubr.bf16.mxu0 %v5478
        %6160 = vmatmul.mubr.bf16.gmra.mrb[0].mxu0 %v5477
        %v6161 = vpop.f32.mrb[0].mxu0
        %v6162 = vadd.f32 0.0, %v6161
        %v6163 = vpop.f32.mrb[0].mxu0
        %v6164 = vpop.f32.mrb[0].mxu0
        %v6165 = vpop.f32.mrb[0].mxu0
        %6166 = vdwg.mxu0
        %6167 = vmatprep.subr.bf16.mxu0 0
        %6168 = vmatpush1.bf16.msra.mxu0 %v5924
        %6169 = vmatprep.subr.bf16.mxu0 0
        %6170 = vmatpush1.bf16.msra.mxu0 %v5927
        %6171 = vmatprep.subr.bf16.mxu0 0
        %6172 = vmatpush1.bf16.msra.mxu0 %v5930
        %6173 = vmatprep.subr.bf16.mxu0 0
        %6174 = vmatpush1.bf16.msra.mxu0 %v5933
        %6175 = vmatprep.subr.bf16.mxu0 0
        %6176 = vmatpush1.bf16.msra.mxu0 %v5936
        %6177 = vmatprep.subr.bf16.mxu0 0
        %6178 = vmatpush1.bf16.msra.mxu0 %v5939
        %6179 = vmatprep.subr.bf16.mxu0 0
        %6180 = vmatpush1.bf16.msra.mxu0 %v5942
        %6181 = vmatprep.subr.bf16.mxu0 0
        %6182 = vmatpush1.bf16.msra.mxu0 %v5945
        %6183 = vmatprep.subr.bf16.mxu0 0
        %6184 = vmatpush1.bf16.msra.mxu0 %v5948
        %6185 = vmatprep.subr.bf16.mxu0 0
        %6186 = vmatpush1.bf16.msra.mxu0 %v5951
        %6187 = vmatprep.subr.bf16.mxu0 0
        %6188 = vmatpush1.bf16.msra.mxu0 %v5954
        %6189 = vmatprep.subr.bf16.mxu0 0
        %6190 = vmatpush1.bf16.msra.mxu0 %v5957
        %6191 = vmatprep.subr.bf16.mxu0 0
        %6192 = vmatpush1.bf16.msra.mxu0 0
        %6193 = vmatprep.subr.bf16.mxu0 0
        %6194 = vmatpush1.bf16.msra.mxu0 0
        %6195 = vmatprep.subr.bf16.mxu0 0
        %6196 = vmatpush1.bf16.msra.mxu0 0
        %6197 = vmatprep.subr.bf16.mxu0 0
        %6198 = vmatpush1.bf16.msra.mxu0 0
        %6199 = vmatprep.mubr.bf16.mxu0 %v6043
        %6200 = vmatmul.mubr.bf16.gmra.mrb[0].mxu0 %v5479
        %v6201 = vpop.f32.mrb[0].mxu0
        %v6202 = vadd.f32 %v6162, %v6201
        %v6203 = vpop.f32.mrb[0].mxu0
        %v6204 = vpop.f32.mrb[0].mxu0
        %v6205 = vpop.f32.mrb[0].mxu0
        %6206 = vdwg.mxu0
        %v6319 = vunpack.c.l.b16 %v5278
        %v6320 = vunpack.c.h.b16 %v5278
        %v6321 = vunpack.c.l.b16 %v5279
        %v6322 = vunpack.c.l.b16 %v5280
        %v6323 = vunpack.c.h.b16 %v5280
        %v6324 = vunpack.c.l.b16 %v5281
        %v6325 = vunpack.c.l.b16 %v5282
        %v6326 = vunpack.c.h.b16 %v5282
        %v6327 = vunpack.c.l.b16 %v5283
        %v6328 = vunpack.c.l.b16 %v5284
        %v6329 = vunpack.c.h.b16 %v5284
        %v6330 = vunpack.c.l.b16 %v5285
        %v6331 = vunpack.c.l.b16 %v5286
        %v6332 = vunpack.c.h.b16 %v5286
        %v6333 = vunpack.c.l.b16 %v5287
        %v6334 = vunpack.c.l.b16 %v5288
        %v6335 = vunpack.c.h.b16 %v5288
        %v6336 = vunpack.c.l.b16 %v5289
        %v6337 = vunpack.c.l.b16 %v5290
        %v6338 = vunpack.c.h.b16 %v5290
        %v6339 = vunpack.c.l.b16 %v5291
        %v6340 = vunpack.c.l.b16 %v5292
        %v6341 = vunpack.c.h.b16 %v5292
        %v6342 = vunpack.c.l.b16 %v5293
        %v6343 = vunpack.c.l.b16 %v5294
        %v6344 = vunpack.c.h.b16 %v5294
        %v6345 = vunpack.c.l.b16 %v5295
        %v6346 = vunpack.c.l.b16 %v5296
        %v6347 = vunpack.c.h.b16 %v5296
        %v6348 = vunpack.c.l.b16 %v5297
        %v6349 = vunpack.c.l.b16 %v5298
        %v6350 = vunpack.c.h.b16 %v5298
        %v6351 = vunpack.c.l.b16 %v5299
        %v6352 = vunpack.c.l.b16 %v5300
        %v6353 = vunpack.c.h.b16 %v5300
        %v6354 = vunpack.c.l.b16 %v5301
        %v6355 = vunpack.c.l.b16 %v5302
        %v6356 = vunpack.c.h.b16 %v5302
        %v6357 = vunpack.c.l.b16 %v5303
        %v6358 = vunpack.c.l.b16 %v5304
        %v6359 = vunpack.c.h.b16 %v5304
        %v6360 = vunpack.c.l.b16 %v5305
        %v6361 = vunpack.c.l.b16 %v5306
        %v6362 = vunpack.c.h.b16 %v5306
        %v6363 = vunpack.c.l.b16 %v5307
        %v6364 = vunpack.c.l.b16 %v5308
        %v6365 = vunpack.c.h.b16 %v5308
        %v6366 = vunpack.c.l.b16 %v5309
        %v6367 = vunpack.c.l.b16 %v5310
        %v6368 = vunpack.c.h.b16 %v5310
        %v6369 = vunpack.c.l.b16 %v5311
        %v6370 = vunpack.c.l.b16 %v5312
        %v6371 = vunpack.c.h.b16 %v5312
        %v6372 = vunpack.c.l.b16 %v5313
        %v6373 = vunpack.c.l.b16 %v5314
        %v6374 = vunpack.c.h.b16 %v5314
        %v6375 = vunpack.c.l.b16 %v5315
        %v6376 = vunpack.c.l.b16 %v5316
        %v6377 = vunpack.c.h.b16 %v5316
        %v6378 = vunpack.c.l.b16 %v5317
        %v6379 = vunpack.c.l.b16 %v5318
        %v6380 = vunpack.c.h.b16 %v5318
        %v6381 = vunpack.c.l.b16 %v5319
        %v6382 = vunpack.c.l.b16 %v5320
        %v6383 = vunpack.c.h.b16 %v5320
        %v6384 = vunpack.c.l.b16 %v5321
        %v6385 = vunpack.c.l.b16 %v5322
        %v6386 = vunpack.c.h.b16 %v5322
        %v6387 = vunpack.c.l.b16 %v5323
        %v6388 = vunpack.c.l.b16 %v5324
        %v6389 = vunpack.c.h.b16 %v5324
        %v6390 = vunpack.c.l.b16 %v5325
        %v6391 = vunpack.c.l.b16 %v5326
        %v6392 = vunpack.c.h.b16 %v5326
        %v6393 = vunpack.c.l.b16 %v5327
        %v6394 = vunpack.c.l.b16 %v5328
        %v6395 = vunpack.c.h.b16 %v5328
        %v6396 = vunpack.c.l.b16 %v5329
        %v6397 = vunpack.c.l.b16 %v5330
        %v6398 = vunpack.c.h.b16 %v5330
        %v6399 = vunpack.c.l.b16 %v5331
        %v6400 = vunpack.c.l.b16 %v5332
        %v6401 = vunpack.c.h.b16 %v5332
        %v6402 = vunpack.c.l.b16 %v5333
        %v6403 = vunpack.c.l.b16 %v5334
        %v6404 = vunpack.c.h.b16 %v5334
        %v6405 = vunpack.c.l.b16 %v5335
        %v6406 = vunpack.c.l.b16 %v5336
        %v6407 = vunpack.c.h.b16 %v5336
        %v6408 = vunpack.c.l.b16 %v5337
        %v6409 = vunpack.c.l.b16 %v5338
        %v6410 = vunpack.c.h.b16 %v5338
        %v6411 = vunpack.c.l.b16 %v5339
        %v6412 = vunpack.c.l.b16 %v5340
        %v6413 = vunpack.c.h.b16 %v5340
        %v6414 = vunpack.c.l.b16 %v5341
        %v6415 = vunpack.c.l.b16 %v5342
        %v6416 = vunpack.c.h.b16 %v5342
        %v6417 = vunpack.c.l.b16 %v5343
        %v6418 = vunpack.c.l.b16 %v5344
        %v6419 = vunpack.c.h.b16 %v5344
        %v6420 = vunpack.c.l.b16 %v5345
        %v6421 = vunpack.c.l.b16 %v5346
        %v6422 = vunpack.c.h.b16 %v5346
        %v6423 = vunpack.c.l.b16 %v5347
        %v6424 = vunpack.c.l.b16 %v5348
        %v6425 = vunpack.c.h.b16 %v5348
        %v6426 = vunpack.c.l.b16 %v5349
        %v6427 = vunpack.c.l.b16 %v5350
        %v6428 = vunpack.c.h.b16 %v5350
        %v6429 = vunpack.c.l.b16 %v5351
        %v6430 = vunpack.c.l.b16 %v5352
        %v6431 = vunpack.c.h.b16 %v5352
        %v6432 = vunpack.c.l.b16 %v5353
        %v6433 = vunpack.c.l.b16 %v5354
        %v6434 = vunpack.c.h.b16 %v5354
        %v6435 = vunpack.c.l.b16 %v5355
        %v6436 = vunpack.c.l.b16 %v5356
        %v6437 = vunpack.c.h.b16 %v5356
        %v6438 = vunpack.c.l.b16 %v5357
        %v6439 = vunpack.c.l.b16 %v5358
        %v6440 = vunpack.c.h.b16 %v5358
        %v6441 = vunpack.c.l.b16 %v5359
        %v6442 = vunpack.c.l.b16 %v5360
        %v6443 = vunpack.c.h.b16 %v5360
        %v6444 = vunpack.c.l.b16 %v5361
        %v6445 = vunpack.c.l.b16 %v5362
        %v6446 = vunpack.c.h.b16 %v5362
        %v6447 = vunpack.c.l.b16 %v5363
        %v6448 = vunpack.c.l.b16 %v5364
        %v6449 = vunpack.c.h.b16 %v5364
        %v6450 = vunpack.c.l.b16 %v5365
        %v6451 = vunpack.c.l.b16 %v5366
        %v6452 = vunpack.c.h.b16 %v5366
        %v6453 = vunpack.c.l.b16 %v5367
        %v6454 = vunpack.c.l.b16 %v5368
        %v6455 = vunpack.c.h.b16 %v5368
        %v6456 = vunpack.c.l.b16 %v5369
        %v6457 = vunpack.c.l.b16 %v5370
        %v6458 = vunpack.c.h.b16 %v5370
        %v6459 = vunpack.c.l.b16 %v5371
        %v6460 = vunpack.c.l.b16 %v5372
        %v6461 = vunpack.c.h.b16 %v5372
        %v6462 = vunpack.c.l.b16 %v5373
        %v6463 = vunpack.c.l.b16 %v5374
        %v6464 = vunpack.c.h.b16 %v5374
        %v6465 = vunpack.c.l.b16 %v5375
        %v6466 = vunpack.c.l.b16 %v5376
        %v6467 = vunpack.c.h.b16 %v5376
        %v6468 = vunpack.c.l.b16 %v5377
        %v6469 = vunpack.c.l.b16 %v5378
        %v6470 = vunpack.c.h.b16 %v5378
        %v6471 = vunpack.c.l.b16 %v5379
        %v6472 = vunpack.c.l.b16 %v5380
        %v6473 = vunpack.c.h.b16 %v5380
        %v6474 = vunpack.c.l.b16 %v5381
        %v6475 = vunpack.c.l.b16 %v5382
        %v6476 = vunpack.c.h.b16 %v5382
        %v6477 = vunpack.c.l.b16 %v5383
        %v6478 = vunpack.c.l.b16 %v5384
        %v6479 = vunpack.c.h.b16 %v5384
        %v6480 = vunpack.c.l.b16 %v5385
        %v6481 = vunpack.c.l.b16 %v5386
        %v6482 = vunpack.c.h.b16 %v5386
        %v6483 = vunpack.c.l.b16 %v5387
        %v6484 = vunpack.c.l.b16 %v5388
        %v6485 = vunpack.c.h.b16 %v5388
        %v6486 = vunpack.c.l.b16 %v5389
        %v6487 = vpack.c.b16 %v6322, %v6319
        %v6488 = vpack.c.b16 %v6323, %v6320
        %v6489 = vpack.c.b16 %v6324, %v6321
        %v6490 = vpack.c.b16 %v6328, %v6325
        %v6491 = vpack.c.b16 %v6329, %v6326
        %v6492 = vpack.c.b16 %v6330, %v6327
        %v6493 = vpack.c.b16 %v6334, %v6331
        %v6494 = vpack.c.b16 %v6335, %v6332
        %v6495 = vpack.c.b16 %v6336, %v6333
        %v6496 = vpack.c.b16 %v6340, %v6337
        %v6497 = vpack.c.b16 %v6341, %v6338
        %v6498 = vpack.c.b16 %v6342, %v6339
        %v6499 = vpack.c.b16 %v6346, %v6343
        %v6500 = vpack.c.b16 %v6347, %v6344
        %v6501 = vpack.c.b16 %v6348, %v6345
        %v6502 = vpack.c.b16 %v6352, %v6349
        %v6503 = vpack.c.b16 %v6353, %v6350
        %v6504 = vpack.c.b16 %v6354, %v6351
        %v6505 = vpack.c.b16 %v6358, %v6355
        %v6506 = vpack.c.b16 %v6359, %v6356
        %v6507 = vpack.c.b16 %v6360, %v6357
        %v6508 = vpack.c.b16 %v6364, %v6361
        %v6509 = vpack.c.b16 %v6365, %v6362
        %v6510 = vpack.c.b16 %v6366, %v6363
        %v6511 = vpack.c.b16 %v6370, %v6367
        %v6512 = vpack.c.b16 %v6371, %v6368
        %v6513 = vpack.c.b16 %v6372, %v6369
        %v6514 = vpack.c.b16 %v6376, %v6373
        %v6515 = vpack.c.b16 %v6377, %v6374
        %v6516 = vpack.c.b16 %v6378, %v6375
        %v6517 = vpack.c.b16 %v6382, %v6379
        %v6518 = vpack.c.b16 %v6383, %v6380
        %v6519 = vpack.c.b16 %v6384, %v6381
        %v6520 = vpack.c.b16 %v6388, %v6385
        %v6521 = vpack.c.b16 %v6389, %v6386
        %v6522 = vpack.c.b16 %v6390, %v6387
        %v6523 = vpack.c.b16 %v6394, %v6391
        %v6524 = vpack.c.b16 %v6395, %v6392
        %v6525 = vpack.c.b16 %v6396, %v6393
        %v6526 = vpack.c.b16 %v6400, %v6397
        %v6527 = vpack.c.b16 %v6401, %v6398
        %v6528 = vpack.c.b16 %v6402, %v6399
        %v6529 = vpack.c.b16 %v6406, %v6403
        %v6530 = vpack.c.b16 %v6407, %v6404
        %v6531 = vpack.c.b16 %v6408, %v6405
        %v6532 = vpack.c.b16 %v6412, %v6409
        %v6533 = vpack.c.b16 %v6413, %v6410
        %v6534 = vpack.c.b16 %v6414, %v6411
        %v6535 = vpack.c.b16 %v6418, %v6415
        %v6536 = vpack.c.b16 %v6419, %v6416
        %v6537 = vpack.c.b16 %v6420, %v6417
        %v6538 = vpack.c.b16 %v6424, %v6421
        %v6539 = vpack.c.b16 %v6425, %v6422
        %v6540 = vpack.c.b16 %v6426, %v6423
        %v6541 = vpack.c.b16 %v6430, %v6427
        %v6542 = vpack.c.b16 %v6431, %v6428
        %v6543 = vpack.c.b16 %v6432, %v6429
        %v6544 = vpack.c.b16 %v6436, %v6433
        %v6545 = vpack.c.b16 %v6437, %v6434
        %v6546 = vpack.c.b16 %v6438, %v6435
        %v6547 = vpack.c.b16 %v6442, %v6439
        %v6548 = vpack.c.b16 %v6443, %v6440
        %v6549 = vpack.c.b16 %v6444, %v6441
        %v6550 = vpack.c.b16 %v6448, %v6445
        %v6551 = vpack.c.b16 %v6449, %v6446
        %v6552 = vpack.c.b16 %v6450, %v6447
        %v6553 = vpack.c.b16 %v6454, %v6451
        %v6554 = vpack.c.b16 %v6455, %v6452
        %v6555 = vpack.c.b16 %v6456, %v6453
        %v6556 = vpack.c.b16 %v6460, %v6457
        %v6557 = vpack.c.b16 %v6461, %v6458
        %v6558 = vpack.c.b16 %v6462, %v6459
        %v6559 = vpack.c.b16 %v6466, %v6463
        %v6560 = vpack.c.b16 %v6467, %v6464
        %v6561 = vpack.c.b16 %v6468, %v6465
        %v6562 = vpack.c.b16 %v6472, %v6469
        %v6563 = vpack.c.b16 %v6473, %v6470
        %v6564 = vpack.c.b16 %v6474, %v6471
        %v6565 = vpack.c.b16 %v6478, %v6475
        %v6566 = vpack.c.b16 %v6479, %v6476
        %v6567 = vpack.c.b16 %v6480, %v6477
        %v6568 = vpack.c.b16 %v6484, %v6481
        %v6569 = vpack.c.b16 %v6485, %v6482
        %v6570 = vpack.c.b16 %v6486, %v6483
        %v6656 = vsel %vm2372, %v5277, 0
        %6658 = vmatprep.subr.bf16.mxu0 %v6488
        %6659 = vmatpush1.bf16.msra.mxu0 %v6487
        %6660 = vmatprep.subr.bf16.mxu0 %v6491
        %6661 = vmatpush1.bf16.msra.mxu0 %v6490
        %6662 = vmatprep.subr.bf16.mxu0 %v6494
        %6663 = vmatpush1.bf16.msra.mxu0 %v6493
        %6664 = vmatprep.subr.bf16.mxu0 %v6497
        %6665 = vmatpush1.bf16.msra.mxu0 %v6496
        %6666 = vmatprep.subr.bf16.mxu0 %v6500
        %6667 = vmatpush1.bf16.msra.mxu0 %v6499
        %6668 = vmatprep.subr.bf16.mxu0 %v6503
        %6669 = vmatpush1.bf16.msra.mxu0 %v6502
        %6670 = vmatprep.subr.bf16.mxu0 %v6506
        %6671 = vmatpush1.bf16.msra.mxu0 %v6505
        %6672 = vmatprep.subr.bf16.mxu0 %v6509
        %6673 = vmatpush1.bf16.msra.mxu0 %v6508
        %6674 = vmatprep.subr.bf16.mxu0 %v6512
        %6675 = vmatpush1.bf16.msra.mxu0 %v6511
        %6676 = vmatprep.subr.bf16.mxu0 %v6515
        %6677 = vmatpush1.bf16.msra.mxu0 %v6514
        %6678 = vmatprep.subr.bf16.mxu0 %v6518
        %6679 = vmatpush1.bf16.msra.mxu0 %v6517
        %6680 = vmatprep.subr.bf16.mxu0 %v6521
        %6681 = vmatpush1.bf16.msra.mxu0 %v6520
        %6682 = vmatprep.subr.bf16.mxu0 %v6524
        %6683 = vmatpush1.bf16.msra.mxu0 %v6523
        %6684 = vmatprep.subr.bf16.mxu0 %v6527
        %6685 = vmatpush1.bf16.msra.mxu0 %v6526
        %6686 = vmatprep.subr.bf16.mxu0 %v6530
        %6687 = vmatpush1.bf16.msra.mxu0 %v6529
        %6688 = vmatprep.subr.bf16.mxu0 %v6533
        %6689 = vmatpush1.bf16.msra.mxu0 %v6532
        %6690 = vmatprep.mubr.bf16.mxu0 %v5275
        %6691 = vmatmul.mubr.bf16.gmra.mrb[0].mxu0 %v5274
        %v6692 = vpop.f32.mrb[0].mxu0
        %v6693 = vadd.f32 %v6121, %v6692
        %v6694 = vpop.f32.mrb[0].mxu0
        %v6695 = vadd.f32 %v6123, %v6694
        %v6696 = vpop.f32.mrb[0].mxu0
        %v6697 = vpop.f32.mrb[0].mxu0
        %6698 = vdwg.mxu0
        %6699 = vmatprep.subr.bf16.mxu0 %v6536
        %6700 = vmatpush1.bf16.msra.mxu0 %v6535
        %6701 = vmatprep.subr.bf16.mxu0 %v6539
        %6702 = vmatpush1.bf16.msra.mxu0 %v6538
        %6703 = vmatprep.subr.bf16.mxu0 %v6542
        %6704 = vmatpush1.bf16.msra.mxu0 %v6541
        %6705 = vmatprep.subr.bf16.mxu0 %v6545
        %6706 = vmatpush1.bf16.msra.mxu0 %v6544
        %6707 = vmatprep.subr.bf16.mxu0 %v6548
        %6708 = vmatpush1.bf16.msra.mxu0 %v6547
        %6709 = vmatprep.subr.bf16.mxu0 %v6551
        %6710 = vmatpush1.bf16.msra.mxu0 %v6550
        %6711 = vmatprep.subr.bf16.mxu0 %v6554
        %6712 = vmatpush1.bf16.msra.mxu0 %v6553
        %6713 = vmatprep.subr.bf16.mxu0 %v6557
        %6714 = vmatpush1.bf16.msra.mxu0 %v6556
        %6715 = vmatprep.subr.bf16.mxu0 %v6560
        %6716 = vmatpush1.bf16.msra.mxu0 %v6559
        %6717 = vmatprep.subr.bf16.mxu0 %v6563
        %6718 = vmatpush1.bf16.msra.mxu0 %v6562
        %6719 = vmatprep.subr.bf16.mxu0 %v6566
        %6720 = vmatpush1.bf16.msra.mxu0 %v6565
        %6721 = vmatprep.subr.bf16.mxu0 %v6569
        %6722 = vmatpush1.bf16.msra.mxu0 %v6568
        %6723 = vmatprep.subr.bf16.mxu0 0
        %6724 = vmatpush1.bf16.msra.mxu0 0
        %6725 = vmatprep.subr.bf16.mxu0 0
        %6726 = vmatpush1.bf16.msra.mxu0 0
        %6727 = vmatprep.subr.bf16.mxu0 0
        %6728 = vmatpush1.bf16.msra.mxu0 0
        %6729 = vmatprep.subr.bf16.mxu0 0
        %6730 = vmatpush1.bf16.msra.mxu0 0
        %6731 = vmatprep.mubr.bf16.mxu0 %v6656
        %6732 = vmatmul.mubr.bf16.gmra.mrb[0].mxu0 %v5276
        %v6733 = vpop.f32.mrb[0].mxu0
        %v6734 = vadd.f32 %v6693, %v6733
        %v6735 = vpop.f32.mrb[0].mxu0
        %v6736 = vadd.f32 %v6695, %v6735
        %v6737 = vpop.f32.mrb[0].mxu0
        %v6738 = vpop.f32.mrb[0].mxu0
        %6739 = vdwg.mxu0
        %6740 = vmatprep.subr.bf16.mxu0 0
        %6741 = vmatpush1.bf16.msra.mxu0 %v6489
        %6742 = vmatprep.subr.bf16.mxu0 0
        %6743 = vmatpush1.bf16.msra.mxu0 %v6492
        %6744 = vmatprep.subr.bf16.mxu0 0
        %6745 = vmatpush1.bf16.msra.mxu0 %v6495
        %6746 = vmatprep.subr.bf16.mxu0 0
        %6747 = vmatpush1.bf16.msra.mxu0 %v6498
        %6748 = vmatprep.subr.bf16.mxu0 0
        %6749 = vmatpush1.bf16.msra.mxu0 %v6501
        %6750 = vmatprep.subr.bf16.mxu0 0
        %6751 = vmatpush1.bf16.msra.mxu0 %v6504
        %6752 = vmatprep.subr.bf16.mxu0 0
        %6753 = vmatpush1.bf16.msra.mxu0 %v6507
        %6754 = vmatprep.subr.bf16.mxu0 0
        %6755 = vmatpush1.bf16.msra.mxu0 %v6510
        %6756 = vmatprep.subr.bf16.mxu0 0
        %6757 = vmatpush1.bf16.msra.mxu0 %v6513
        %6758 = vmatprep.subr.bf16.mxu0 0
        %6759 = vmatpush1.bf16.msra.mxu0 %v6516
        %6760 = vmatprep.subr.bf16.mxu0 0
        %6761 = vmatpush1.bf16.msra.mxu0 %v6519
        %6762 = vmatprep.subr.bf16.mxu0 0
        %6763 = vmatpush1.bf16.msra.mxu0 %v6522
        %6764 = vmatprep.subr.bf16.mxu0 0
        %6765 = vmatpush1.bf16.msra.mxu0 %v6525
        %6766 = vmatprep.subr.bf16.mxu0 0
        %6767 = vmatpush1.bf16.msra.mxu0 %v6528
        %6768 = vmatprep.subr.bf16.mxu0 0
        %6769 = vmatpush1.bf16.msra.mxu0 %v6531
        %6770 = vmatprep.subr.bf16.mxu0 0
        %6771 = vmatpush1.bf16.msra.mxu0 %v6534
        %6772 = vmatprep.mubr.bf16.mxu0 %v5275
        %6773 = vmatmul.mubr.bf16.gmra.mrb[0].mxu0 %v5274
        %v6774 = vpop.f32.mrb[0].mxu0
        %v6775 = vadd.f32 %v6202, %v6774
        %v6776 = vpop.f32.mrb[0].mxu0
        %v6777 = vpop.f32.mrb[0].mxu0
        %v6778 = vpop.f32.mrb[0].mxu0
        %6779 = vdwg.mxu0
        %6780 = vmatprep.subr.bf16.mxu0 0
        %6781 = vmatpush1.bf16.msra.mxu0 %v6537
        %6782 = vmatprep.subr.bf16.mxu0 0
        %6783 = vmatpush1.bf16.msra.mxu0 %v6540
        %6784 = vmatprep.subr.bf16.mxu0 0
        %6785 = vmatpush1.bf16.msra.mxu0 %v6543
        %6786 = vmatprep.subr.bf16.mxu0 0
        %6787 = vmatpush1.bf16.msra.mxu0 %v6546
        %6788 = vmatprep.subr.bf16.mxu0 0
        %6789 = vmatpush1.bf16.msra.mxu0 %v6549
        %6790 = vmatprep.subr.bf16.mxu0 0
        %6791 = vmatpush1.bf16.msra.mxu0 %v6552
        %6792 = vmatprep.subr.bf16.mxu0 0
        %6793 = vmatpush1.bf16.msra.mxu0 %v6555
        %6794 = vmatprep.subr.bf16.mxu0 0
        %6795 = vmatpush1.bf16.msra.mxu0 %v6558
        %6796 = vmatprep.subr.bf16.mxu0 0
        %6797 = vmatpush1.bf16.msra.mxu0 %v6561
        %6798 = vmatprep.subr.bf16.mxu0 0
        %6799 = vmatpush1.bf16.msra.mxu0 %v6564
        %6800 = vmatprep.subr.bf16.mxu0 0
        %6801 = vmatpush1.bf16.msra.mxu0 %v6567
        %6802 = vmatprep.subr.bf16.mxu0 0
        %6803 = vmatpush1.bf16.msra.mxu0 %v6570
        %6804 = vmatprep.subr.bf16.mxu0 0
        %6805 = vmatpush1.bf16.msra.mxu0 0
        %6806 = vmatprep.subr.bf16.mxu0 0
        %6807 = vmatpush1.bf16.msra.mxu0 0
        %6808 = vmatprep.subr.bf16.mxu0 0
        %6809 = vmatpush1.bf16.msra.mxu0 0
        %6810 = vmatprep.subr.bf16.mxu0 0
        %6811 = vmatpush1.bf16.msra.mxu0 0
        %6812 = vmatprep.mubr.bf16.mxu0 %v6656
        %6813 = vmatmul.mubr.bf16.gmra.mrb[0].mxu0 %v5276
        %v6814 = vpop.f32.mrb[0].mxu0
        %v6815 = vadd.f32 %v6775, %v6814
        %v6816 = vpop.f32.mrb[0].mxu0
        %v6817 = vpop.f32.mrb[0].mxu0
        %v6818 = vpop.f32.mrb[0].mxu0
        %6819 = vdwg.mxu0
        %s6820 = scalar_lea.vmem %s7, 4
        %v6821 = vld [vmem:[%s6820] sm:$0x3]
        %v6823 = vsel %vm5172, %v6821, 0
        %6825 = vmatprep.subr.bf16.mxu0 %v5184
        %6826 = vmatpush1.bf16.msra.mxu0 %v5181
        %6827 = vmatprep.subr.bf16.mxu0 0
        %6828 = vmatpush1.bf16.msra.mxu0 0
        %6829 = vmatprep.subr.bf16.mxu0 0
        %6830 = vmatpush1.bf16.msra.mxu0 0
        %6831 = vmatprep.subr.bf16.mxu0 0
        %6832 = vmatpush1.bf16.msra.mxu0 0
        %6833 = vmatprep.subr.bf16.mxu0 0
        %6834 = vmatpush1.bf16.msra.mxu0 0
        %6835 = vmatprep.subr.bf16.mxu0 0
        %6836 = vmatpush1.bf16.msra.mxu0 0
        %6837 = vmatprep.subr.bf16.mxu0 0
        %6838 = vmatpush1.bf16.msra.mxu0 0
        %6839 = vmatprep.subr.bf16.mxu0 0
        %6840 = vmatpush1.bf16.msra.mxu0 0
        %6841 = vmatprep.subr.bf16.mxu0 0
        %6842 = vmatpush1.bf16.msra.mxu0 0
        %6843 = vmatprep.subr.bf16.mxu0 0
        %6844 = vmatpush1.bf16.msra.mxu0 0
        %6845 = vmatprep.subr.bf16.mxu0 0
        %6846 = vmatpush1.bf16.msra.mxu0 0
        %6847 = vmatprep.subr.bf16.mxu0 0
        %6848 = vmatpush1.bf16.msra.mxu0 0
        %6849 = vmatprep.subr.bf16.mxu0 0
        %6850 = vmatpush1.bf16.msra.mxu0 0
        %6851 = vmatprep.subr.bf16.mxu0 0
        %6852 = vmatpush1.bf16.msra.mxu0 0
        %6853 = vmatprep.subr.bf16.mxu0 0
        %6854 = vmatpush1.bf16.msra.mxu0 0
        %6855 = vmatprep.subr.bf16.mxu0 0
        %6856 = vmatpush1.bf16.msra.mxu0 0
        %6857 = vmatprep.mubr.bf16.mxu0 0
        %6858 = vmatmul.mubr.bf16.gmra.mrb[0].mxu0 %v6823
        %v6859 = vpop.f32.mrb[0].mxu0
        %v6860 = vadd.f32 0.0, %v6859
        %v6861 = vpop.f32.mrb[0].mxu0
        %v6862 = vadd.f32 0.0, %v6861
        %v6863 = vpop.f32.mrb[0].mxu0
        %v6864 = vpop.f32.mrb[0].mxu0
        %6865 = vdwg.mxu0
        %6866 = vmatprep.subr.bf16.mxu0 %v5190
        %6867 = vmatpush1.bf16.msra.mxu0 %v5187
        %6868 = vmatprep.subr.bf16.mxu0 0
        %6869 = vmatpush1.bf16.msra.mxu0 0
        %6870 = vmatprep.subr.bf16.mxu0 0
        %6871 = vmatpush1.bf16.msra.mxu0 0
        %6872 = vmatprep.subr.bf16.mxu0 0
        %6873 = vmatpush1.bf16.msra.mxu0 0
        %6874 = vmatprep.subr.bf16.mxu0 0
        %6875 = vmatpush1.bf16.msra.mxu0 0
        %6876 = vmatprep.subr.bf16.mxu0 0
        %6877 = vmatpush1.bf16.msra.mxu0 0
        %6878 = vmatprep.subr.bf16.mxu0 0
        %6879 = vmatpush1.bf16.msra.mxu0 0
        %6880 = vmatprep.subr.bf16.mxu0 0
        %6881 = vmatpush1.bf16.msra.mxu0 0
        %6882 = vmatprep.subr.bf16.mxu0 0
        %6883 = vmatpush1.bf16.msra.mxu0 0
        %6884 = vmatprep.subr.bf16.mxu0 0
        %6885 = vmatpush1.bf16.msra.mxu0 0
        %6886 = vmatprep.subr.bf16.mxu0 0
        %6887 = vmatpush1.bf16.msra.mxu0 0
        %6888 = vmatprep.subr.bf16.mxu0 0
        %6889 = vmatpush1.bf16.msra.mxu0 0
        %6890 = vmatprep.subr.bf16.mxu0 0
        %6891 = vmatpush1.bf16.msra.mxu0 0
        %6892 = vmatprep.subr.bf16.mxu0 0
        %6893 = vmatpush1.bf16.msra.mxu0 0
        %6894 = vmatprep.subr.bf16.mxu0 0
        %6895 = vmatpush1.bf16.msra.mxu0 0
        %6896 = vmatprep.subr.bf16.mxu0 0
        %6897 = vmatpush1.bf16.msra.mxu0 0
        %6898 = vmatprep.mubr.bf16.mxu0 0
        %6899 = vmatmul.mubr.bf16.gmra.mrb[0].mxu0 %v6823
        %v6900 = vpop.f32.mrb[0].mxu0
        %v6901 = vadd.f32 0.0, %v6900
        %v6902 = vpop.f32.mrb[0].mxu0
        %v6903 = vadd.f32 0.0, %v6902
        %v6904 = vpop.f32.mrb[0].mxu0
        %v6905 = vpop.f32.mrb[0].mxu0
        %6906 = vdwg.mxu0
        %v6907 = vpack.c.bf16 %v6860, %v6860
        %v6908 = vpack.c.bf16 %v6862, %v6862
        %v6909 = vpack.c.bf16 %v6901, %v6901
        %v6910 = vpack.c.bf16 %v6903, %v6903
        %s6911 = scalar_lea.vmem [#allocation8], 1344
        %v6912 = vld [vmem:[%s6911] sm:$0xff]
        %v6913 = vld [vmem:[%s6911 + $0x8] sm:$0xf]
        %v6914 = vld [vmem:[%s6911 + $0xc] sm:$0xff]
        %v6915 = vld [vmem:[%s6911 + $0x14] sm:$0xf]
        %v6916 = vld [vmem:[%s6911 + $0x18] sm:$0xff]
        %v6917 = vld [vmem:[%s6911 + $0x20] sm:$0xf]
        %v6918 = vld [vmem:[%s6911 + $0x24] sm:$0xff]
        %v6919 = vld [vmem:[%s6911 + $0x2c] sm:$0xf]
        %v6920 = vld [vmem:[%s6911 + $0x30] sm:$0xff]
        %v6921 = vld [vmem:[%s6911 + $0x38] sm:$0xf]
        %v6922 = vld [vmem:[%s6911 + $0x3c] sm:$0xff]
        %v6923 = vld [vmem:[%s6911 + $0x44] sm:$0xf]
        %v6924 = vld [vmem:[%s6911 + $0x48] sm:$0xff]
        %v6925 = vld [vmem:[%s6911 + $0x50] sm:$0xf]
        %v6926 = vld [vmem:[%s6911 + $0x54] sm:$0xff]
        %v6927 = vld [vmem:[%s6911 + $0x5c] sm:$0xf]
        %v6928 = vld [vmem:[%s6911 + $0x60] sm:$0xff]
        %v6929 = vld [vmem:[%s6911 + $0x68] sm:$0xf]
        %v6930 = vld [vmem:[%s6911 + $0x6c] sm:$0xff]
        %v6931 = vld [vmem:[%s6911 + $0x74] sm:$0xf]
        %v6932 = vld [vmem:[%s6911 + $0x78] sm:$0xff]
        %v6933 = vld [vmem:[%s6911 + $0x80] sm:$0xf]
        %v6934 = vld [vmem:[%s6911 + $0x84] sm:$0xff]
        %v6935 = vld [vmem:[%s6911 + $0x8c] sm:$0xf]
        %v6936 = vld [vmem:[%s6911 + $0x90] sm:$0xff]
        %v6937 = vld [vmem:[%s6911 + $0x98] sm:$0xf]
        %v6938 = vld [vmem:[%s6911 + $0x9c] sm:$0xff]
        %v6939 = vld [vmem:[%s6911 + $0xa4] sm:$0xf]
        %v6940 = vld [vmem:[%s6911 + $0xa8] sm:$0xff]
        %v6941 = vld [vmem:[%s6911 + $0xb0] sm:$0xf]
        %v6942 = vld [vmem:[%s6911 + $0xb4] sm:$0xff]
        %v6943 = vld [vmem:[%s6911 + $0xbc] sm:$0xf]
        %v6944 = vld [vmem:[%s6911 + $0xc0] sm:$0xff]
        %v6945 = vld [vmem:[%s6911 + $0xc8] sm:$0xf]
        %v6946 = vld [vmem:[%s6911 + $0xcc] sm:$0xff]
        %v6947 = vld [vmem:[%s6911 + $0xd4] sm:$0xf]
        %v6948 = vld [vmem:[%s6911 + $0xd8] sm:$0xff]
        %v6949 = vld [vmem:[%s6911 + $0xe0] sm:$0xf]
        %v6950 = vld [vmem:[%s6911 + $0xe4] sm:$0xff]
        %v6951 = vld [vmem:[%s6911 + $0xec] sm:$0xf]
        %v6952 = vld [vmem:[%s6911 + $0xf0] sm:$0xff]
        %v6953 = vld [vmem:[%s6911 + $0xf8] sm:$0xf]
        %v6954 = vld [vmem:[%s6911 + $0xfc] sm:$0xff]
        %v6955 = vld [vmem:[%s6911 + $0x104] sm:$0xf]
        %v6956 = vld [vmem:[%s6911 + $0x108] sm:$0xff]
        %v6957 = vld [vmem:[%s6911 + $0x110] sm:$0xf]
        %v6958 = vld [vmem:[%s6911 + $0x114] sm:$0xff]
        %v6959 = vld [vmem:[%s6911 + $0x11c] sm:$0xf]
        %v6960 = vld [vmem:[%s6911 + $0x120] sm:$0xff]
        %v6961 = vld [vmem:[%s6911 + $0x128] sm:$0xf]
        %v6962 = vld [vmem:[%s6911 + $0x12c] sm:$0xff]
        %v6963 = vld [vmem:[%s6911 + $0x134] sm:$0xf]
        %v6964 = vld [vmem:[%s6911 + $0x138] sm:$0xff]
        %v6965 = vld [vmem:[%s6911 + $0x140] sm:$0xf]
        %v6966 = vld [vmem:[%s6911 + $0x144] sm:$0xff]
        %v6967 = vld [vmem:[%s6911 + $0x14c] sm:$0xf]
        %v6968 = vld [vmem:[%s6911 + $0x150] sm:$0xff]
        %v6969 = vld [vmem:[%s6911 + $0x158] sm:$0xf]
        %v6970 = vld [vmem:[%s6911 + $0x15c] sm:$0xff]
        %v6971 = vld [vmem:[%s6911 + $0x164] sm:$0xf]
        %v6972 = vld [vmem:[%s6911 + $0x168] sm:$0xff]
        %v6973 = vld [vmem:[%s6911 + $0x170] sm:$0xf]
        %v6974 = vld [vmem:[%s6911 + $0x174] sm:$0xff]
        %v6975 = vld [vmem:[%s6911 + $0x17c] sm:$0xf]
        %v6976 = vld [vmem:[%s6911 + $0x180] sm:$0xff]
        %v6977 = vld [vmem:[%s6911 + $0x188] sm:$0xf]
        %v6978 = vld [vmem:[%s6911 + $0x18c] sm:$0xff]
        %v6979 = vld [vmem:[%s6911 + $0x194] sm:$0xf]
        %v6980 = vld [vmem:[%s6911 + $0x198] sm:$0xff]
        %v6981 = vld [vmem:[%s6911 + $0x1a0] sm:$0xf]
        %v6982 = vld [vmem:[%s6911 + $0x1a4] sm:$0xff]
        %v6983 = vld [vmem:[%s6911 + $0x1ac] sm:$0xf]
        %v6984 = vld [vmem:[%s6911 + $0x1b0] sm:$0xff]
        %v6985 = vld [vmem:[%s6911 + $0x1b8] sm:$0xf]
        %v6986 = vld [vmem:[%s6911 + $0x1bc] sm:$0xff]
        %v6987 = vld [vmem:[%s6911 + $0x1c4] sm:$0xf]
        %v6988 = vld [vmem:[%s6911 + $0x1c8] sm:$0xff]
        %v6989 = vld [vmem:[%s6911 + $0x1d0] sm:$0xf]
        %v6990 = vld [vmem:[%s6911 + $0x1d4] sm:$0xff]
        %v6991 = vld [vmem:[%s6911 + $0x1dc] sm:$0xf]
        %v6992 = vld [vmem:[%s6911 + $0x1e0] sm:$0xff]
        %v6993 = vld [vmem:[%s6911 + $0x1e8] sm:$0xf]
        %v6994 = vld [vmem:[%s6911 + $0x1ec] sm:$0xff]
        %v6995 = vld [vmem:[%s6911 + $0x1f4] sm:$0xf]
        %v6996 = vld [vmem:[%s6911 + $0x1f8] sm:$0xff]
        %v6997 = vld [vmem:[%s6911 + $0x200] sm:$0xf]
        %v6998 = vld [vmem:[%s6911 + $0x204] sm:$0xff]
        %v6999 = vld [vmem:[%s6911 + $0x20c] sm:$0xf]
        %v7000 = vld [vmem:[%s6911 + $0x210] sm:$0xff]
        %v7001 = vld [vmem:[%s6911 + $0x218] sm:$0xf]
        %v7002 = vld [vmem:[%s6911 + $0x21c] sm:$0xff]
        %v7003 = vld [vmem:[%s6911 + $0x224] sm:$0xf]
        %v7004 = vld [vmem:[%s6911 + $0x228] sm:$0xff]
        %v7005 = vld [vmem:[%s6911 + $0x230] sm:$0xf]
        %v7006 = vld [vmem:[%s6911 + $0x234] sm:$0xff]
        %v7007 = vld [vmem:[%s6911 + $0x23c] sm:$0xf]
        %v7008 = vld [vmem:[%s6911 + $0x240] sm:$0xff]
        %v7009 = vld [vmem:[%s6911 + $0x248] sm:$0xf]
        %v7010 = vld [vmem:[%s6911 + $0x24c] sm:$0xff]
        %v7011 = vld [vmem:[%s6911 + $0x254] sm:$0xf]
        %v7012 = vld [vmem:[%s6911 + $0x258] sm:$0xff]
        %v7013 = vld [vmem:[%s6911 + $0x260] sm:$0xf]
        %v7014 = vld [vmem:[%s6911 + $0x264] sm:$0xff]
        %v7015 = vld [vmem:[%s6911 + $0x26c] sm:$0xf]
        %v7016 = vld [vmem:[%s6911 + $0x270] sm:$0xff]
        %v7017 = vld [vmem:[%s6911 + $0x278] sm:$0xf]
        %v7018 = vld [vmem:[%s6911 + $0x27c] sm:$0xff]
        %v7019 = vld [vmem:[%s6911 + $0x284] sm:$0xf]
        %v7020 = vld [vmem:[%s6911 + $0x288] sm:$0xff]
        %v7021 = vld [vmem:[%s6911 + $0x290] sm:$0xf]
        %v7022 = vld [vmem:[%s6911 + $0x294] sm:$0xff]
        %v7023 = vld [vmem:[%s6911 + $0x29c] sm:$0xf]
        %v7136 = vunpack.c.l.b16 %v6912
        %v7137 = vunpack.c.h.b16 %v6912
        %v7138 = vunpack.c.l.b16 %v6913
        %v7139 = vunpack.c.l.b16 %v6914
        %v7140 = vunpack.c.h.b16 %v6914
        %v7141 = vunpack.c.l.b16 %v6915
        %v7142 = vunpack.c.l.b16 %v6916
        %v7143 = vunpack.c.h.b16 %v6916
        %v7144 = vunpack.c.l.b16 %v6917
        %v7145 = vunpack.c.l.b16 %v6918
        %v7146 = vunpack.c.h.b16 %v6918
        %v7147 = vunpack.c.l.b16 %v6919
        %v7148 = vunpack.c.l.b16 %v6920
        %v7149 = vunpack.c.h.b16 %v6920
        %v7150 = vunpack.c.l.b16 %v6921
        %v7151 = vunpack.c.l.b16 %v6922
        %v7152 = vunpack.c.h.b16 %v6922
        %v7153 = vunpack.c.l.b16 %v6923
        %v7154 = vunpack.c.l.b16 %v6924
        %v7155 = vunpack.c.h.b16 %v6924
        %v7156 = vunpack.c.l.b16 %v6925
        %v7157 = vunpack.c.l.b16 %v6926
        %v7158 = vunpack.c.h.b16 %v6926
        %v7159 = vunpack.c.l.b16 %v6927
        %v7160 = vunpack.c.l.b16 %v6928
        %v7161 = vunpack.c.h.b16 %v6928
        %v7162 = vunpack.c.l.b16 %v6929
        %v7163 = vunpack.c.l.b16 %v6930
        %v7164 = vunpack.c.h.b16 %v6930
        %v7165 = vunpack.c.l.b16 %v6931
        %v7166 = vunpack.c.l.b16 %v6932
        %v7167 = vunpack.c.h.b16 %v6932
        %v7168 = vunpack.c.l.b16 %v6933
        %v7169 = vunpack.c.l.b16 %v6934
        %v7170 = vunpack.c.h.b16 %v6934
        %v7171 = vunpack.c.l.b16 %v6935
        %v7172 = vunpack.c.l.b16 %v6936
        %v7173 = vunpack.c.h.b16 %v6936
        %v7174 = vunpack.c.l.b16 %v6937
        %v7175 = vunpack.c.l.b16 %v6938
        %v7176 = vunpack.c.h.b16 %v6938
        %v7177 = vunpack.c.l.b16 %v6939
        %v7178 = vunpack.c.l.b16 %v6940
        %v7179 = vunpack.c.h.b16 %v6940
        %v7180 = vunpack.c.l.b16 %v6941
        %v7181 = vunpack.c.l.b16 %v6942
        %v7182 = vunpack.c.h.b16 %v6942
        %v7183 = vunpack.c.l.b16 %v6943
        %v7184 = vunpack.c.l.b16 %v6944
        %v7185 = vunpack.c.h.b16 %v6944
        %v7186 = vunpack.c.l.b16 %v6945
        %v7187 = vunpack.c.l.b16 %v6946
        %v7188 = vunpack.c.h.b16 %v6946
        %v7189 = vunpack.c.l.b16 %v6947
        %v7190 = vunpack.c.l.b16 %v6948
        %v7191 = vunpack.c.h.b16 %v6948
        %v7192 = vunpack.c.l.b16 %v6949
        %v7193 = vunpack.c.l.b16 %v6950
        %v7194 = vunpack.c.h.b16 %v6950
        %v7195 = vunpack.c.l.b16 %v6951
        %v7196 = vunpack.c.l.b16 %v6952
        %v7197 = vunpack.c.h.b16 %v6952
        %v7198 = vunpack.c.l.b16 %v6953
        %v7199 = vunpack.c.l.b16 %v6954
        %v7200 = vunpack.c.h.b16 %v6954
        %v7201 = vunpack.c.l.b16 %v6955
        %v7202 = vunpack.c.l.b16 %v6956
        %v7203 = vunpack.c.h.b16 %v6956
        %v7204 = vunpack.c.l.b16 %v6957
        %v7205 = vunpack.c.l.b16 %v6958
        %v7206 = vunpack.c.h.b16 %v6958
        %v7207 = vunpack.c.l.b16 %v6959
        %v7208 = vunpack.c.l.b16 %v6960
        %v7209 = vunpack.c.h.b16 %v6960
        %v7210 = vunpack.c.l.b16 %v6961
        %v7211 = vunpack.c.l.b16 %v6962
        %v7212 = vunpack.c.h.b16 %v6962
        %v7213 = vunpack.c.l.b16 %v6963
        %v7214 = vunpack.c.l.b16 %v6964
        %v7215 = vunpack.c.h.b16 %v6964
        %v7216 = vunpack.c.l.b16 %v6965
        %v7217 = vunpack.c.l.b16 %v6966
        %v7218 = vunpack.c.h.b16 %v6966
        %v7219 = vunpack.c.l.b16 %v6967
        %v7220 = vunpack.c.l.b16 %v6968
        %v7221 = vunpack.c.h.b16 %v6968
        %v7222 = vunpack.c.l.b16 %v6969
        %v7223 = vunpack.c.l.b16 %v6970
        %v7224 = vunpack.c.h.b16 %v6970
        %v7225 = vunpack.c.l.b16 %v6971
        %v7226 = vunpack.c.l.b16 %v6972
        %v7227 = vunpack.c.h.b16 %v6972
        %v7228 = vunpack.c.l.b16 %v6973
        %v7229 = vunpack.c.l.b16 %v6974
        %v7230 = vunpack.c.h.b16 %v6974
        %v7231 = vunpack.c.l.b16 %v6975
        %v7232 = vunpack.c.l.b16 %v6976
        %v7233 = vunpack.c.h.b16 %v6976
        %v7234 = vunpack.c.l.b16 %v6977
        %v7235 = vunpack.c.l.b16 %v6978
        %v7236 = vunpack.c.h.b16 %v6978
        %v7237 = vunpack.c.l.b16 %v6979
        %v7238 = vunpack.c.l.b16 %v6980
        %v7239 = vunpack.c.h.b16 %v6980
        %v7240 = vunpack.c.l.b16 %v6981
        %v7241 = vunpack.c.l.b16 %v6982
        %v7242 = vunpack.c.h.b16 %v6982
        %v7243 = vunpack.c.l.b16 %v6983
        %v7244 = vunpack.c.l.b16 %v6984
        %v7245 = vunpack.c.h.b16 %v6984
        %v7246 = vunpack.c.l.b16 %v6985
        %v7247 = vunpack.c.l.b16 %v6986
        %v7248 = vunpack.c.h.b16 %v6986
        %v7249 = vunpack.c.l.b16 %v6987
        %v7250 = vunpack.c.l.b16 %v6988
        %v7251 = vunpack.c.h.b16 %v6988
        %v7252 = vunpack.c.l.b16 %v6989
        %v7253 = vunpack.c.l.b16 %v6990
        %v7254 = vunpack.c.h.b16 %v6990
        %v7255 = vunpack.c.l.b16 %v6991
        %v7256 = vunpack.c.l.b16 %v6992
        %v7257 = vunpack.c.h.b16 %v6992
        %v7258 = vunpack.c.l.b16 %v6993
        %v7259 = vunpack.c.l.b16 %v6994
        %v7260 = vunpack.c.h.b16 %v6994
        %v7261 = vunpack.c.l.b16 %v6995
        %v7262 = vunpack.c.l.b16 %v6996
        %v7263 = vunpack.c.h.b16 %v6996
        %v7264 = vunpack.c.l.b16 %v6997
        %v7265 = vunpack.c.l.b16 %v6998
        %v7266 = vunpack.c.h.b16 %v6998
        %v7267 = vunpack.c.l.b16 %v6999
        %v7268 = vunpack.c.l.b16 %v7000
        %v7269 = vunpack.c.h.b16 %v7000
        %v7270 = vunpack.c.l.b16 %v7001
        %v7271 = vunpack.c.l.b16 %v7002
        %v7272 = vunpack.c.h.b16 %v7002
        %v7273 = vunpack.c.l.b16 %v7003
        %v7274 = vunpack.c.l.b16 %v7004
        %v7275 = vunpack.c.h.b16 %v7004
        %v7276 = vunpack.c.l.b16 %v7005
        %v7277 = vunpack.c.l.b16 %v7006
        %v7278 = vunpack.c.h.b16 %v7006
        %v7279 = vunpack.c.l.b16 %v7007
        %v7280 = vunpack.c.l.b16 %v7008
        %v7281 = vunpack.c.h.b16 %v7008
        %v7282 = vunpack.c.l.b16 %v7009
        %v7283 = vunpack.c.l.b16 %v7010
        %v7284 = vunpack.c.h.b16 %v7010
        %v7285 = vunpack.c.l.b16 %v7011
        %v7286 = vunpack.c.l.b16 %v7012
        %v7287 = vunpack.c.h.b16 %v7012
        %v7288 = vunpack.c.l.b16 %v7013
        %v7289 = vunpack.c.l.b16 %v7014
        %v7290 = vunpack.c.h.b16 %v7014
        %v7291 = vunpack.c.l.b16 %v7015
        %v7292 = vunpack.c.l.b16 %v7016
        %v7293 = vunpack.c.h.b16 %v7016
        %v7294 = vunpack.c.l.b16 %v7017
        %v7295 = vunpack.c.l.b16 %v7018
        %v7296 = vunpack.c.h.b16 %v7018
        %v7297 = vunpack.c.l.b16 %v7019
        %v7298 = vunpack.c.l.b16 %v7020
        %v7299 = vunpack.c.h.b16 %v7020
        %v7300 = vunpack.c.l.b16 %v7021
        %v7301 = vunpack.c.l.b16 %v7022
        %v7302 = vunpack.c.h.b16 %v7022
        %v7303 = vunpack.c.l.b16 %v7023
        %v7304 = vpack.c.b16 %v7139, %v7136
        %v7305 = vpack.c.b16 %v7140, %v7137
        %v7306 = vpack.c.b16 %v7141, %v7138
        %v7307 = vpack.c.b16 %v7145, %v7142
        %v7308 = vpack.c.b16 %v7146, %v7143
        %v7309 = vpack.c.b16 %v7147, %v7144
        %v7310 = vpack.c.b16 %v7151, %v7148
        %v7311 = vpack.c.b16 %v7152, %v7149
        %v7312 = vpack.c.b16 %v7153, %v7150
        %v7313 = vpack.c.b16 %v7157, %v7154
        %v7314 = vpack.c.b16 %v7158, %v7155
        %v7315 = vpack.c.b16 %v7159, %v7156
        %v7316 = vpack.c.b16 %v7163, %v7160
        %v7317 = vpack.c.b16 %v7164, %v7161
        %v7318 = vpack.c.b16 %v7165, %v7162
        %v7319 = vpack.c.b16 %v7169, %v7166
        %v7320 = vpack.c.b16 %v7170, %v7167
        %v7321 = vpack.c.b16 %v7171, %v7168
        %v7322 = vpack.c.b16 %v7175, %v7172
        %v7323 = vpack.c.b16 %v7176, %v7173
        %v7324 = vpack.c.b16 %v7177, %v7174
        %v7325 = vpack.c.b16 %v7181, %v7178
        %v7326 = vpack.c.b16 %v7182, %v7179
        %v7327 = vpack.c.b16 %v7183, %v7180
        %v7328 = vpack.c.b16 %v7187, %v7184
        %v7329 = vpack.c.b16 %v7188, %v7185
        %v7330 = vpack.c.b16 %v7189, %v7186
        %v7331 = vpack.c.b16 %v7193, %v7190
        %v7332 = vpack.c.b16 %v7194, %v7191
        %v7333 = vpack.c.b16 %v7195, %v7192
        %v7334 = vpack.c.b16 %v7199, %v7196
        %v7335 = vpack.c.b16 %v7200, %v7197
        %v7336 = vpack.c.b16 %v7201, %v7198
        %v7337 = vpack.c.b16 %v7205, %v7202
        %v7338 = vpack.c.b16 %v7206, %v7203
        %v7339 = vpack.c.b16 %v7207, %v7204
        %v7340 = vpack.c.b16 %v7211, %v7208
        %v7341 = vpack.c.b16 %v7212, %v7209
        %v7342 = vpack.c.b16 %v7213, %v7210
        %v7343 = vpack.c.b16 %v7217, %v7214
        %v7344 = vpack.c.b16 %v7218, %v7215
        %v7345 = vpack.c.b16 %v7219, %v7216
        %v7346 = vpack.c.b16 %v7223, %v7220
        %v7347 = vpack.c.b16 %v7224, %v7221
        %v7348 = vpack.c.b16 %v7225, %v7222
        %v7349 = vpack.c.b16 %v7229, %v7226
        %v7350 = vpack.c.b16 %v7230, %v7227
        %v7351 = vpack.c.b16 %v7231, %v7228
        %v7352 = vpack.c.b16 %v7235, %v7232
        %v7353 = vpack.c.b16 %v7236, %v7233
        %v7354 = vpack.c.b16 %v7237, %v7234
        %v7355 = vpack.c.b16 %v7241, %v7238
        %v7356 = vpack.c.b16 %v7242, %v7239
        %v7357 = vpack.c.b16 %v7243, %v7240
        %v7358 = vpack.c.b16 %v7247, %v7244
        %v7359 = vpack.c.b16 %v7248, %v7245
        %v7360 = vpack.c.b16 %v7249, %v7246
        %v7361 = vpack.c.b16 %v7253, %v7250
        %v7362 = vpack.c.b16 %v7254, %v7251
        %v7363 = vpack.c.b16 %v7255, %v7252
        %v7364 = vpack.c.b16 %v7259, %v7256
        %v7365 = vpack.c.b16 %v7260, %v7257
        %v7366 = vpack.c.b16 %v7261, %v7258
        %v7367 = vpack.c.b16 %v7265, %v7262
        %v7368 = vpack.c.b16 %v7266, %v7263
        %v7369 = vpack.c.b16 %v7267, %v7264
        %v7370 = vpack.c.b16 %v7271, %v7268
        %v7371 = vpack.c.b16 %v7272, %v7269
        %v7372 = vpack.c.b16 %v7273, %v7270
        %v7373 = vpack.c.b16 %v7277, %v7274
        %v7374 = vpack.c.b16 %v7278, %v7275
        %v7375 = vpack.c.b16 %v7279, %v7276
        %v7376 = vpack.c.b16 %v7283, %v7280
        %v7377 = vpack.c.b16 %v7284, %v7281
        %v7378 = vpack.c.b16 %v7285, %v7282
        %v7379 = vpack.c.b16 %v7289, %v7286
        %v7380 = vpack.c.b16 %v7290, %v7287
        %v7381 = vpack.c.b16 %v7291, %v7288
        %v7382 = vpack.c.b16 %v7295, %v7292
        %v7383 = vpack.c.b16 %v7296, %v7293
        %v7384 = vpack.c.b16 %v7297, %v7294
        %v7385 = vpack.c.b16 %v7301, %v7298
        %v7386 = vpack.c.b16 %v7302, %v7299
        %v7387 = vpack.c.b16 %v7303, %v7300
        %v7473 = vsel %vm2372, %v6910, 0
        %7475 = vmatprep.subr.bf16.mxu0 %v7305
        %7476 = vmatpush1.bf16.msra.mxu0 %v7304
        %7477 = vmatprep.subr.bf16.mxu0 %v7308
        %7478 = vmatpush1.bf16.msra.mxu0 %v7307
        %7479 = vmatprep.subr.bf16.mxu0 %v7311
        %7480 = vmatpush1.bf16.msra.mxu0 %v7310
        %7481 = vmatprep.subr.bf16.mxu0 %v7314
        %7482 = vmatpush1.bf16.msra.mxu0 %v7313
        %7483 = vmatprep.subr.bf16.mxu0 %v7317
        %7484 = vmatpush1.bf16.msra.mxu0 %v7316
        %7485 = vmatprep.subr.bf16.mxu0 %v7320
        %7486 = vmatpush1.bf16.msra.mxu0 %v7319
        %7487 = vmatprep.subr.bf16.mxu0 %v7323
        %7488 = vmatpush1.bf16.msra.mxu0 %v7322
        %7489 = vmatprep.subr.bf16.mxu0 %v7326
        %7490 = vmatpush1.bf16.msra.mxu0 %v7325
        %7491 = vmatprep.subr.bf16.mxu0 %v7329
        %7492 = vmatpush1.bf16.msra.mxu0 %v7328
        %7493 = vmatprep.subr.bf16.mxu0 %v7332
        %7494 = vmatpush1.bf16.msra.mxu0 %v7331
        %7495 = vmatprep.subr.bf16.mxu0 %v7335
        %7496 = vmatpush1.bf16.msra.mxu0 %v7334
        %7497 = vmatprep.subr.bf16.mxu0 %v7338
        %7498 = vmatpush1.bf16.msra.mxu0 %v7337
        %7499 = vmatprep.subr.bf16.mxu0 %v7341
        %7500 = vmatpush1.bf16.msra.mxu0 %v7340
        %7501 = vmatprep.subr.bf16.mxu0 %v7344
        %7502 = vmatpush1.bf16.msra.mxu0 %v7343
        %7503 = vmatprep.subr.bf16.mxu0 %v7347
        %7504 = vmatpush1.bf16.msra.mxu0 %v7346
        %7505 = vmatprep.subr.bf16.mxu0 %v7350
        %7506 = vmatpush1.bf16.msra.mxu0 %v7349
        %7507 = vmatprep.mubr.bf16.mxu0 %v6908
        %7508 = vmatmul.mubr.bf16.gmra.mrb[0].mxu0 %v6907
        %v7509 = vpop.f32.mrb[0].mxu0
        %v7510 = vadd.f32 0.0, %v7509
        %v7511 = vpop.f32.mrb[0].mxu0
        %v7512 = vadd.f32 0.0, %v7511
        %v7513 = vpop.f32.mrb[0].mxu0
        %v7514 = vpop.f32.mrb[0].mxu0
        %7515 = vdwg.mxu0
        %7516 = vmatprep.subr.bf16.mxu0 %v7353
        %7517 = vmatpush1.bf16.msra.mxu0 %v7352
        %7518 = vmatprep.subr.bf16.mxu0 %v7356
        %7519 = vmatpush1.bf16.msra.mxu0 %v7355
        %7520 = vmatprep.subr.bf16.mxu0 %v7359
        %7521 = vmatpush1.bf16.msra.mxu0 %v7358
        %7522 = vmatprep.subr.bf16.mxu0 %v7362
        %7523 = vmatpush1.bf16.msra.mxu0 %v7361
        %7524 = vmatprep.subr.bf16.mxu0 %v7365
        %7525 = vmatpush1.bf16.msra.mxu0 %v7364
        %7526 = vmatprep.subr.bf16.mxu0 %v7368
        %7527 = vmatpush1.bf16.msra.mxu0 %v7367
        %7528 = vmatprep.subr.bf16.mxu0 %v7371
        %7529 = vmatpush1.bf16.msra.mxu0 %v7370
        %7530 = vmatprep.subr.bf16.mxu0 %v7374
        %7531 = vmatpush1.bf16.msra.mxu0 %v7373
        %7532 = vmatprep.subr.bf16.mxu0 %v7377
        %7533 = vmatpush1.bf16.msra.mxu0 %v7376
        %7534 = vmatprep.subr.bf16.mxu0 %v7380
        %7535 = vmatpush1.bf16.msra.mxu0 %v7379
        %7536 = vmatprep.subr.bf16.mxu0 %v7383
        %7537 = vmatpush1.bf16.msra.mxu0 %v7382
        %7538 = vmatprep.subr.bf16.mxu0 %v7386
        %7539 = vmatpush1.bf16.msra.mxu0 %v7385
        %7540 = vmatprep.subr.bf16.mxu0 0
        %7541 = vmatpush1.bf16.msra.mxu0 0
        %7542 = vmatprep.subr.bf16.mxu0 0
        %7543 = vmatpush1.bf16.msra.mxu0 0
        %7544 = vmatprep.subr.bf16.mxu0 0
        %7545 = vmatpush1.bf16.msra.mxu0 0
        %7546 = vmatprep.subr.bf16.mxu0 0
        %7547 = vmatpush1.bf16.msra.mxu0 0
        %7548 = vmatprep.mubr.bf16.mxu0 %v7473
        %7549 = vmatmul.mubr.bf16.gmra.mrb[0].mxu0 %v6909
        %v7550 = vpop.f32.mrb[0].mxu0
        %v7551 = vadd.f32 %v7510, %v7550
        %v7552 = vpop.f32.mrb[0].mxu0
        %v7553 = vadd.f32 %v7512, %v7552
        %v7554 = vpop.f32.mrb[0].mxu0
        %v7555 = vpop.f32.mrb[0].mxu0
        %7556 = vdwg.mxu0
        %7557 = vmatprep.subr.bf16.mxu0 0
        %7558 = vmatpush1.bf16.msra.mxu0 %v7306
        %7559 = vmatprep.subr.bf16.mxu0 0
        %7560 = vmatpush1.bf16.msra.mxu0 %v7309
        %7561 = vmatprep.subr.bf16.mxu0 0
        %7562 = vmatpush1.bf16.msra.mxu0 %v7312
        %7563 = vmatprep.subr.bf16.mxu0 0
        %7564 = vmatpush1.bf16.msra.mxu0 %v7315
        %7565 = vmatprep.subr.bf16.mxu0 0
        %7566 = vmatpush1.bf16.msra.mxu0 %v7318
        %7567 = vmatprep.subr.bf16.mxu0 0
        %7568 = vmatpush1.bf16.msra.mxu0 %v7321
        %7569 = vmatprep.subr.bf16.mxu0 0
        %7570 = vmatpush1.bf16.msra.mxu0 %v7324
        %7571 = vmatprep.subr.bf16.mxu0 0
        %7572 = vmatpush1.bf16.msra.mxu0 %v7327
        %7573 = vmatprep.subr.bf16.mxu0 0
        %7574 = vmatpush1.bf16.msra.mxu0 %v7330
        %7575 = vmatprep.subr.bf16.mxu0 0
        %7576 = vmatpush1.bf16.msra.mxu0 %v7333
        %7577 = vmatprep.subr.bf16.mxu0 0
        %7578 = vmatpush1.bf16.msra.mxu0 %v7336
        %7579 = vmatprep.subr.bf16.mxu0 0
        %7580 = vmatpush1.bf16.msra.mxu0 %v7339
        %7581 = vmatprep.subr.bf16.mxu0 0
        %7582 = vmatpush1.bf16.msra.mxu0 %v7342
        %7583 = vmatprep.subr.bf16.mxu0 0
        %7584 = vmatpush1.bf16.msra.mxu0 %v7345
        %7585 = vmatprep.subr.bf16.mxu0 0
        %7586 = vmatpush1.bf16.msra.mxu0 %v7348
        %7587 = vmatprep.subr.bf16.mxu0 0
        %7588 = vmatpush1.bf16.msra.mxu0 %v7351
        %7589 = vmatprep.mubr.bf16.mxu0 %v6908
        %7590 = vmatmul.mubr.bf16.gmra.mrb[0].mxu0 %v6907
        %v7591 = vpop.f32.mrb[0].mxu0
        %v7592 = vadd.f32 0.0, %v7591
        %v7593 = vpop.f32.mrb[0].mxu0
        %v7594 = vpop.f32.mrb[0].mxu0
        %v7595 = vpop.f32.mrb[0].mxu0
        %7596 = vdwg.mxu0
        %7597 = vmatprep.subr.bf16.mxu0 0
        %7598 = vmatpush1.bf16.msra.mxu0 %v7354
        %7599 = vmatprep.subr.bf16.mxu0 0
        %7600 = vmatpush1.bf16.msra.mxu0 %v7357
        %7601 = vmatprep.subr.bf16.mxu0 0
        %7602 = vmatpush1.bf16.msra.mxu0 %v7360
        %7603 = vmatprep.subr.bf16.mxu0 0
        %7604 = vmatpush1.bf16.msra.mxu0 %v7363
        %7605 = vmatprep.subr.bf16.mxu0 0
        %7606 = vmatpush1.bf16.msra.mxu0 %v7366
        %7607 = vmatprep.subr.bf16.mxu0 0
        %7608 = vmatpush1.bf16.msra.mxu0 %v7369
        %7609 = vmatprep.subr.bf16.mxu0 0
        %7610 = vmatpush1.bf16.msra.mxu0 %v7372
        %7611 = vmatprep.subr.bf16.mxu0 0
        %7612 = vmatpush1.bf16.msra.mxu0 %v7375
        %7613 = vmatprep.subr.bf16.mxu0 0
        %7614 = vmatpush1.bf16.msra.mxu0 %v7378
        %7615 = vmatprep.subr.bf16.mxu0 0
        %7616 = vmatpush1.bf16.msra.mxu0 %v7381
        %7617 = vmatprep.subr.bf16.mxu0 0
        %7618 = vmatpush1.bf16.msra.mxu0 %v7384
        %7619 = vmatprep.subr.bf16.mxu0 0
        %7620 = vmatpush1.bf16.msra.mxu0 %v7387
        %7621 = vmatprep.subr.bf16.mxu0 0
        %7622 = vmatpush1.bf16.msra.mxu0 0
        %7623 = vmatprep.subr.bf16.mxu0 0
        %7624 = vmatpush1.bf16.msra.mxu0 0
        %7625 = vmatprep.subr.bf16.mxu0 0
        %7626 = vmatpush1.bf16.msra.mxu0 0
        %7627 = vmatprep.subr.bf16.mxu0 0
        %7628 = vmatpush1.bf16.msra.mxu0 0
        %7629 = vmatprep.mubr.bf16.mxu0 %v7473
        %7630 = vmatmul.mubr.bf16.gmra.mrb[0].mxu0 %v6909
        %v7631 = vpop.f32.mrb[0].mxu0
        %v7632 = vadd.f32 %v7592, %v7631
        %v7633 = vpop.f32.mrb[0].mxu0
        %v7634 = vpop.f32.mrb[0].mxu0
        %v7635 = vpop.f32.mrb[0].mxu0
        %7636 = vdwg.mxu0
        %v7637 = vadd.f32 %v6734, %v7551
        %v7638 = vadd.f32 %v6736, %v7553
        %v7639 = vadd.f32 %v6815, %v7632
        %s7640 = scalar_lea.vmem %s7, 6
        %v7641 = vld [vmem:[%s7640] sm:$0x3]
        %v7643 = vsel %vm5172, %v7641, 0
        %7645 = vmatprep.subr.bf16.mxu0 %v5184
        %7646 = vmatpush1.bf16.msra.mxu0 %v5181
        %7647 = vmatprep.subr.bf16.mxu0 0
        %7648 = vmatpush1.bf16.msra.mxu0 0
        %7649 = vmatprep.subr.bf16.mxu0 0
        %7650 = vmatpush1.bf16.msra.mxu0 0
        %7651 = vmatprep.subr.bf16.mxu0 0
        %7652 = vmatpush1.bf16.msra.mxu0 0
        %7653 = vmatprep.subr.bf16.mxu0 0
        %7654 = vmatpush1.bf16.msra.mxu0 0
        %7655 = vmatprep.subr.bf16.mxu0 0
        %7656 = vmatpush1.bf16.msra.mxu0 0
        %7657 = vmatprep.subr.bf16.mxu0 0
        %7658 = vmatpush1.bf16.msra.mxu0 0
        %7659 = vmatprep.subr.bf16.mxu0 0
        %7660 = vmatpush1.bf16.msra.mxu0 0
        %7661 = vmatprep.subr.bf16.mxu0 0
        %7662 = vmatpush1.bf16.msra.mxu0 0
        %7663 = vmatprep.subr.bf16.mxu0 0
        %7664 = vmatpush1.bf16.msra.mxu0 0
        %7665 = vmatprep.subr.bf16.mxu0 0
        %7666 = vmatpush1.bf16.msra.mxu0 0
        %7667 = vmatprep.subr.bf16.mxu0 0
        %7668 = vmatpush1.bf16.msra.mxu0 0
        %7669 = vmatprep.subr.bf16.mxu0 0
        %7670 = vmatpush1.bf16.msra.mxu0 0
        %7671 = vmatprep.subr.bf16.mxu0 0
        %7672 = vmatpush1.bf16.msra.mxu0 0
        %7673 = vmatprep.subr.bf16.mxu0 0
        %7674 = vmatpush1.bf16.msra.mxu0 0
        %7675 = vmatprep.subr.bf16.mxu0 0
        %7676 = vmatpush1.bf16.msra.mxu0 0
        %7677 = vmatprep.mubr.bf16.mxu0 0
        %7678 = vmatmul.mubr.bf16.gmra.mrb[0].mxu0 %v7643
        %v7679 = vpop.f32.mrb[0].mxu0
        %v7680 = vadd.f32 0.0, %v7679
        %v7681 = vpop.f32.mrb[0].mxu0
        %v7682 = vadd.f32 0.0, %v7681
        %v7683 = vpop.f32.mrb[0].mxu0
        %v7684 = vpop.f32.mrb[0].mxu0
        %7685 = vdwg.mxu0
        %7686 = vmatprep.subr.bf16.mxu0 %v5190
        %7687 = vmatpush1.bf16.msra.mxu0 %v5187
        %7688 = vmatprep.subr.bf16.mxu0 0
        %7689 = vmatpush1.bf16.msra.mxu0 0
        %7690 = vmatprep.subr.bf16.mxu0 0
        %7691 = vmatpush1.bf16.msra.mxu0 0
        %7692 = vmatprep.subr.bf16.mxu0 0
        %7693 = vmatpush1.bf16.msra.mxu0 0
        %7694 = vmatprep.subr.bf16.mxu0 0
        %7695 = vmatpush1.bf16.msra.mxu0 0
        %7696 = vmatprep.subr.bf16.mxu0 0
        %7697 = vmatpush1.bf16.msra.mxu0 0
        %7698 = vmatprep.subr.bf16.mxu0 0
        %7699 = vmatpush1.bf16.msra.mxu0 0
        %7700 = vmatprep.subr.bf16.mxu0 0
        %7701 = vmatpush1.bf16.msra.mxu0 0
        %7702 = vmatprep.subr.bf16.mxu0 0
        %7703 = vmatpush1.bf16.msra.mxu0 0
        %7704 = vmatprep.subr.bf16.mxu0 0
        %7705 = vmatpush1.bf16.msra.mxu0 0
        %7706 = vmatprep.subr.bf16.mxu0 0
        %7707 = vmatpush1.bf16.msra.mxu0 0
        %7708 = vmatprep.subr.bf16.mxu0 0
        %7709 = vmatpush1.bf16.msra.mxu0 0
        %7710 = vmatprep.subr.bf16.mxu0 0
        %7711 = vmatpush1.bf16.msra.mxu0 0
        %7712 = vmatprep.subr.bf16.mxu0 0
        %7713 = vmatpush1.bf16.msra.mxu0 0
        %7714 = vmatprep.subr.bf16.mxu0 0
        %7715 = vmatpush1.bf16.msra.mxu0 0
        %7716 = vmatprep.subr.bf16.mxu0 0
        %7717 = vmatpush1.bf16.msra.mxu0 0
        %7718 = vmatprep.mubr.bf16.mxu0 0
        %7719 = vmatmul.mubr.bf16.gmra.mrb[0].mxu0 %v7643
        %v7720 = vpop.f32.mrb[0].mxu0
        %v7721 = vadd.f32 0.0, %v7720
        %v7722 = vpop.f32.mrb[0].mxu0
        %v7723 = vadd.f32 0.0, %v7722
        %v7724 = vpop.f32.mrb[0].mxu0
        %v7725 = vpop.f32.mrb[0].mxu0
        %7726 = vdwg.mxu0
        %v7727 = vpack.c.bf16 %v7680, %v7680
        %v7728 = vpack.c.bf16 %v7682, %v7682
        %v7729 = vpack.c.bf16 %v7721, %v7721
        %v7730 = vpack.c.bf16 %v7723, %v7723
        %s7731 = scalar_lea.vmem [#allocation8], 2016
        %v7732 = vld [vmem:[%s7731] sm:$0xff]
        %v7733 = vld [vmem:[%s7731 + $0x8] sm:$0xf]
        %v7734 = vld [vmem:[%s7731 + $0xc] sm:$0xff]
        %v7735 = vld [vmem:[%s7731 + $0x14] sm:$0xf]
        %v7736 = vld [vmem:[%s7731 + $0x18] sm:$0xff]
        %v7737 = vld [vmem:[%s7731 + $0x20] sm:$0xf]
        %v7738 = vld [vmem:[%s7731 + $0x24] sm:$0xff]
        %v7739 = vld [vmem:[%s7731 + $0x2c] sm:$0xf]
        %v7740 = vld [vmem:[%s7731 + $0x30] sm:$0xff]
        %v7741 = vld [vmem:[%s7731 + $0x38] sm:$0xf]
        %v7742 = vld [vmem:[%s7731 + $0x3c] sm:$0xff]
        %v7743 = vld [vmem:[%s7731 + $0x44] sm:$0xf]
        %v7744 = vld [vmem:[%s7731 + $0x48] sm:$0xff]
        %v7745 = vld [vmem:[%s7731 + $0x50] sm:$0xf]
        %v7746 = vld [vmem:[%s7731 + $0x54] sm:$0xff]
        %v7747 = vld [vmem:[%s7731 + $0x5c] sm:$0xf]
        %v7748 = vld [vmem:[%s7731 + $0x60] sm:$0xff]
        %v7749 = vld [vmem:[%s7731 + $0x68] sm:$0xf]
        %v7750 = vld [vmem:[%s7731 + $0x6c] sm:$0xff]
        %v7751 = vld [vmem:[%s7731 + $0x74] sm:$0xf]
        %v7752 = vld [vmem:[%s7731 + $0x78] sm:$0xff]
        %v7753 = vld [vmem:[%s7731 + $0x80] sm:$0xf]
        %v7754 = vld [vmem:[%s7731 + $0x84] sm:$0xff]
        %v7755 = vld [vmem:[%s7731 + $0x8c] sm:$0xf]
        %v7756 = vld [vmem:[%s7731 + $0x90] sm:$0xff]
        %v7757 = vld [vmem:[%s7731 + $0x98] sm:$0xf]
        %v7758 = vld [vmem:[%s7731 + $0x9c] sm:$0xff]
        %v7759 = vld [vmem:[%s7731 + $0xa4] sm:$0xf]
        %v7760 = vld [vmem:[%s7731 + $0xa8] sm:$0xff]
        %v7761 = vld [vmem:[%s7731 + $0xb0] sm:$0xf]
        %v7762 = vld [vmem:[%s7731 + $0xb4] sm:$0xff]
        %v7763 = vld [vmem:[%s7731 + $0xbc] sm:$0xf]
        %v7764 = vld [vmem:[%s7731 + $0xc0] sm:$0xff]
        %v7765 = vld [vmem:[%s7731 + $0xc8] sm:$0xf]
        %v7766 = vld [vmem:[%s7731 + $0xcc] sm:$0xff]
        %v7767 = vld [vmem:[%s7731 + $0xd4] sm:$0xf]
        %v7768 = vld [vmem:[%s7731 + $0xd8] sm:$0xff]
        %v7769 = vld [vmem:[%s7731 + $0xe0] sm:$0xf]
        %v7770 = vld [vmem:[%s7731 + $0xe4] sm:$0xff]
        %v7771 = vld [vmem:[%s7731 + $0xec] sm:$0xf]
        %v7772 = vld [vmem:[%s7731 + $0xf0] sm:$0xff]
        %v7773 = vld [vmem:[%s7731 + $0xf8] sm:$0xf]
        %v7774 = vld [vmem:[%s7731 + $0xfc] sm:$0xff]
        %v7775 = vld [vmem:[%s7731 + $0x104] sm:$0xf]
        %v7776 = vld [vmem:[%s7731 + $0x108] sm:$0xff]
        %v7777 = vld [vmem:[%s7731 + $0x110] sm:$0xf]
        %v7778 = vld [vmem:[%s7731 + $0x114] sm:$0xff]
        %v7779 = vld [vmem:[%s7731 + $0x11c] sm:$0xf]
        %v7780 = vld [vmem:[%s7731 + $0x120] sm:$0xff]
        %v7781 = vld [vmem:[%s7731 + $0x128] sm:$0xf]
        %v7782 = vld [vmem:[%s7731 + $0x12c] sm:$0xff]
        %v7783 = vld [vmem:[%s7731 + $0x134] sm:$0xf]
        %v7784 = vld [vmem:[%s7731 + $0x138] sm:$0xff]
        %v7785 = vld [vmem:[%s7731 + $0x140] sm:$0xf]
        %v7786 = vld [vmem:[%s7731 + $0x144] sm:$0xff]
        %v7787 = vld [vmem:[%s7731 + $0x14c] sm:$0xf]
        %v7788 = vld [vmem:[%s7731 + $0x150] sm:$0xff]
        %v7789 = vld [vmem:[%s7731 + $0x158] sm:$0xf]
        %v7790 = vld [vmem:[%s7731 + $0x15c] sm:$0xff]
        %v7791 = vld [vmem:[%s7731 + $0x164] sm:$0xf]
        %v7792 = vld [vmem:[%s7731 + $0x168] sm:$0xff]
        %v7793 = vld [vmem:[%s7731 + $0x170] sm:$0xf]
        %v7794 = vld [vmem:[%s7731 + $0x174] sm:$0xff]
        %v7795 = vld [vmem:[%s7731 + $0x17c] sm:$0xf]
        %v7796 = vld [vmem:[%s7731 + $0x180] sm:$0xff]
        %v7797 = vld [vmem:[%s7731 + $0x188] sm:$0xf]
        %v7798 = vld [vmem:[%s7731 + $0x18c] sm:$0xff]
        %v7799 = vld [vmem:[%s7731 + $0x194] sm:$0xf]
        %v7800 = vld [vmem:[%s7731 + $0x198] sm:$0xff]
        %v7801 = vld [vmem:[%s7731 + $0x1a0] sm:$0xf]
        %v7802 = vld [vmem:[%s7731 + $0x1a4] sm:$0xff]
        %v7803 = vld [vmem:[%s7731 + $0x1ac] sm:$0xf]
        %v7804 = vld [vmem:[%s7731 + $0x1b0] sm:$0xff]
        %v7805 = vld [vmem:[%s7731 + $0x1b8] sm:$0xf]
        %v7806 = vld [vmem:[%s7731 + $0x1bc] sm:$0xff]
        %v7807 = vld [vmem:[%s7731 + $0x1c4] sm:$0xf]
        %v7808 = vld [vmem:[%s7731 + $0x1c8] sm:$0xff]
        %v7809 = vld [vmem:[%s7731 + $0x1d0] sm:$0xf]
        %v7810 = vld [vmem:[%s7731 + $0x1d4] sm:$0xff]
        %v7811 = vld [vmem:[%s7731 + $0x1dc] sm:$0xf]
        %v7812 = vld [vmem:[%s7731 + $0x1e0] sm:$0xff]
        %v7813 = vld [vmem:[%s7731 + $0x1e8] sm:$0xf]
        %v7814 = vld [vmem:[%s7731 + $0x1ec] sm:$0xff]
        %v7815 = vld [vmem:[%s7731 + $0x1f4] sm:$0xf]
        %v7816 = vld [vmem:[%s7731 + $0x1f8] sm:$0xff]
        %v7817 = vld [vmem:[%s7731 + $0x200] sm:$0xf]
        %v7818 = vld [vmem:[%s7731 + $0x204] sm:$0xff]
        %v7819 = vld [vmem:[%s7731 + $0x20c] sm:$0xf]
        %v7820 = vld [vmem:[%s7731 + $0x210] sm:$0xff]
        %v7821 = vld [vmem:[%s7731 + $0x218] sm:$0xf]
        %v7822 = vld [vmem:[%s7731 + $0x21c] sm:$0xff]
        %v7823 = vld [vmem:[%s7731 + $0x224] sm:$0xf]
        %v7824 = vld [vmem:[%s7731 + $0x228] sm:$0xff]
        %v7825 = vld [vmem:[%s7731 + $0x230] sm:$0xf]
        %v7826 = vld [vmem:[%s7731 + $0x234] sm:$0xff]
        %v7827 = vld [vmem:[%s7731 + $0x23c] sm:$0xf]
        %v7828 = vld [vmem:[%s7731 + $0x240] sm:$0xff]
        %v7829 = vld [vmem:[%s7731 + $0x248] sm:$0xf]
        %v7830 = vld [vmem:[%s7731 + $0x24c] sm:$0xff]
        %v7831 = vld [vmem:[%s7731 + $0x254] sm:$0xf]
        %v7832 = vld [vmem:[%s7731 + $0x258] sm:$0xff]
        %v7833 = vld [vmem:[%s7731 + $0x260] sm:$0xf]
        %v7834 = vld [vmem:[%s7731 + $0x264] sm:$0xff]
        %v7835 = vld [vmem:[%s7731 + $0x26c] sm:$0xf]
        %v7836 = vld [vmem:[%s7731 + $0x270] sm:$0xff]
        %v7837 = vld [vmem:[%s7731 + $0x278] sm:$0xf]
        %v7838 = vld [vmem:[%s7731 + $0x27c] sm:$0xff]
        %v7839 = vld [vmem:[%s7731 + $0x284] sm:$0xf]
        %v7840 = vld [vmem:[%s7731 + $0x288] sm:$0xff]
        %v7841 = vld [vmem:[%s7731 + $0x290] sm:$0xf]
        %v7842 = vld [vmem:[%s7731 + $0x294] sm:$0xff]
        %v7843 = vld [vmem:[%s7731 + $0x29c] sm:$0xf]
        %v7956 = vunpack.c.l.b16 %v7732
        %v7957 = vunpack.c.h.b16 %v7732
        %v7958 = vunpack.c.l.b16 %v7733
        %v7959 = vunpack.c.l.b16 %v7734
        %v7960 = vunpack.c.h.b16 %v7734
        %v7961 = vunpack.c.l.b16 %v7735
        %v7962 = vunpack.c.l.b16 %v7736
        %v7963 = vunpack.c.h.b16 %v7736
        %v7964 = vunpack.c.l.b16 %v7737
        %v7965 = vunpack.c.l.b16 %v7738
        %v7966 = vunpack.c.h.b16 %v7738
        %v7967 = vunpack.c.l.b16 %v7739
        %v7968 = vunpack.c.l.b16 %v7740
        %v7969 = vunpack.c.h.b16 %v7740
        %v7970 = vunpack.c.l.b16 %v7741
        %v7971 = vunpack.c.l.b16 %v7742
        %v7972 = vunpack.c.h.b16 %v7742
        %v7973 = vunpack.c.l.b16 %v7743
        %v7974 = vunpack.c.l.b16 %v7744
        %v7975 = vunpack.c.h.b16 %v7744
        %v7976 = vunpack.c.l.b16 %v7745
        %v7977 = vunpack.c.l.b16 %v7746
        %v7978 = vunpack.c.h.b16 %v7746
        %v7979 = vunpack.c.l.b16 %v7747
        %v7980 = vunpack.c.l.b16 %v7748
        %v7981 = vunpack.c.h.b16 %v7748
        %v7982 = vunpack.c.l.b16 %v7749
        %v7983 = vunpack.c.l.b16 %v7750
        %v7984 = vunpack.c.h.b16 %v7750
        %v7985 = vunpack.c.l.b16 %v7751
        %v7986 = vunpack.c.l.b16 %v7752
        %v7987 = vunpack.c.h.b16 %v7752
        %v7988 = vunpack.c.l.b16 %v7753
        %v7989 = vunpack.c.l.b16 %v7754
        %v7990 = vunpack.c.h.b16 %v7754
        %v7991 = vunpack.c.l.b16 %v7755
        %v7992 = vunpack.c.l.b16 %v7756
        %v7993 = vunpack.c.h.b16 %v7756
        %v7994 = vunpack.c.l.b16 %v7757
        %v7995 = vunpack.c.l.b16 %v7758
        %v7996 = vunpack.c.h.b16 %v7758
        %v7997 = vunpack.c.l.b16 %v7759
        %v7998 = vunpack.c.l.b16 %v7760
        %v7999 = vunpack.c.h.b16 %v7760
        %v8000 = vunpack.c.l.b16 %v7761
        %v8001 = vunpack.c.l.b16 %v7762
        %v8002 = vunpack.c.h.b16 %v7762
        %v8003 = vunpack.c.l.b16 %v7763
        %v8004 = vunpack.c.l.b16 %v7764
        %v8005 = vunpack.c.h.b16 %v7764
        %v8006 = vunpack.c.l.b16 %v7765
        %v8007 = vunpack.c.l.b16 %v7766
        %v8008 = vunpack.c.h.b16 %v7766
        %v8009 = vunpack.c.l.b16 %v7767
        %v8010 = vunpack.c.l.b16 %v7768
        %v8011 = vunpack.c.h.b16 %v7768
        %v8012 = vunpack.c.l.b16 %v7769
        %v8013 = vunpack.c.l.b16 %v7770
        %v8014 = vunpack.c.h.b16 %v7770
        %v8015 = vunpack.c.l.b16 %v7771
        %v8016 = vunpack.c.l.b16 %v7772
        %v8017 = vunpack.c.h.b16 %v7772
        %v8018 = vunpack.c.l.b16 %v7773
        %v8019 = vunpack.c.l.b16 %v7774
        %v8020 = vunpack.c.h.b16 %v7774
        %v8021 = vunpack.c.l.b16 %v7775
        %v8022 = vunpack.c.l.b16 %v7776
        %v8023 = vunpack.c.h.b16 %v7776
        %v8024 = vunpack.c.l.b16 %v7777
        %v8025 = vunpack.c.l.b16 %v7778
        %v8026 = vunpack.c.h.b16 %v7778
        %v8027 = vunpack.c.l.b16 %v7779
        %v8028 = vunpack.c.l.b16 %v7780
        %v8029 = vunpack.c.h.b16 %v7780
        %v8030 = vunpack.c.l.b16 %v7781
        %v8031 = vunpack.c.l.b16 %v7782
        %v8032 = vunpack.c.h.b16 %v7782
        %v8033 = vunpack.c.l.b16 %v7783
        %v8034 = vunpack.c.l.b16 %v7784
        %v8035 = vunpack.c.h.b16 %v7784
        %v8036 = vunpack.c.l.b16 %v7785
        %v8037 = vunpack.c.l.b16 %v7786
        %v8038 = vunpack.c.h.b16 %v7786
        %v8039 = vunpack.c.l.b16 %v7787
        %v8040 = vunpack.c.l.b16 %v7788
        %v8041 = vunpack.c.h.b16 %v7788
        %v8042 = vunpack.c.l.b16 %v7789
        %v8043 = vunpack.c.l.b16 %v7790
        %v8044 = vunpack.c.h.b16 %v7790
        %v8045 = vunpack.c.l.b16 %v7791
        %v8046 = vunpack.c.l.b16 %v7792
        %v8047 = vunpack.c.h.b16 %v7792
        %v8048 = vunpack.c.l.b16 %v7793
        %v8049 = vunpack.c.l.b16 %v7794
        %v8050 = vunpack.c.h.b16 %v7794
        %v8051 = vunpack.c.l.b16 %v7795
        %v8052 = vunpack.c.l.b16 %v7796
        %v8053 = vunpack.c.h.b16 %v7796
        %v8054 = vunpack.c.l.b16 %v7797
        %v8055 = vunpack.c.l.b16 %v7798
        %v8056 = vunpack.c.h.b16 %v7798
        %v8057 = vunpack.c.l.b16 %v7799
        %v8058 = vunpack.c.l.b16 %v7800
        %v8059 = vunpack.c.h.b16 %v7800
        %v8060 = vunpack.c.l.b16 %v7801
        %v8061 = vunpack.c.l.b16 %v7802
        %v8062 = vunpack.c.h.b16 %v7802
        %v8063 = vunpack.c.l.b16 %v7803
        %v8064 = vunpack.c.l.b16 %v7804
        %v8065 = vunpack.c.h.b16 %v7804
        %v8066 = vunpack.c.l.b16 %v7805
        %v8067 = vunpack.c.l.b16 %v7806
        %v8068 = vunpack.c.h.b16 %v7806
        %v8069 = vunpack.c.l.b16 %v7807
        %v8070 = vunpack.c.l.b16 %v7808
        %v8071 = vunpack.c.h.b16 %v7808
        %v8072 = vunpack.c.l.b16 %v7809
        %v8073 = vunpack.c.l.b16 %v7810
        %v8074 = vunpack.c.h.b16 %v7810
        %v8075 = vunpack.c.l.b16 %v7811
        %v8076 = vunpack.c.l.b16 %v7812
        %v8077 = vunpack.c.h.b16 %v7812
        %v8078 = vunpack.c.l.b16 %v7813
        %v8079 = vunpack.c.l.b16 %v7814
        %v8080 = vunpack.c.h.b16 %v7814
        %v8081 = vunpack.c.l.b16 %v7815
        %v8082 = vunpack.c.l.b16 %v7816
        %v8083 = vunpack.c.h.b16 %v7816
        %v8084 = vunpack.c.l.b16 %v7817
        %v8085 = vunpack.c.l.b16 %v7818
        %v8086 = vunpack.c.h.b16 %v7818
        %v8087 = vunpack.c.l.b16 %v7819
        %v8088 = vunpack.c.l.b16 %v7820
        %v8089 = vunpack.c.h.b16 %v7820
        %v8090 = vunpack.c.l.b16 %v7821
        %v8091 = vunpack.c.l.b16 %v7822
        %v8092 = vunpack.c.h.b16 %v7822
        %v8093 = vunpack.c.l.b16 %v7823
        %v8094 = vunpack.c.l.b16 %v7824
        %v8095 = vunpack.c.h.b16 %v7824
        %v8096 = vunpack.c.l.b16 %v7825
        %v8097 = vunpack.c.l.b16 %v7826
        %v8098 = vunpack.c.h.b16 %v7826
        %v8099 = vunpack.c.l.b16 %v7827
        %v8100 = vunpack.c.l.b16 %v7828
        %v8101 = vunpack.c.h.b16 %v7828
        %v8102 = vunpack.c.l.b16 %v7829
        %v8103 = vunpack.c.l.b16 %v7830
        %v8104 = vunpack.c.h.b16 %v7830
        %v8105 = vunpack.c.l.b16 %v7831
        %v8106 = vunpack.c.l.b16 %v7832
        %v8107 = vunpack.c.h.b16 %v7832
        %v8108 = vunpack.c.l.b16 %v7833
        %v8109 = vunpack.c.l.b16 %v7834
        %v8110 = vunpack.c.h.b16 %v7834
        %v8111 = vunpack.c.l.b16 %v7835
        %v8112 = vunpack.c.l.b16 %v7836
        %v8113 = vunpack.c.h.b16 %v7836
        %v8114 = vunpack.c.l.b16 %v7837
        %v8115 = vunpack.c.l.b16 %v7838
        %v8116 = vunpack.c.h.b16 %v7838
        %v8117 = vunpack.c.l.b16 %v7839
        %v8118 = vunpack.c.l.b16 %v7840
        %v8119 = vunpack.c.h.b16 %v7840
        %v8120 = vunpack.c.l.b16 %v7841
        %v8121 = vunpack.c.l.b16 %v7842
        %v8122 = vunpack.c.h.b16 %v7842
        %v8123 = vunpack.c.l.b16 %v7843
        %v8124 = vpack.c.b16 %v7959, %v7956
        %v8125 = vpack.c.b16 %v7960, %v7957
        %v8126 = vpack.c.b16 %v7961, %v7958
        %v8127 = vpack.c.b16 %v7965, %v7962
        %v8128 = vpack.c.b16 %v7966, %v7963
        %v8129 = vpack.c.b16 %v7967, %v7964
        %v8130 = vpack.c.b16 %v7971, %v7968
        %v8131 = vpack.c.b16 %v7972, %v7969
        %v8132 = vpack.c.b16 %v7973, %v7970
        %v8133 = vpack.c.b16 %v7977, %v7974
        %v8134 = vpack.c.b16 %v7978, %v7975
        %v8135 = vpack.c.b16 %v7979, %v7976
        %v8136 = vpack.c.b16 %v7983, %v7980
        %v8137 = vpack.c.b16 %v7984, %v7981
        %v8138 = vpack.c.b16 %v7985, %v7982
        %v8139 = vpack.c.b16 %v7989, %v7986
        %v8140 = vpack.c.b16 %v7990, %v7987
        %v8141 = vpack.c.b16 %v7991, %v7988
        %v8142 = vpack.c.b16 %v7995, %v7992
        %v8143 = vpack.c.b16 %v7996, %v7993
        %v8144 = vpack.c.b16 %v7997, %v7994
        %v8145 = vpack.c.b16 %v8001, %v7998
        %v8146 = vpack.c.b16 %v8002, %v7999
        %v8147 = vpack.c.b16 %v8003, %v8000
        %v8148 = vpack.c.b16 %v8007, %v8004
        %v8149 = vpack.c.b16 %v8008, %v8005
        %v8150 = vpack.c.b16 %v8009, %v8006
        %v8151 = vpack.c.b16 %v8013, %v8010
        %v8152 = vpack.c.b16 %v8014, %v8011
        %v8153 = vpack.c.b16 %v8015, %v8012
        %v8154 = vpack.c.b16 %v8019, %v8016
        %v8155 = vpack.c.b16 %v8020, %v8017
        %v8156 = vpack.c.b16 %v8021, %v8018
        %v8157 = vpack.c.b16 %v8025, %v8022
        %v8158 = vpack.c.b16 %v8026, %v8023
        %v8159 = vpack.c.b16 %v8027, %v8024
        %v8160 = vpack.c.b16 %v8031, %v8028
        %v8161 = vpack.c.b16 %v8032, %v8029
        %v8162 = vpack.c.b16 %v8033, %v8030
        %v8163 = vpack.c.b16 %v8037, %v8034
        %v8164 = vpack.c.b16 %v8038, %v8035
        %v8165 = vpack.c.b16 %v8039, %v8036
        %v8166 = vpack.c.b16 %v8043, %v8040
        %v8167 = vpack.c.b16 %v8044, %v8041
        %v8168 = vpack.c.b16 %v8045, %v8042
        %v8169 = vpack.c.b16 %v8049, %v8046
        %v8170 = vpack.c.b16 %v8050, %v8047
        %v8171 = vpack.c.b16 %v8051, %v8048
        %v8172 = vpack.c.b16 %v8055, %v8052
        %v8173 = vpack.c.b16 %v8056, %v8053
        %v8174 = vpack.c.b16 %v8057, %v8054
        %v8175 = vpack.c.b16 %v8061, %v8058
        %v8176 = vpack.c.b16 %v8062, %v8059
        %v8177 = vpack.c.b16 %v8063, %v8060
        %v8178 = vpack.c.b16 %v8067, %v8064
        %v8179 = vpack.c.b16 %v8068, %v8065
        %v8180 = vpack.c.b16 %v8069, %v8066
        %v8181 = vpack.c.b16 %v8073, %v8070
        %v8182 = vpack.c.b16 %v8074, %v8071
        %v8183 = vpack.c.b16 %v8075, %v8072
        %v8184 = vpack.c.b16 %v8079, %v8076
        %v8185 = vpack.c.b16 %v8080, %v8077
        %v8186 = vpack.c.b16 %v8081, %v8078
        %v8187 = vpack.c.b16 %v8085, %v8082
        %v8188 = vpack.c.b16 %v8086, %v8083
        %v8189 = vpack.c.b16 %v8087, %v8084
        %v8190 = vpack.c.b16 %v8091, %v8088
        %v8191 = vpack.c.b16 %v8092, %v8089
        %v8192 = vpack.c.b16 %v8093, %v8090
        %v8193 = vpack.c.b16 %v8097, %v8094
        %v8194 = vpack.c.b16 %v8098, %v8095
        %v8195 = vpack.c.b16 %v8099, %v8096
        %v8196 = vpack.c.b16 %v8103, %v8100
        %v8197 = vpack.c.b16 %v8104, %v8101
        %v8198 = vpack.c.b16 %v8105, %v8102
        %v8199 = vpack.c.b16 %v8109, %v8106
        %v8200 = vpack.c.b16 %v8110, %v8107
        %v8201 = vpack.c.b16 %v8111, %v8108
        %v8202 = vpack.c.b16 %v8115, %v8112
        %v8203 = vpack.c.b16 %v8116, %v8113
        %v8204 = vpack.c.b16 %v8117, %v8114
        %v8205 = vpack.c.b16 %v8121, %v8118
        %v8206 = vpack.c.b16 %v8122, %v8119
        %v8207 = vpack.c.b16 %v8123, %v8120
        %v8293 = vsel %vm2372, %v7730, 0
        %8295 = vmatprep.subr.bf16.mxu0 %v8125
        %8296 = vmatpush1.bf16.msra.mxu0 %v8124
        %8297 = vmatprep.subr.bf16.mxu0 %v8128
        %8298 = vmatpush1.bf16.msra.mxu0 %v8127
        %8299 = vmatprep.subr.bf16.mxu0 %v8131
        %8300 = vmatpush1.bf16.msra.mxu0 %v8130
        %8301 = vmatprep.subr.bf16.mxu0 %v8134
        %8302 = vmatpush1.bf16.msra.mxu0 %v8133
        %8303 = vmatprep.subr.bf16.mxu0 %v8137
        %8304 = vmatpush1.bf16.msra.mxu0 %v8136
        %8305 = vmatprep.subr.bf16.mxu0 %v8140
        %8306 = vmatpush1.bf16.msra.mxu0 %v8139
        %8307 = vmatprep.subr.bf16.mxu0 %v8143
        %8308 = vmatpush1.bf16.msra.mxu0 %v8142
        %8309 = vmatprep.subr.bf16.mxu0 %v8146
        %8310 = vmatpush1.bf16.msra.mxu0 %v8145
        %8311 = vmatprep.subr.bf16.mxu0 %v8149
        %8312 = vmatpush1.bf16.msra.mxu0 %v8148
        %8313 = vmatprep.subr.bf16.mxu0 %v8152
        %8314 = vmatpush1.bf16.msra.mxu0 %v8151
        %8315 = vmatprep.subr.bf16.mxu0 %v8155
        %8316 = vmatpush1.bf16.msra.mxu0 %v8154
        %8317 = vmatprep.subr.bf16.mxu0 %v8158
        %8318 = vmatpush1.bf16.msra.mxu0 %v8157
        %8319 = vmatprep.subr.bf16.mxu0 %v8161
        %8320 = vmatpush1.bf16.msra.mxu0 %v8160
        %8321 = vmatprep.subr.bf16.mxu0 %v8164
        %8322 = vmatpush1.bf16.msra.mxu0 %v8163
        %8323 = vmatprep.subr.bf16.mxu0 %v8167
        %8324 = vmatpush1.bf16.msra.mxu0 %v8166
        %8325 = vmatprep.subr.bf16.mxu0 %v8170
        %8326 = vmatpush1.bf16.msra.mxu0 %v8169
        %8327 = vmatprep.mubr.bf16.mxu0 %v7728
        %8328 = vmatmul.mubr.bf16.gmra.mrb[0].mxu0 %v7727
        %v8329 = vpop.f32.mrb[0].mxu0
        %v8330 = vadd.f32 0.0, %v8329
        %v8331 = vpop.f32.mrb[0].mxu0
        %v8332 = vadd.f32 0.0, %v8331
        %v8333 = vpop.f32.mrb[0].mxu0
        %v8334 = vpop.f32.mrb[0].mxu0
        %8335 = vdwg.mxu0
        %8336 = vmatprep.subr.bf16.mxu0 %v8173
        %8337 = vmatpush1.bf16.msra.mxu0 %v8172
        %8338 = vmatprep.subr.bf16.mxu0 %v8176
        %8339 = vmatpush1.bf16.msra.mxu0 %v8175
        %8340 = vmatprep.subr.bf16.mxu0 %v8179
        %8341 = vmatpush1.bf16.msra.mxu0 %v8178
        %8342 = vmatprep.subr.bf16.mxu0 %v8182
        %8343 = vmatpush1.bf16.msra.mxu0 %v8181
        %8344 = vmatprep.subr.bf16.mxu0 %v8185
        %8345 = vmatpush1.bf16.msra.mxu0 %v8184
        %8346 = vmatprep.subr.bf16.mxu0 %v8188
        %8347 = vmatpush1.bf16.msra.mxu0 %v8187
        %8348 = vmatprep.subr.bf16.mxu0 %v8191
        %8349 = vmatpush1.bf16.msra.mxu0 %v8190
        %8350 = vmatprep.subr.bf16.mxu0 %v8194
        %8351 = vmatpush1.bf16.msra.mxu0 %v8193
        %8352 = vmatprep.subr.bf16.mxu0 %v8197
        %8353 = vmatpush1.bf16.msra.mxu0 %v8196
        %8354 = vmatprep.subr.bf16.mxu0 %v8200
        %8355 = vmatpush1.bf16.msra.mxu0 %v8199
        %8356 = vmatprep.subr.bf16.mxu0 %v8203
        %8357 = vmatpush1.bf16.msra.mxu0 %v8202
        %8358 = vmatprep.subr.bf16.mxu0 %v8206
        %8359 = vmatpush1.bf16.msra.mxu0 %v8205
        %8360 = vmatprep.subr.bf16.mxu0 0
        %8361 = vmatpush1.bf16.msra.mxu0 0
        %8362 = vmatprep.subr.bf16.mxu0 0
        %8363 = vmatpush1.bf16.msra.mxu0 0
        %8364 = vmatprep.subr.bf16.mxu0 0
        %8365 = vmatpush1.bf16.msra.mxu0 0
        %8366 = vmatprep.subr.bf16.mxu0 0
        %8367 = vmatpush1.bf16.msra.mxu0 0
        %8368 = vmatprep.mubr.bf16.mxu0 %v8293
        %8369 = vmatmul.mubr.bf16.gmra.mrb[0].mxu0 %v7729
        %v8370 = vpop.f32.mrb[0].mxu0
        %v8371 = vadd.f32 %v8330, %v8370
        %v8372 = vpop.f32.mrb[0].mxu0
        %v8373 = vadd.f32 %v8332, %v8372
        %v8374 = vpop.f32.mrb[0].mxu0
        %v8375 = vpop.f32.mrb[0].mxu0
        %8376 = vdwg.mxu0
        %8377 = vmatprep.subr.bf16.mxu0 0
        %8378 = vmatpush1.bf16.msra.mxu0 %v8126
        %8379 = vmatprep.subr.bf16.mxu0 0
        %8380 = vmatpush1.bf16.msra.mxu0 %v8129
        %8381 = vmatprep.subr.bf16.mxu0 0
        %8382 = vmatpush1.bf16.msra.mxu0 %v8132
        %8383 = vmatprep.subr.bf16.mxu0 0
        %8384 = vmatpush1.bf16.msra.mxu0 %v8135
        %8385 = vmatprep.subr.bf16.mxu0 0
        %8386 = vmatpush1.bf16.msra.mxu0 %v8138
        %8387 = vmatprep.subr.bf16.mxu0 0
        %8388 = vmatpush1.bf16.msra.mxu0 %v8141
        %8389 = vmatprep.subr.bf16.mxu0 0
        %8390 = vmatpush1.bf16.msra.mxu0 %v8144
        %8391 = vmatprep.subr.bf16.mxu0 0
        %8392 = vmatpush1.bf16.msra.mxu0 %v8147
        %8393 = vmatprep.subr.bf16.mxu0 0
        %8394 = vmatpush1.bf16.msra.mxu0 %v8150
        %8395 = vmatprep.subr.bf16.mxu0 0
        %8396 = vmatpush1.bf16.msra.mxu0 %v8153
        %8397 = vmatprep.subr.bf16.mxu0 0
        %8398 = vmatpush1.bf16.msra.mxu0 %v8156
        %8399 = vmatprep.subr.bf16.mxu0 0
        %8400 = vmatpush1.bf16.msra.mxu0 %v8159
        %8401 = vmatprep.subr.bf16.mxu0 0
        %8402 = vmatpush1.bf16.msra.mxu0 %v8162
        %8403 = vmatprep.subr.bf16.mxu0 0
        %8404 = vmatpush1.bf16.msra.mxu0 %v8165
        %8405 = vmatprep.subr.bf16.mxu0 0
        %8406 = vmatpush1.bf16.msra.mxu0 %v8168
        %8407 = vmatprep.subr.bf16.mxu0 0
        %8408 = vmatpush1.bf16.msra.mxu0 %v8171
        %8409 = vmatprep.mubr.bf16.mxu0 %v7728
        %8410 = vmatmul.mubr.bf16.gmra.mrb[0].mxu0 %v7727
        %v8411 = vpop.f32.mrb[0].mxu0
        %v8412 = vadd.f32 0.0, %v8411
        %v8413 = vpop.f32.mrb[0].mxu0
        %v8414 = vpop.f32.mrb[0].mxu0
        %v8415 = vpop.f32.mrb[0].mxu0
        %8416 = vdwg.mxu0
        %8417 = vmatprep.subr.bf16.mxu0 0
        %8418 = vmatpush1.bf16.msra.mxu0 %v8174
        %8419 = vmatprep.subr.bf16.mxu0 0
        %8420 = vmatpush1.bf16.msra.mxu0 %v8177
        %8421 = vmatprep.subr.bf16.mxu0 0
        %8422 = vmatpush1.bf16.msra.mxu0 %v8180
        %8423 = vmatprep.subr.bf16.mxu0 0
        %8424 = vmatpush1.bf16.msra.mxu0 %v8183
        %8425 = vmatprep.subr.bf16.mxu0 0
        %8426 = vmatpush1.bf16.msra.mxu0 %v8186
        %8427 = vmatprep.subr.bf16.mxu0 0
        %8428 = vmatpush1.bf16.msra.mxu0 %v8189
        %8429 = vmatprep.subr.bf16.mxu0 0
        %8430 = vmatpush1.bf16.msra.mxu0 %v8192
        %8431 = vmatprep.subr.bf16.mxu0 0
        %8432 = vmatpush1.bf16.msra.mxu0 %v8195
        %8433 = vmatprep.subr.bf16.mxu0 0
        %8434 = vmatpush1.bf16.msra.mxu0 %v8198
        %8435 = vmatprep.subr.bf16.mxu0 0
        %8436 = vmatpush1.bf16.msra.mxu0 %v8201
        %8437 = vmatprep.subr.bf16.mxu0 0
        %8438 = vmatpush1.bf16.msra.mxu0 %v8204
        %8439 = vmatprep.subr.bf16.mxu0 0
        %8440 = vmatpush1.bf16.msra.mxu0 %v8207
        %8441 = vmatprep.subr.bf16.mxu0 0
        %8442 = vmatpush1.bf16.msra.mxu0 0
        %8443 = vmatprep.subr.bf16.mxu0 0
        %8444 = vmatpush1.bf16.msra.mxu0 0
        %8445 = vmatprep.subr.bf16.mxu0 0
        %8446 = vmatpush1.bf16.msra.mxu0 0
        %8447 = vmatprep.subr.bf16.mxu0 0
        %8448 = vmatpush1.bf16.msra.mxu0 0
        %8449 = vmatprep.mubr.bf16.mxu0 %v8293
        %8450 = vmatmul.mubr.bf16.gmra.mrb[0].mxu0 %v7729
        %v8451 = vpop.f32.mrb[0].mxu0
        %v8452 = vadd.f32 %v8412, %v8451
        %v8453 = vpop.f32.mrb[0].mxu0
        %v8454 = vpop.f32.mrb[0].mxu0
        %v8455 = vpop.f32.mrb[0].mxu0
        %8456 = vdwg.mxu0
        %v8457 = vadd.f32 %v7637, %v8371
        %v8458 = vadd.f32 %v7638, %v8373
        %v8459 = vadd.f32 %v7639, %v8452
        %v8460 = vld [vmem:[#allocation10] sm:$0x7]
        %v8462 = vlaneseq
        %v8463 = vshrl.u32 %v8462, 7
        %v8464 = vsub.s32 0, %v8463
        %v8465 = vrot.slane %v8460, %v8464
        %v8466 = vlaneseq
        %v8467 = vshrl.u32 %v8466, 7
        %v8468 = vsub.s32 1, %v8467
        %v8469 = vrot.slane %v8460, %v8468
        %v8470 = vlaneseq
        %v8471 = vshrl.u32 %v8470, 7
        %v8472 = vsub.s32 2, %v8471
        %v8473 = vrot.slane %v8460, %v8472
        %v8477 = vadd.f32 %v8457, %v8465
        %v8478 = vadd.f32 %v8458, %v8469
        %v8479 = vadd.f32 %v8459, %v8473
        %v8480 = vmax.f32 %v8477, 0.0
        %v8481 = vmax.f32 %v8478, 0.0
        %v8482 = vmax.f32 %v8479, 0.0
        %v8483 = vpack.c.bf16 %v8480, %v8480
        %v8484 = vpack.c.bf16 %v8481, %v8481
        %v8485 = vpack.c.bf16 %v8482, %v8482
        %v8486 = vld [vmem:[#allocation11] sm:$0x1]
        %v8487 = vld [vmem:[%s10] sm:$0xf]
        %v8488 = vld [vmem:[%s10 + $0x4] sm:$0xf]
        %v8489 = vld [vmem:[%s10 + $0x8] sm:$0xf]
        %v8490 = vld [vmem:[%s10 + $0xc] sm:$0xf]
        %v8491 = vld [vmem:[%s10 + $0x10] sm:$0xf]
        %v8492 = vld [vmem:[%s10 + $0x14] sm:$0xf]
        %v8493 = vld [vmem:[%s10 + $0x18] sm:$0xf]
        %v8494 = vld [vmem:[%s10 + $0x1c] sm:$0xf]
        %v8495 = vld [vmem:[%s10 + $0x20] sm:$0xf]
        %v8496 = vld [vmem:[%s10 + $0x24] sm:$0xf]
        %v8497 = vld [vmem:[%s10 + $0x28] sm:$0xf]
        %v8498 = vld [vmem:[%s10 + $0x2c] sm:$0xf]
        %v8499 = vld [vmem:[%s10 + $0x30] sm:$0xf]
        %v8500 = vld [vmem:[%s10 + $0x34] sm:$0xf]
        %v8501 = vld [vmem:[%s10 + $0x38] sm:$0xf]
        %v8502 = vld [vmem:[%s10 + $0x3c] sm:$0xf]
        %v8503 = vld [vmem:[%s10 + $0x40] sm:$0xf]
        %v8504 = vld [vmem:[%s10 + $0x44] sm:$0xf]
        %v8505 = vld [vmem:[%s10 + $0x48] sm:$0xf]
        %v8506 = vld [vmem:[%s10 + $0x4c] sm:$0xf]
        %v8507 = vld [vmem:[%s10 + $0x50] sm:$0xf]
        %v8508 = vld [vmem:[%s10 + $0x54] sm:$0xf]
        %v8509 = vld [vmem:[%s10 + $0x58] sm:$0xf]
        %v8510 = vld [vmem:[%s10 + $0x5c] sm:$0xf]
        %v8511 = vld [vmem:[%s10 + $0x60] sm:$0xf]
        %v8512 = vld [vmem:[%s10 + $0x64] sm:$0xf]
        %v8513 = vld [vmem:[%s10 + $0x68] sm:$0xf]
        %v8514 = vld [vmem:[%s10 + $0x6c] sm:$0xf]
        %v8515 = vld [vmem:[%s10 + $0x70] sm:$0xf]
        %v8516 = vld [vmem:[%s10 + $0x74] sm:$0xf]
        %v8517 = vld [vmem:[%s10 + $0x78] sm:$0xf]
        %v8518 = vld [vmem:[%s10 + $0x7c] sm:$0xf]
        %v8519 = vld [vmem:[%s10 + $0x80] sm:$0xf]
        %v8520 = vld [vmem:[%s10 + $0x84] sm:$0xf]
        %v8521 = vld [vmem:[%s10 + $0x88] sm:$0xf]
        %v8522 = vld [vmem:[%s10 + $0x8c] sm:$0xf]
        %v8523 = vld [vmem:[%s10 + $0x90] sm:$0xf]
        %v8524 = vld [vmem:[%s10 + $0x94] sm:$0xf]
        %v8525 = vld [vmem:[%s10 + $0x98] sm:$0xf]
        %v8526 = vld [vmem:[%s10 + $0x9c] sm:$0xf]
        %v8527 = vld [vmem:[%s10 + $0xa0] sm:$0xf]
        %v8528 = vld [vmem:[%s10 + $0xa4] sm:$0xf]
        %v8529 = vld [vmem:[%s10 + $0xa8] sm:$0xf]
        %v8530 = vld [vmem:[%s10 + $0xac] sm:$0xf]
        %v8531 = vld [vmem:[%s10 + $0xb0] sm:$0xf]
        %v8532 = vld [vmem:[%s10 + $0xb4] sm:$0xf]
        %v8533 = vld [vmem:[%s10 + $0xb8] sm:$0xf]
        %v8534 = vld [vmem:[%s10 + $0xbc] sm:$0xf]
        %v8583 = vunpack.c.l.b16 %v8487
        %v8584 = vunpack.c.l.b16 %v8488
        %v8585 = vunpack.c.l.b16 %v8489
        %v8586 = vunpack.c.l.b16 %v8490
        %v8587 = vunpack.c.l.b16 %v8491
        %v8588 = vunpack.c.l.b16 %v8492
        %v8589 = vunpack.c.l.b16 %v8493
        %v8590 = vunpack.c.l.b16 %v8494
        %v8591 = vunpack.c.l.b16 %v8495
        %v8592 = vunpack.c.l.b16 %v8496
        %v8593 = vunpack.c.l.b16 %v8497
        %v8594 = vunpack.c.l.b16 %v8498
        %v8595 = vunpack.c.l.b16 %v8499
        %v8596 = vunpack.c.l.b16 %v8500
        %v8597 = vunpack.c.l.b16 %v8501
        %v8598 = vunpack.c.l.b16 %v8502
        %v8599 = vunpack.c.l.b16 %v8503
        %v8600 = vunpack.c.l.b16 %v8504
        %v8601 = vunpack.c.l.b16 %v8505
        %v8602 = vunpack.c.l.b16 %v8506
        %v8603 = vunpack.c.l.b16 %v8507
        %v8604 = vunpack.c.l.b16 %v8508
        %v8605 = vunpack.c.l.b16 %v8509
        %v8606 = vunpack.c.l.b16 %v8510
        %v8607 = vunpack.c.l.b16 %v8511
        %v8608 = vunpack.c.l.b16 %v8512
        %v8609 = vunpack.c.l.b16 %v8513
        %v8610 = vunpack.c.l.b16 %v8514
        %v8611 = vunpack.c.l.b16 %v8515
        %v8612 = vunpack.c.l.b16 %v8516
        %v8613 = vunpack.c.l.b16 %v8517
        %v8614 = vunpack.c.l.b16 %v8518
        %v8615 = vunpack.c.l.b16 %v8519
        %v8616 = vunpack.c.l.b16 %v8520
        %v8617 = vunpack.c.l.b16 %v8521
        %v8618 = vunpack.c.l.b16 %v8522
        %v8619 = vunpack.c.l.b16 %v8523
        %v8620 = vunpack.c.l.b16 %v8524
        %v8621 = vunpack.c.l.b16 %v8525
        %v8622 = vunpack.c.l.b16 %v8526
        %v8623 = vunpack.c.l.b16 %v8527
        %v8624 = vunpack.c.l.b16 %v8528
        %v8625 = vunpack.c.l.b16 %v8529
        %v8626 = vunpack.c.l.b16 %v8530
        %v8627 = vunpack.c.l.b16 %v8531
        %v8628 = vunpack.c.l.b16 %v8532
        %v8629 = vunpack.c.l.b16 %v8533
        %v8630 = vunpack.c.l.b16 %v8534
        %v8631 = vpack.c.b16 %v8584, %v8583
        %v8632 = vpack.c.b16 %v8586, %v8585
        %v8633 = vpack.c.b16 %v8588, %v8587
        %v8634 = vpack.c.b16 %v8590, %v8589
        %v8635 = vpack.c.b16 %v8592, %v8591
        %v8636 = vpack.c.b16 %v8594, %v8593
        %v8637 = vpack.c.b16 %v8596, %v8595
        %v8638 = vpack.c.b16 %v8598, %v8597
        %v8639 = vpack.c.b16 %v8600, %v8599
        %v8640 = vpack.c.b16 %v8602, %v8601
        %v8641 = vpack.c.b16 %v8604, %v8603
        %v8642 = vpack.c.b16 %v8606, %v8605
        %v8643 = vpack.c.b16 %v8608, %v8607
        %v8644 = vpack.c.b16 %v8610, %v8609
        %v8645 = vpack.c.b16 %v8612, %v8611
        %v8646 = vpack.c.b16 %v8614, %v8613
        %v8647 = vpack.c.b16 %v8616, %v8615
        %v8648 = vpack.c.b16 %v8618, %v8617
        %v8649 = vpack.c.b16 %v8620, %v8619
        %v8650 = vpack.c.b16 %v8622, %v8621
        %v8651 = vpack.c.b16 %v8624, %v8623
        %v8652 = vpack.c.b16 %v8626, %v8625
        %v8653 = vpack.c.b16 %v8628, %v8627
        %v8654 = vpack.c.b16 %v8630, %v8629
        %8679 = vmatprep.subr.bf16.mxu0 0
        %8680 = vmatpush1.bf16.msra.mxu0 %v8631
        %8681 = vmatprep.subr.bf16.mxu0 0
        %8682 = vmatpush1.bf16.msra.mxu0 %v8632
        %8683 = vmatprep.subr.bf16.mxu0 0
        %8684 = vmatpush1.bf16.msra.mxu0 %v8633
        %8685 = vmatprep.subr.bf16.mxu0 0
        %8686 = vmatpush1.bf16.msra.mxu0 %v8634
        %8687 = vmatprep.subr.bf16.mxu0 0
        %8688 = vmatpush1.bf16.msra.mxu0 %v8635
        %8689 = vmatprep.subr.bf16.mxu0 0
        %8690 = vmatpush1.bf16.msra.mxu0 %v8636
        %8691 = vmatprep.subr.bf16.mxu0 0
        %8692 = vmatpush1.bf16.msra.mxu0 %v8637
        %8693 = vmatprep.subr.bf16.mxu0 0
        %8694 = vmatpush1.bf16.msra.mxu0 %v8638
        %8695 = vmatprep.subr.bf16.mxu0 0
        %8696 = vmatpush1.bf16.msra.mxu0 %v8639
        %8697 = vmatprep.subr.bf16.mxu0 0
        %8698 = vmatpush1.bf16.msra.mxu0 %v8640
        %8699 = vmatprep.subr.bf16.mxu0 0
        %8700 = vmatpush1.bf16.msra.mxu0 %v8641
        %8701 = vmatprep.subr.bf16.mxu0 0
        %8702 = vmatpush1.bf16.msra.mxu0 %v8642
        %8703 = vmatprep.subr.bf16.mxu0 0
        %8704 = vmatpush1.bf16.msra.mxu0 %v8643
        %8705 = vmatprep.subr.bf16.mxu0 0
        %8706 = vmatpush1.bf16.msra.mxu0 %v8644
        %8707 = vmatprep.subr.bf16.mxu0 0
        %8708 = vmatpush1.bf16.msra.mxu0 %v8645
        %8709 = vmatprep.subr.bf16.mxu0 0
        %8710 = vmatpush1.bf16.msra.mxu0 %v8646
        %8711 = vmatprep.mubr.bf16.mxu0 %v8484
        %8712 = vmatmul.mubr.bf16.gmra.mrb[0].mxu0 %v8483
        %v8713 = vpop.f32.mrb[0].mxu0
        %v8714 = vadd.f32 0.0, %v8713
        %v8715 = vpop.f32.mrb[0].mxu0
        %v8716 = vpop.f32.mrb[0].mxu0
        %v8717 = vpop.f32.mrb[0].mxu0
        %8718 = vdwg.mxu0
        %8719 = vmatprep.subr.bf16.mxu0 0
        %8720 = vmatpush1.bf16.msra.mxu0 %v8647
        %8721 = vmatprep.subr.bf16.mxu0 0
        %8722 = vmatpush1.bf16.msra.mxu0 %v8648
        %8723 = vmatprep.subr.bf16.mxu0 0
        %8724 = vmatpush1.bf16.msra.mxu0 %v8649
        %8725 = vmatprep.subr.bf16.mxu0 0
        %8726 = vmatpush1.bf16.msra.mxu0 %v8650
        %8727 = vmatprep.subr.bf16.mxu0 0
        %8728 = vmatpush1.bf16.msra.mxu0 %v8651
        %8729 = vmatprep.subr.bf16.mxu0 0
        %8730 = vmatpush1.bf16.msra.mxu0 %v8652
        %8731 = vmatprep.subr.bf16.mxu0 0
        %8732 = vmatpush1.bf16.msra.mxu0 %v8653
        %8733 = vmatprep.subr.bf16.mxu0 0
        %8734 = vmatpush1.bf16.msra.mxu0 %v8654
        %8735 = vmatprep.subr.bf16.mxu0 0
        %8736 = vmatpush1.bf16.msra.mxu0 0
        %8737 = vmatprep.subr.bf16.mxu0 0
        %8738 = vmatpush1.bf16.msra.mxu0 0
        %8739 = vmatprep.subr.bf16.mxu0 0
        %8740 = vmatpush1.bf16.msra.mxu0 0
        %8741 = vmatprep.subr.bf16.mxu0 0
        %8742 = vmatpush1.bf16.msra.mxu0 0
        %8743 = vmatprep.subr.bf16.mxu0 0
        %8744 = vmatpush1.bf16.msra.mxu0 0
        %8745 = vmatprep.subr.bf16.mxu0 0
        %8746 = vmatpush1.bf16.msra.mxu0 0
        %8747 = vmatprep.subr.bf16.mxu0 0
        %8748 = vmatpush1.bf16.msra.mxu0 0
        %8749 = vmatprep.subr.bf16.mxu0 0
        %8750 = vmatpush1.bf16.msra.mxu0 0
        %8751 = vmatprep.mubr.bf16.mxu0 0
        %8752 = vmatmul.mubr.bf16.gmra.mrb[0].mxu0 %v8485
        %v8753 = vpop.f32.mrb[0].mxu0
        %v8754 = vadd.f32 %v8714, %v8753
        %v8755 = vpop.f32.mrb[0].mxu0
        %v8756 = vpop.f32.mrb[0].mxu0
        %v8757 = vpop.f32.mrb[0].mxu0
        %8758 = vdwg.mxu0
        %v8759 = vadd.f32 %v8486, %v8754
        %s8760 = scalar_lea.vmem %s10, 192
        %v8761 = vld [vmem:[%s8760] sm:$0xf]
        %v8762 = vld [vmem:[%s8760 + $0x4] sm:$0xf]
        %v8763 = vld [vmem:[%s8760 + $0x8] sm:$0xf]
        %v8764 = vld [vmem:[%s8760 + $0xc] sm:$0xf]
        %v8765 = vld [vmem:[%s8760 + $0x10] sm:$0xf]
        %v8766 = vld [vmem:[%s8760 + $0x14] sm:$0xf]
        %v8767 = vld [vmem:[%s8760 + $0x18] sm:$0xf]
        %v8768 = vld [vmem:[%s8760 + $0x1c] sm:$0xf]
        %v8769 = vld [vmem:[%s8760 + $0x20] sm:$0xf]
        %v8770 = vld [vmem:[%s8760 + $0x24] sm:$0xf]
        %v8771 = vld [vmem:[%s8760 + $0x28] sm:$0xf]
        %v8772 = vld [vmem:[%s8760 + $0x2c] sm:$0xf]
        %v8773 = vld [vmem:[%s8760 + $0x30] sm:$0xf]
        %v8774 = vld [vmem:[%s8760 + $0x34] sm:$0xf]
        %v8775 = vld [vmem:[%s8760 + $0x38] sm:$0xf]
        %v8776 = vld [vmem:[%s8760 + $0x3c] sm:$0xf]
        %v8777 = vld [vmem:[%s8760 + $0x40] sm:$0xf]
        %v8778 = vld [vmem:[%s8760 + $0x44] sm:$0xf]
        %v8779 = vld [vmem:[%s8760 + $0x48] sm:$0xf]
        %v8780 = vld [vmem:[%s8760 + $0x4c] sm:$0xf]
        %v8781 = vld [vmem:[%s8760 + $0x50] sm:$0xf]
        %v8782 = vld [vmem:[%s8760 + $0x54] sm:$0xf]
        %v8783 = vld [vmem:[%s8760 + $0x58] sm:$0xf]
        %v8784 = vld [vmem:[%s8760 + $0x5c] sm:$0xf]
        %v8785 = vld [vmem:[%s8760 + $0x60] sm:$0xf]
        %v8786 = vld [vmem:[%s8760 + $0x64] sm:$0xf]
        %v8787 = vld [vmem:[%s8760 + $0x68] sm:$0xf]
        %v8788 = vld [vmem:[%s8760 + $0x6c] sm:$0xf]
        %v8789 = vld [vmem:[%s8760 + $0x70] sm:$0xf]
        %v8790 = vld [vmem:[%s8760 + $0x74] sm:$0xf]
        %v8791 = vld [vmem:[%s8760 + $0x78] sm:$0xf]
        %v8792 = vld [vmem:[%s8760 + $0x7c] sm:$0xf]
        %v8793 = vld [vmem:[%s8760 + $0x80] sm:$0xf]
        %v8794 = vld [vmem:[%s8760 + $0x84] sm:$0xf]
        %v8795 = vld [vmem:[%s8760 + $0x88] sm:$0xf]
        %v8796 = vld [vmem:[%s8760 + $0x8c] sm:$0xf]
        %v8797 = vld [vmem:[%s8760 + $0x90] sm:$0xf]
        %v8798 = vld [vmem:[%s8760 + $0x94] sm:$0xf]
        %v8799 = vld [vmem:[%s8760 + $0x98] sm:$0xf]
        %v8800 = vld [vmem:[%s8760 + $0x9c] sm:$0xf]
        %v8801 = vld [vmem:[%s8760 + $0xa0] sm:$0xf]
        %v8802 = vld [vmem:[%s8760 + $0xa4] sm:$0xf]
        %v8803 = vld [vmem:[%s8760 + $0xa8] sm:$0xf]
        %v8804 = vld [vmem:[%s8760 + $0xac] sm:$0xf]
        %v8805 = vld [vmem:[%s8760 + $0xb0] sm:$0xf]
        %v8806 = vld [vmem:[%s8760 + $0xb4] sm:$0xf]
        %v8807 = vld [vmem:[%s8760 + $0xb8] sm:$0xf]
        %v8808 = vld [vmem:[%s8760 + $0xbc] sm:$0xf]
        %v8810 = vshrl.u32 %v8483, 16
        %v8813 = vshrl.u32 %v8484, 16
        %v8816 = vshrl.u32 %v8485, 16
        %v8869 = vunpack.c.l.b16 %v8761
        %v8870 = vunpack.c.l.b16 %v8762
        %v8871 = vunpack.c.l.b16 %v8763
        %v8872 = vunpack.c.l.b16 %v8764
        %v8873 = vunpack.c.l.b16 %v8765
        %v8874 = vunpack.c.l.b16 %v8766
        %v8875 = vunpack.c.l.b16 %v8767
        %v8876 = vunpack.c.l.b16 %v8768
        %v8877 = vunpack.c.l.b16 %v8769
        %v8878 = vunpack.c.l.b16 %v8770
        %v8879 = vunpack.c.l.b16 %v8771
        %v8880 = vunpack.c.l.b16 %v8772
        %v8881 = vunpack.c.l.b16 %v8773
        %v8882 = vunpack.c.l.b16 %v8774
        %v8883 = vunpack.c.l.b16 %v8775
        %v8884 = vunpack.c.l.b16 %v8776
        %v8885 = vunpack.c.l.b16 %v8777
        %v8886 = vunpack.c.l.b16 %v8778
        %v8887 = vunpack.c.l.b16 %v8779
        %v8888 = vunpack.c.l.b16 %v8780
        %v8889 = vunpack.c.l.b16 %v8781
        %v8890 = vunpack.c.l.b16 %v8782
        %v8891 = vunpack.c.l.b16 %v8783
        %v8892 = vunpack.c.l.b16 %v8784
        %v8893 = vunpack.c.l.b16 %v8785
        %v8894 = vunpack.c.l.b16 %v8786
        %v8895 = vunpack.c.l.b16 %v8787
        %v8896 = vunpack.c.l.b16 %v8788
        %v8897 = vunpack.c.l.b16 %v8789
        %v8898 = vunpack.c.l.b16 %v8790
        %v8899 = vunpack.c.l.b16 %v8791
        %v8900 = vunpack.c.l.b16 %v8792
        %v8901 = vunpack.c.l.b16 %v8793
        %v8902 = vunpack.c.l.b16 %v8794
        %v8903 = vunpack.c.l.b16 %v8795
        %v8904 = vunpack.c.l.b16 %v8796
        %v8905 = vunpack.c.l.b16 %v8797
        %v8906 = vunpack.c.l.b16 %v8798
        %v8907 = vunpack.c.l.b16 %v8799
        %v8908 = vunpack.c.l.b16 %v8800
        %v8909 = vunpack.c.l.b16 %v8801
        %v8910 = vunpack.c.l.b16 %v8802
        %v8911 = vunpack.c.l.b16 %v8803
        %v8912 = vunpack.c.l.b16 %v8804
        %v8913 = vunpack.c.l.b16 %v8805
        %v8914 = vunpack.c.l.b16 %v8806
        %v8915 = vunpack.c.l.b16 %v8807
        %v8916 = vunpack.c.l.b16 %v8808
        %v8917 = vpack.c.b16 %v8870, %v8869
        %v8918 = vpack.c.b16 %v8872, %v8871
        %v8919 = vpack.c.b16 %v8874, %v8873
        %v8920 = vpack.c.b16 %v8876, %v8875
        %v8921 = vpack.c.b16 %v8878, %v8877
        %v8922 = vpack.c.b16 %v8880, %v8879
        %v8923 = vpack.c.b16 %v8882, %v8881
        %v8924 = vpack.c.b16 %v8884, %v8883
        %v8925 = vpack.c.b16 %v8886, %v8885
        %v8926 = vpack.c.b16 %v8888, %v8887
        %v8927 = vpack.c.b16 %v8890, %v8889
        %v8928 = vpack.c.b16 %v8892, %v8891
        %v8929 = vpack.c.b16 %v8894, %v8893
        %v8930 = vpack.c.b16 %v8896, %v8895
        %v8931 = vpack.c.b16 %v8898, %v8897
        %v8932 = vpack.c.b16 %v8900, %v8899
        %v8933 = vpack.c.b16 %v8902, %v8901
        %v8934 = vpack.c.b16 %v8904, %v8903
        %v8935 = vpack.c.b16 %v8906, %v8905
        %v8936 = vpack.c.b16 %v8908, %v8907
        %v8937 = vpack.c.b16 %v8910, %v8909
        %v8938 = vpack.c.b16 %v8912, %v8911
        %v8939 = vpack.c.b16 %v8914, %v8913
        %v8940 = vpack.c.b16 %v8916, %v8915
        %8965 = vmatprep.subr.bf16.mxu0 0
        %8966 = vmatpush1.bf16.msra.mxu0 %v8917
        %8967 = vmatprep.subr.bf16.mxu0 0
        %8968 = vmatpush1.bf16.msra.mxu0 %v8918
        %8969 = vmatprep.subr.bf16.mxu0 0
        %8970 = vmatpush1.bf16.msra.mxu0 %v8919
        %8971 = vmatprep.subr.bf16.mxu0 0
        %8972 = vmatpush1.bf16.msra.mxu0 %v8920
        %8973 = vmatprep.subr.bf16.mxu0 0
        %8974 = vmatpush1.bf16.msra.mxu0 %v8921
        %8975 = vmatprep.subr.bf16.mxu0 0
        %8976 = vmatpush1.bf16.msra.mxu0 %v8922
        %8977 = vmatprep.subr.bf16.mxu0 0
        %8978 = vmatpush1.bf16.msra.mxu0 %v8923
        %8979 = vmatprep.subr.bf16.mxu0 0
        %8980 = vmatpush1.bf16.msra.mxu0 %v8924
        %8981 = vmatprep.subr.bf16.mxu0 0
        %8982 = vmatpush1.bf16.msra.mxu0 %v8925
        %8983 = vmatprep.subr.bf16.mxu0 0
        %8984 = vmatpush1.bf16.msra.mxu0 %v8926
        %8985 = vmatprep.subr.bf16.mxu0 0
        %8986 = vmatpush1.bf16.msra.mxu0 %v8927
        %8987 = vmatprep.subr.bf16.mxu0 0
        %8988 = vmatpush1.bf16.msra.mxu0 %v8928
        %8989 = vmatprep.subr.bf16.mxu0 0
        %8990 = vmatpush1.bf16.msra.mxu0 %v8929
        %8991 = vmatprep.subr.bf16.mxu0 0
        %8992 = vmatpush1.bf16.msra.mxu0 %v8930
        %8993 = vmatprep.subr.bf16.mxu0 0
        %8994 = vmatpush1.bf16.msra.mxu0 %v8931
        %8995 = vmatprep.subr.bf16.mxu0 0
        %8996 = vmatpush1.bf16.msra.mxu0 %v8932
        %8997 = vmatprep.mubr.bf16.mxu0 %v8813
        %8998 = vmatmul.mubr.bf16.gmra.mrb[0].mxu0 %v8810
        %v8999 = vpop.f32.mrb[0].mxu0
        %v9000 = vadd.f32 0.0, %v8999
        %v9001 = vpop.f32.mrb[0].mxu0
        %v9002 = vpop.f32.mrb[0].mxu0
        %v9003 = vpop.f32.mrb[0].mxu0
        %9004 = vdwg.mxu0
        %9005 = vmatprep.subr.bf16.mxu0 0
        %9006 = vmatpush1.bf16.msra.mxu0 %v8933
        %9007 = vmatprep.subr.bf16.mxu0 0
        %9008 = vmatpush1.bf16.msra.mxu0 %v8934
        %9009 = vmatprep.subr.bf16.mxu0 0
        %9010 = vmatpush1.bf16.msra.mxu0 %v8935
        %9011 = vmatprep.subr.bf16.mxu0 0
        %9012 = vmatpush1.bf16.msra.mxu0 %v8936
        %9013 = vmatprep.subr.bf16.mxu0 0
        %9014 = vmatpush1.bf16.msra.mxu0 %v8937
        %9015 = vmatprep.subr.bf16.mxu0 0
        %9016 = vmatpush1.bf16.msra.mxu0 %v8938
        %9017 = vmatprep.subr.bf16.mxu0 0
        %9018 = vmatpush1.bf16.msra.mxu0 %v8939
        %9019 = vmatprep.subr.bf16.mxu0 0
        %9020 = vmatpush1.bf16.msra.mxu0 %v8940
        %9021 = vmatprep.subr.bf16.mxu0 0
        %9022 = vmatpush1.bf16.msra.mxu0 0
        %9023 = vmatprep.subr.bf16.mxu0 0
        %9024 = vmatpush1.bf16.msra.mxu0 0
        %9025 = vmatprep.subr.bf16.mxu0 0
        %9026 = vmatpush1.bf16.msra.mxu0 0
        %9027 = vmatprep.subr.bf16.mxu0 0
        %9028 = vmatpush1.bf16.msra.mxu0 0
        %9029 = vmatprep.subr.bf16.mxu0 0
        %9030 = vmatpush1.bf16.msra.mxu0 0
        %9031 = vmatprep.subr.bf16.mxu0 0
        %9032 = vmatpush1.bf16.msra.mxu0 0
        %9033 = vmatprep.subr.bf16.mxu0 0
        %9034 = vmatpush1.bf16.msra.mxu0 0
        %9035 = vmatprep.subr.bf16.mxu0 0
        %9036 = vmatpush1.bf16.msra.mxu0 0
        %9037 = vmatprep.mubr.bf16.mxu0 0
        %9038 = vmatmul.mubr.bf16.gmra.mrb[0].mxu0 %v8816
        %v9039 = vpop.f32.mrb[0].mxu0
        %v9040 = vadd.f32 %v9000, %v9039
        %v9041 = vpop.f32.mrb[0].mxu0
        %v9042 = vpop.f32.mrb[0].mxu0
        %v9043 = vpop.f32.mrb[0].mxu0
        %9044 = vdwg.mxu0
        %v9045 = vadd.f32 %v8759, %v9040
        %s9046 = scalar_lea.vmem %s10, 384
        %v9047 = vld [vmem:[%s9046] sm:$0xf]
        %v9048 = vld [vmem:[%s9046 + $0x4] sm:$0xf]
        %v9049 = vld [vmem:[%s9046 + $0x8] sm:$0xf]
        %v9050 = vld [vmem:[%s9046 + $0xc] sm:$0xf]
        %v9051 = vld [vmem:[%s9046 + $0x10] sm:$0xf]
        %v9052 = vld [vmem:[%s9046 + $0x14] sm:$0xf]
        %v9053 = vld [vmem:[%s9046 + $0x18] sm:$0xf]
        %v9054 = vld [vmem:[%s9046 + $0x1c] sm:$0xf]
        %v9055 = vld [vmem:[%s9046 + $0x20] sm:$0xf]
        %v9056 = vld [vmem:[%s9046 + $0x24] sm:$0xf]
        %v9057 = vld [vmem:[%s9046 + $0x28] sm:$0xf]
        %v9058 = vld [vmem:[%s9046 + $0x2c] sm:$0xf]
        %v9059 = vld [vmem:[%s9046 + $0x30] sm:$0xf]
        %v9060 = vld [vmem:[%s9046 + $0x34] sm:$0xf]
        %v9061 = vld [vmem:[%s9046 + $0x38] sm:$0xf]
        %v9062 = vld [vmem:[%s9046 + $0x3c] sm:$0xf]
        %v9063 = vld [vmem:[%s9046 + $0x40] sm:$0xf]
        %v9064 = vld [vmem:[%s9046 + $0x44] sm:$0xf]
        %v9065 = vld [vmem:[%s9046 + $0x48] sm:$0xf]
        %v9066 = vld [vmem:[%s9046 + $0x4c] sm:$0xf]
        %v9067 = vld [vmem:[%s9046 + $0x50] sm:$0xf]
        %v9068 = vld [vmem:[%s9046 + $0x54] sm:$0xf]
        %v9069 = vld [vmem:[%s9046 + $0x58] sm:$0xf]
        %v9070 = vld [vmem:[%s9046 + $0x5c] sm:$0xf]
        %v9071 = vld [vmem:[%s9046 + $0x60] sm:$0xf]
        %v9072 = vld [vmem:[%s9046 + $0x64] sm:$0xf]
        %v9073 = vld [vmem:[%s9046 + $0x68] sm:$0xf]
        %v9074 = vld [vmem:[%s9046 + $0x6c] sm:$0xf]
        %v9075 = vld [vmem:[%s9046 + $0x70] sm:$0xf]
        %v9076 = vld [vmem:[%s9046 + $0x74] sm:$0xf]
        %v9077 = vld [vmem:[%s9046 + $0x78] sm:$0xf]
        %v9078 = vld [vmem:[%s9046 + $0x7c] sm:$0xf]
        %v9079 = vld [vmem:[%s9046 + $0x80] sm:$0xf]
        %v9080 = vld [vmem:[%s9046 + $0x84] sm:$0xf]
        %v9081 = vld [vmem:[%s9046 + $0x88] sm:$0xf]
        %v9082 = vld [vmem:[%s9046 + $0x8c] sm:$0xf]
        %v9083 = vld [vmem:[%s9046 + $0x90] sm:$0xf]
        %v9084 = vld [vmem:[%s9046 + $0x94] sm:$0xf]
        %v9085 = vld [vmem:[%s9046 + $0x98] sm:$0xf]
        %v9086 = vld [vmem:[%s9046 + $0x9c] sm:$0xf]
        %v9087 = vld [vmem:[%s9046 + $0xa0] sm:$0xf]
        %v9088 = vld [vmem:[%s9046 + $0xa4] sm:$0xf]
        %v9089 = vld [vmem:[%s9046 + $0xa8] sm:$0xf]
        %v9090 = vld [vmem:[%s9046 + $0xac] sm:$0xf]
        %v9091 = vld [vmem:[%s9046 + $0xb0] sm:$0xf]
        %v9092 = vld [vmem:[%s9046 + $0xb4] sm:$0xf]
        %v9093 = vld [vmem:[%s9046 + $0xb8] sm:$0xf]
        %v9094 = vld [vmem:[%s9046 + $0xbc] sm:$0xf]
        %v9098 = vrot.slane %v8483, 1
        %v9099 = vrot.slane %v8484, 1
        %v9100 = vrot.slane %v8485, 1
        %v9152 = vunpack.c.l.b16 %v9047
        %v9153 = vunpack.c.l.b16 %v9048
        %v9154 = vunpack.c.l.b16 %v9049
        %v9155 = vunpack.c.l.b16 %v9050
        %v9156 = vunpack.c.l.b16 %v9051
        %v9157 = vunpack.c.l.b16 %v9052
        %v9158 = vunpack.c.l.b16 %v9053
        %v9159 = vunpack.c.l.b16 %v9054
        %v9160 = vunpack.c.l.b16 %v9055
        %v9161 = vunpack.c.l.b16 %v9056
        %v9162 = vunpack.c.l.b16 %v9057
        %v9163 = vunpack.c.l.b16 %v9058
        %v9164 = vunpack.c.l.b16 %v9059
        %v9165 = vunpack.c.l.b16 %v9060
        %v9166 = vunpack.c.l.b16 %v9061
        %v9167 = vunpack.c.l.b16 %v9062
        %v9168 = vunpack.c.l.b16 %v9063
        %v9169 = vunpack.c.l.b16 %v9064
        %v9170 = vunpack.c.l.b16 %v9065
        %v9171 = vunpack.c.l.b16 %v9066
        %v9172 = vunpack.c.l.b16 %v9067
        %v9173 = vunpack.c.l.b16 %v9068
        %v9174 = vunpack.c.l.b16 %v9069
        %v9175 = vunpack.c.l.b16 %v9070
        %v9176 = vunpack.c.l.b16 %v9071
        %v9177 = vunpack.c.l.b16 %v9072
        %v9178 = vunpack.c.l.b16 %v9073
        %v9179 = vunpack.c.l.b16 %v9074
        %v9180 = vunpack.c.l.b16 %v9075
        %v9181 = vunpack.c.l.b16 %v9076
        %v9182 = vunpack.c.l.b16 %v9077
        %v9183 = vunpack.c.l.b16 %v9078
        %v9184 = vunpack.c.l.b16 %v9079
        %v9185 = vunpack.c.l.b16 %v9080
        %v9186 = vunpack.c.l.b16 %v9081
        %v9187 = vunpack.c.l.b16 %v9082
        %v9188 = vunpack.c.l.b16 %v9083
        %v9189 = vunpack.c.l.b16 %v9084
        %v9190 = vunpack.c.l.b16 %v9085
        %v9191 = vunpack.c.l.b16 %v9086
        %v9192 = vunpack.c.l.b16 %v9087
        %v9193 = vunpack.c.l.b16 %v9088
        %v9194 = vunpack.c.l.b16 %v9089
        %v9195 = vunpack.c.l.b16 %v9090
        %v9196 = vunpack.c.l.b16 %v9091
        %v9197 = vunpack.c.l.b16 %v9092
        %v9198 = vunpack.c.l.b16 %v9093
        %v9199 = vunpack.c.l.b16 %v9094
        %v9200 = vpack.c.b16 %v9153, %v9152
        %v9201 = vpack.c.b16 %v9155, %v9154
        %v9202 = vpack.c.b16 %v9157, %v9156
        %v9203 = vpack.c.b16 %v9159, %v9158
        %v9204 = vpack.c.b16 %v9161, %v9160
        %v9205 = vpack.c.b16 %v9163, %v9162
        %v9206 = vpack.c.b16 %v9165, %v9164
        %v9207 = vpack.c.b16 %v9167, %v9166
        %v9208 = vpack.c.b16 %v9169, %v9168
        %v9209 = vpack.c.b16 %v9171, %v9170
        %v9210 = vpack.c.b16 %v9173, %v9172
        %v9211 = vpack.c.b16 %v9175, %v9174
        %v9212 = vpack.c.b16 %v9177, %v9176
        %v9213 = vpack.c.b16 %v9179, %v9178
        %v9214 = vpack.c.b16 %v9181, %v9180
        %v9215 = vpack.c.b16 %v9183, %v9182
        %v9216 = vpack.c.b16 %v9185, %v9184
        %v9217 = vpack.c.b16 %v9187, %v9186
        %v9218 = vpack.c.b16 %v9189, %v9188
        %v9219 = vpack.c.b16 %v9191, %v9190
        %v9220 = vpack.c.b16 %v9193, %v9192
        %v9221 = vpack.c.b16 %v9195, %v9194
        %v9222 = vpack.c.b16 %v9197, %v9196
        %v9223 = vpack.c.b16 %v9199, %v9198
        %9248 = vmatprep.subr.bf16.mxu0 0
        %9249 = vmatpush1.bf16.msra.mxu0 %v9200
        %9250 = vmatprep.subr.bf16.mxu0 0
        %9251 = vmatpush1.bf16.msra.mxu0 %v9201
        %9252 = vmatprep.subr.bf16.mxu0 0
        %9253 = vmatpush1.bf16.msra.mxu0 %v9202
        %9254 = vmatprep.subr.bf16.mxu0 0
        %9255 = vmatpush1.bf16.msra.mxu0 %v9203
        %9256 = vmatprep.subr.bf16.mxu0 0
        %9257 = vmatpush1.bf16.msra.mxu0 %v9204
        %9258 = vmatprep.subr.bf16.mxu0 0
        %9259 = vmatpush1.bf16.msra.mxu0 %v9205
        %9260 = vmatprep.subr.bf16.mxu0 0
        %9261 = vmatpush1.bf16.msra.mxu0 %v9206
        %9262 = vmatprep.subr.bf16.mxu0 0
        %9263 = vmatpush1.bf16.msra.mxu0 %v9207
        %9264 = vmatprep.subr.bf16.mxu0 0
        %9265 = vmatpush1.bf16.msra.mxu0 %v9208
        %9266 = vmatprep.subr.bf16.mxu0 0
        %9267 = vmatpush1.bf16.msra.mxu0 %v9209
        %9268 = vmatprep.subr.bf16.mxu0 0
        %9269 = vmatpush1.bf16.msra.mxu0 %v9210
        %9270 = vmatprep.subr.bf16.mxu0 0
        %9271 = vmatpush1.bf16.msra.mxu0 %v9211
        %9272 = vmatprep.subr.bf16.mxu0 0
        %9273 = vmatpush1.bf16.msra.mxu0 %v9212
        %9274 = vmatprep.subr.bf16.mxu0 0
        %9275 = vmatpush1.bf16.msra.mxu0 %v9213
        %9276 = vmatprep.subr.bf16.mxu0 0
        %9277 = vmatpush1.bf16.msra.mxu0 %v9214
        %9278 = vmatprep.subr.bf16.mxu0 0
        %9279 = vmatpush1.bf16.msra.mxu0 %v9215
        %9280 = vmatprep.mubr.bf16.mxu0 %v9099
        %9281 = vmatmul.mubr.bf16.gmra.mrb[0].mxu0 %v9098
        %v9282 = vpop.f32.mrb[0].mxu0
        %v9283 = vadd.f32 0.0, %v9282
        %v9284 = vpop.f32.mrb[0].mxu0
        %v9285 = vpop.f32.mrb[0].mxu0
        %v9286 = vpop.f32.mrb[0].mxu0
        %9287 = vdwg.mxu0
        %9288 = vmatprep.subr.bf16.mxu0 0
        %9289 = vmatpush1.bf16.msra.mxu0 %v9216
        %9290 = vmatprep.subr.bf16.mxu0 0
        %9291 = vmatpush1.bf16.msra.mxu0 %v9217
        %9292 = vmatprep.subr.bf16.mxu0 0
        %9293 = vmatpush1.bf16.msra.mxu0 %v9218
        %9294 = vmatprep.subr.bf16.mxu0 0
        %9295 = vmatpush1.bf16.msra.mxu0 %v9219
        %9296 = vmatprep.subr.bf16.mxu0 0
        %9297 = vmatpush1.bf16.msra.mxu0 %v9220
        %9298 = vmatprep.subr.bf16.mxu0 0
        %9299 = vmatpush1.bf16.msra.mxu0 %v9221
        %9300 = vmatprep.subr.bf16.mxu0 0
        %9301 = vmatpush1.bf16.msra.mxu0 %v9222
        %9302 = vmatprep.subr.bf16.mxu0 0
        %9303 = vmatpush1.bf16.msra.mxu0 %v9223
        %9304 = vmatprep.subr.bf16.mxu0 0
        %9305 = vmatpush1.bf16.msra.mxu0 0
        %9306 = vmatprep.subr.bf16.mxu0 0
        %9307 = vmatpush1.bf16.msra.mxu0 0
        %9308 = vmatprep.subr.bf16.mxu0 0
        %9309 = vmatpush1.bf16.msra.mxu0 0
        %9310 = vmatprep.subr.bf16.mxu0 0
        %9311 = vmatpush1.bf16.msra.mxu0 0
        %9312 = vmatprep.subr.bf16.mxu0 0
        %9313 = vmatpush1.bf16.msra.mxu0 0
        %9314 = vmatprep.subr.bf16.mxu0 0
        %9315 = vmatpush1.bf16.msra.mxu0 0
        %9316 = vmatprep.subr.bf16.mxu0 0
        %9317 = vmatpush1.bf16.msra.mxu0 0
        %9318 = vmatprep.subr.bf16.mxu0 0
        %9319 = vmatpush1.bf16.msra.mxu0 0
        %9320 = vmatprep.mubr.bf16.mxu0 0
        %9321 = vmatmul.mubr.bf16.gmra.mrb[0].mxu0 %v9100
        %v9322 = vpop.f32.mrb[0].mxu0
        %v9323 = vadd.f32 %v9283, %v9322
        %v9324 = vpop.f32.mrb[0].mxu0
        %v9325 = vpop.f32.mrb[0].mxu0
        %v9326 = vpop.f32.mrb[0].mxu0
        %9327 = vdwg.mxu0
        %v9328 = vadd.f32 %v9045, %v9323
        %vm9329 = vcmask 57344
        %9330 = vst.msk [vmem:[%s516] sm:$0x1] %vm9329, %v9328
        %v9332 = vlaneseq
        %v9333 = vshrl.u32 %v9332, 7
        %v9334 = vsub.s32 0, %v9333
        %v9335 = vrot.slane %v9328, %v9334
        %9336 = vrot.lane.b32.xlu0 %v9335, 120
        %v9337 = vpop.permute.xlu0 %9336
        %9339 = vst.msk [vmem:[%s522] sm:$0x1] %vm9329, %v9337
        %s9340 = sand.u32 %s300, 1
        %s9341 = scalar_lea.sflag [#allocation4], %s9340
        %s9342 = sand.u32 %s300, 1
        %s9343 = scalar_lea.vmem [#allocation13], %s9342
        %s9344 = sand.u32 %s326, 1
        %s9345 = scalar_lea.sflag [#allocation15], %s9344
        %s9346 = sand.u32 %s326, 1
        %s9347 = scalar_lea.vmem [#allocation14], %s9346
        // Predicated region
        $region93: #{vae_encoder_forward.1} parent=67 // pred_check
          %p9348 = pneg %p310
        $region94: #{vae_encoder_forward.1} parent=67 // pred_check_branch
          %9350 = sbr.rel (%p9348) target = $region96
        $region95: #{vae_encoder_forward.1} parent=67 // pred_region
          %s9352 = ssub.s32 16, 16
          %9353 = vsyncadd %s9341, %s9352
          %s9354 = smul.addr %s35, 16
          %s9355 = scalar_lea.hbm %s12, %s9354
          %s9357 = sshll.u32 %s9343, 4
          %s9358 = int_to_ptr.vmem [resolvable:$true] %s9357
          %9360 = dma.vmem_to_hbm [thread:$0]  %s9358, 16, %s9355, %s9341
        $region96: #{vae_encoder_forward.1} parent=67 // pred_fallthru
          _
        // Predicated region
        $region97: #{vae_encoder_forward.1} parent=67 // pred_check
          %p9361 = pneg %p336
        $region98: #{vae_encoder_forward.1} parent=67 // pred_check_branch
          %9363 = sbr.rel (%p9361) target = $region100
        $region99: #{vae_encoder_forward.1} parent=67 // pred_region
          %s9365 = ssub.s32 16, 16
          %9366 = vsyncadd %s9345, %s9365
          %s9367 = smul.addr %s35, 16
          %s9368 = scalar_lea.hbm %s13, %s9367
          %s9370 = sshll.u32 %s9347, 4
          %s9371 = int_to_ptr.vmem [resolvable:$true] %s9370
          %9373 = dma.vmem_to_hbm [thread:$0]  %s9371, 16, %s9368, %s9345
        $region100: #{vae_encoder_forward.1} parent=67 // pred_fallthru
          _
      $region68: #{vae_encoder_forward.1} parent=5 // pred_fallthru
        _
      %p9374 = scmp.le.s32.totalorder 2, %s30
      // Predicated region
      $region101: #{vae_encoder_forward.1} parent=5 // pred_check
        %p9375 = pneg %p9374
      $region102: #{vae_encoder_forward.1} parent=5 // pred_check_branch
        %9377 = sbr.rel (%p9375) target = $region104
      $region103: #{vae_encoder_forward.1} parent=5 // pred_region
        %s9378 = ssub.s32 %s30, 2
        // Predicated region
        $region105: #{vae_encoder_forward.1} parent=103 // pred_check
          %p9379 = pneg %p316
        $region106: #{vae_encoder_forward.1} parent=103 // pred_check_branch
          %9381 = sbr.rel (%p9379) target = $region108
        $region107: #{vae_encoder_forward.1} parent=103 // pred_region
          %s9382 = sand.u32 %s301, 1
          %s9383 = scalar_lea.sflag [#allocation4], %s9382
          %s9384 = sand.u32 %s301, 1
          %s9385 = scalar_lea.vmem [#allocation13], %s9384
          %9386 = dma.done %s9383, 16
        $region108: #{vae_encoder_forward.1} parent=103 // pred_fallthru
          _
        // Predicated region
        $region109: #{vae_encoder_forward.1} parent=103 // pred_check
          %p9387 = pneg %p342
        $region110: #{vae_encoder_forward.1} parent=103 // pred_check_branch
          %9389 = sbr.rel (%p9387) target = $region112
        $region111: #{vae_encoder_forward.1} parent=103 // pred_region
          %s9390 = sand.u32 %s327, 1
          %s9391 = scalar_lea.sflag [#allocation15], %s9390
          %s9392 = sand.u32 %s327, 1
          %s9393 = scalar_lea.vmem [#allocation14], %s9392
          %9394 = dma.done %s9391, 16
        $region112: #{vae_encoder_forward.1} parent=103 // pred_fallthru
          _
      $region104: #{vae_encoder_forward.1} parent=5 // pred_fallthru
        _
    $region6: #{vae_encoder_forward.1} parent=1 // loop_footer
      %s34 = sadd.s32 1, %s30
    $region7: #{vae_encoder_forward.1} parent=1 // loop_footer_branch
      %29 = sbr.rel target = $region3
    $region8: #{vae_encoder_forward.1} parent=1 // loop_exit
      _
    %9395 = vsyncpa [#allocation3], 1
    %s9396 = scalar_lea.sflag [#allocation3], 1
    %9397 = vsyncpa %s9396, 1
    %9398 = vsyncpa [#allocation6], 1
    %9399 = vsyncpa [#allocation9], 1
    %9400 = vsyncpa [#allocation12], 1
    %9401 = vsyncpa [#allocation4], 1
    %s9402 = scalar_lea.sflag [#allocation4], 1
    %9403 = vsyncpa %s9402, 1
    %9404 = vsyncpa [#allocation15], 1
    %s9405 = scalar_lea.sflag [#allocation15], 1
    %9406 = vsyncpa %s9405, 1

</llo_original>
